<compile_context>
chip_gen: v6e
topology: v6e:2x2x1
jax: 0.10.0
libtpu: 0.0.40
codegen_flags: <defaults>
</compile_context>

<pallas_src>
import functools

import numpy as np
import jax
import jax.numpy as jnp
from jax.experimental import pallas as pl
from jax.experimental.pallas import tpu as pltpu

BN_EPS = 1e-5


# ----------------------------------------------------------------------------
# Fused Pallas kernel: entire PosteriorModule forward (fcn=True, add_stop=True)
# ----------------------------------------------------------------------------
def _posterior_kernel(patches0_ref, w0_ref, sel1_ref, sel2_ref, sel3_ref,
                      w123_ref, rep_ref, wpost_ref, bnp_ref,
                      wb_cls_ref, wb_loc_ref, wb_stp_ref,
                      logits_sel_ref, sampled_sel_ref,
                      logits_loc_ref, sampled_loc_ref, prob_stp_ref):
    f32 = jnp.float32
    enc_hid = w0_ref.shape[1]

    def bn_relu(y, l):
        # BatchNorm2d (training mode): biased batch statistics over all rows
        # (B * H_out * W_out), per channel.  The conv bias is omitted because it
        # is exactly cancelled by the mean subtraction.
        g = bnp_ref[2 * l:2 * l + 1, :]
        b = bnp_ref[2 * l + 1:2 * l + 2, :]
        mean = jnp.mean(y, axis=0, keepdims=True)
        var = jnp.mean(jnp.square(y - mean), axis=0, keepdims=True)
        return jnp.maximum(g * (y - mean) * jax.lax.rsqrt(var + BN_EPS) + b, 0.0)

    # --- embed block 0: Conv2d(imgd, enc_hid, 3, 2, 1) + BN + ReLU -----------
    # (raw image im2col'd in the wrapper; the conv is one matmul here)
    h = jnp.dot(patches0_ref[...], w0_ref[...], preferred_element_type=f32)
    h = bn_relu(h, 0)

    # --- embed blocks 1..3: conv3x3/s2/p1 + BN + ReLU, in-VMEM im2col --------
    # Y = sum_k Sel_k @ X @ W_k ; Sel_k is a 0/1 row-selection matrix (zero rows
    # where kernel tap k falls in the zero padding), W_k = conv weight at tap k.
    for li, sel_ref in ((1, sel1_ref), (2, sel2_ref), (3, sel3_ref)):
        m_out = sel_ref.shape[1]
        acc = jnp.zeros((m_out, enc_hid), f32)
        for k in range(9):
            p = jnp.dot(sel_ref[k], h, preferred_element_type=f32)
            acc = acc + jnp.dot(p, w123_ref[li - 1, k, :, :],
                                preferred_element_type=f32)
        h = bn_relu(acc, li)

    # --- Interpolate((hw, hw), bilinear) from 1x1 == exact row broadcast -----
    hb = jnp.dot(rep_ref[...], h, preferred_element_type=f32)       # (B*hw*hw, C)

    # --- fcn tail: Conv2d(enc_hid, enc_hid, 1, 1) + BN + ReLU ----------------
    h2 = bn_relu(jnp.dot(hb, wpost_ref[...], preferred_element_type=f32), 4)

    # --- heads: 1x1 convs (weight = rows 0:enc_hid, bias = row enc_hid) ------
    def head(wb_ref):
        y = jnp.dot(h2, wb_ref[0:enc_hid, :], preferred_element_type=f32)
        return y + wb_ref[enc_hid:enc_hid + 1, :]

    def softmax(y):  # relaxed-categorical sampler used for sel / loc
        m = jnp.max(y, axis=-1, keepdims=True)
        e = jnp.exp(y - m)
        return e / jnp.sum(e, axis=-1, keepdims=True)

    y_cls = head(wb_cls_ref)
    logits_sel_ref[...] = y_cls
    sampled_sel_ref[...] = softmax(y_cls)

    y_loc = head(wb_loc_ref)
    logits_loc_ref[...] = y_loc
    sampled_loc_ref[...] = softmax(y_loc)

    # head_stop includes Sigmoid, so 'logits_stp' holds probabilities, exactly
    # like the PyTorch reference.
    prob_stp_ref[...] = jax.nn.sigmoid(head(wb_stp_ref))


def _full_spec(shape):
    # whole array as one VMEM block (grid=(1,)); full dims are exempt from the
    # (8, 128) divisibility rule.
    return pl.BlockSpec(shape, lambda i: (0,) * len(shape))


# ----------------------------------------------------------------------------
# Wrapper-side helpers (shape-only constants / one small XLA producer fusion)
# ----------------------------------------------------------------------------
def im2col_3x3_s2_p1(x_nhwc):
    """im2col for Conv2d(k=3, s=2, p=1) in NHWC; column order (kh, kw, c)."""
    b, h, w, c = x_nhwc.shape
    ho, wo = h // 2, w // 2
    xp = jnp.pad(x_nhwc, ((0, 0), (1, 1), (1, 1), (0, 0)))
    cols = []
    for kh in range(3):
        for kw in range(3):
            cols.append(xp[:, kh:kh + 2 * ho:2, kw:kw + 2 * wo:2, :])
    return jnp.concatenate(cols, axis=-1)          # (B, Ho, Wo, 9*C)


def _conv_selection_matrices(b, h, w):
    """9 0/1 matrices Sel_k of shape (B*Ho*Wo, B*H*W) implementing the row
    gather of a 3x3 / stride-2 / pad-1 conv on (B,H,W,C)-flattened rows
    (zero rows where the tap falls into the zero padding)."""
    ho, wo = h // 2, w // 2
    sel = np.zeros((9, b * ho * wo, b * h * w), np.float32)
    for bb in range(b):
        for i in range(ho):
            for j in range(wo):
                ro = (bb * ho + i) * wo + j
                for kh in range(3):
                    for kw in range(3):
                        hi, wi = 2 * i + kh - 1, 2 * j + kw - 1
                        if 0 <= hi < h and 0 <= wi < w:
                            sel[kh * 3 + kw, ro, (bb * h + hi) * w + wi] = 1.0
    return jnp.asarray(sel)


def _broadcast_rows_matrix(b, hw):
    """(B*hw*hw, B) 0/1 matrix: bilinear interpolation 1x1 -> hw x hw is an
    exact per-batch row broadcast."""
    rep = np.zeros((b * hw * hw, b), np.float32)
    for r in range(b * hw * hw):
        rep[r, r // (hw * hw)] = 1.0
    return jnp.asarray(rep)


# ----------------------------------------------------------------------------
# Parameters (deterministic, synthetic) — already in kernel operand layout
# ----------------------------------------------------------------------------
def init_params(key, cfg):
    """Mapping to the PyTorch module:
      w0    : embed block 0 Conv2d(imgd, enc_hid, 3, 2, 1).weight  (HWIO -> (9*imgd, enc_hid))
      w123  : embed blocks 1..3 conv weights, stacked (3, 9, enc_hid, enc_hid)
      bnp   : rows (2l, 2l+1) = (gamma, beta) of BN l  (l=0..3 downsample, l=4 post-conv BN)
      wpost : fcn tail Conv2d(enc_hid, enc_hid, 1, 1).weight  ((enc_hid, enc_hid))
      wb_*  : head Conv2d weight (rows 0:enc_hid) and bias (row enc_hid)
    Conv biases of BN-followed convs are omitted: a per-channel bias added before
    training-mode BatchNorm is exactly cancelled by the mean subtraction."""
    enc_hid, imgd = cfg["enc_hid"], cfg["imgd"]
    ks = iter(jax.random.split(key, 24))
    nrm = lambda shape, s=0.1: s * jax.random.normal(next(ks), shape, jnp.float32)
    p = {}
    p["w0"] = nrm((3, 3, imgd, enc_hid)).reshape(9 * imgd, enc_hid)
    p["w123"] = jnp.stack(
        [nrm((3, 3, enc_hid, enc_hid)).reshape(9, enc_hid, enc_hid) for _ in range(3)])
    bn_rows = []
    for _ in range(5):
        bn_rows.append(1.0 + nrm((enc_hid,), 0.05))   # gamma
        bn_rows.append(nrm((enc_hid,), 0.01))         # beta
    p["bnp"] = jnp.stack(bn_rows)                     # (10, enc_hid)
    p["wpost"] = nrm((enc_hid, enc_hid))
    head = lambda n: jnp.concatenate([nrm((enc_hid, n)), nrm((1, n), 0.01)], axis=0)
    p["wb_cls"] = head(cfg["K"])
    p["wb_loc"] = head(cfg["n_class_loc"])
    p["wb_stp"] = head(1)
    return p


# ----------------------------------------------------------------------------
# Forward pass (mirrors PosteriorModule.forward, fcn=True, add_stop=True)
# ----------------------------------------------------------------------------
def posterior_forward(x_nchw, params, stp_key, *, cfg):
    enc_hid = cfg["enc_hid"]
    K, n_loc, nloc = cfg["K"], cfg["n_class_loc"], cfg["nloc"]
    img, imgd = cfg["img_size"], cfg["imgd"]
    hw = int(round(nloc ** 0.5))
    assert hw * hw == nloc
    assert img == 16, "4 stride-2 blocks must reduce the 16x16 image to 1x1"
    b = x_nchw.shape[0]

    # Layer-0 im2col of the raw image (one small XLA fusion feeding the kernel;
    # layers 1..3 do their im2col inside the kernel via selection matmuls).
    x_nhwc = jnp.transpose(x_nchw, (0, 2, 3, 1))
    patches0 = im2col_3x3_s2_p1(x_nhwc).reshape(b * (img // 2) ** 2, 9 * imgd)

    # Shape-only 0/1 operators (numpy -> constants at trace time).
    sel1 = _conv_selection_matrices(b, img // 2, img // 2)   # (9, B*16, B*64)
    sel2 = _conv_selection_matrices(b, img // 4, img // 4)   # (9, B*4,  B*16)
    sel3 = _conv_selection_matrices(b, img // 8, img // 8)   # (9, B,    B*4)
    rep = _broadcast_rows_matrix(b, hw)                      # (B*nloc, B)

    operands = (patches0, params["w0"], sel1, sel2, sel3, params["w123"],
                rep, params["wpost"], params["bnp"],
                params["wb_cls"], params["wb_loc"], params["wb_stp"])
    out_shape = (
        jax.ShapeDtypeStruct((b * nloc, K), jnp.float32),      # logits_sel
        jax.ShapeDtypeStruct((b * nloc, K), jnp.float32),      # sampled_sel
        jax.ShapeDtypeStruct((b * nloc, n_loc), jnp.float32),  # logits_loc
        jax.ShapeDtypeStruct((b * nloc, n_loc), jnp.float32),  # sampled_loc
        jax.ShapeDtypeStruct((b * nloc, 1), jnp.float32),      # prob_stp
    )

    outs = pl.pallas_call(
        _posterior_kernel,
        grid=(1,),
        in_specs=[_full_spec(o.shape) for o in operands],
        out_specs=tuple(_full_spec(s.shape) for s in out_shape),
        out_shape=out_shape,
        compiler_params=pltpu.CompilerParams(
            dimension_semantics=("arbitrary",)),
        cost_estimate=pl.CostEstimate(
            flops=4_000_000, transcendentals=256, bytes_accessed=320_000),
    )(*operands)
    logits_sel, sampled_sel, logits_loc, sampled_loc, prob_stp = outs

    latent = {
        "logits_sel": logits_sel.reshape(b, nloc, K),
        "sampled_sel": sampled_sel.reshape(b, nloc, K),
        "logits_loc": logits_loc.reshape(b, nloc, n_loc),
        "sampled_loc": sampled_loc.reshape(b, nloc, n_loc),
    }
    prob_stp = prob_stp.reshape(b, nloc, 1)
    latent["logits_stp"] = prob_stp   # post-sigmoid probs, as in the reference
    # torch.bernoulli(prob_stp).float()
    latent["sampled_stp"] = jax.random.bernoulli(stp_key, prob_stp).astype(jnp.float32)
    return latent


# ----------------------------------------------------------------------------
# Pure-JAX reference of the same math (for a numerical check only)
# ----------------------------------------------------------------------------
def reference_forward(x_nchw, params, cfg):
    enc_hid, nloc = cfg["enc_hid"], cfg["nloc"]
    hw = int(round(nloc ** 0.5))
    b = x_nchw.shape[0]

    def bn_relu(y, l):
        g, beta = params["bnp"][2 * l], params["bnp"][2 * l + 1]
        m = jnp.mean(y, axis=0, keepdims=True)
        v = jnp.mean(jnp.square(y - m), axis=0, keepdims=True)
        return jnp.maximum(g * (y - m) * jax.lax.rsqrt(v + BN_EPS) + beta, 0.0)

    with jax.default_matmul_precision("highest"):
        h = jnp.transpose(x_nchw, (0, 2, 3, 1))
        w2ds = [params["w0"]] + [params["w123"][i].reshape(9 * enc_hid, enc_hid)
                                 for i in range(3)]
        for l in range(4):
            pch = im2col_3x3_s2_p1(h)
            bb, ho, wo, kc = pch.shape
            y = bn_relu(pch.reshape(bb * ho * wo, kc) @ w2ds[l], l)
            h = y.reshape(bb, ho, wo, enc_hid)
        hb = jnp.broadcast_to(h, (b, hw, hw, enc_hid)).reshape(b * hw * hw, enc_hid)
        h2 = bn_relu(hb @ params["wpost"], 4)
        hd = lambda wb: h2 @ wb[:enc_hid] + wb[enc_hid:]
        return (hd(params["wb_cls"]).reshape(b, nloc, -1),
                hd(params["wb_loc"]).reshape(b, nloc, -1),
                jax.nn.sigmoid(hd(params["wb_stp"])).reshape(b, nloc, 1))


# ----------------------------------------------------------------------------
if __name__ == "__main__":
    cfg = dict(enc_hid=32, K=8, n_class_loc=10, nloc=4, img_size=16, imgd=3)

    root = jax.random.PRNGKey(0)
    k_x, k_p, k_stp = jax.random.split(root, 3)

    x = jax.random.normal(
        k_x, (2, cfg["imgd"], cfg["img_size"], cfg["img_size"]), jnp.float32)
    params = init_params(k_p, cfg)

    fwd = jax.jit(functools.partial(posterior_forward, cfg=cfg))
    latent = jax.block_until_ready(fwd(x, params, k_stp))

    # shape contract of the module
    assert latent["logits_sel"].shape == (2, cfg["nloc"], cfg["K"])
    assert latent["sampled_sel"].shape == (2, cfg["nloc"], cfg["K"])
    assert latent["logits_loc"].shape == (2, cfg["nloc"], cfg["n_class_loc"])
    assert latent["sampled_loc"].shape == (2, cfg["nloc"], cfg["n_class_loc"])
    assert latent["logits_stp"].shape == (2, cfg["nloc"], 1)
    assert latent["sampled_stp"].shape == (2, cfg["nloc"], 1)

    # numerical check against a pure-JAX reference of the same math
    ref_sel, ref_loc, ref_stp = reference_forward(x, params, cfg)
    np.testing.assert_allclose(latent["logits_sel"], ref_sel, rtol=2e-2, atol=2e-2)
    np.testing.assert_allclose(latent["logits_loc"], ref_loc, rtol=2e-2, atol=2e-2)
    np.testing.assert_allclose(latent["logits_stp"], ref_stp, rtol=2e-2, atol=2e-2)
    np.testing.assert_allclose(
        np.asarray(latent["sampled_sel"]).sum(-1), 1.0, rtol=1e-3, atol=1e-3)

    print("KERNEL_OK")
</pallas_src>

<mosaic_0001>
module attributes {stable_mosaic.version = 11 : i64} {
  func.func @_posterior_kernel(%arg0: i32, %arg1: memref<128x27xf32, #tpu.memory_space<vmem>>, %arg2: memref<27x32xf32, #tpu.memory_space<vmem>>, %arg3: memref<9x32x128xf32, #tpu.memory_space<vmem>>, %arg4: memref<9x8x32xf32, #tpu.memory_space<vmem>>, %arg5: memref<9x2x8xf32, #tpu.memory_space<vmem>>, %arg6: memref<3x9x32x32xf32, #tpu.memory_space<vmem>>, %arg7: memref<8x2xf32, #tpu.memory_space<vmem>>, %arg8: memref<32x32xf32, #tpu.memory_space<vmem>>, %arg9: memref<10x32xf32, #tpu.memory_space<vmem>>, %arg10: memref<33x8xf32, #tpu.memory_space<vmem>>, %arg11: memref<33x10xf32, #tpu.memory_space<vmem>>, %arg12: memref<33x1xf32, #tpu.memory_space<vmem>>, %arg13: memref<8x8xf32, #tpu.memory_space<vmem>>, %arg14: memref<8x8xf32, #tpu.memory_space<vmem>>, %arg15: memref<8x10xf32, #tpu.memory_space<vmem>>, %arg16: memref<8x10xf32, #tpu.memory_space<vmem>>, %arg17: memref<8x1xf32, #tpu.memory_space<vmem>>) attributes {dimension_semantics = [#tpu.dimension_semantics<arbitrary>], iteration_bounds = array<i64: 1>, scalar_prefetch = 0 : i64, scratch_operands = 0 : i64, tpu.core_type = #tpu.core_type<tc>, window_params = [{pipeline_mode = #tpu.pipeline_mode<synchronous>, transform_indices = @transform_0, window_bounds = array<i64: 128, 27>}, {pipeline_mode = #tpu.pipeline_mode<synchronous>, transform_indices = @transform_1, window_bounds = array<i64: 27, 32>}, {pipeline_mode = #tpu.pipeline_mode<synchronous>, transform_indices = @transform_2, window_bounds = array<i64: 9, 32, 128>}, {pipeline_mode = #tpu.pipeline_mode<synchronous>, transform_indices = @transform_3, window_bounds = array<i64: 9, 8, 32>}, {pipeline_mode = #tpu.pipeline_mode<synchronous>, transform_indices = @transform_4, window_bounds = array<i64: 9, 2, 8>}, {pipeline_mode = #tpu.pipeline_mode<synchronous>, transform_indices = @transform_5, window_bounds = array<i64: 3, 9, 32, 32>}, {pipeline_mode = #tpu.pipeline_mode<synchronous>, transform_indices = @transform_6, window_bounds = array<i64: 8, 2>}, {pipeline_mode = #tpu.pipeline_mode<synchronous>, transform_indices = @transform_7, window_bounds = array<i64: 32, 32>}, {pipeline_mode = #tpu.pipeline_mode<synchronous>, transform_indices = @transform_8, window_bounds = array<i64: 10, 32>}, {pipeline_mode = #tpu.pipeline_mode<synchronous>, transform_indices = @transform_9, window_bounds = array<i64: 33, 8>}, {pipeline_mode = #tpu.pipeline_mode<synchronous>, transform_indices = @transform_10, window_bounds = array<i64: 33, 10>}, {pipeline_mode = #tpu.pipeline_mode<synchronous>, transform_indices = @transform_11, window_bounds = array<i64: 33, 1>}, {pipeline_mode = #tpu.pipeline_mode<synchronous>, transform_indices = @transform_12, window_bounds = array<i64: 8, 8>}, {pipeline_mode = #tpu.pipeline_mode<synchronous>, transform_indices = @transform_13, window_bounds = array<i64: 8, 8>}, {pipeline_mode = #tpu.pipeline_mode<synchronous>, transform_indices = @transform_14, window_bounds = array<i64: 8, 10>}, {pipeline_mode = #tpu.pipeline_mode<synchronous>, transform_indices = @transform_15, window_bounds = array<i64: 8, 10>}, {pipeline_mode = #tpu.pipeline_mode<synchronous>, transform_indices = @transform_16, window_bounds = array<i64: 8, 1>}]} {
    %c0 = arith.constant 0 : index
    %c0_0 = arith.constant 0 : index
    %0 = vector.load %arg1[%c0, %c0_0] : memref<128x27xf32, #tpu.memory_space<vmem>>, vector<128x27xf32>
    %c0_1 = arith.constant 0 : index
    %c0_2 = arith.constant 0 : index
    %1 = vector.load %arg2[%c0_1, %c0_2] : memref<27x32xf32, #tpu.memory_space<vmem>>, vector<27x32xf32>
    %cst = arith.constant dense<0.000000e+00> : vector<128x32xf32>
    %2 = tpu.matmul %0, %1, %cst {dimension_numbers = #tpu.dot_dimension_numbers<[1], [0], [0], [1], [0, 0, 1, 1], [], []>} : vector<128x27xf32>, vector<27x32xf32>, vector<128x32xf32> -> vector<128x32xf32>
    %c0_3 = arith.constant 0 : index
    %c0_4 = arith.constant 0 : index
    %3 = vector.load %arg9[%c0_3, %c0_4] : memref<10x32xf32, #tpu.memory_space<vmem>>, vector<1x32xf32>
    %c1 = arith.constant 1 : index
    %c0_5 = arith.constant 0 : index
    %4 = vector.load %arg9[%c1, %c0_5] : memref<10x32xf32, #tpu.memory_space<vmem>>, vector<1x32xf32>
    %cst_6 = arith.constant dense<0.000000e+00> : vector<32xf32>
    %5 = vector.multi_reduction <add>, %2, %cst_6 [0] : vector<128x32xf32> to vector<32xf32>
    %6 = vector.shape_cast %5 : vector<32xf32> to vector<1x32xf32>
    %cst_7 = arith.constant 1.280000e+02 : f32
    %7 = vector.broadcast %cst_7 : f32 to vector<1x32xf32>
    %8 = arith.divf %6, %7 : vector<1x32xf32>
    %9 = vector.broadcast %8 : vector<1x32xf32> to vector<128x32xf32>
    %10 = arith.subf %2, %9 : vector<128x32xf32>
    %11 = arith.mulf %10, %10 : vector<128x32xf32>
    %cst_8 = arith.constant dense<0.000000e+00> : vector<32xf32>
    %12 = vector.multi_reduction <add>, %11, %cst_8 [0] : vector<128x32xf32> to vector<32xf32>
    %13 = vector.shape_cast %12 : vector<32xf32> to vector<1x32xf32>
    %cst_9 = arith.constant 1.280000e+02 : f32
    %14 = vector.broadcast %cst_9 : f32 to vector<1x32xf32>
    %15 = arith.divf %13, %14 : vector<1x32xf32>
    %16 = vector.broadcast %8 : vector<1x32xf32> to vector<128x32xf32>
    %17 = arith.subf %2, %16 : vector<128x32xf32>
    %18 = vector.broadcast %3 : vector<1x32xf32> to vector<128x32xf32>
    %19 = arith.mulf %18, %17 : vector<128x32xf32>
    %cst_10 = arith.constant 9.99999974E-6 : f32
    %20 = vector.broadcast %cst_10 : f32 to vector<1x32xf32>
    %21 = arith.addf %15, %20 : vector<1x32xf32>
    %22 = math.rsqrt %21 : vector<1x32xf32>
    %23 = vector.broadcast %22 : vector<1x32xf32> to vector<128x32xf32>
    %24 = arith.mulf %19, %23 : vector<128x32xf32>
    %25 = vector.broadcast %4 : vector<1x32xf32> to vector<128x32xf32>
    %26 = arith.addf %24, %25 : vector<128x32xf32>
    %cst_11 = arith.constant 0.000000e+00 : f32
    %27 = vector.broadcast %cst_11 : f32 to vector<128x32xf32>
    %28 = arith.maximumf %26, %27 : vector<128x32xf32>
    %cst_12 = arith.constant 0.000000e+00 : f32
    %29 = vector.broadcast %cst_12 : f32 to vector<32x32xf32>
    %c0_13 = arith.constant 0 : index
    %c0_14 = arith.constant 0 : index
    %c0_15 = arith.constant 0 : index
    %30 = vector.load %arg3[%c0_13, %c0_14, %c0_15] : memref<9x32x128xf32, #tpu.memory_space<vmem>>, vector<1x32x128xf32>
    %31 = vector.shape_cast %30 : vector<1x32x128xf32> to vector<32x128xf32>
    %cst_16 = arith.constant dense<0.000000e+00> : vector<32x32xf32>
    %32 = tpu.matmul %31, %28, %cst_16 {dimension_numbers = #tpu.dot_dimension_numbers<[1], [0], [0], [1], [0, 0, 1, 1], [], []>} : vector<32x128xf32>, vector<128x32xf32>, vector<32x32xf32> -> vector<32x32xf32>
    %c0_17 = arith.constant 0 : index
    %c0_18 = arith.constant 0 : index
    %c0_19 = arith.constant 0 : index
    %c0_20 = arith.constant 0 : index
    %33 = vector.load %arg6[%c0_17, %c0_18, %c0_19, %c0_20] : memref<3x9x32x32xf32, #tpu.memory_space<vmem>>, vector<1x1x32x32xf32>
    %34 = vector.shape_cast %33 : vector<1x1x32x32xf32> to vector<32x32xf32>
    %cst_21 = arith.constant dense<0.000000e+00> : vector<32x32xf32>
    %35 = tpu.matmul %32, %34, %cst_21 {dimension_numbers = #tpu.dot_dimension_numbers<[1], [0], [0], [1], [0, 0, 1, 1], [], []>} : vector<32x32xf32>, vector<32x32xf32>, vector<32x32xf32> -> vector<32x32xf32>
    %36 = arith.addf %29, %35 : vector<32x32xf32>
    %c1_22 = arith.constant 1 : index
    %c0_23 = arith.constant 0 : index
    %c0_24 = arith.constant 0 : index
    %37 = vector.load %arg3[%c1_22, %c0_23, %c0_24] : memref<9x32x128xf32, #tpu.memory_space<vmem>>, vector<1x32x128xf32>
    %38 = vector.shape_cast %37 : vector<1x32x128xf32> to vector<32x128xf32>
    %cst_25 = arith.constant dense<0.000000e+00> : vector<32x32xf32>
    %39 = tpu.matmul %38, %28, %cst_25 {dimension_numbers = #tpu.dot_dimension_numbers<[1], [0], [0], [1], [0, 0, 1, 1], [], []>} : vector<32x128xf32>, vector<128x32xf32>, vector<32x32xf32> -> vector<32x32xf32>
    %c0_26 = arith.constant 0 : index
    %c1_27 = arith.constant 1 : index
    %c0_28 = arith.constant 0 : index
    %c0_29 = arith.constant 0 : index
    %40 = vector.load %arg6[%c0_26, %c1_27, %c0_28, %c0_29] : memref<3x9x32x32xf32, #tpu.memory_space<vmem>>, vector<1x1x32x32xf32>
    %41 = vector.shape_cast %40 : vector<1x1x32x32xf32> to vector<32x32xf32>
    %cst_30 = arith.constant dense<0.000000e+00> : vector<32x32xf32>
    %42 = tpu.matmul %39, %41, %cst_30 {dimension_numbers = #tpu.dot_dimension_numbers<[1], [0], [0], [1], [0, 0, 1, 1], [], []>} : vector<32x32xf32>, vector<32x32xf32>, vector<32x32xf32> -> vector<32x32xf32>
    %43 = arith.addf %36, %42 : vector<32x32xf32>
    %c2 = arith.constant 2 : index
    %c0_31 = arith.constant 0 : index
    %c0_32 = arith.constant 0 : index
    %44 = vector.load %arg3[%c2, %c0_31, %c0_32] : memref<9x32x128xf32, #tpu.memory_space<vmem>>, vector<1x32x128xf32>
    %45 = vector.shape_cast %44 : vector<1x32x128xf32> to vector<32x128xf32>
    %cst_33 = arith.constant dense<0.000000e+00> : vector<32x32xf32>
    %46 = tpu.matmul %45, %28, %cst_33 {dimension_numbers = #tpu.dot_dimension_numbers<[1], [0], [0], [1], [0, 0, 1, 1], [], []>} : vector<32x128xf32>, vector<128x32xf32>, vector<32x32xf32> -> vector<32x32xf32>
    %c0_34 = arith.constant 0 : index
    %c2_35 = arith.constant 2 : index
    %c0_36 = arith.constant 0 : index
    %c0_37 = arith.constant 0 : index
    %47 = vector.load %arg6[%c0_34, %c2_35, %c0_36, %c0_37] : memref<3x9x32x32xf32, #tpu.memory_space<vmem>>, vector<1x1x32x32xf32>
    %48 = vector.shape_cast %47 : vector<1x1x32x32xf32> to vector<32x32xf32>
    %cst_38 = arith.constant dense<0.000000e+00> : vector<32x32xf32>
    %49 = tpu.matmul %46, %48, %cst_38 {dimension_numbers = #tpu.dot_dimension_numbers<[1], [0], [0], [1], [0, 0, 1, 1], [], []>} : vector<32x32xf32>, vector<32x32xf32>, vector<32x32xf32> -> vector<32x32xf32>
    %50 = arith.addf %43, %49 : vector<32x32xf32>
    %c3 = arith.constant 3 : index
    %c0_39 = arith.constant 0 : index
    %c0_40 = arith.constant 0 : index
    %51 = vector.load %arg3[%c3, %c0_39, %c0_40] : memref<9x32x128xf32, #tpu.memory_space<vmem>>, vector<1x32x128xf32>
    %52 = vector.shape_cast %51 : vector<1x32x128xf32> to vector<32x128xf32>
    %cst_41 = arith.constant dense<0.000000e+00> : vector<32x32xf32>
    %53 = tpu.matmul %52, %28, %cst_41 {dimension_numbers = #tpu.dot_dimension_numbers<[1], [0], [0], [1], [0, 0, 1, 1], [], []>} : vector<32x128xf32>, vector<128x32xf32>, vector<32x32xf32> -> vector<32x32xf32>
    %c0_42 = arith.constant 0 : index
    %c3_43 = arith.constant 3 : index
    %c0_44 = arith.constant 0 : index
    %c0_45 = arith.constant 0 : index
    %54 = vector.load %arg6[%c0_42, %c3_43, %c0_44, %c0_45] : memref<3x9x32x32xf32, #tpu.memory_space<vmem>>, vector<1x1x32x32xf32>
    %55 = vector.shape_cast %54 : vector<1x1x32x32xf32> to vector<32x32xf32>
    %cst_46 = arith.constant dense<0.000000e+00> : vector<32x32xf32>
    %56 = tpu.matmul %53, %55, %cst_46 {dimension_numbers = #tpu.dot_dimension_numbers<[1], [0], [0], [1], [0, 0, 1, 1], [], []>} : vector<32x32xf32>, vector<32x32xf32>, vector<32x32xf32> -> vector<32x32xf32>
    %57 = arith.addf %50, %56 : vector<32x32xf32>
    %c4 = arith.constant 4 : index
    %c0_47 = arith.constant 0 : index
    %c0_48 = arith.constant 0 : index
    %58 = vector.load %arg3[%c4, %c0_47, %c0_48] : memref<9x32x128xf32, #tpu.memory_space<vmem>>, vector<1x32x128xf32>
    %59 = vector.shape_cast %58 : vector<1x32x128xf32> to vector<32x128xf32>
    %cst_49 = arith.constant dense<0.000000e+00> : vector<32x32xf32>
    %60 = tpu.matmul %59, %28, %cst_49 {dimension_numbers = #tpu.dot_dimension_numbers<[1], [0], [0], [1], [0, 0, 1, 1], [], []>} : vector<32x128xf32>, vector<128x32xf32>, vector<32x32xf32> -> vector<32x32xf32>
    %c0_50 = arith.constant 0 : index
    %c4_51 = arith.constant 4 : index
    %c0_52 = arith.constant 0 : index
    %c0_53 = arith.constant 0 : index
    %61 = vector.load %arg6[%c0_50, %c4_51, %c0_52, %c0_53] : memref<3x9x32x32xf32, #tpu.memory_space<vmem>>, vector<1x1x32x32xf32>
    %62 = vector.shape_cast %61 : vector<1x1x32x32xf32> to vector<32x32xf32>
    %cst_54 = arith.constant dense<0.000000e+00> : vector<32x32xf32>
    %63 = tpu.matmul %60, %62, %cst_54 {dimension_numbers = #tpu.dot_dimension_numbers<[1], [0], [0], [1], [0, 0, 1, 1], [], []>} : vector<32x32xf32>, vector<32x32xf32>, vector<32x32xf32> -> vector<32x32xf32>
    %64 = arith.addf %57, %63 : vector<32x32xf32>
    %c5 = arith.constant 5 : index
    %c0_55 = arith.constant 0 : index
    %c0_56 = arith.constant 0 : index
    %65 = vector.load %arg3[%c5, %c0_55, %c0_56] : memref<9x32x128xf32, #tpu.memory_space<vmem>>, vector<1x32x128xf32>
    %66 = vector.shape_cast %65 : vector<1x32x128xf32> to vector<32x128xf32>
    %cst_57 = arith.constant dense<0.000000e+00> : vector<32x32xf32>
    %67 = tpu.matmul %66, %28, %cst_57 {dimension_numbers = #tpu.dot_dimension_numbers<[1], [0], [0], [1], [0, 0, 1, 1], [], []>} : vector<32x128xf32>, vector<128x32xf32>, vector<32x32xf32> -> vector<32x32xf32>
    %c0_58 = arith.constant 0 : index
    %c5_59 = arith.constant 5 : index
    %c0_60 = arith.constant 0 : index
    %c0_61 = arith.constant 0 : index
    %68 = vector.load %arg6[%c0_58, %c5_59, %c0_60, %c0_61] : memref<3x9x32x32xf32, #tpu.memory_space<vmem>>, vector<1x1x32x32xf32>
    %69 = vector.shape_cast %68 : vector<1x1x32x32xf32> to vector<32x32xf32>
    %cst_62 = arith.constant dense<0.000000e+00> : vector<32x32xf32>
    %70 = tpu.matmul %67, %69, %cst_62 {dimension_numbers = #tpu.dot_dimension_numbers<[1], [0], [0], [1], [0, 0, 1, 1], [], []>} : vector<32x32xf32>, vector<32x32xf32>, vector<32x32xf32> -> vector<32x32xf32>
    %71 = arith.addf %64, %70 : vector<32x32xf32>
    %c6 = arith.constant 6 : index
    %c0_63 = arith.constant 0 : index
    %c0_64 = arith.constant 0 : index
    %72 = vector.load %arg3[%c6, %c0_63, %c0_64] : memref<9x32x128xf32, #tpu.memory_space<vmem>>, vector<1x32x128xf32>
    %73 = vector.shape_cast %72 : vector<1x32x128xf32> to vector<32x128xf32>
    %cst_65 = arith.constant dense<0.000000e+00> : vector<32x32xf32>
    %74 = tpu.matmul %73, %28, %cst_65 {dimension_numbers = #tpu.dot_dimension_numbers<[1], [0], [0], [1], [0, 0, 1, 1], [], []>} : vector<32x128xf32>, vector<128x32xf32>, vector<32x32xf32> -> vector<32x32xf32>
    %c0_66 = arith.constant 0 : index
    %c6_67 = arith.constant 6 : index
    %c0_68 = arith.constant 0 : index
    %c0_69 = arith.constant 0 : index
    %75 = vector.load %arg6[%c0_66, %c6_67, %c0_68, %c0_69] : memref<3x9x32x32xf32, #tpu.memory_space<vmem>>, vector<1x1x32x32xf32>
    %76 = vector.shape_cast %75 : vector<1x1x32x32xf32> to vector<32x32xf32>
    %cst_70 = arith.constant dense<0.000000e+00> : vector<32x32xf32>
    %77 = tpu.matmul %74, %76, %cst_70 {dimension_numbers = #tpu.dot_dimension_numbers<[1], [0], [0], [1], [0, 0, 1, 1], [], []>} : vector<32x32xf32>, vector<32x32xf32>, vector<32x32xf32> -> vector<32x32xf32>
    %78 = arith.addf %71, %77 : vector<32x32xf32>
    %c7 = arith.constant 7 : index
    %c0_71 = arith.constant 0 : index
    %c0_72 = arith.constant 0 : index
    %79 = vector.load %arg3[%c7, %c0_71, %c0_72] : memref<9x32x128xf32, #tpu.memory_space<vmem>>, vector<1x32x128xf32>
    %80 = vector.shape_cast %79 : vector<1x32x128xf32> to vector<32x128xf32>
    %cst_73 = arith.constant dense<0.000000e+00> : vector<32x32xf32>
    %81 = tpu.matmul %80, %28, %cst_73 {dimension_numbers = #tpu.dot_dimension_numbers<[1], [0], [0], [1], [0, 0, 1, 1], [], []>} : vector<32x128xf32>, vector<128x32xf32>, vector<32x32xf32> -> vector<32x32xf32>
    %c0_74 = arith.constant 0 : index
    %c7_75 = arith.constant 7 : index
    %c0_76 = arith.constant 0 : index
    %c0_77 = arith.constant 0 : index
    %82 = vector.load %arg6[%c0_74, %c7_75, %c0_76, %c0_77] : memref<3x9x32x32xf32, #tpu.memory_space<vmem>>, vector<1x1x32x32xf32>
    %83 = vector.shape_cast %82 : vector<1x1x32x32xf32> to vector<32x32xf32>
    %cst_78 = arith.constant dense<0.000000e+00> : vector<32x32xf32>
    %84 = tpu.matmul %81, %83, %cst_78 {dimension_numbers = #tpu.dot_dimension_numbers<[1], [0], [0], [1], [0, 0, 1, 1], [], []>} : vector<32x32xf32>, vector<32x32xf32>, vector<32x32xf32> -> vector<32x32xf32>
    %85 = arith.addf %78, %84 : vector<32x32xf32>
    %c8 = arith.constant 8 : index
    %c0_79 = arith.constant 0 : index
    %c0_80 = arith.constant 0 : index
    %86 = vector.load %arg3[%c8, %c0_79, %c0_80] : memref<9x32x128xf32, #tpu.memory_space<vmem>>, vector<1x32x128xf32>
    %87 = vector.shape_cast %86 : vector<1x32x128xf32> to vector<32x128xf32>
    %cst_81 = arith.constant dense<0.000000e+00> : vector<32x32xf32>
    %88 = tpu.matmul %87, %28, %cst_81 {dimension_numbers = #tpu.dot_dimension_numbers<[1], [0], [0], [1], [0, 0, 1, 1], [], []>} : vector<32x128xf32>, vector<128x32xf32>, vector<32x32xf32> -> vector<32x32xf32>
    %c0_82 = arith.constant 0 : index
    %c8_83 = arith.constant 8 : index
    %c0_84 = arith.constant 0 : index
    %c0_85 = arith.constant 0 : index
    %89 = vector.load %arg6[%c0_82, %c8_83, %c0_84, %c0_85] : memref<3x9x32x32xf32, #tpu.memory_space<vmem>>, vector<1x1x32x32xf32>
    %90 = vector.shape_cast %89 : vector<1x1x32x32xf32> to vector<32x32xf32>
    %cst_86 = arith.constant dense<0.000000e+00> : vector<32x32xf32>
    %91 = tpu.matmul %88, %90, %cst_86 {dimension_numbers = #tpu.dot_dimension_numbers<[1], [0], [0], [1], [0, 0, 1, 1], [], []>} : vector<32x32xf32>, vector<32x32xf32>, vector<32x32xf32> -> vector<32x32xf32>
    %92 = arith.addf %85, %91 : vector<32x32xf32>
    %c2_87 = arith.constant 2 : index
    %c0_88 = arith.constant 0 : index
    %93 = vector.load %arg9[%c2_87, %c0_88] : memref<10x32xf32, #tpu.memory_space<vmem>>, vector<1x32xf32>
    %c3_89 = arith.constant 3 : index
    %c0_90 = arith.constant 0 : index
    %94 = vector.load %arg9[%c3_89, %c0_90] : memref<10x32xf32, #tpu.memory_space<vmem>>, vector<1x32xf32>
    %cst_91 = arith.constant dense<0.000000e+00> : vector<32xf32>
    %95 = vector.multi_reduction <add>, %92, %cst_91 [0] : vector<32x32xf32> to vector<32xf32>
    %96 = vector.shape_cast %95 : vector<32xf32> to vector<1x32xf32>
    %cst_92 = arith.constant 3.200000e+01 : f32
    %97 = vector.broadcast %cst_92 : f32 to vector<1x32xf32>
    %98 = arith.divf %96, %97 : vector<1x32xf32>
    %99 = vector.broadcast %98 : vector<1x32xf32> to vector<32x32xf32>
    %100 = arith.subf %92, %99 : vector<32x32xf32>
    %101 = arith.mulf %100, %100 : vector<32x32xf32>
    %cst_93 = arith.constant dense<0.000000e+00> : vector<32xf32>
    %102 = vector.multi_reduction <add>, %101, %cst_93 [0] : vector<32x32xf32> to vector<32xf32>
    %103 = vector.shape_cast %102 : vector<32xf32> to vector<1x32xf32>
    %cst_94 = arith.constant 3.200000e+01 : f32
    %104 = vector.broadcast %cst_94 : f32 to vector<1x32xf32>
    %105 = arith.divf %103, %104 : vector<1x32xf32>
    %106 = vector.broadcast %98 : vector<1x32xf32> to vector<32x32xf32>
    %107 = arith.subf %92, %106 : vector<32x32xf32>
    %108 = vector.broadcast %93 : vector<1x32xf32> to vector<32x32xf32>
    %109 = arith.mulf %108, %107 : vector<32x32xf32>
    %cst_95 = arith.constant 9.99999974E-6 : f32
    %110 = vector.broadcast %cst_95 : f32 to vector<1x32xf32>
    %111 = arith.addf %105, %110 : vector<1x32xf32>
    %112 = math.rsqrt %111 : vector<1x32xf32>
    %113 = vector.broadcast %112 : vector<1x32xf32> to vector<32x32xf32>
    %114 = arith.mulf %109, %113 : vector<32x32xf32>
    %115 = vector.broadcast %94 : vector<1x32xf32> to vector<32x32xf32>
    %116 = arith.addf %114, %115 : vector<32x32xf32>
    %cst_96 = arith.constant 0.000000e+00 : f32
    %117 = vector.broadcast %cst_96 : f32 to vector<32x32xf32>
    %118 = arith.maximumf %116, %117 : vector<32x32xf32>
    %cst_97 = arith.constant 0.000000e+00 : f32
    %119 = vector.broadcast %cst_97 : f32 to vector<8x32xf32>
    %c0_98 = arith.constant 0 : index
    %c0_99 = arith.constant 0 : index
    %c0_100 = arith.constant 0 : index
    %120 = vector.load %arg4[%c0_98, %c0_99, %c0_100] : memref<9x8x32xf32, #tpu.memory_space<vmem>>, vector<1x8x32xf32>
    %121 = vector.shape_cast %120 : vector<1x8x32xf32> to vector<8x32xf32>
    %cst_101 = arith.constant dense<0.000000e+00> : vector<8x32xf32>
    %122 = tpu.matmul %121, %118, %cst_101 {dimension_numbers = #tpu.dot_dimension_numbers<[1], [0], [0], [1], [0, 0, 1, 1], [], []>} : vector<8x32xf32>, vector<32x32xf32>, vector<8x32xf32> -> vector<8x32xf32>
    %c1_102 = arith.constant 1 : index
    %c0_103 = arith.constant 0 : index
    %c0_104 = arith.constant 0 : index
    %c0_105 = arith.constant 0 : index
    %123 = vector.load %arg6[%c1_102, %c0_103, %c0_104, %c0_105] : memref<3x9x32x32xf32, #tpu.memory_space<vmem>>, vector<1x1x32x32xf32>
    %124 = vector.shape_cast %123 : vector<1x1x32x32xf32> to vector<32x32xf32>
    %cst_106 = arith.constant dense<0.000000e+00> : vector<8x32xf32>
    %125 = tpu.matmul %122, %124, %cst_106 {dimension_numbers = #tpu.dot_dimension_numbers<[1], [0], [0], [1], [0, 0, 1, 1], [], []>} : vector<8x32xf32>, vector<32x32xf32>, vector<8x32xf32> -> vector<8x32xf32>
    %126 = arith.addf %119, %125 : vector<8x32xf32>
    %c1_107 = arith.constant 1 : index
    %c0_108 = arith.constant 0 : index
    %c0_109 = arith.constant 0 : index
    %127 = vector.load %arg4[%c1_107, %c0_108, %c0_109] : memref<9x8x32xf32, #tpu.memory_space<vmem>>, vector<1x8x32xf32>
    %128 = vector.shape_cast %127 : vector<1x8x32xf32> to vector<8x32xf32>
    %cst_110 = arith.constant dense<0.000000e+00> : vector<8x32xf32>
    %129 = tpu.matmul %128, %118, %cst_110 {dimension_numbers = #tpu.dot_dimension_numbers<[1], [0], [0], [1], [0, 0, 1, 1], [], []>} : vector<8x32xf32>, vector<32x32xf32>, vector<8x32xf32> -> vector<8x32xf32>
    %c1_111 = arith.constant 1 : index
    %c1_112 = arith.constant 1 : index
    %c0_113 = arith.constant 0 : index
    %c0_114 = arith.constant 0 : index
    %130 = vector.load %arg6[%c1_111, %c1_112, %c0_113, %c0_114] : memref<3x9x32x32xf32, #tpu.memory_space<vmem>>, vector<1x1x32x32xf32>
    %131 = vector.shape_cast %130 : vector<1x1x32x32xf32> to vector<32x32xf32>
    %cst_115 = arith.constant dense<0.000000e+00> : vector<8x32xf32>
    %132 = tpu.matmul %129, %131, %cst_115 {dimension_numbers = #tpu.dot_dimension_numbers<[1], [0], [0], [1], [0, 0, 1, 1], [], []>} : vector<8x32xf32>, vector<32x32xf32>, vector<8x32xf32> -> vector<8x32xf32>
    %133 = arith.addf %126, %132 : vector<8x32xf32>
    %c2_116 = arith.constant 2 : index
    %c0_117 = arith.constant 0 : index
    %c0_118 = arith.constant 0 : index
    %134 = vector.load %arg4[%c2_116, %c0_117, %c0_118] : memref<9x8x32xf32, #tpu.memory_space<vmem>>, vector<1x8x32xf32>
    %135 = vector.shape_cast %134 : vector<1x8x32xf32> to vector<8x32xf32>
    %cst_119 = arith.constant dense<0.000000e+00> : vector<8x32xf32>
    %136 = tpu.matmul %135, %118, %cst_119 {dimension_numbers = #tpu.dot_dimension_numbers<[1], [0], [0], [1], [0, 0, 1, 1], [], []>} : vector<8x32xf32>, vector<32x32xf32>, vector<8x32xf32> -> vector<8x32xf32>
    %c1_120 = arith.constant 1 : index
    %c2_121 = arith.constant 2 : index
    %c0_122 = arith.constant 0 : index
    %c0_123 = arith.constant 0 : index
    %137 = vector.load %arg6[%c1_120, %c2_121, %c0_122, %c0_123] : memref<3x9x32x32xf32, #tpu.memory_space<vmem>>, vector<1x1x32x32xf32>
    %138 = vector.shape_cast %137 : vector<1x1x32x32xf32> to vector<32x32xf32>
    %cst_124 = arith.constant dense<0.000000e+00> : vector<8x32xf32>
    %139 = tpu.matmul %136, %138, %cst_124 {dimension_numbers = #tpu.dot_dimension_numbers<[1], [0], [0], [1], [0, 0, 1, 1], [], []>} : vector<8x32xf32>, vector<32x32xf32>, vector<8x32xf32> -> vector<8x32xf32>
    %140 = arith.addf %133, %139 : vector<8x32xf32>
    %c3_125 = arith.constant 3 : index
    %c0_126 = arith.constant 0 : index
    %c0_127 = arith.constant 0 : index
    %141 = vector.load %arg4[%c3_125, %c0_126, %c0_127] : memref<9x8x32xf32, #tpu.memory_space<vmem>>, vector<1x8x32xf32>
    %142 = vector.shape_cast %141 : vector<1x8x32xf32> to vector<8x32xf32>
    %cst_128 = arith.constant dense<0.000000e+00> : vector<8x32xf32>
    %143 = tpu.matmul %142, %118, %cst_128 {dimension_numbers = #tpu.dot_dimension_numbers<[1], [0], [0], [1], [0, 0, 1, 1], [], []>} : vector<8x32xf32>, vector<32x32xf32>, vector<8x32xf32> -> vector<8x32xf32>
    %c1_129 = arith.constant 1 : index
    %c3_130 = arith.constant 3 : index
    %c0_131 = arith.constant 0 : index
    %c0_132 = arith.constant 0 : index
    %144 = vector.load %arg6[%c1_129, %c3_130, %c0_131, %c0_132] : memref<3x9x32x32xf32, #tpu.memory_space<vmem>>, vector<1x1x32x32xf32>
    %145 = vector.shape_cast %144 : vector<1x1x32x32xf32> to vector<32x32xf32>
    %cst_133 = arith.constant dense<0.000000e+00> : vector<8x32xf32>
    %146 = tpu.matmul %143, %145, %cst_133 {dimension_numbers = #tpu.dot_dimension_numbers<[1], [0], [0], [1], [0, 0, 1, 1], [], []>} : vector<8x32xf32>, vector<32x32xf32>, vector<8x32xf32> -> vector<8x32xf32>
    %147 = arith.addf %140, %146 : vector<8x32xf32>
    %c4_134 = arith.constant 4 : index
    %c0_135 = arith.constant 0 : index
    %c0_136 = arith.constant 0 : index
    %148 = vector.load %arg4[%c4_134, %c0_135, %c0_136] : memref<9x8x32xf32, #tpu.memory_space<vmem>>, vector<1x8x32xf32>
    %149 = vector.shape_cast %148 : vector<1x8x32xf32> to vector<8x32xf32>
    %cst_137 = arith.constant dense<0.000000e+00> : vector<8x32xf32>
    %150 = tpu.matmul %149, %118, %cst_137 {dimension_numbers = #tpu.dot_dimension_numbers<[1], [0], [0], [1], [0, 0, 1, 1], [], []>} : vector<8x32xf32>, vector<32x32xf32>, vector<8x32xf32> -> vector<8x32xf32>
    %c1_138 = arith.constant 1 : index
    %c4_139 = arith.constant 4 : index
    %c0_140 = arith.constant 0 : index
    %c0_141 = arith.constant 0 : index
    %151 = vector.load %arg6[%c1_138, %c4_139, %c0_140, %c0_141] : memref<3x9x32x32xf32, #tpu.memory_space<vmem>>, vector<1x1x32x32xf32>
    %152 = vector.shape_cast %151 : vector<1x1x32x32xf32> to vector<32x32xf32>
    %cst_142 = arith.constant dense<0.000000e+00> : vector<8x32xf32>
    %153 = tpu.matmul %150, %152, %cst_142 {dimension_numbers = #tpu.dot_dimension_numbers<[1], [0], [0], [1], [0, 0, 1, 1], [], []>} : vector<8x32xf32>, vector<32x32xf32>, vector<8x32xf32> -> vector<8x32xf32>
    %154 = arith.addf %147, %153 : vector<8x32xf32>
    %c5_143 = arith.constant 5 : index
    %c0_144 = arith.constant 0 : index
    %c0_145 = arith.constant 0 : index
    %155 = vector.load %arg4[%c5_143, %c0_144, %c0_145] : memref<9x8x32xf32, #tpu.memory_space<vmem>>, vector<1x8x32xf32>
    %156 = vector.shape_cast %155 : vector<1x8x32xf32> to vector<8x32xf32>
    %cst_146 = arith.constant dense<0.000000e+00> : vector<8x32xf32>
    %157 = tpu.matmul %156, %118, %cst_146 {dimension_numbers = #tpu.dot_dimension_numbers<[1], [0], [0], [1], [0, 0, 1, 1], [], []>} : vector<8x32xf32>, vector<32x32xf32>, vector<8x32xf32> -> vector<8x32xf32>
    %c1_147 = arith.constant 1 : index
    %c5_148 = arith.constant 5 : index
    %c0_149 = arith.constant 0 : index
    %c0_150 = arith.constant 0 : index
    %158 = vector.load %arg6[%c1_147, %c5_148, %c0_149, %c0_150] : memref<3x9x32x32xf32, #tpu.memory_space<vmem>>, vector<1x1x32x32xf32>
    %159 = vector.shape_cast %158 : vector<1x1x32x32xf32> to vector<32x32xf32>
    %cst_151 = arith.constant dense<0.000000e+00> : vector<8x32xf32>
    %160 = tpu.matmul %157, %159, %cst_151 {dimension_numbers = #tpu.dot_dimension_numbers<[1], [0], [0], [1], [0, 0, 1, 1], [], []>} : vector<8x32xf32>, vector<32x32xf32>, vector<8x32xf32> -> vector<8x32xf32>
    %161 = arith.addf %154, %160 : vector<8x32xf32>
    %c6_152 = arith.constant 6 : index
    %c0_153 = arith.constant 0 : index
    %c0_154 = arith.constant 0 : index
    %162 = vector.load %arg4[%c6_152, %c0_153, %c0_154] : memref<9x8x32xf32, #tpu.memory_space<vmem>>, vector<1x8x32xf32>
    %163 = vector.shape_cast %162 : vector<1x8x32xf32> to vector<8x32xf32>
    %cst_155 = arith.constant dense<0.000000e+00> : vector<8x32xf32>
    %164 = tpu.matmul %163, %118, %cst_155 {dimension_numbers = #tpu.dot_dimension_numbers<[1], [0], [0], [1], [0, 0, 1, 1], [], []>} : vector<8x32xf32>, vector<32x32xf32>, vector<8x32xf32> -> vector<8x32xf32>
    %c1_156 = arith.constant 1 : index
    %c6_157 = arith.constant 6 : index
    %c0_158 = arith.constant 0 : index
    %c0_159 = arith.constant 0 : index
    %165 = vector.load %arg6[%c1_156, %c6_157, %c0_158, %c0_159] : memref<3x9x32x32xf32, #tpu.memory_space<vmem>>, vector<1x1x32x32xf32>
    %166 = vector.shape_cast %165 : vector<1x1x32x32xf32> to vector<32x32xf32>
    %cst_160 = arith.constant dense<0.000000e+00> : vector<8x32xf32>
    %167 = tpu.matmul %164, %166, %cst_160 {dimension_numbers = #tpu.dot_dimension_numbers<[1], [0], [0], [1], [0, 0, 1, 1], [], []>} : vector<8x32xf32>, vector<32x32xf32>, vector<8x32xf32> -> vector<8x32xf32>
    %168 = arith.addf %161, %167 : vector<8x32xf32>
    %c7_161 = arith.constant 7 : index
    %c0_162 = arith.constant 0 : index
    %c0_163 = arith.constant 0 : index
    %169 = vector.load %arg4[%c7_161, %c0_162, %c0_163] : memref<9x8x32xf32, #tpu.memory_space<vmem>>, vector<1x8x32xf32>
    %170 = vector.shape_cast %169 : vector<1x8x32xf32> to vector<8x32xf32>
    %cst_164 = arith.constant dense<0.000000e+00> : vector<8x32xf32>
    %171 = tpu.matmul %170, %118, %cst_164 {dimension_numbers = #tpu.dot_dimension_numbers<[1], [0], [0], [1], [0, 0, 1, 1], [], []>} : vector<8x32xf32>, vector<32x32xf32>, vector<8x32xf32> -> vector<8x32xf32>
    %c1_165 = arith.constant 1 : index
    %c7_166 = arith.constant 7 : index
    %c0_167 = arith.constant 0 : index
    %c0_168 = arith.constant 0 : index
    %172 = vector.load %arg6[%c1_165, %c7_166, %c0_167, %c0_168] : memref<3x9x32x32xf32, #tpu.memory_space<vmem>>, vector<1x1x32x32xf32>
    %173 = vector.shape_cast %172 : vector<1x1x32x32xf32> to vector<32x32xf32>
    %cst_169 = arith.constant dense<0.000000e+00> : vector<8x32xf32>
    %174 = tpu.matmul %171, %173, %cst_169 {dimension_numbers = #tpu.dot_dimension_numbers<[1], [0], [0], [1], [0, 0, 1, 1], [], []>} : vector<8x32xf32>, vector<32x32xf32>, vector<8x32xf32> -> vector<8x32xf32>
    %175 = arith.addf %168, %174 : vector<8x32xf32>
    %c8_170 = arith.constant 8 : index
    %c0_171 = arith.constant 0 : index
    %c0_172 = arith.constant 0 : index
    %176 = vector.load %arg4[%c8_170, %c0_171, %c0_172] : memref<9x8x32xf32, #tpu.memory_space<vmem>>, vector<1x8x32xf32>
    %177 = vector.shape_cast %176 : vector<1x8x32xf32> to vector<8x32xf32>
    %cst_173 = arith.constant dense<0.000000e+00> : vector<8x32xf32>
    %178 = tpu.matmul %177, %118, %cst_173 {dimension_numbers = #tpu.dot_dimension_numbers<[1], [0], [0], [1], [0, 0, 1, 1], [], []>} : vector<8x32xf32>, vector<32x32xf32>, vector<8x32xf32> -> vector<8x32xf32>
    %c1_174 = arith.constant 1 : index
    %c8_175 = arith.constant 8 : index
    %c0_176 = arith.constant 0 : index
    %c0_177 = arith.constant 0 : index
    %179 = vector.load %arg6[%c1_174, %c8_175, %c0_176, %c0_177] : memref<3x9x32x32xf32, #tpu.memory_space<vmem>>, vector<1x1x32x32xf32>
    %180 = vector.shape_cast %179 : vector<1x1x32x32xf32> to vector<32x32xf32>
    %cst_178 = arith.constant dense<0.000000e+00> : vector<8x32xf32>
    %181 = tpu.matmul %178, %180, %cst_178 {dimension_numbers = #tpu.dot_dimension_numbers<[1], [0], [0], [1], [0, 0, 1, 1], [], []>} : vector<8x32xf32>, vector<32x32xf32>, vector<8x32xf32> -> vector<8x32xf32>
    %182 = arith.addf %175, %181 : vector<8x32xf32>
    %c4_179 = arith.constant 4 : index
    %c0_180 = arith.constant 0 : index
    %183 = vector.load %arg9[%c4_179, %c0_180] : memref<10x32xf32, #tpu.memory_space<vmem>>, vector<1x32xf32>
    %c5_181 = arith.constant 5 : index
    %c0_182 = arith.constant 0 : index
    %184 = vector.load %arg9[%c5_181, %c0_182] : memref<10x32xf32, #tpu.memory_space<vmem>>, vector<1x32xf32>
    %cst_183 = arith.constant dense<0.000000e+00> : vector<32xf32>
    %185 = vector.multi_reduction <add>, %182, %cst_183 [0] : vector<8x32xf32> to vector<32xf32>
    %186 = vector.shape_cast %185 : vector<32xf32> to vector<1x32xf32>
    %cst_184 = arith.constant 8.000000e+00 : f32
    %187 = vector.broadcast %cst_184 : f32 to vector<1x32xf32>
    %188 = arith.divf %186, %187 : vector<1x32xf32>
    %189 = vector.broadcast %188 : vector<1x32xf32> to vector<8x32xf32>
    %190 = arith.subf %182, %189 : vector<8x32xf32>
    %191 = arith.mulf %190, %190 : vector<8x32xf32>
    %cst_185 = arith.constant dense<0.000000e+00> : vector<32xf32>
    %192 = vector.multi_reduction <add>, %191, %cst_185 [0] : vector<8x32xf32> to vector<32xf32>
    %193 = vector.shape_cast %192 : vector<32xf32> to vector<1x32xf32>
    %cst_186 = arith.constant 8.000000e+00 : f32
    %194 = vector.broadcast %cst_186 : f32 to vector<1x32xf32>
    %195 = arith.divf %193, %194 : vector<1x32xf32>
    %196 = vector.broadcast %188 : vector<1x32xf32> to vector<8x32xf32>
    %197 = arith.subf %182, %196 : vector<8x32xf32>
    %198 = vector.broadcast %183 : vector<1x32xf32> to vector<8x32xf32>
    %199 = arith.mulf %198, %197 : vector<8x32xf32>
    %cst_187 = arith.constant 9.99999974E-6 : f32
    %200 = vector.broadcast %cst_187 : f32 to vector<1x32xf32>
    %201 = arith.addf %195, %200 : vector<1x32xf32>
    %202 = math.rsqrt %201 : vector<1x32xf32>
    %203 = vector.broadcast %202 : vector<1x32xf32> to vector<8x32xf32>
    %204 = arith.mulf %199, %203 : vector<8x32xf32>
    %205 = vector.broadcast %184 : vector<1x32xf32> to vector<8x32xf32>
    %206 = arith.addf %204, %205 : vector<8x32xf32>
    %cst_188 = arith.constant 0.000000e+00 : f32
    %207 = vector.broadcast %cst_188 : f32 to vector<8x32xf32>
    %208 = arith.maximumf %206, %207 : vector<8x32xf32>
    %cst_189 = arith.constant 0.000000e+00 : f32
    %209 = vector.broadcast %cst_189 : f32 to vector<2x32xf32>
    %c0_190 = arith.constant 0 : index
    %c0_191 = arith.constant 0 : index
    %c0_192 = arith.constant 0 : index
    %210 = vector.load %arg5[%c0_190, %c0_191, %c0_192] : memref<9x2x8xf32, #tpu.memory_space<vmem>>, vector<1x2x8xf32>
    %211 = vector.shape_cast %210 : vector<1x2x8xf32> to vector<2x8xf32>
    %cst_193 = arith.constant dense<0.000000e+00> : vector<2x32xf32>
    %212 = tpu.matmul %211, %208, %cst_193 {dimension_numbers = #tpu.dot_dimension_numbers<[1], [0], [0], [1], [0, 0, 1, 1], [], []>} : vector<2x8xf32>, vector<8x32xf32>, vector<2x32xf32> -> vector<2x32xf32>
    %c2_194 = arith.constant 2 : index
    %c0_195 = arith.constant 0 : index
    %c0_196 = arith.constant 0 : index
    %c0_197 = arith.constant 0 : index
    %213 = vector.load %arg6[%c2_194, %c0_195, %c0_196, %c0_197] : memref<3x9x32x32xf32, #tpu.memory_space<vmem>>, vector<1x1x32x32xf32>
    %214 = vector.shape_cast %213 : vector<1x1x32x32xf32> to vector<32x32xf32>
    %cst_198 = arith.constant dense<0.000000e+00> : vector<2x32xf32>
    %215 = tpu.matmul %212, %214, %cst_198 {dimension_numbers = #tpu.dot_dimension_numbers<[1], [0], [0], [1], [0, 0, 1, 1], [], []>} : vector<2x32xf32>, vector<32x32xf32>, vector<2x32xf32> -> vector<2x32xf32>
    %216 = arith.addf %209, %215 : vector<2x32xf32>
    %c1_199 = arith.constant 1 : index
    %c0_200 = arith.constant 0 : index
    %c0_201 = arith.constant 0 : index
    %217 = vector.load %arg5[%c1_199, %c0_200, %c0_201] : memref<9x2x8xf32, #tpu.memory_space<vmem>>, vector<1x2x8xf32>
    %218 = vector.shape_cast %217 : vector<1x2x8xf32> to vector<2x8xf32>
    %cst_202 = arith.constant dense<0.000000e+00> : vector<2x32xf32>
    %219 = tpu.matmul %218, %208, %cst_202 {dimension_numbers = #tpu.dot_dimension_numbers<[1], [0], [0], [1], [0, 0, 1, 1], [], []>} : vector<2x8xf32>, vector<8x32xf32>, vector<2x32xf32> -> vector<2x32xf32>
    %c2_203 = arith.constant 2 : index
    %c1_204 = arith.constant 1 : index
    %c0_205 = arith.constant 0 : index
    %c0_206 = arith.constant 0 : index
    %220 = vector.load %arg6[%c2_203, %c1_204, %c0_205, %c0_206] : memref<3x9x32x32xf32, #tpu.memory_space<vmem>>, vector<1x1x32x32xf32>
    %221 = vector.shape_cast %220 : vector<1x1x32x32xf32> to vector<32x32xf32>
    %cst_207 = arith.constant dense<0.000000e+00> : vector<2x32xf32>
    %222 = tpu.matmul %219, %221, %cst_207 {dimension_numbers = #tpu.dot_dimension_numbers<[1], [0], [0], [1], [0, 0, 1, 1], [], []>} : vector<2x32xf32>, vector<32x32xf32>, vector<2x32xf32> -> vector<2x32xf32>
    %223 = arith.addf %216, %222 : vector<2x32xf32>
    %c2_208 = arith.constant 2 : index
    %c0_209 = arith.constant 0 : index
    %c0_210 = arith.constant 0 : index
    %224 = vector.load %arg5[%c2_208, %c0_209, %c0_210] : memref<9x2x8xf32, #tpu.memory_space<vmem>>, vector<1x2x8xf32>
    %225 = vector.shape_cast %224 : vector<1x2x8xf32> to vector<2x8xf32>
    %cst_211 = arith.constant dense<0.000000e+00> : vector<2x32xf32>
    %226 = tpu.matmul %225, %208, %cst_211 {dimension_numbers = #tpu.dot_dimension_numbers<[1], [0], [0], [1], [0, 0, 1, 1], [], []>} : vector<2x8xf32>, vector<8x32xf32>, vector<2x32xf32> -> vector<2x32xf32>
    %c2_212 = arith.constant 2 : index
    %c2_213 = arith.constant 2 : index
    %c0_214 = arith.constant 0 : index
    %c0_215 = arith.constant 0 : index
    %227 = vector.load %arg6[%c2_212, %c2_213, %c0_214, %c0_215] : memref<3x9x32x32xf32, #tpu.memory_space<vmem>>, vector<1x1x32x32xf32>
    %228 = vector.shape_cast %227 : vector<1x1x32x32xf32> to vector<32x32xf32>
    %cst_216 = arith.constant dense<0.000000e+00> : vector<2x32xf32>
    %229 = tpu.matmul %226, %228, %cst_216 {dimension_numbers = #tpu.dot_dimension_numbers<[1], [0], [0], [1], [0, 0, 1, 1], [], []>} : vector<2x32xf32>, vector<32x32xf32>, vector<2x32xf32> -> vector<2x32xf32>
    %230 = arith.addf %223, %229 : vector<2x32xf32>
    %c3_217 = arith.constant 3 : index
    %c0_218 = arith.constant 0 : index
    %c0_219 = arith.constant 0 : index
    %231 = vector.load %arg5[%c3_217, %c0_218, %c0_219] : memref<9x2x8xf32, #tpu.memory_space<vmem>>, vector<1x2x8xf32>
    %232 = vector.shape_cast %231 : vector<1x2x8xf32> to vector<2x8xf32>
    %cst_220 = arith.constant dense<0.000000e+00> : vector<2x32xf32>
    %233 = tpu.matmul %232, %208, %cst_220 {dimension_numbers = #tpu.dot_dimension_numbers<[1], [0], [0], [1], [0, 0, 1, 1], [], []>} : vector<2x8xf32>, vector<8x32xf32>, vector<2x32xf32> -> vector<2x32xf32>
    %c2_221 = arith.constant 2 : index
    %c3_222 = arith.constant 3 : index
    %c0_223 = arith.constant 0 : index
    %c0_224 = arith.constant 0 : index
    %234 = vector.load %arg6[%c2_221, %c3_222, %c0_223, %c0_224] : memref<3x9x32x32xf32, #tpu.memory_space<vmem>>, vector<1x1x32x32xf32>
    %235 = vector.shape_cast %234 : vector<1x1x32x32xf32> to vector<32x32xf32>
    %cst_225 = arith.constant dense<0.000000e+00> : vector<2x32xf32>
    %236 = tpu.matmul %233, %235, %cst_225 {dimension_numbers = #tpu.dot_dimension_numbers<[1], [0], [0], [1], [0, 0, 1, 1], [], []>} : vector<2x32xf32>, vector<32x32xf32>, vector<2x32xf32> -> vector<2x32xf32>
    %237 = arith.addf %230, %236 : vector<2x32xf32>
    %c4_226 = arith.constant 4 : index
    %c0_227 = arith.constant 0 : index
    %c0_228 = arith.constant 0 : index
    %238 = vector.load %arg5[%c4_226, %c0_227, %c0_228] : memref<9x2x8xf32, #tpu.memory_space<vmem>>, vector<1x2x8xf32>
    %239 = vector.shape_cast %238 : vector<1x2x8xf32> to vector<2x8xf32>
    %cst_229 = arith.constant dense<0.000000e+00> : vector<2x32xf32>
    %240 = tpu.matmul %239, %208, %cst_229 {dimension_numbers = #tpu.dot_dimension_numbers<[1], [0], [0], [1], [0, 0, 1, 1], [], []>} : vector<2x8xf32>, vector<8x32xf32>, vector<2x32xf32> -> vector<2x32xf32>
    %c2_230 = arith.constant 2 : index
    %c4_231 = arith.constant 4 : index
    %c0_232 = arith.constant 0 : index
    %c0_233 = arith.constant 0 : index
    %241 = vector.load %arg6[%c2_230, %c4_231, %c0_232, %c0_233] : memref<3x9x32x32xf32, #tpu.memory_space<vmem>>, vector<1x1x32x32xf32>
    %242 = vector.shape_cast %241 : vector<1x1x32x32xf32> to vector<32x32xf32>
    %cst_234 = arith.constant dense<0.000000e+00> : vector<2x32xf32>
    %243 = tpu.matmul %240, %242, %cst_234 {dimension_numbers = #tpu.dot_dimension_numbers<[1], [0], [0], [1], [0, 0, 1, 1], [], []>} : vector<2x32xf32>, vector<32x32xf32>, vector<2x32xf32> -> vector<2x32xf32>
    %244 = arith.addf %237, %243 : vector<2x32xf32>
    %c5_235 = arith.constant 5 : index
    %c0_236 = arith.constant 0 : index
    %c0_237 = arith.constant 0 : index
    %245 = vector.load %arg5[%c5_235, %c0_236, %c0_237] : memref<9x2x8xf32, #tpu.memory_space<vmem>>, vector<1x2x8xf32>
    %246 = vector.shape_cast %245 : vector<1x2x8xf32> to vector<2x8xf32>
    %cst_238 = arith.constant dense<0.000000e+00> : vector<2x32xf32>
    %247 = tpu.matmul %246, %208, %cst_238 {dimension_numbers = #tpu.dot_dimension_numbers<[1], [0], [0], [1], [0, 0, 1, 1], [], []>} : vector<2x8xf32>, vector<8x32xf32>, vector<2x32xf32> -> vector<2x32xf32>
    %c2_239 = arith.constant 2 : index
    %c5_240 = arith.constant 5 : index
    %c0_241 = arith.constant 0 : index
    %c0_242 = arith.constant 0 : index
    %248 = vector.load %arg6[%c2_239, %c5_240, %c0_241, %c0_242] : memref<3x9x32x32xf32, #tpu.memory_space<vmem>>, vector<1x1x32x32xf32>
    %249 = vector.shape_cast %248 : vector<1x1x32x32xf32> to vector<32x32xf32>
    %cst_243 = arith.constant dense<0.000000e+00> : vector<2x32xf32>
    %250 = tpu.matmul %247, %249, %cst_243 {dimension_numbers = #tpu.dot_dimension_numbers<[1], [0], [0], [1], [0, 0, 1, 1], [], []>} : vector<2x32xf32>, vector<32x32xf32>, vector<2x32xf32> -> vector<2x32xf32>
    %251 = arith.addf %244, %250 : vector<2x32xf32>
    %c6_244 = arith.constant 6 : index
    %c0_245 = arith.constant 0 : index
    %c0_246 = arith.constant 0 : index
    %252 = vector.load %arg5[%c6_244, %c0_245, %c0_246] : memref<9x2x8xf32, #tpu.memory_space<vmem>>, vector<1x2x8xf32>
    %253 = vector.shape_cast %252 : vector<1x2x8xf32> to vector<2x8xf32>
    %cst_247 = arith.constant dense<0.000000e+00> : vector<2x32xf32>
    %254 = tpu.matmul %253, %208, %cst_247 {dimension_numbers = #tpu.dot_dimension_numbers<[1], [0], [0], [1], [0, 0, 1, 1], [], []>} : vector<2x8xf32>, vector<8x32xf32>, vector<2x32xf32> -> vector<2x32xf32>
    %c2_248 = arith.constant 2 : index
    %c6_249 = arith.constant 6 : index
    %c0_250 = arith.constant 0 : index
    %c0_251 = arith.constant 0 : index
    %255 = vector.load %arg6[%c2_248, %c6_249, %c0_250, %c0_251] : memref<3x9x32x32xf32, #tpu.memory_space<vmem>>, vector<1x1x32x32xf32>
    %256 = vector.shape_cast %255 : vector<1x1x32x32xf32> to vector<32x32xf32>
    %cst_252 = arith.constant dense<0.000000e+00> : vector<2x32xf32>
    %257 = tpu.matmul %254, %256, %cst_252 {dimension_numbers = #tpu.dot_dimension_numbers<[1], [0], [0], [1], [0, 0, 1, 1], [], []>} : vector<2x32xf32>, vector<32x32xf32>, vector<2x32xf32> -> vector<2x32xf32>
    %258 = arith.addf %251, %257 : vector<2x32xf32>
    %c7_253 = arith.constant 7 : index
    %c0_254 = arith.constant 0 : index
    %c0_255 = arith.constant 0 : index
    %259 = vector.load %arg5[%c7_253, %c0_254, %c0_255] : memref<9x2x8xf32, #tpu.memory_space<vmem>>, vector<1x2x8xf32>
    %260 = vector.shape_cast %259 : vector<1x2x8xf32> to vector<2x8xf32>
    %cst_256 = arith.constant dense<0.000000e+00> : vector<2x32xf32>
    %261 = tpu.matmul %260, %208, %cst_256 {dimension_numbers = #tpu.dot_dimension_numbers<[1], [0], [0], [1], [0, 0, 1, 1], [], []>} : vector<2x8xf32>, vector<8x32xf32>, vector<2x32xf32> -> vector<2x32xf32>
    %c2_257 = arith.constant 2 : index
    %c7_258 = arith.constant 7 : index
    %c0_259 = arith.constant 0 : index
    %c0_260 = arith.constant 0 : index
    %262 = vector.load %arg6[%c2_257, %c7_258, %c0_259, %c0_260] : memref<3x9x32x32xf32, #tpu.memory_space<vmem>>, vector<1x1x32x32xf32>
    %263 = vector.shape_cast %262 : vector<1x1x32x32xf32> to vector<32x32xf32>
    %cst_261 = arith.constant dense<0.000000e+00> : vector<2x32xf32>
    %264 = tpu.matmul %261, %263, %cst_261 {dimension_numbers = #tpu.dot_dimension_numbers<[1], [0], [0], [1], [0, 0, 1, 1], [], []>} : vector<2x32xf32>, vector<32x32xf32>, vector<2x32xf32> -> vector<2x32xf32>
    %265 = arith.addf %258, %264 : vector<2x32xf32>
    %c8_262 = arith.constant 8 : index
    %c0_263 = arith.constant 0 : index
    %c0_264 = arith.constant 0 : index
    %266 = vector.load %arg5[%c8_262, %c0_263, %c0_264] : memref<9x2x8xf32, #tpu.memory_space<vmem>>, vector<1x2x8xf32>
    %267 = vector.shape_cast %266 : vector<1x2x8xf32> to vector<2x8xf32>
    %cst_265 = arith.constant dense<0.000000e+00> : vector<2x32xf32>
    %268 = tpu.matmul %267, %208, %cst_265 {dimension_numbers = #tpu.dot_dimension_numbers<[1], [0], [0], [1], [0, 0, 1, 1], [], []>} : vector<2x8xf32>, vector<8x32xf32>, vector<2x32xf32> -> vector<2x32xf32>
    %c2_266 = arith.constant 2 : index
    %c8_267 = arith.constant 8 : index
    %c0_268 = arith.constant 0 : index
    %c0_269 = arith.constant 0 : index
    %269 = vector.load %arg6[%c2_266, %c8_267, %c0_268, %c0_269] : memref<3x9x32x32xf32, #tpu.memory_space<vmem>>, vector<1x1x32x32xf32>
    %270 = vector.shape_cast %269 : vector<1x1x32x32xf32> to vector<32x32xf32>
    %cst_270 = arith.constant dense<0.000000e+00> : vector<2x32xf32>
    %271 = tpu.matmul %268, %270, %cst_270 {dimension_numbers = #tpu.dot_dimension_numbers<[1], [0], [0], [1], [0, 0, 1, 1], [], []>} : vector<2x32xf32>, vector<32x32xf32>, vector<2x32xf32> -> vector<2x32xf32>
    %272 = arith.addf %265, %271 : vector<2x32xf32>
    %c6_271 = arith.constant 6 : index
    %c0_272 = arith.constant 0 : index
    %273 = vector.load %arg9[%c6_271, %c0_272] : memref<10x32xf32, #tpu.memory_space<vmem>>, vector<1x32xf32>
    %c7_273 = arith.constant 7 : index
    %c0_274 = arith.constant 0 : index
    %274 = vector.load %arg9[%c7_273, %c0_274] : memref<10x32xf32, #tpu.memory_space<vmem>>, vector<1x32xf32>
    %cst_275 = arith.constant dense<0.000000e+00> : vector<32xf32>
    %275 = vector.multi_reduction <add>, %272, %cst_275 [0] : vector<2x32xf32> to vector<32xf32>
    %276 = vector.shape_cast %275 : vector<32xf32> to vector<1x32xf32>
    %cst_276 = arith.constant 2.000000e+00 : f32
    %277 = vector.broadcast %cst_276 : f32 to vector<1x32xf32>
    %278 = arith.divf %276, %277 : vector<1x32xf32>
    %279 = vector.broadcast %278 : vector<1x32xf32> to vector<2x32xf32>
    %280 = arith.subf %272, %279 : vector<2x32xf32>
    %281 = arith.mulf %280, %280 : vector<2x32xf32>
    %cst_277 = arith.constant dense<0.000000e+00> : vector<32xf32>
    %282 = vector.multi_reduction <add>, %281, %cst_277 [0] : vector<2x32xf32> to vector<32xf32>
    %283 = vector.shape_cast %282 : vector<32xf32> to vector<1x32xf32>
    %cst_278 = arith.constant 2.000000e+00 : f32
    %284 = vector.broadcast %cst_278 : f32 to vector<1x32xf32>
    %285 = arith.divf %283, %284 : vector<1x32xf32>
    %286 = vector.broadcast %278 : vector<1x32xf32> to vector<2x32xf32>
    %287 = arith.subf %272, %286 : vector<2x32xf32>
    %288 = vector.broadcast %273 : vector<1x32xf32> to vector<2x32xf32>
    %289 = arith.mulf %288, %287 : vector<2x32xf32>
    %cst_279 = arith.constant 9.99999974E-6 : f32
    %290 = vector.broadcast %cst_279 : f32 to vector<1x32xf32>
    %291 = arith.addf %285, %290 : vector<1x32xf32>
    %292 = math.rsqrt %291 : vector<1x32xf32>
    %293 = vector.broadcast %292 : vector<1x32xf32> to vector<2x32xf32>
    %294 = arith.mulf %289, %293 : vector<2x32xf32>
    %295 = vector.broadcast %274 : vector<1x32xf32> to vector<2x32xf32>
    %296 = arith.addf %294, %295 : vector<2x32xf32>
    %cst_280 = arith.constant 0.000000e+00 : f32
    %297 = vector.broadcast %cst_280 : f32 to vector<2x32xf32>
    %298 = arith.maximumf %296, %297 : vector<2x32xf32>
    %c0_281 = arith.constant 0 : index
    %c0_282 = arith.constant 0 : index
    %299 = vector.load %arg7[%c0_281, %c0_282] : memref<8x2xf32, #tpu.memory_space<vmem>>, vector<8x2xf32>
    %cst_283 = arith.constant dense<0.000000e+00> : vector<8x32xf32>
    %300 = tpu.matmul %299, %298, %cst_283 {dimension_numbers = #tpu.dot_dimension_numbers<[1], [0], [0], [1], [0, 0, 1, 1], [], []>} : vector<8x2xf32>, vector<2x32xf32>, vector<8x32xf32> -> vector<8x32xf32>
    %c0_284 = arith.constant 0 : index
    %c0_285 = arith.constant 0 : index
    %301 = vector.load %arg8[%c0_284, %c0_285] : memref<32x32xf32, #tpu.memory_space<vmem>>, vector<32x32xf32>
    %cst_286 = arith.constant dense<0.000000e+00> : vector<8x32xf32>
    %302 = tpu.matmul %300, %301, %cst_286 {dimension_numbers = #tpu.dot_dimension_numbers<[1], [0], [0], [1], [0, 0, 1, 1], [], []>} : vector<8x32xf32>, vector<32x32xf32>, vector<8x32xf32> -> vector<8x32xf32>
    %c8_287 = arith.constant 8 : index
    %c0_288 = arith.constant 0 : index
    %303 = vector.load %arg9[%c8_287, %c0_288] : memref<10x32xf32, #tpu.memory_space<vmem>>, vector<1x32xf32>
    %c9 = arith.constant 9 : index
    %c0_289 = arith.constant 0 : index
    %304 = vector.load %arg9[%c9, %c0_289] : memref<10x32xf32, #tpu.memory_space<vmem>>, vector<1x32xf32>
    %cst_290 = arith.constant dense<0.000000e+00> : vector<32xf32>
    %305 = vector.multi_reduction <add>, %302, %cst_290 [0] : vector<8x32xf32> to vector<32xf32>
    %306 = vector.shape_cast %305 : vector<32xf32> to vector<1x32xf32>
    %cst_291 = arith.constant 8.000000e+00 : f32
    %307 = vector.broadcast %cst_291 : f32 to vector<1x32xf32>
    %308 = arith.divf %306, %307 : vector<1x32xf32>
    %309 = vector.broadcast %308 : vector<1x32xf32> to vector<8x32xf32>
    %310 = arith.subf %302, %309 : vector<8x32xf32>
    %311 = arith.mulf %310, %310 : vector<8x32xf32>
    %cst_292 = arith.constant dense<0.000000e+00> : vector<32xf32>
    %312 = vector.multi_reduction <add>, %311, %cst_292 [0] : vector<8x32xf32> to vector<32xf32>
    %313 = vector.shape_cast %312 : vector<32xf32> to vector<1x32xf32>
    %cst_293 = arith.constant 8.000000e+00 : f32
    %314 = vector.broadcast %cst_293 : f32 to vector<1x32xf32>
    %315 = arith.divf %313, %314 : vector<1x32xf32>
    %316 = vector.broadcast %308 : vector<1x32xf32> to vector<8x32xf32>
    %317 = arith.subf %302, %316 : vector<8x32xf32>
    %318 = vector.broadcast %303 : vector<1x32xf32> to vector<8x32xf32>
    %319 = arith.mulf %318, %317 : vector<8x32xf32>
    %cst_294 = arith.constant 9.99999974E-6 : f32
    %320 = vector.broadcast %cst_294 : f32 to vector<1x32xf32>
    %321 = arith.addf %315, %320 : vector<1x32xf32>
    %322 = math.rsqrt %321 : vector<1x32xf32>
    %323 = vector.broadcast %322 : vector<1x32xf32> to vector<8x32xf32>
    %324 = arith.mulf %319, %323 : vector<8x32xf32>
    %325 = vector.broadcast %304 : vector<1x32xf32> to vector<8x32xf32>
    %326 = arith.addf %324, %325 : vector<8x32xf32>
    %cst_295 = arith.constant 0.000000e+00 : f32
    %327 = vector.broadcast %cst_295 : f32 to vector<8x32xf32>
    %328 = arith.maximumf %326, %327 : vector<8x32xf32>
    %c0_296 = arith.constant 0 : index
    %c0_297 = arith.constant 0 : index
    %329 = vector.load %arg10[%c0_296, %c0_297] : memref<33x8xf32, #tpu.memory_space<vmem>>, vector<32x8xf32>
    %cst_298 = arith.constant dense<0.000000e+00> : vector<8x8xf32>
    %330 = tpu.matmul %328, %329, %cst_298 {dimension_numbers = #tpu.dot_dimension_numbers<[1], [0], [0], [1], [0, 0, 1, 1], [], []>} : vector<8x32xf32>, vector<32x8xf32>, vector<8x8xf32> -> vector<8x8xf32>
    %c32 = arith.constant 32 : index
    %c0_299 = arith.constant 0 : index
    %331 = vector.load %arg10[%c32, %c0_299] : memref<33x8xf32, #tpu.memory_space<vmem>>, vector<1x8xf32>
    %332 = vector.broadcast %331 : vector<1x8xf32> to vector<8x8xf32>
    %333 = arith.addf %330, %332 : vector<8x8xf32>
    %c0_300 = arith.constant 0 : index
    %c0_301 = arith.constant 0 : index
    %334 = vector.load %arg13[%c0_300, %c0_301] : memref<8x8xf32, #tpu.memory_space<vmem>>, vector<8x8xf32>
    tpu.vector_store %arg13[%c0_300, %c0_301], %333 {strides = array<i32>} : memref<8x8xf32, #tpu.memory_space<vmem>>, vector<8x8xf32>,
    %cst_302 = arith.constant dense<0xFF800000> : vector<8xf32>
    %335 = vector.multi_reduction <maximumf>, %333, %cst_302 [1] : vector<8x8xf32> to vector<8xf32>
    %336 = vector.shape_cast %335 : vector<8xf32> to vector<8x1xf32>
    %337 = vector.broadcast %336 : vector<8x1xf32> to vector<8x8xf32>
    %338 = arith.subf %333, %337 : vector<8x8xf32>
    %339 = math.exp %338 : vector<8x8xf32>
    %cst_303 = arith.constant dense<0.000000e+00> : vector<8xf32>
    %340 = vector.multi_reduction <add>, %339, %cst_303 [1] : vector<8x8xf32> to vector<8xf32>
    %341 = vector.shape_cast %340 : vector<8xf32> to vector<8x1xf32>
    %342 = vector.broadcast %341 : vector<8x1xf32> to vector<8x8xf32>
    %343 = arith.divf %339, %342 : vector<8x8xf32>
    %c0_304 = arith.constant 0 : index
    %c0_305 = arith.constant 0 : index
    %344 = vector.load %arg14[%c0_304, %c0_305] : memref<8x8xf32, #tpu.memory_space<vmem>>, vector<8x8xf32>
    tpu.vector_store %arg14[%c0_304, %c0_305], %343 {strides = array<i32>} : memref<8x8xf32, #tpu.memory_space<vmem>>, vector<8x8xf32>,
    %c0_306 = arith.constant 0 : index
    %c0_307 = arith.constant 0 : index
    %345 = vector.load %arg11[%c0_306, %c0_307] : memref<33x10xf32, #tpu.memory_space<vmem>>, vector<32x10xf32>
    %cst_308 = arith.constant dense<0.000000e+00> : vector<8x10xf32>
    %346 = tpu.matmul %328, %345, %cst_308 {dimension_numbers = #tpu.dot_dimension_numbers<[1], [0], [0], [1], [0, 0, 1, 1], [], []>} : vector<8x32xf32>, vector<32x10xf32>, vector<8x10xf32> -> vector<8x10xf32>
    %c32_309 = arith.constant 32 : index
    %c0_310 = arith.constant 0 : index
    %347 = vector.load %arg11[%c32_309, %c0_310] : memref<33x10xf32, #tpu.memory_space<vmem>>, vector<1x10xf32>
    %348 = vector.broadcast %347 : vector<1x10xf32> to vector<8x10xf32>
    %349 = arith.addf %346, %348 : vector<8x10xf32>
    %c0_311 = arith.constant 0 : index
    %c0_312 = arith.constant 0 : index
    %350 = vector.load %arg15[%c0_311, %c0_312] : memref<8x10xf32, #tpu.memory_space<vmem>>, vector<8x10xf32>
    tpu.vector_store %arg15[%c0_311, %c0_312], %349 {strides = array<i32>} : memref<8x10xf32, #tpu.memory_space<vmem>>, vector<8x10xf32>,
    %cst_313 = arith.constant dense<0xFF800000> : vector<8xf32>
    %351 = vector.multi_reduction <maximumf>, %349, %cst_313 [1] : vector<8x10xf32> to vector<8xf32>
    %352 = vector.shape_cast %351 : vector<8xf32> to vector<8x1xf32>
    %353 = vector.broadcast %352 : vector<8x1xf32> to vector<8x10xf32>
    %354 = arith.subf %349, %353 : vector<8x10xf32>
    %355 = math.exp %354 : vector<8x10xf32>
    %cst_314 = arith.constant dense<0.000000e+00> : vector<8xf32>
    %356 = vector.multi_reduction <add>, %355, %cst_314 [1] : vector<8x10xf32> to vector<8xf32>
    %357 = vector.shape_cast %356 : vector<8xf32> to vector<8x1xf32>
    %358 = vector.broadcast %357 : vector<8x1xf32> to vector<8x10xf32>
    %359 = arith.divf %355, %358 : vector<8x10xf32>
    %c0_315 = arith.constant 0 : index
    %c0_316 = arith.constant 0 : index
    %360 = vector.load %arg16[%c0_315, %c0_316] : memref<8x10xf32, #tpu.memory_space<vmem>>, vector<8x10xf32>
    tpu.vector_store %arg16[%c0_315, %c0_316], %359 {strides = array<i32>} : memref<8x10xf32, #tpu.memory_space<vmem>>, vector<8x10xf32>,
    %c0_317 = arith.constant 0 : index
    %c0_318 = arith.constant 0 : index
    %361 = vector.load %arg12[%c0_317, %c0_318] : memref<33x1xf32, #tpu.memory_space<vmem>>, vector<32x1xf32>
    %cst_319 = arith.constant dense<0.000000e+00> : vector<8x1xf32>
    %362 = tpu.matmul %328, %361, %cst_319 {dimension_numbers = #tpu.dot_dimension_numbers<[1], [0], [0], [1], [0, 0, 1, 1], [], []>} : vector<8x32xf32>, vector<32x1xf32>, vector<8x1xf32> -> vector<8x1xf32>
    %c32_320 = arith.constant 32 : index
    %c0_321 = arith.constant 0 : index
    %363 = vector.load %arg12[%c32_320, %c0_321] : memref<33x1xf32, #tpu.memory_space<vmem>>, vector<1x1xf32>
    %364 = vector.broadcast %363 : vector<1x1xf32> to vector<8x1xf32>
    %365 = arith.addf %362, %364 : vector<8x1xf32>
    %366 = arith.negf %365 : vector<8x1xf32>
    %367 = math.exp %366 : vector<8x1xf32>
    %cst_322 = arith.constant 1.000000e+00 : f32
    %368 = vector.broadcast %cst_322 : f32 to vector<8x1xf32>
    %369 = arith.addf %368, %367 : vector<8x1xf32>
    %370 = arith.divf %368, %369 : vector<8x1xf32>
    %c0_323 = arith.constant 0 : index
    %c0_324 = arith.constant 0 : index
    %371 = vector.load %arg17[%c0_323, %c0_324] : memref<8x1xf32, #tpu.memory_space<vmem>>, vector<8x1xf32>
    tpu.vector_store %arg17[%c0_323, %c0_324], %370 {strides = array<i32>} : memref<8x1xf32, #tpu.memory_space<vmem>>, vector<8x1xf32>,
    return
  }
  func.func @transform_0(%arg0: i32) -> (i32, i32) {
    %c0_i32 = arith.constant 0 : i32
    %c0_i32_0 = arith.constant 0 : i32
    %c0_i32_1 = arith.constant 0 : i32
    return %c0_i32, %c0_i32_0 : i32, i32
  }
  func.func @transform_1(%arg0: i32) -> (i32, i32) {
    %c0_i32 = arith.constant 0 : i32
    %c0_i32_0 = arith.constant 0 : i32
    %c0_i32_1 = arith.constant 0 : i32
    return %c0_i32, %c0_i32_0 : i32, i32
  }
  func.func @transform_2(%arg0: i32) -> (i32, i32, i32) {
    %c0_i32 = arith.constant 0 : i32
    %c0_i32_0 = arith.constant 0 : i32
    %c0_i32_1 = arith.constant 0 : i32
    %c0_i32_2 = arith.constant 0 : i32
    return %c0_i32, %c0_i32_0, %c0_i32_1 : i32, i32, i32
  }
  func.func @transform_3(%arg0: i32) -> (i32, i32, i32) {
    %c0_i32 = arith.constant 0 : i32
    %c0_i32_0 = arith.constant 0 : i32
    %c0_i32_1 = arith.constant 0 : i32
    %c0_i32_2 = arith.constant 0 : i32
    return %c0_i32, %c0_i32_0, %c0_i32_1 : i32, i32, i32
  }
  func.func @transform_4(%arg0: i32) -> (i32, i32, i32) {
    %c0_i32 = arith.constant 0 : i32
    %c0_i32_0 = arith.constant 0 : i32
    %c0_i32_1 = arith.constant 0 : i32
    %c0_i32_2 = arith.constant 0 : i32
    return %c0_i32, %c0_i32_0, %c0_i32_1 : i32, i32, i32
  }
  func.func @transform_5(%arg0: i32) -> (i32, i32, i32, i32) {
    %c0_i32 = arith.constant 0 : i32
    %c0_i32_0 = arith.constant 0 : i32
    %c0_i32_1 = arith.constant 0 : i32
    %c0_i32_2 = arith.constant 0 : i32
    %c0_i32_3 = arith.constant 0 : i32
    return %c0_i32, %c0_i32_0, %c0_i32_1, %c0_i32_2 : i32, i32, i32, i32
  }
  func.func @transform_6(%arg0: i32) -> (i32, i32) {
    %c0_i32 = arith.constant 0 : i32
    %c0_i32_0 = arith.constant 0 : i32
    %c0_i32_1 = arith.constant 0 : i32
    return %c0_i32, %c0_i32_0 : i32, i32
  }
  func.func @transform_7(%arg0: i32) -> (i32, i32) {
    %c0_i32 = arith.constant 0 : i32
    %c0_i32_0 = arith.constant 0 : i32
    %c0_i32_1 = arith.constant 0 : i32
    return %c0_i32, %c0_i32_0 : i32, i32
  }
  func.func @transform_8(%arg0: i32) -> (i32, i32) {
    %c0_i32 = arith.constant 0 : i32
    %c0_i32_0 = arith.constant 0 : i32
    %c0_i32_1 = arith.constant 0 : i32
    return %c0_i32, %c0_i32_0 : i32, i32
  }
  func.func @transform_9(%arg0: i32) -> (i32, i32) {
    %c0_i32 = arith.constant 0 : i32
    %c0_i32_0 = arith.constant 0 : i32
    %c0_i32_1 = arith.constant 0 : i32
    return %c0_i32, %c0_i32_0 : i32, i32
  }
  func.func @transform_10(%arg0: i32) -> (i32, i32) {
    %c0_i32 = arith.constant 0 : i32
    %c0_i32_0 = arith.constant 0 : i32
    %c0_i32_1 = arith.constant 0 : i32
    return %c0_i32, %c0_i32_0 : i32, i32
  }
  func.func @transform_11(%arg0: i32) -> (i32, i32) {
    %c0_i32 = arith.constant 0 : i32
    %c0_i32_0 = arith.constant 0 : i32
    %c0_i32_1 = arith.constant 0 : i32
    return %c0_i32, %c0_i32_0 : i32, i32
  }
  func.func @transform_12(%arg0: i32) -> (i32, i32) {
    %c0_i32 = arith.constant 0 : i32
    %c0_i32_0 = arith.constant 0 : i32
    %c0_i32_1 = arith.constant 0 : i32
    return %c0_i32, %c0_i32_0 : i32, i32
  }
  func.func @transform_13(%arg0: i32) -> (i32, i32) {
    %c0_i32 = arith.constant 0 : i32
    %c0_i32_0 = arith.constant 0 : i32
    %c0_i32_1 = arith.constant 0 : i32
    return %c0_i32, %c0_i32_0 : i32, i32
  }
  func.func @transform_14(%arg0: i32) -> (i32, i32) {
    %c0_i32 = arith.constant 0 : i32
    %c0_i32_0 = arith.constant 0 : i32
    %c0_i32_1 = arith.constant 0 : i32
    return %c0_i32, %c0_i32_0 : i32, i32
  }
  func.func @transform_15(%arg0: i32) -> (i32, i32) {
    %c0_i32 = arith.constant 0 : i32
    %c0_i32_0 = arith.constant 0 : i32
    %c0_i32_1 = arith.constant 0 : i32
    return %c0_i32, %c0_i32_0 : i32, i32
  }
  func.func @transform_16(%arg0: i32) -> (i32, i32) {
    %c0_i32 = arith.constant 0 : i32
    %c0_i32_0 = arith.constant 0 : i32
    %c0_i32_1 = arith.constant 0 : i32
    return %c0_i32, %c0_i32_0 : i32, i32
  }
}

</mosaic_0001>

<llo_original>
// kernel: posterior_forward.1
$region0: #{posterior_forward.1}
  #allocation0 [shape = 'u32[]', space=smem, size = 0x4, offset = 0x4, fixed_abs, tag = 'smem constant byte address 0x4 - core index']
  #allocation1 [shape = 'u32[144,128]{1,0:T(1,128)}', space=vmem, size = 0x12000, scoped, tag = 'internal scratch']
  %s0 = inlined_call_operand.vmem [shape: f32[128,27], index: 0, kind: input, shape index: {}]
  %s1 = inlined_call_operand.vmem [shape: f32[27,32], index: 1, kind: input, shape index: {}]
  %s2 = inlined_call_operand.vmem [shape: f32[9,32,128], index: 2, kind: input, shape index: {}]
  %s3 = inlined_call_operand.vmem [shape: f32[9,8,32], index: 3, kind: input, shape index: {}]
  %s4 = inlined_call_operand.vmem [shape: f32[9,2,8], index: 4, kind: input, shape index: {}]
  %s5 = inlined_call_operand.vmem [shape: f32[3,9,32,32], index: 5, kind: input, shape index: {}]
  %s6 = inlined_call_operand.vmem [shape: f32[8,2], index: 6, kind: input, shape index: {}]
  %s7 = inlined_call_operand.vmem [shape: f32[32,32], index: 7, kind: input, shape index: {}]
  %s8 = inlined_call_operand.vmem [shape: f32[10,32], index: 8, kind: input, shape index: {}]
  %s9 = inlined_call_operand.vmem [shape: f32[33,8], index: 9, kind: input, shape index: {}]
  %s10 = inlined_call_operand.vmem [shape: f32[33,10], index: 10, kind: input, shape index: {}]
  %s11 = inlined_call_operand.vmem [shape: f32[33,1], index: 11, kind: input, shape index: {}]
  %s12 = inlined_call_operand.hbm [shape: f32[8,8], index: 12, kind: output, shape index: {0}]
  %s13 = inlined_call_operand.hbm [shape: f32[8,8], index: 13, kind: output, shape index: {1}]
  %s14 = inlined_call_operand.hbm [shape: f32[8,10], index: 14, kind: output, shape index: {2}]
  %s15 = inlined_call_operand.hbm [shape: f32[8,10], index: 15, kind: output, shape index: {3}]
  %s16 = inlined_call_operand.vmem [shape: f32[8,1], index: 16, kind: output, shape index: {4}]
  %17 = xla_tuple %s12, %s13, %s14, %s15, %s16
  %s18 = sld [smem:[#allocation0]]
  $region90: #{posterior_forward.1} parent=0
    _
  %s20 = ssub.s32 1, %s18
  %s21 = scalar_select 0, %s20, %s18
  $region1: #{posterior_forward.1} parent=0
    #allocation2 [shape = 'u8[4096]{0}', space=vmem, size = 0x1000, scoped, tag = 'output window, operand 0, single buffered']
    #allocation3 [shape = 's32[1]{0}', space=sflag, size = 0x4, scoped, tag = 'scoped memory for posterior_forward.1']
    #allocation4 [shape = 'u8[4096]{0}', space=vmem, size = 0x1000, scoped, tag = 'output window, operand 1, single buffered']
    #allocation5 [shape = 's32[1]{0}', space=sflag, size = 0x4, scoped, tag = 'scoped memory for posterior_forward.1']
    #allocation6 [shape = 'u8[4096]{0}', space=vmem, size = 0x1000, scoped, tag = 'output window, operand 2, single buffered']
    #allocation7 [shape = 'u8[4096]{0}', space=vmem, size = 0x1000, scoped, tag = 'output window, operand 3, single buffered']
    #allocation8 [shape = 's32[1]{0}', space=sflag, size = 0x4, scoped, tag = 'scoped memory for posterior_forward.1']
    %22 = vsyncpa [#allocation3], 0
    %23 = vsyncpa [#allocation5], 0
    %24 = vsyncpa [#allocation8], 0
    // Predicated region
    $region2: #{posterior_forward.1} parent=1 // pred_check
      _
    $region3: #{posterior_forward.1} parent=1 // pred_check_branch
      %26 = sbr.rel (0) target = $region5
    $region4: #{posterior_forward.1} parent=1 // pred_region
      _
    $region5: #{posterior_forward.1} parent=1 // pred_fallthru
      _
    // Predicated region
    $region6: #{posterior_forward.1} parent=1 // pred_check
      _
    $region7: #{posterior_forward.1} parent=1 // pred_check_branch
      %28 = sbr.rel (0) target = $region9
    $region8: #{posterior_forward.1} parent=1 // pred_region
      _
    $region9: #{posterior_forward.1} parent=1 // pred_fallthru
      _
    // Predicated region
    $region10: #{posterior_forward.1} parent=1 // pred_check
      _
    $region11: #{posterior_forward.1} parent=1 // pred_check_branch
      %30 = sbr.rel (0) target = $region13
    $region12: #{posterior_forward.1} parent=1 // pred_region
      _
    $region13: #{posterior_forward.1} parent=1 // pred_fallthru
      _
    // Predicated region
    $region14: #{posterior_forward.1} parent=1 // pred_check
      _
    $region15: #{posterior_forward.1} parent=1 // pred_check_branch
      %32 = sbr.rel (0) target = $region17
    $region16: #{posterior_forward.1} parent=1 // pred_region
      _
    $region17: #{posterior_forward.1} parent=1 // pred_fallthru
      _
    // Predicated region
    $region18: #{posterior_forward.1} parent=1 // pred_check
      _
    $region19: #{posterior_forward.1} parent=1 // pred_check_branch
      %34 = sbr.rel (0) target = $region21
    $region20: #{posterior_forward.1} parent=1 // pred_region
      _
    $region21: #{posterior_forward.1} parent=1 // pred_fallthru
      _
    // Predicated region
    $region22: #{posterior_forward.1} parent=1 // pred_check
      _
    $region23: #{posterior_forward.1} parent=1 // pred_check_branch
      %36 = sbr.rel (0) target = $region25
    $region24: #{posterior_forward.1} parent=1 // pred_region
      _
    $region25: #{posterior_forward.1} parent=1 // pred_fallthru
      _
    // Predicated region
    $region26: #{posterior_forward.1} parent=1 // pred_check
      _
    $region27: #{posterior_forward.1} parent=1 // pred_check_branch
      %38 = sbr.rel (0) target = $region29
    $region28: #{posterior_forward.1} parent=1 // pred_region
      _
    $region29: #{posterior_forward.1} parent=1 // pred_fallthru
      _
    // Predicated region
    $region30: #{posterior_forward.1} parent=1 // pred_check
      _
    $region31: #{posterior_forward.1} parent=1 // pred_check_branch
      %40 = sbr.rel (0) target = $region33
    $region32: #{posterior_forward.1} parent=1 // pred_region
      _
    $region33: #{posterior_forward.1} parent=1 // pred_fallthru
      _
    // Predicated region
    $region34: #{posterior_forward.1} parent=1 // pred_check
      _
    $region35: #{posterior_forward.1} parent=1 // pred_check_branch
      %42 = sbr.rel (0) target = $region37
    $region36: #{posterior_forward.1} parent=1 // pred_region
      _
    $region37: #{posterior_forward.1} parent=1 // pred_fallthru
      _
    // Predicated region
    $region38: #{posterior_forward.1} parent=1 // pred_check
      _
    $region39: #{posterior_forward.1} parent=1 // pred_check_branch
      %44 = sbr.rel (0) target = $region41
    $region40: #{posterior_forward.1} parent=1 // pred_region
      _
    $region41: #{posterior_forward.1} parent=1 // pred_fallthru
      _
    // Predicated region
    $region42: #{posterior_forward.1} parent=1 // pred_check
      _
    $region43: #{posterior_forward.1} parent=1 // pred_check_branch
      %46 = sbr.rel (0) target = $region45
    $region44: #{posterior_forward.1} parent=1 // pred_region
      _
    $region45: #{posterior_forward.1} parent=1 // pred_fallthru
      _
    // Predicated region
    $region46: #{posterior_forward.1} parent=1 // pred_check
      _
    $region47: #{posterior_forward.1} parent=1 // pred_check_branch
      %48 = sbr.rel (0) target = $region49
    $region48: #{posterior_forward.1} parent=1 // pred_region
      _
    $region49: #{posterior_forward.1} parent=1 // pred_fallthru
      _
    %v49 = vld [vmem:[%s0] sm:$0xff]
    %v50 = vld [vmem:[%s0 + $0x8] sm:$0xff]
    %v51 = vld [vmem:[%s0 + $0x10] sm:$0xff]
    %v52 = vld [vmem:[%s0 + $0x18] sm:$0xff]
    %v53 = vld [vmem:[%s0 + $0x20] sm:$0xff]
    %v54 = vld [vmem:[%s0 + $0x28] sm:$0xff]
    %v55 = vld [vmem:[%s0 + $0x30] sm:$0xff]
    %v56 = vld [vmem:[%s0 + $0x38] sm:$0xff]
    %v57 = vld [vmem:[%s0 + $0x40] sm:$0xff]
    %v58 = vld [vmem:[%s0 + $0x48] sm:$0xff]
    %v59 = vld [vmem:[%s0 + $0x50] sm:$0xff]
    %v60 = vld [vmem:[%s0 + $0x58] sm:$0xff]
    %v61 = vld [vmem:[%s0 + $0x60] sm:$0xff]
    %v62 = vld [vmem:[%s0 + $0x68] sm:$0xff]
    %v63 = vld [vmem:[%s0 + $0x70] sm:$0xff]
    %v64 = vld [vmem:[%s0 + $0x78] sm:$0xff]
    %v65 = vld [vmem:[%s1] sm:$0xff]
    %v66 = vld [vmem:[%s1 + $0x8] sm:$0xff]
    %v67 = vld [vmem:[%s1 + $0x10] sm:$0xff]
    %v68 = vld [vmem:[%s1 + $0x18] sm:$0x7]
    %vm69 = vcmask 220160
    %v71 = vsel %vm69, %v49, 0
    %v74 = vsel %vm69, %v50, 0
    %v77 = vsel %vm69, %v51, 0
    %v80 = vsel %vm69, %v52, 0
    %v83 = vsel %vm69, %v53, 0
    %v86 = vsel %vm69, %v54, 0
    %v89 = vsel %vm69, %v55, 0
    %v92 = vsel %vm69, %v56, 0
    %v95 = vsel %vm69, %v57, 0
    %v98 = vsel %vm69, %v58, 0
    %v101 = vsel %vm69, %v59, 0
    %v104 = vsel %vm69, %v60, 0
    %v107 = vsel %vm69, %v61, 0
    %v110 = vsel %vm69, %v62, 0
    %v113 = vsel %vm69, %v63, 0
    %v116 = vsel %vm69, %v64, 0
    %vm118 = vcmask 1042432
    %v120 = vsel %vm118, %v68, 0
    %122 = vmatprep.subr.mxu0 0.0
    %123 = vmatpush1.msra.mxu0 0.0
    %124 = vmatprep.subr.mxu0 0.0
    %125 = vmatpush1.msra.mxu0 0.0
    %126 = vmatprep.subr.mxu0 0.0
    %127 = vmatpush1.msra.mxu0 0.0
    %128 = vmatprep.subr.mxu0 0.0
    %129 = vmatpush1.msra.mxu0 0.0
    %130 = vmatprep.subr.mxu0 0.0
    %131 = vmatpush1.msra.mxu0 0.0
    %132 = vmatprep.subr.mxu0 0.0
    %133 = vmatpush1.msra.mxu0 0.0
    %134 = vmatprep.subr.mxu0 0.0
    %135 = vmatpush1.msra.mxu0 0.0
    %136 = vmatprep.subr.mxu0 0.0
    %137 = vmatpush1.msra.mxu0 0.0
    %138 = vmatprep.subr.mxu0 0.0
    %139 = vmatpush1.msra.mxu0 0.0
    %140 = vmatprep.subr.mxu0 0.0
    %141 = vmatpush1.msra.mxu0 0.0
    %142 = vmatprep.subr.mxu0 0.0
    %143 = vmatpush1.msra.mxu0 0.0
    %144 = vmatprep.subr.mxu0 0.0
    %145 = vmatpush1.msra.mxu0 0.0
    %146 = vmatprep.subr.mxu0 0.0
    %147 = vmatpush1.msra.mxu0 %v120
    %148 = vmatprep.subr.mxu0 0.0
    %149 = vmatpush1.msra.mxu0 %v67
    %150 = vmatprep.subr.mxu0 0.0
    %151 = vmatpush1.msra.mxu0 %v66
    %152 = vmatprep.subr.mxu0 0.0
    %153 = vmatpush1.msra.mxu0 %v65
    %154 = vmatprep.subr.mxu0 0.0
    %155 = vmatpush2.msra.mxu0 0.0
    %156 = vmatprep.subr.mxu0 0.0
    %157 = vmatpush2.msra.mxu0 0.0
    %158 = vmatprep.subr.mxu0 0.0
    %159 = vmatpush2.msra.mxu0 0.0
    %160 = vmatprep.subr.mxu0 0.0
    %161 = vmatpush2.msra.mxu0 0.0
    %162 = vmatprep.subr.mxu0 0.0
    %163 = vmatpush2.msra.mxu0 0.0
    %164 = vmatprep.subr.mxu0 0.0
    %165 = vmatpush2.msra.mxu0 0.0
    %166 = vmatprep.subr.mxu0 0.0
    %167 = vmatpush2.msra.mxu0 0.0
    %168 = vmatprep.subr.mxu0 0.0
    %169 = vmatpush2.msra.mxu0 0.0
    %170 = vmatprep.subr.mxu0 0.0
    %171 = vmatpush2.msra.mxu0 0.0
    %172 = vmatprep.subr.mxu0 0.0
    %173 = vmatpush2.msra.mxu0 0.0
    %174 = vmatprep.subr.mxu0 0.0
    %175 = vmatpush2.msra.mxu0 0.0
    %176 = vmatprep.subr.mxu0 0.0
    %177 = vmatpush2.msra.mxu0 0.0
    %178 = vmatprep.subr.mxu0 0.0
    %179 = vmatpush2.msra.mxu0 0.0
    %180 = vmatprep.subr.mxu0 0.0
    %181 = vmatpush2.msra.mxu0 0.0
    %182 = vmatprep.subr.mxu0 0.0
    %183 = vmatpush2.msra.mxu0 0.0
    %184 = vmatprep.subr.mxu0 0.0
    %185 = vmatpush2.msra.mxu0 0.0
    %186 = vmatprep.mubr.f32.mxu0 0.0
    %187 = vmatmul.mubr.f32.gmra.mxu0 %v71
    %v188 = vpop.f32.mrf.mxu0
    %v189 = vadd.f32 0.0, %v188
    %v190 = vpop.f32.mrf.mxu0
    %191 = vmatprep.mubr.f32.mxu0 0.0
    %192 = vmatmul.mubr.f32.gmra.mxu0 %v74
    %v193 = vpop.f32.mrf.mxu0
    %v194 = vadd.f32 0.0, %v193
    %v195 = vpop.f32.mrf.mxu0
    %196 = vmatprep.mubr.f32.mxu0 0.0
    %197 = vmatmul.mubr.f32.gmra.mxu0 %v77
    %v198 = vpop.f32.mrf.mxu0
    %v199 = vadd.f32 0.0, %v198
    %v200 = vpop.f32.mrf.mxu0
    %201 = vmatprep.mubr.f32.mxu0 0.0
    %202 = vmatmul.mubr.f32.gmra.mxu0 %v80
    %v203 = vpop.f32.mrf.mxu0
    %v204 = vadd.f32 0.0, %v203
    %v205 = vpop.f32.mrf.mxu0
    %206 = vmatprep.mubr.f32.mxu0 0.0
    %207 = vmatmul.mubr.f32.gmra.mxu0 %v83
    %v208 = vpop.f32.mrf.mxu0
    %v209 = vadd.f32 0.0, %v208
    %v210 = vpop.f32.mrf.mxu0
    %211 = vmatprep.mubr.f32.mxu0 0.0
    %212 = vmatmul.mubr.f32.gmra.mxu0 %v86
    %v213 = vpop.f32.mrf.mxu0
    %v214 = vadd.f32 0.0, %v213
    %v215 = vpop.f32.mrf.mxu0
    %216 = vmatprep.mubr.f32.mxu0 0.0
    %217 = vmatmul.mubr.f32.gmra.mxu0 %v89
    %v218 = vpop.f32.mrf.mxu0
    %v219 = vadd.f32 0.0, %v218
    %v220 = vpop.f32.mrf.mxu0
    %221 = vmatprep.mubr.f32.mxu0 0.0
    %222 = vmatmul.mubr.f32.gmra.mxu0 %v92
    %v223 = vpop.f32.mrf.mxu0
    %v224 = vadd.f32 0.0, %v223
    %v225 = vpop.f32.mrf.mxu0
    %226 = vmatprep.mubr.f32.mxu0 0.0
    %227 = vmatmul.mubr.f32.gmra.mxu0 %v95
    %v228 = vpop.f32.mrf.mxu0
    %v229 = vadd.f32 0.0, %v228
    %v230 = vpop.f32.mrf.mxu0
    %231 = vmatprep.mubr.f32.mxu0 0.0
    %232 = vmatmul.mubr.f32.gmra.mxu0 %v98
    %v233 = vpop.f32.mrf.mxu0
    %v234 = vadd.f32 0.0, %v233
    %v235 = vpop.f32.mrf.mxu0
    %236 = vmatprep.mubr.f32.mxu0 0.0
    %237 = vmatmul.mubr.f32.gmra.mxu0 %v101
    %v238 = vpop.f32.mrf.mxu0
    %v239 = vadd.f32 0.0, %v238
    %v240 = vpop.f32.mrf.mxu0
    %241 = vmatprep.mubr.f32.mxu0 0.0
    %242 = vmatmul.mubr.f32.gmra.mxu0 %v104
    %v243 = vpop.f32.mrf.mxu0
    %v244 = vadd.f32 0.0, %v243
    %v245 = vpop.f32.mrf.mxu0
    %246 = vmatprep.mubr.f32.mxu0 0.0
    %247 = vmatmul.mubr.f32.gmra.mxu0 %v107
    %v248 = vpop.f32.mrf.mxu0
    %v249 = vadd.f32 0.0, %v248
    %v250 = vpop.f32.mrf.mxu0
    %251 = vmatprep.mubr.f32.mxu0 0.0
    %252 = vmatmul.mubr.f32.gmra.mxu0 %v110
    %v253 = vpop.f32.mrf.mxu0
    %v254 = vadd.f32 0.0, %v253
    %v255 = vpop.f32.mrf.mxu0
    %256 = vmatprep.mubr.f32.mxu0 0.0
    %257 = vmatmul.mubr.f32.gmra.mxu0 %v113
    %v258 = vpop.f32.mrf.mxu0
    %v259 = vadd.f32 0.0, %v258
    %v260 = vpop.f32.mrf.mxu0
    %261 = vmatprep.mubr.f32.mxu0 0.0
    %262 = vmatmul.mubr.f32.gmra.mxu0 %v116
    %v263 = vpop.f32.mrf.mxu0
    %v264 = vadd.f32 0.0, %v263
    %v265 = vpop.f32.mrf.mxu0
    %266 = vdwg.mxu0
    %v267 = vld [vmem:[%s8] sm:$0x1]
    %v268 = vld [vmem:[%s8 + $0x1] sm:$0x1]
    %vm269 = vcmask 261120
    %v270 = vsel %vm269, %v189, 0.0
    %v271 = vsel %vm269, %v194, 0.0
    %v272 = vadd.f32 %v270, %v271
    %v273 = vsel %vm269, %v199, 0.0
    %v274 = vadd.f32 %v272, %v273
    %v275 = vsel %vm269, %v204, 0.0
    %v276 = vadd.f32 %v274, %v275
    %v277 = vsel %vm269, %v209, 0.0
    %v278 = vadd.f32 %v276, %v277
    %v279 = vsel %vm269, %v214, 0.0
    %v280 = vadd.f32 %v278, %v279
    %v281 = vsel %vm269, %v219, 0.0
    %v282 = vadd.f32 %v280, %v281
    %v283 = vsel %vm269, %v224, 0.0
    %v284 = vadd.f32 %v282, %v283
    %v285 = vsel %vm269, %v229, 0.0
    %v286 = vadd.f32 %v284, %v285
    %v287 = vsel %vm269, %v234, 0.0
    %v288 = vadd.f32 %v286, %v287
    %v289 = vsel %vm269, %v239, 0.0
    %v290 = vadd.f32 %v288, %v289
    %v291 = vsel %vm269, %v244, 0.0
    %v292 = vadd.f32 %v290, %v291
    %v293 = vsel %vm269, %v249, 0.0
    %v294 = vadd.f32 %v292, %v293
    %v295 = vsel %vm269, %v254, 0.0
    %v296 = vadd.f32 %v294, %v295
    %v297 = vsel %vm269, %v259, 0.0
    %v298 = vadd.f32 %v296, %v297
    %v299 = vsel %vm269, %v264, 0.0
    %v300 = vadd.f32 %v298, %v299
    %v301 = vrot.slane %v300, 4
    %v302 = vadd.f32 %v300, %v301
    %v303 = vrot.slane %v302, 2
    %v304 = vadd.f32 %v302, %v303
    %v305 = vrot.slane %v304, 1
    %v306 = vadd.f32 %v304, %v305
    %v307 = vrcp.pop 128.0
    %v308 = vmul.f32 %v306, %v307
    %v309 = vsub.f32 %v189, %v308
    %v310 = vsub.f32 %v194, %v308
    %v311 = vsub.f32 %v199, %v308
    %v312 = vsub.f32 %v204, %v308
    %v313 = vsub.f32 %v209, %v308
    %v314 = vsub.f32 %v214, %v308
    %v315 = vsub.f32 %v219, %v308
    %v316 = vsub.f32 %v224, %v308
    %v317 = vsub.f32 %v229, %v308
    %v318 = vsub.f32 %v234, %v308
    %v319 = vsub.f32 %v239, %v308
    %v320 = vsub.f32 %v244, %v308
    %v321 = vsub.f32 %v249, %v308
    %v322 = vsub.f32 %v254, %v308
    %v323 = vsub.f32 %v259, %v308
    %v324 = vsub.f32 %v264, %v308
    %v325 = vmul.f32 %v309, %v309
    %v326 = vmul.f32 %v310, %v310
    %v327 = vmul.f32 %v311, %v311
    %v328 = vmul.f32 %v312, %v312
    %v329 = vmul.f32 %v313, %v313
    %v330 = vmul.f32 %v314, %v314
    %v331 = vmul.f32 %v315, %v315
    %v332 = vmul.f32 %v316, %v316
    %v333 = vmul.f32 %v317, %v317
    %v334 = vmul.f32 %v318, %v318
    %v335 = vmul.f32 %v319, %v319
    %v336 = vmul.f32 %v320, %v320
    %v337 = vmul.f32 %v321, %v321
    %v338 = vmul.f32 %v322, %v322
    %v339 = vmul.f32 %v323, %v323
    %v340 = vmul.f32 %v324, %v324
    %v341 = vsel %vm269, %v325, 0.0
    %v342 = vsel %vm269, %v326, 0.0
    %v343 = vadd.f32 %v341, %v342
    %v344 = vsel %vm269, %v327, 0.0
    %v345 = vadd.f32 %v343, %v344
    %v346 = vsel %vm269, %v328, 0.0
    %v347 = vadd.f32 %v345, %v346
    %v348 = vsel %vm269, %v329, 0.0
    %v349 = vadd.f32 %v347, %v348
    %v350 = vsel %vm269, %v330, 0.0
    %v351 = vadd.f32 %v349, %v350
    %v352 = vsel %vm269, %v331, 0.0
    %v353 = vadd.f32 %v351, %v352
    %v354 = vsel %vm269, %v332, 0.0
    %v355 = vadd.f32 %v353, %v354
    %v356 = vsel %vm269, %v333, 0.0
    %v357 = vadd.f32 %v355, %v356
    %v358 = vsel %vm269, %v334, 0.0
    %v359 = vadd.f32 %v357, %v358
    %v360 = vsel %vm269, %v335, 0.0
    %v361 = vadd.f32 %v359, %v360
    %v362 = vsel %vm269, %v336, 0.0
    %v363 = vadd.f32 %v361, %v362
    %v364 = vsel %vm269, %v337, 0.0
    %v365 = vadd.f32 %v363, %v364
    %v366 = vsel %vm269, %v338, 0.0
    %v367 = vadd.f32 %v365, %v366
    %v368 = vsel %vm269, %v339, 0.0
    %v369 = vadd.f32 %v367, %v368
    %v370 = vsel %vm269, %v340, 0.0
    %v371 = vadd.f32 %v369, %v370
    %v372 = vrot.slane %v371, 4
    %v373 = vadd.f32 %v371, %v372
    %v374 = vrot.slane %v373, 2
    %v375 = vadd.f32 %v373, %v374
    %v376 = vrot.slane %v375, 1
    %v377 = vadd.f32 %v375, %v376
    %v378 = vmul.f32 %v377, %v307
    %v379 = vlaneseq
    %v380 = vshrl.u32 %v379, 7
    %v381 = vsub.s32 0, %v380
    %v382 = vrot.slane %v267, %v381
    %v383 = vmul.f32 %v382, %v309
    %v384 = vmul.f32 %v382, %v310
    %v385 = vmul.f32 %v382, %v311
    %v386 = vmul.f32 %v382, %v312
    %v387 = vmul.f32 %v382, %v313
    %v388 = vmul.f32 %v382, %v314
    %v389 = vmul.f32 %v382, %v315
    %v390 = vmul.f32 %v382, %v316
    %v391 = vmul.f32 %v382, %v317
    %v392 = vmul.f32 %v382, %v318
    %v393 = vmul.f32 %v382, %v319
    %v394 = vmul.f32 %v382, %v320
    %v395 = vmul.f32 %v382, %v321
    %v396 = vmul.f32 %v382, %v322
    %v397 = vmul.f32 %v382, %v323
    %v398 = vmul.f32 %v382, %v324
    %v399 = vadd.f32 %v378, 1e-05
    %v400 = vrsqrt.pop %v399
    %v401 = vmul.f32 %v383, %v400
    %v402 = vmul.f32 %v384, %v400
    %v403 = vmul.f32 %v385, %v400
    %v404 = vmul.f32 %v386, %v400
    %v405 = vmul.f32 %v387, %v400
    %v406 = vmul.f32 %v388, %v400
    %v407 = vmul.f32 %v389, %v400
    %v408 = vmul.f32 %v390, %v400
    %v409 = vmul.f32 %v391, %v400
    %v410 = vmul.f32 %v392, %v400
    %v411 = vmul.f32 %v393, %v400
    %v412 = vmul.f32 %v394, %v400
    %v413 = vmul.f32 %v395, %v400
    %v414 = vmul.f32 %v396, %v400
    %v415 = vmul.f32 %v397, %v400
    %v416 = vmul.f32 %v398, %v400
    %v417 = vlaneseq
    %v418 = vshrl.u32 %v417, 7
    %v419 = vsub.s32 0, %v418
    %v420 = vrot.slane %v268, %v419
    %v421 = vadd.f32 %v401, %v420
    %v422 = vadd.f32 %v402, %v420
    %v423 = vadd.f32 %v403, %v420
    %v424 = vadd.f32 %v404, %v420
    %v425 = vadd.f32 %v405, %v420
    %v426 = vadd.f32 %v406, %v420
    %v427 = vadd.f32 %v407, %v420
    %v428 = vadd.f32 %v408, %v420
    %v429 = vadd.f32 %v409, %v420
    %v430 = vadd.f32 %v410, %v420
    %v431 = vadd.f32 %v411, %v420
    %v432 = vadd.f32 %v412, %v420
    %v433 = vadd.f32 %v413, %v420
    %v434 = vadd.f32 %v414, %v420
    %v435 = vadd.f32 %v415, %v420
    %v436 = vadd.f32 %v416, %v420
    %v437 = vmax.f32 %v421, 0.0
    %v438 = vmax.f32 %v422, 0.0
    %v439 = vmax.f32 %v423, 0.0
    %v440 = vmax.f32 %v424, 0.0
    %v441 = vmax.f32 %v425, 0.0
    %v442 = vmax.f32 %v426, 0.0
    %v443 = vmax.f32 %v427, 0.0
    %v444 = vmax.f32 %v428, 0.0
    %v445 = vmax.f32 %v429, 0.0
    %v446 = vmax.f32 %v430, 0.0
    %v447 = vmax.f32 %v431, 0.0
    %v448 = vmax.f32 %v432, 0.0
    %v449 = vmax.f32 %v433, 0.0
    %v450 = vmax.f32 %v434, 0.0
    %v451 = vmax.f32 %v435, 0.0
    %v452 = vmax.f32 %v436, 0.0
    %v453 = vld [vmem:[%s2] sm:$0xff]
    %v454 = vld [vmem:[%s2 + $0x8] sm:$0xff]
    %v455 = vld [vmem:[%s2 + $0x10] sm:$0xff]
    %v456 = vld [vmem:[%s2 + $0x18] sm:$0xff]
    %457 = vmatprep.subr.mxu0 0.0
    %458 = vmatpush1.msra.mxu0 %v452
    %459 = vmatprep.subr.mxu0 0.0
    %460 = vmatpush1.msra.mxu0 %v451
    %461 = vmatprep.subr.mxu0 0.0
    %462 = vmatpush1.msra.mxu0 %v450
    %463 = vmatprep.subr.mxu0 0.0
    %464 = vmatpush1.msra.mxu0 %v449
    %465 = vmatprep.subr.mxu0 0.0
    %466 = vmatpush1.msra.mxu0 %v448
    %467 = vmatprep.subr.mxu0 0.0
    %468 = vmatpush1.msra.mxu0 %v447
    %469 = vmatprep.subr.mxu0 0.0
    %470 = vmatpush1.msra.mxu0 %v446
    %471 = vmatprep.subr.mxu0 0.0
    %472 = vmatpush1.msra.mxu0 %v445
    %473 = vmatprep.subr.mxu0 0.0
    %474 = vmatpush1.msra.mxu0 %v444
    %475 = vmatprep.subr.mxu0 0.0
    %476 = vmatpush1.msra.mxu0 %v443
    %477 = vmatprep.subr.mxu0 0.0
    %478 = vmatpush1.msra.mxu0 %v442
    %479 = vmatprep.subr.mxu0 0.0
    %480 = vmatpush1.msra.mxu0 %v441
    %481 = vmatprep.subr.mxu0 0.0
    %482 = vmatpush1.msra.mxu0 %v440
    %483 = vmatprep.subr.mxu0 0.0
    %484 = vmatpush1.msra.mxu0 %v439
    %485 = vmatprep.subr.mxu0 0.0
    %486 = vmatpush1.msra.mxu0 %v438
    %487 = vmatprep.subr.mxu0 0.0
    %488 = vmatpush1.msra.mxu0 %v437
    %489 = vmatprep.subr.mxu0 0.0
    %490 = vmatpush2.msra.mxu0 0.0
    %491 = vmatprep.subr.mxu0 0.0
    %492 = vmatpush2.msra.mxu0 0.0
    %493 = vmatprep.subr.mxu0 0.0
    %494 = vmatpush2.msra.mxu0 0.0
    %495 = vmatprep.subr.mxu0 0.0
    %496 = vmatpush2.msra.mxu0 0.0
    %497 = vmatprep.subr.mxu0 0.0
    %498 = vmatpush2.msra.mxu0 0.0
    %499 = vmatprep.subr.mxu0 0.0
    %500 = vmatpush2.msra.mxu0 0.0
    %501 = vmatprep.subr.mxu0 0.0
    %502 = vmatpush2.msra.mxu0 0.0
    %503 = vmatprep.subr.mxu0 0.0
    %504 = vmatpush2.msra.mxu0 0.0
    %505 = vmatprep.subr.mxu0 0.0
    %506 = vmatpush2.msra.mxu0 0.0
    %507 = vmatprep.subr.mxu0 0.0
    %508 = vmatpush2.msra.mxu0 0.0
    %509 = vmatprep.subr.mxu0 0.0
    %510 = vmatpush2.msra.mxu0 0.0
    %511 = vmatprep.subr.mxu0 0.0
    %512 = vmatpush2.msra.mxu0 0.0
    %513 = vmatprep.subr.mxu0 0.0
    %514 = vmatpush2.msra.mxu0 0.0
    %515 = vmatprep.subr.mxu0 0.0
    %516 = vmatpush2.msra.mxu0 0.0
    %517 = vmatprep.subr.mxu0 0.0
    %518 = vmatpush2.msra.mxu0 0.0
    %519 = vmatprep.subr.mxu0 0.0
    %520 = vmatpush2.msra.mxu0 0.0
    %521 = vmatprep.mubr.f32.mxu0 0.0
    %522 = vmatmul.mubr.f32.gmra.mxu0 %v453
    %v523 = vpop.f32.mrf.mxu0
    %v524 = vadd.f32 0.0, %v523
    %v525 = vpop.f32.mrf.mxu0
    %526 = vmatprep.mubr.f32.mxu0 0.0
    %527 = vmatmul.mubr.f32.gmra.mxu0 %v454
    %v528 = vpop.f32.mrf.mxu0
    %v529 = vadd.f32 0.0, %v528
    %v530 = vpop.f32.mrf.mxu0
    %531 = vmatprep.mubr.f32.mxu0 0.0
    %532 = vmatmul.mubr.f32.gmra.mxu0 %v455
    %v533 = vpop.f32.mrf.mxu0
    %v534 = vadd.f32 0.0, %v533
    %v535 = vpop.f32.mrf.mxu0
    %536 = vmatprep.mubr.f32.mxu0 0.0
    %537 = vmatmul.mubr.f32.gmra.mxu0 %v456
    %v538 = vpop.f32.mrf.mxu0
    %v539 = vadd.f32 0.0, %v538
    %v540 = vpop.f32.mrf.mxu0
    %541 = vdwg.mxu0
    %v542 = vld [vmem:[%s5] sm:$0xff]
    %v543 = vld [vmem:[%s5 + $0x8] sm:$0xff]
    %v544 = vld [vmem:[%s5 + $0x10] sm:$0xff]
    %v545 = vld [vmem:[%s5 + $0x18] sm:$0xff]
    %s546 = scalar_lea.vmem %s2, 32
    %v547 = vld [vmem:[%s546] sm:$0xff]
    %v548 = vld [vmem:[%s546 + $0x8] sm:$0xff]
    %v549 = vld [vmem:[%s546 + $0x10] sm:$0xff]
    %v550 = vld [vmem:[%s546 + $0x18] sm:$0xff]
    %551 = vmatprep.subr.mxu0 0.0
    %552 = vmatpush1.msra.mxu0 %v452
    %553 = vmatprep.subr.mxu0 0.0
    %554 = vmatpush1.msra.mxu0 %v451
    %555 = vmatprep.subr.mxu0 0.0
    %556 = vmatpush1.msra.mxu0 %v450
    %557 = vmatprep.subr.mxu0 0.0
    %558 = vmatpush1.msra.mxu0 %v449
    %559 = vmatprep.subr.mxu0 0.0
    %560 = vmatpush1.msra.mxu0 %v448
    %561 = vmatprep.subr.mxu0 0.0
    %562 = vmatpush1.msra.mxu0 %v447
    %563 = vmatprep.subr.mxu0 0.0
    %564 = vmatpush1.msra.mxu0 %v446
    %565 = vmatprep.subr.mxu0 0.0
    %566 = vmatpush1.msra.mxu0 %v445
    %567 = vmatprep.subr.mxu0 0.0
    %568 = vmatpush1.msra.mxu0 %v444
    %569 = vmatprep.subr.mxu0 0.0
    %570 = vmatpush1.msra.mxu0 %v443
    %571 = vmatprep.subr.mxu0 0.0
    %572 = vmatpush1.msra.mxu0 %v442
    %573 = vmatprep.subr.mxu0 0.0
    %574 = vmatpush1.msra.mxu0 %v441
    %575 = vmatprep.subr.mxu0 0.0
    %576 = vmatpush1.msra.mxu0 %v440
    %577 = vmatprep.subr.mxu0 0.0
    %578 = vmatpush1.msra.mxu0 %v439
    %579 = vmatprep.subr.mxu0 0.0
    %580 = vmatpush1.msra.mxu0 %v438
    %581 = vmatprep.subr.mxu0 0.0
    %582 = vmatpush1.msra.mxu0 %v437
    %583 = vmatprep.subr.mxu0 0.0
    %584 = vmatpush2.msra.mxu0 0.0
    %585 = vmatprep.subr.mxu0 0.0
    %586 = vmatpush2.msra.mxu0 0.0
    %587 = vmatprep.subr.mxu0 0.0
    %588 = vmatpush2.msra.mxu0 0.0
    %589 = vmatprep.subr.mxu0 0.0
    %590 = vmatpush2.msra.mxu0 0.0
    %591 = vmatprep.subr.mxu0 0.0
    %592 = vmatpush2.msra.mxu0 0.0
    %593 = vmatprep.subr.mxu0 0.0
    %594 = vmatpush2.msra.mxu0 0.0
    %595 = vmatprep.subr.mxu0 0.0
    %596 = vmatpush2.msra.mxu0 0.0
    %597 = vmatprep.subr.mxu0 0.0
    %598 = vmatpush2.msra.mxu0 0.0
    %599 = vmatprep.subr.mxu0 0.0
    %600 = vmatpush2.msra.mxu0 0.0
    %601 = vmatprep.subr.mxu0 0.0
    %602 = vmatpush2.msra.mxu0 0.0
    %603 = vmatprep.subr.mxu0 0.0
    %604 = vmatpush2.msra.mxu0 0.0
    %605 = vmatprep.subr.mxu0 0.0
    %606 = vmatpush2.msra.mxu0 0.0
    %607 = vmatprep.subr.mxu0 0.0
    %608 = vmatpush2.msra.mxu0 0.0
    %609 = vmatprep.subr.mxu0 0.0
    %610 = vmatpush2.msra.mxu0 0.0
    %611 = vmatprep.subr.mxu0 0.0
    %612 = vmatpush2.msra.mxu0 0.0
    %613 = vmatprep.subr.mxu0 0.0
    %614 = vmatpush2.msra.mxu0 0.0
    %615 = vmatprep.mubr.f32.mxu0 0.0
    %616 = vmatmul.mubr.f32.gmra.mxu0 %v547
    %v617 = vpop.f32.mrf.mxu0
    %v618 = vadd.f32 0.0, %v617
    %v619 = vpop.f32.mrf.mxu0
    %620 = vmatprep.mubr.f32.mxu0 0.0
    %621 = vmatmul.mubr.f32.gmra.mxu0 %v548
    %v622 = vpop.f32.mrf.mxu0
    %v623 = vadd.f32 0.0, %v622
    %v624 = vpop.f32.mrf.mxu0
    %625 = vmatprep.mubr.f32.mxu0 0.0
    %626 = vmatmul.mubr.f32.gmra.mxu0 %v549
    %v627 = vpop.f32.mrf.mxu0
    %v628 = vadd.f32 0.0, %v627
    %v629 = vpop.f32.mrf.mxu0
    %630 = vmatprep.mubr.f32.mxu0 0.0
    %631 = vmatmul.mubr.f32.gmra.mxu0 %v550
    %v632 = vpop.f32.mrf.mxu0
    %v633 = vadd.f32 0.0, %v632
    %v634 = vpop.f32.mrf.mxu0
    %635 = vdwg.mxu0
    %s636 = scalar_lea.vmem %s5, 32
    %v637 = vld [vmem:[%s636] sm:$0xff]
    %v638 = vld [vmem:[%s636 + $0x8] sm:$0xff]
    %v639 = vld [vmem:[%s636 + $0x10] sm:$0xff]
    %v640 = vld [vmem:[%s636 + $0x18] sm:$0xff]
    %v642 = vsel %vm269, %v618, 0
    %v645 = vsel %vm269, %v623, 0
    %v648 = vsel %vm269, %v628, 0
    %v651 = vsel %vm269, %v633, 0
    %653 = vmatprep.subr.mxu0 0.0
    %654 = vmatpush1.msra.mxu0 0.0
    %655 = vmatprep.subr.mxu0 0.0
    %656 = vmatpush1.msra.mxu0 0.0
    %657 = vmatprep.subr.mxu0 0.0
    %658 = vmatpush1.msra.mxu0 0.0
    %659 = vmatprep.subr.mxu0 0.0
    %660 = vmatpush1.msra.mxu0 0.0
    %661 = vmatprep.subr.mxu0 0.0
    %662 = vmatpush1.msra.mxu0 0.0
    %663 = vmatprep.subr.mxu0 0.0
    %664 = vmatpush1.msra.mxu0 0.0
    %665 = vmatprep.subr.mxu0 0.0
    %666 = vmatpush1.msra.mxu0 0.0
    %667 = vmatprep.subr.mxu0 0.0
    %668 = vmatpush1.msra.mxu0 0.0
    %669 = vmatprep.subr.mxu0 0.0
    %670 = vmatpush1.msra.mxu0 0.0
    %671 = vmatprep.subr.mxu0 0.0
    %672 = vmatpush1.msra.mxu0 0.0
    %673 = vmatprep.subr.mxu0 0.0
    %674 = vmatpush1.msra.mxu0 0.0
    %675 = vmatprep.subr.mxu0 0.0
    %676 = vmatpush1.msra.mxu0 0.0
    %677 = vmatprep.subr.mxu0 0.0
    %678 = vmatpush1.msra.mxu0 %v640
    %679 = vmatprep.subr.mxu0 0.0
    %680 = vmatpush1.msra.mxu0 %v639
    %681 = vmatprep.subr.mxu0 0.0
    %682 = vmatpush1.msra.mxu0 %v638
    %683 = vmatprep.subr.mxu0 0.0
    %684 = vmatpush1.msra.mxu0 %v637
    %685 = vmatprep.subr.mxu0 0.0
    %686 = vmatpush2.msra.mxu0 0.0
    %687 = vmatprep.subr.mxu0 0.0
    %688 = vmatpush2.msra.mxu0 0.0
    %689 = vmatprep.subr.mxu0 0.0
    %690 = vmatpush2.msra.mxu0 0.0
    %691 = vmatprep.subr.mxu0 0.0
    %692 = vmatpush2.msra.mxu0 0.0
    %693 = vmatprep.subr.mxu0 0.0
    %694 = vmatpush2.msra.mxu0 0.0
    %695 = vmatprep.subr.mxu0 0.0
    %696 = vmatpush2.msra.mxu0 0.0
    %697 = vmatprep.subr.mxu0 0.0
    %698 = vmatpush2.msra.mxu0 0.0
    %699 = vmatprep.subr.mxu0 0.0
    %700 = vmatpush2.msra.mxu0 0.0
    %701 = vmatprep.subr.mxu0 0.0
    %702 = vmatpush2.msra.mxu0 0.0
    %703 = vmatprep.subr.mxu0 0.0
    %704 = vmatpush2.msra.mxu0 0.0
    %705 = vmatprep.subr.mxu0 0.0
    %706 = vmatpush2.msra.mxu0 0.0
    %707 = vmatprep.subr.mxu0 0.0
    %708 = vmatpush2.msra.mxu0 0.0
    %709 = vmatprep.subr.mxu0 0.0
    %710 = vmatpush2.msra.mxu0 0.0
    %711 = vmatprep.subr.mxu0 0.0
    %712 = vmatpush2.msra.mxu0 0.0
    %713 = vmatprep.subr.mxu0 0.0
    %714 = vmatpush2.msra.mxu0 0.0
    %715 = vmatprep.subr.mxu0 0.0
    %716 = vmatpush2.msra.mxu0 0.0
    %717 = vmatprep.mubr.f32.mxu0 0.0
    %718 = vmatmul.mubr.f32.gmra.mxu0 %v642
    %v719 = vpop.f32.mrf.mxu0
    %v720 = vadd.f32 0.0, %v719
    %v721 = vpop.f32.mrf.mxu0
    %722 = vmatprep.mubr.f32.mxu0 0.0
    %723 = vmatmul.mubr.f32.gmra.mxu0 %v645
    %v724 = vpop.f32.mrf.mxu0
    %v725 = vadd.f32 0.0, %v724
    %v726 = vpop.f32.mrf.mxu0
    %727 = vmatprep.mubr.f32.mxu0 0.0
    %728 = vmatmul.mubr.f32.gmra.mxu0 %v648
    %v729 = vpop.f32.mrf.mxu0
    %v730 = vadd.f32 0.0, %v729
    %v731 = vpop.f32.mrf.mxu0
    %732 = vmatprep.mubr.f32.mxu0 0.0
    %733 = vmatmul.mubr.f32.gmra.mxu0 %v651
    %v734 = vpop.f32.mrf.mxu0
    %v735 = vadd.f32 0.0, %v734
    %v736 = vpop.f32.mrf.mxu0
    %737 = vdwg.mxu0
    %v739 = vsel %vm269, %v524, 0
    %v742 = vsel %vm269, %v529, 0
    %v745 = vsel %vm269, %v534, 0
    %v748 = vsel %vm269, %v539, 0
    %750 = vmatprep.subr.mxu0 0.0
    %751 = vmatpush1.msra.mxu0 0.0
    %752 = vmatprep.subr.mxu0 0.0
    %753 = vmatpush1.msra.mxu0 0.0
    %754 = vmatprep.subr.mxu0 0.0
    %755 = vmatpush1.msra.mxu0 0.0
    %756 = vmatprep.subr.mxu0 0.0
    %757 = vmatpush1.msra.mxu0 0.0
    %758 = vmatprep.subr.mxu0 0.0
    %759 = vmatpush1.msra.mxu0 0.0
    %760 = vmatprep.subr.mxu0 0.0
    %761 = vmatpush1.msra.mxu0 0.0
    %762 = vmatprep.subr.mxu0 0.0
    %763 = vmatpush1.msra.mxu0 0.0
    %764 = vmatprep.subr.mxu0 0.0
    %765 = vmatpush1.msra.mxu0 0.0
    %766 = vmatprep.subr.mxu0 0.0
    %767 = vmatpush1.msra.mxu0 0.0
    %768 = vmatprep.subr.mxu0 0.0
    %769 = vmatpush1.msra.mxu0 0.0
    %770 = vmatprep.subr.mxu0 0.0
    %771 = vmatpush1.msra.mxu0 0.0
    %772 = vmatprep.subr.mxu0 0.0
    %773 = vmatpush1.msra.mxu0 0.0
    %774 = vmatprep.subr.mxu0 0.0
    %775 = vmatpush1.msra.mxu0 %v545
    %776 = vmatprep.subr.mxu0 0.0
    %777 = vmatpush1.msra.mxu0 %v544
    %778 = vmatprep.subr.mxu0 0.0
    %779 = vmatpush1.msra.mxu0 %v543
    %780 = vmatprep.subr.mxu0 0.0
    %781 = vmatpush1.msra.mxu0 %v542
    %782 = vmatprep.subr.mxu0 0.0
    %783 = vmatpush2.msra.mxu0 0.0
    %784 = vmatprep.subr.mxu0 0.0
    %785 = vmatpush2.msra.mxu0 0.0
    %786 = vmatprep.subr.mxu0 0.0
    %787 = vmatpush2.msra.mxu0 0.0
    %788 = vmatprep.subr.mxu0 0.0
    %789 = vmatpush2.msra.mxu0 0.0
    %790 = vmatprep.subr.mxu0 0.0
    %791 = vmatpush2.msra.mxu0 0.0
    %792 = vmatprep.subr.mxu0 0.0
    %793 = vmatpush2.msra.mxu0 0.0
    %794 = vmatprep.subr.mxu0 0.0
    %795 = vmatpush2.msra.mxu0 0.0
    %796 = vmatprep.subr.mxu0 0.0
    %797 = vmatpush2.msra.mxu0 0.0
    %798 = vmatprep.subr.mxu0 0.0
    %799 = vmatpush2.msra.mxu0 0.0
    %800 = vmatprep.subr.mxu0 0.0
    %801 = vmatpush2.msra.mxu0 0.0
    %802 = vmatprep.subr.mxu0 0.0
    %803 = vmatpush2.msra.mxu0 0.0
    %804 = vmatprep.subr.mxu0 0.0
    %805 = vmatpush2.msra.mxu0 0.0
    %806 = vmatprep.subr.mxu0 0.0
    %807 = vmatpush2.msra.mxu0 0.0
    %808 = vmatprep.subr.mxu0 0.0
    %809 = vmatpush2.msra.mxu0 0.0
    %810 = vmatprep.subr.mxu0 0.0
    %811 = vmatpush2.msra.mxu0 0.0
    %812 = vmatprep.subr.mxu0 0.0
    %813 = vmatpush2.msra.mxu0 0.0
    %814 = vmatprep.mubr.f32.mxu0 0.0
    %815 = vmatmul.mubr.f32.gmra.mxu0 %v739
    %v816 = vpop.f32.mrf.mxu0
    %v817 = vadd.f32 %v720, %v816
    %v818 = vpop.f32.mrf.mxu0
    %819 = vmatprep.mubr.f32.mxu0 0.0
    %820 = vmatmul.mubr.f32.gmra.mxu0 %v742
    %v821 = vpop.f32.mrf.mxu0
    %v822 = vadd.f32 %v725, %v821
    %v823 = vpop.f32.mrf.mxu0
    %824 = vmatprep.mubr.f32.mxu0 0.0
    %825 = vmatmul.mubr.f32.gmra.mxu0 %v745
    %v826 = vpop.f32.mrf.mxu0
    %v827 = vadd.f32 %v730, %v826
    %v828 = vpop.f32.mrf.mxu0
    %829 = vmatprep.mubr.f32.mxu0 0.0
    %830 = vmatmul.mubr.f32.gmra.mxu0 %v748
    %v831 = vpop.f32.mrf.mxu0
    %v832 = vadd.f32 %v735, %v831
    %v833 = vpop.f32.mrf.mxu0
    %834 = vdwg.mxu0
    %s835 = scalar_lea.vmem %s2, 64
    %v836 = vld [vmem:[%s835] sm:$0xff]
    %v837 = vld [vmem:[%s835 + $0x8] sm:$0xff]
    %v838 = vld [vmem:[%s835 + $0x10] sm:$0xff]
    %v839 = vld [vmem:[%s835 + $0x18] sm:$0xff]
    %840 = vmatprep.subr.mxu0 0.0
    %841 = vmatpush1.msra.mxu0 %v452
    %842 = vmatprep.subr.mxu0 0.0
    %843 = vmatpush1.msra.mxu0 %v451
    %844 = vmatprep.subr.mxu0 0.0
    %845 = vmatpush1.msra.mxu0 %v450
    %846 = vmatprep.subr.mxu0 0.0
    %847 = vmatpush1.msra.mxu0 %v449
    %848 = vmatprep.subr.mxu0 0.0
    %849 = vmatpush1.msra.mxu0 %v448
    %850 = vmatprep.subr.mxu0 0.0
    %851 = vmatpush1.msra.mxu0 %v447
    %852 = vmatprep.subr.mxu0 0.0
    %853 = vmatpush1.msra.mxu0 %v446
    %854 = vmatprep.subr.mxu0 0.0
    %855 = vmatpush1.msra.mxu0 %v445
    %856 = vmatprep.subr.mxu0 0.0
    %857 = vmatpush1.msra.mxu0 %v444
    %858 = vmatprep.subr.mxu0 0.0
    %859 = vmatpush1.msra.mxu0 %v443
    %860 = vmatprep.subr.mxu0 0.0
    %861 = vmatpush1.msra.mxu0 %v442
    %862 = vmatprep.subr.mxu0 0.0
    %863 = vmatpush1.msra.mxu0 %v441
    %864 = vmatprep.subr.mxu0 0.0
    %865 = vmatpush1.msra.mxu0 %v440
    %866 = vmatprep.subr.mxu0 0.0
    %867 = vmatpush1.msra.mxu0 %v439
    %868 = vmatprep.subr.mxu0 0.0
    %869 = vmatpush1.msra.mxu0 %v438
    %870 = vmatprep.subr.mxu0 0.0
    %871 = vmatpush1.msra.mxu0 %v437
    %872 = vmatprep.subr.mxu0 0.0
    %873 = vmatpush2.msra.mxu0 0.0
    %874 = vmatprep.subr.mxu0 0.0
    %875 = vmatpush2.msra.mxu0 0.0
    %876 = vmatprep.subr.mxu0 0.0
    %877 = vmatpush2.msra.mxu0 0.0
    %878 = vmatprep.subr.mxu0 0.0
    %879 = vmatpush2.msra.mxu0 0.0
    %880 = vmatprep.subr.mxu0 0.0
    %881 = vmatpush2.msra.mxu0 0.0
    %882 = vmatprep.subr.mxu0 0.0
    %883 = vmatpush2.msra.mxu0 0.0
    %884 = vmatprep.subr.mxu0 0.0
    %885 = vmatpush2.msra.mxu0 0.0
    %886 = vmatprep.subr.mxu0 0.0
    %887 = vmatpush2.msra.mxu0 0.0
    %888 = vmatprep.subr.mxu0 0.0
    %889 = vmatpush2.msra.mxu0 0.0
    %890 = vmatprep.subr.mxu0 0.0
    %891 = vmatpush2.msra.mxu0 0.0
    %892 = vmatprep.subr.mxu0 0.0
    %893 = vmatpush2.msra.mxu0 0.0
    %894 = vmatprep.subr.mxu0 0.0
    %895 = vmatpush2.msra.mxu0 0.0
    %896 = vmatprep.subr.mxu0 0.0
    %897 = vmatpush2.msra.mxu0 0.0
    %898 = vmatprep.subr.mxu0 0.0
    %899 = vmatpush2.msra.mxu0 0.0
    %900 = vmatprep.subr.mxu0 0.0
    %901 = vmatpush2.msra.mxu0 0.0
    %902 = vmatprep.subr.mxu0 0.0
    %903 = vmatpush2.msra.mxu0 0.0
    %904 = vmatprep.mubr.f32.mxu0 0.0
    %905 = vmatmul.mubr.f32.gmra.mxu0 %v836
    %v906 = vpop.f32.mrf.mxu0
    %v907 = vadd.f32 0.0, %v906
    %v908 = vpop.f32.mrf.mxu0
    %909 = vmatprep.mubr.f32.mxu0 0.0
    %910 = vmatmul.mubr.f32.gmra.mxu0 %v837
    %v911 = vpop.f32.mrf.mxu0
    %v912 = vadd.f32 0.0, %v911
    %v913 = vpop.f32.mrf.mxu0
    %914 = vmatprep.mubr.f32.mxu0 0.0
    %915 = vmatmul.mubr.f32.gmra.mxu0 %v838
    %v916 = vpop.f32.mrf.mxu0
    %v917 = vadd.f32 0.0, %v916
    %v918 = vpop.f32.mrf.mxu0
    %919 = vmatprep.mubr.f32.mxu0 0.0
    %920 = vmatmul.mubr.f32.gmra.mxu0 %v839
    %v921 = vpop.f32.mrf.mxu0
    %v922 = vadd.f32 0.0, %v921
    %v923 = vpop.f32.mrf.mxu0
    %924 = vdwg.mxu0
    %s925 = scalar_lea.vmem %s5, 64
    %v926 = vld [vmem:[%s925] sm:$0xff]
    %v927 = vld [vmem:[%s925 + $0x8] sm:$0xff]
    %v928 = vld [vmem:[%s925 + $0x10] sm:$0xff]
    %v929 = vld [vmem:[%s925 + $0x18] sm:$0xff]
    %v931 = vsel %vm269, %v907, 0
    %v934 = vsel %vm269, %v912, 0
    %v937 = vsel %vm269, %v917, 0
    %v940 = vsel %vm269, %v922, 0
    %942 = vmatprep.subr.mxu0 0.0
    %943 = vmatpush1.msra.mxu0 0.0
    %944 = vmatprep.subr.mxu0 0.0
    %945 = vmatpush1.msra.mxu0 0.0
    %946 = vmatprep.subr.mxu0 0.0
    %947 = vmatpush1.msra.mxu0 0.0
    %948 = vmatprep.subr.mxu0 0.0
    %949 = vmatpush1.msra.mxu0 0.0
    %950 = vmatprep.subr.mxu0 0.0
    %951 = vmatpush1.msra.mxu0 0.0
    %952 = vmatprep.subr.mxu0 0.0
    %953 = vmatpush1.msra.mxu0 0.0
    %954 = vmatprep.subr.mxu0 0.0
    %955 = vmatpush1.msra.mxu0 0.0
    %956 = vmatprep.subr.mxu0 0.0
    %957 = vmatpush1.msra.mxu0 0.0
    %958 = vmatprep.subr.mxu0 0.0
    %959 = vmatpush1.msra.mxu0 0.0
    %960 = vmatprep.subr.mxu0 0.0
    %961 = vmatpush1.msra.mxu0 0.0
    %962 = vmatprep.subr.mxu0 0.0
    %963 = vmatpush1.msra.mxu0 0.0
    %964 = vmatprep.subr.mxu0 0.0
    %965 = vmatpush1.msra.mxu0 0.0
    %966 = vmatprep.subr.mxu0 0.0
    %967 = vmatpush1.msra.mxu0 %v929
    %968 = vmatprep.subr.mxu0 0.0
    %969 = vmatpush1.msra.mxu0 %v928
    %970 = vmatprep.subr.mxu0 0.0
    %971 = vmatpush1.msra.mxu0 %v927
    %972 = vmatprep.subr.mxu0 0.0
    %973 = vmatpush1.msra.mxu0 %v926
    %974 = vmatprep.subr.mxu0 0.0
    %975 = vmatpush2.msra.mxu0 0.0
    %976 = vmatprep.subr.mxu0 0.0
    %977 = vmatpush2.msra.mxu0 0.0
    %978 = vmatprep.subr.mxu0 0.0
    %979 = vmatpush2.msra.mxu0 0.0
    %980 = vmatprep.subr.mxu0 0.0
    %981 = vmatpush2.msra.mxu0 0.0
    %982 = vmatprep.subr.mxu0 0.0
    %983 = vmatpush2.msra.mxu0 0.0
    %984 = vmatprep.subr.mxu0 0.0
    %985 = vmatpush2.msra.mxu0 0.0
    %986 = vmatprep.subr.mxu0 0.0
    %987 = vmatpush2.msra.mxu0 0.0
    %988 = vmatprep.subr.mxu0 0.0
    %989 = vmatpush2.msra.mxu0 0.0
    %990 = vmatprep.subr.mxu0 0.0
    %991 = vmatpush2.msra.mxu0 0.0
    %992 = vmatprep.subr.mxu0 0.0
    %993 = vmatpush2.msra.mxu0 0.0
    %994 = vmatprep.subr.mxu0 0.0
    %995 = vmatpush2.msra.mxu0 0.0
    %996 = vmatprep.subr.mxu0 0.0
    %997 = vmatpush2.msra.mxu0 0.0
    %998 = vmatprep.subr.mxu0 0.0
    %999 = vmatpush2.msra.mxu0 0.0
    %1000 = vmatprep.subr.mxu0 0.0
    %1001 = vmatpush2.msra.mxu0 0.0
    %1002 = vmatprep.subr.mxu0 0.0
    %1003 = vmatpush2.msra.mxu0 0.0
    %1004 = vmatprep.subr.mxu0 0.0
    %1005 = vmatpush2.msra.mxu0 0.0
    %1006 = vmatprep.mubr.f32.mxu0 0.0
    %1007 = vmatmul.mubr.f32.gmra.mxu0 %v931
    %v1008 = vpop.f32.mrf.mxu0
    %v1009 = vadd.f32 0.0, %v1008
    %v1010 = vpop.f32.mrf.mxu0
    %1011 = vmatprep.mubr.f32.mxu0 0.0
    %1012 = vmatmul.mubr.f32.gmra.mxu0 %v934
    %v1013 = vpop.f32.mrf.mxu0
    %v1014 = vadd.f32 0.0, %v1013
    %v1015 = vpop.f32.mrf.mxu0
    %1016 = vmatprep.mubr.f32.mxu0 0.0
    %1017 = vmatmul.mubr.f32.gmra.mxu0 %v937
    %v1018 = vpop.f32.mrf.mxu0
    %v1019 = vadd.f32 0.0, %v1018
    %v1020 = vpop.f32.mrf.mxu0
    %1021 = vmatprep.mubr.f32.mxu0 0.0
    %1022 = vmatmul.mubr.f32.gmra.mxu0 %v940
    %v1023 = vpop.f32.mrf.mxu0
    %v1024 = vadd.f32 0.0, %v1023
    %v1025 = vpop.f32.mrf.mxu0
    %1026 = vdwg.mxu0
    %v1027 = vadd.f32 %v817, %v1009
    %v1028 = vadd.f32 %v822, %v1014
    %v1029 = vadd.f32 %v827, %v1019
    %v1030 = vadd.f32 %v832, %v1024
    %s1031 = scalar_lea.vmem %s2, 96
    %v1032 = vld [vmem:[%s1031] sm:$0xff]
    %v1033 = vld [vmem:[%s1031 + $0x8] sm:$0xff]
    %v1034 = vld [vmem:[%s1031 + $0x10] sm:$0xff]
    %v1035 = vld [vmem:[%s1031 + $0x18] sm:$0xff]
    %1036 = vmatprep.subr.mxu0 0.0
    %1037 = vmatpush1.msra.mxu0 %v452
    %1038 = vmatprep.subr.mxu0 0.0
    %1039 = vmatpush1.msra.mxu0 %v451
    %1040 = vmatprep.subr.mxu0 0.0
    %1041 = vmatpush1.msra.mxu0 %v450
    %1042 = vmatprep.subr.mxu0 0.0
    %1043 = vmatpush1.msra.mxu0 %v449
    %1044 = vmatprep.subr.mxu0 0.0
    %1045 = vmatpush1.msra.mxu0 %v448
    %1046 = vmatprep.subr.mxu0 0.0
    %1047 = vmatpush1.msra.mxu0 %v447
    %1048 = vmatprep.subr.mxu0 0.0
    %1049 = vmatpush1.msra.mxu0 %v446
    %1050 = vmatprep.subr.mxu0 0.0
    %1051 = vmatpush1.msra.mxu0 %v445
    %1052 = vmatprep.subr.mxu0 0.0
    %1053 = vmatpush1.msra.mxu0 %v444
    %1054 = vmatprep.subr.mxu0 0.0
    %1055 = vmatpush1.msra.mxu0 %v443
    %1056 = vmatprep.subr.mxu0 0.0
    %1057 = vmatpush1.msra.mxu0 %v442
    %1058 = vmatprep.subr.mxu0 0.0
    %1059 = vmatpush1.msra.mxu0 %v441
    %1060 = vmatprep.subr.mxu0 0.0
    %1061 = vmatpush1.msra.mxu0 %v440
    %1062 = vmatprep.subr.mxu0 0.0
    %1063 = vmatpush1.msra.mxu0 %v439
    %1064 = vmatprep.subr.mxu0 0.0
    %1065 = vmatpush1.msra.mxu0 %v438
    %1066 = vmatprep.subr.mxu0 0.0
    %1067 = vmatpush1.msra.mxu0 %v437
    %1068 = vmatprep.subr.mxu0 0.0
    %1069 = vmatpush2.msra.mxu0 0.0
    %1070 = vmatprep.subr.mxu0 0.0
    %1071 = vmatpush2.msra.mxu0 0.0
    %1072 = vmatprep.subr.mxu0 0.0
    %1073 = vmatpush2.msra.mxu0 0.0
    %1074 = vmatprep.subr.mxu0 0.0
    %1075 = vmatpush2.msra.mxu0 0.0
    %1076 = vmatprep.subr.mxu0 0.0
    %1077 = vmatpush2.msra.mxu0 0.0
    %1078 = vmatprep.subr.mxu0 0.0
    %1079 = vmatpush2.msra.mxu0 0.0
    %1080 = vmatprep.subr.mxu0 0.0
    %1081 = vmatpush2.msra.mxu0 0.0
    %1082 = vmatprep.subr.mxu0 0.0
    %1083 = vmatpush2.msra.mxu0 0.0
    %1084 = vmatprep.subr.mxu0 0.0
    %1085 = vmatpush2.msra.mxu0 0.0
    %1086 = vmatprep.subr.mxu0 0.0
    %1087 = vmatpush2.msra.mxu0 0.0
    %1088 = vmatprep.subr.mxu0 0.0
    %1089 = vmatpush2.msra.mxu0 0.0
    %1090 = vmatprep.subr.mxu0 0.0
    %1091 = vmatpush2.msra.mxu0 0.0
    %1092 = vmatprep.subr.mxu0 0.0
    %1093 = vmatpush2.msra.mxu0 0.0
    %1094 = vmatprep.subr.mxu0 0.0
    %1095 = vmatpush2.msra.mxu0 0.0
    %1096 = vmatprep.subr.mxu0 0.0
    %1097 = vmatpush2.msra.mxu0 0.0
    %1098 = vmatprep.subr.mxu0 0.0
    %1099 = vmatpush2.msra.mxu0 0.0
    %1100 = vmatprep.mubr.f32.mxu0 0.0
    %1101 = vmatmul.mubr.f32.gmra.mxu0 %v1032
    %v1102 = vpop.f32.mrf.mxu0
    %v1103 = vadd.f32 0.0, %v1102
    %v1104 = vpop.f32.mrf.mxu0
    %1105 = vmatprep.mubr.f32.mxu0 0.0
    %1106 = vmatmul.mubr.f32.gmra.mxu0 %v1033
    %v1107 = vpop.f32.mrf.mxu0
    %v1108 = vadd.f32 0.0, %v1107
    %v1109 = vpop.f32.mrf.mxu0
    %1110 = vmatprep.mubr.f32.mxu0 0.0
    %1111 = vmatmul.mubr.f32.gmra.mxu0 %v1034
    %v1112 = vpop.f32.mrf.mxu0
    %v1113 = vadd.f32 0.0, %v1112
    %v1114 = vpop.f32.mrf.mxu0
    %1115 = vmatprep.mubr.f32.mxu0 0.0
    %1116 = vmatmul.mubr.f32.gmra.mxu0 %v1035
    %v1117 = vpop.f32.mrf.mxu0
    %v1118 = vadd.f32 0.0, %v1117
    %v1119 = vpop.f32.mrf.mxu0
    %1120 = vdwg.mxu0
    %s1121 = scalar_lea.vmem %s5, 96
    %v1122 = vld [vmem:[%s1121] sm:$0xff]
    %v1123 = vld [vmem:[%s1121 + $0x8] sm:$0xff]
    %v1124 = vld [vmem:[%s1121 + $0x10] sm:$0xff]
    %v1125 = vld [vmem:[%s1121 + $0x18] sm:$0xff]
    %v1127 = vsel %vm269, %v1103, 0
    %v1130 = vsel %vm269, %v1108, 0
    %v1133 = vsel %vm269, %v1113, 0
    %v1136 = vsel %vm269, %v1118, 0
    %1138 = vmatprep.subr.mxu0 0.0
    %1139 = vmatpush1.msra.mxu0 0.0
    %1140 = vmatprep.subr.mxu0 0.0
    %1141 = vmatpush1.msra.mxu0 0.0
    %1142 = vmatprep.subr.mxu0 0.0
    %1143 = vmatpush1.msra.mxu0 0.0
    %1144 = vmatprep.subr.mxu0 0.0
    %1145 = vmatpush1.msra.mxu0 0.0
    %1146 = vmatprep.subr.mxu0 0.0
    %1147 = vmatpush1.msra.mxu0 0.0
    %1148 = vmatprep.subr.mxu0 0.0
    %1149 = vmatpush1.msra.mxu0 0.0
    %1150 = vmatprep.subr.mxu0 0.0
    %1151 = vmatpush1.msra.mxu0 0.0
    %1152 = vmatprep.subr.mxu0 0.0
    %1153 = vmatpush1.msra.mxu0 0.0
    %1154 = vmatprep.subr.mxu0 0.0
    %1155 = vmatpush1.msra.mxu0 0.0
    %1156 = vmatprep.subr.mxu0 0.0
    %1157 = vmatpush1.msra.mxu0 0.0
    %1158 = vmatprep.subr.mxu0 0.0
    %1159 = vmatpush1.msra.mxu0 0.0
    %1160 = vmatprep.subr.mxu0 0.0
    %1161 = vmatpush1.msra.mxu0 0.0
    %1162 = vmatprep.subr.mxu0 0.0
    %1163 = vmatpush1.msra.mxu0 %v1125
    %1164 = vmatprep.subr.mxu0 0.0
    %1165 = vmatpush1.msra.mxu0 %v1124
    %1166 = vmatprep.subr.mxu0 0.0
    %1167 = vmatpush1.msra.mxu0 %v1123
    %1168 = vmatprep.subr.mxu0 0.0
    %1169 = vmatpush1.msra.mxu0 %v1122
    %1170 = vmatprep.subr.mxu0 0.0
    %1171 = vmatpush2.msra.mxu0 0.0
    %1172 = vmatprep.subr.mxu0 0.0
    %1173 = vmatpush2.msra.mxu0 0.0
    %1174 = vmatprep.subr.mxu0 0.0
    %1175 = vmatpush2.msra.mxu0 0.0
    %1176 = vmatprep.subr.mxu0 0.0
    %1177 = vmatpush2.msra.mxu0 0.0
    %1178 = vmatprep.subr.mxu0 0.0
    %1179 = vmatpush2.msra.mxu0 0.0
    %1180 = vmatprep.subr.mxu0 0.0
    %1181 = vmatpush2.msra.mxu0 0.0
    %1182 = vmatprep.subr.mxu0 0.0
    %1183 = vmatpush2.msra.mxu0 0.0
    %1184 = vmatprep.subr.mxu0 0.0
    %1185 = vmatpush2.msra.mxu0 0.0
    %1186 = vmatprep.subr.mxu0 0.0
    %1187 = vmatpush2.msra.mxu0 0.0
    %1188 = vmatprep.subr.mxu0 0.0
    %1189 = vmatpush2.msra.mxu0 0.0
    %1190 = vmatprep.subr.mxu0 0.0
    %1191 = vmatpush2.msra.mxu0 0.0
    %1192 = vmatprep.subr.mxu0 0.0
    %1193 = vmatpush2.msra.mxu0 0.0
    %1194 = vmatprep.subr.mxu0 0.0
    %1195 = vmatpush2.msra.mxu0 0.0
    %1196 = vmatprep.subr.mxu0 0.0
    %1197 = vmatpush2.msra.mxu0 0.0
    %1198 = vmatprep.subr.mxu0 0.0
    %1199 = vmatpush2.msra.mxu0 0.0
    %1200 = vmatprep.subr.mxu0 0.0
    %1201 = vmatpush2.msra.mxu0 0.0
    %1202 = vmatprep.mubr.f32.mxu0 0.0
    %1203 = vmatmul.mubr.f32.gmra.mxu0 %v1127
    %v1204 = vpop.f32.mrf.mxu0
    %v1205 = vadd.f32 0.0, %v1204
    %v1206 = vpop.f32.mrf.mxu0
    %1207 = vmatprep.mubr.f32.mxu0 0.0
    %1208 = vmatmul.mubr.f32.gmra.mxu0 %v1130
    %v1209 = vpop.f32.mrf.mxu0
    %v1210 = vadd.f32 0.0, %v1209
    %v1211 = vpop.f32.mrf.mxu0
    %1212 = vmatprep.mubr.f32.mxu0 0.0
    %1213 = vmatmul.mubr.f32.gmra.mxu0 %v1133
    %v1214 = vpop.f32.mrf.mxu0
    %v1215 = vadd.f32 0.0, %v1214
    %v1216 = vpop.f32.mrf.mxu0
    %1217 = vmatprep.mubr.f32.mxu0 0.0
    %1218 = vmatmul.mubr.f32.gmra.mxu0 %v1136
    %v1219 = vpop.f32.mrf.mxu0
    %v1220 = vadd.f32 0.0, %v1219
    %v1221 = vpop.f32.mrf.mxu0
    %1222 = vdwg.mxu0
    %v1223 = vadd.f32 %v1027, %v1205
    %v1224 = vadd.f32 %v1028, %v1210
    %v1225 = vadd.f32 %v1029, %v1215
    %v1226 = vadd.f32 %v1030, %v1220
    %s1227 = scalar_lea.vmem %s2, 128
    %v1228 = vld [vmem:[%s1227] sm:$0xff]
    %v1229 = vld [vmem:[%s1227 + $0x8] sm:$0xff]
    %v1230 = vld [vmem:[%s1227 + $0x10] sm:$0xff]
    %v1231 = vld [vmem:[%s1227 + $0x18] sm:$0xff]
    %1232 = vmatprep.subr.mxu0 0.0
    %1233 = vmatpush1.msra.mxu0 %v452
    %1234 = vmatprep.subr.mxu0 0.0
    %1235 = vmatpush1.msra.mxu0 %v451
    %1236 = vmatprep.subr.mxu0 0.0
    %1237 = vmatpush1.msra.mxu0 %v450
    %1238 = vmatprep.subr.mxu0 0.0
    %1239 = vmatpush1.msra.mxu0 %v449
    %1240 = vmatprep.subr.mxu0 0.0
    %1241 = vmatpush1.msra.mxu0 %v448
    %1242 = vmatprep.subr.mxu0 0.0
    %1243 = vmatpush1.msra.mxu0 %v447
    %1244 = vmatprep.subr.mxu0 0.0
    %1245 = vmatpush1.msra.mxu0 %v446
    %1246 = vmatprep.subr.mxu0 0.0
    %1247 = vmatpush1.msra.mxu0 %v445
    %1248 = vmatprep.subr.mxu0 0.0
    %1249 = vmatpush1.msra.mxu0 %v444
    %1250 = vmatprep.subr.mxu0 0.0
    %1251 = vmatpush1.msra.mxu0 %v443
    %1252 = vmatprep.subr.mxu0 0.0
    %1253 = vmatpush1.msra.mxu0 %v442
    %1254 = vmatprep.subr.mxu0 0.0
    %1255 = vmatpush1.msra.mxu0 %v441
    %1256 = vmatprep.subr.mxu0 0.0
    %1257 = vmatpush1.msra.mxu0 %v440
    %1258 = vmatprep.subr.mxu0 0.0
    %1259 = vmatpush1.msra.mxu0 %v439
    %1260 = vmatprep.subr.mxu0 0.0
    %1261 = vmatpush1.msra.mxu0 %v438
    %1262 = vmatprep.subr.mxu0 0.0
    %1263 = vmatpush1.msra.mxu0 %v437
    %1264 = vmatprep.subr.mxu0 0.0
    %1265 = vmatpush2.msra.mxu0 0.0
    %1266 = vmatprep.subr.mxu0 0.0
    %1267 = vmatpush2.msra.mxu0 0.0
    %1268 = vmatprep.subr.mxu0 0.0
    %1269 = vmatpush2.msra.mxu0 0.0
    %1270 = vmatprep.subr.mxu0 0.0
    %1271 = vmatpush2.msra.mxu0 0.0
    %1272 = vmatprep.subr.mxu0 0.0
    %1273 = vmatpush2.msra.mxu0 0.0
    %1274 = vmatprep.subr.mxu0 0.0
    %1275 = vmatpush2.msra.mxu0 0.0
    %1276 = vmatprep.subr.mxu0 0.0
    %1277 = vmatpush2.msra.mxu0 0.0
    %1278 = vmatprep.subr.mxu0 0.0
    %1279 = vmatpush2.msra.mxu0 0.0
    %1280 = vmatprep.subr.mxu0 0.0
    %1281 = vmatpush2.msra.mxu0 0.0
    %1282 = vmatprep.subr.mxu0 0.0
    %1283 = vmatpush2.msra.mxu0 0.0
    %1284 = vmatprep.subr.mxu0 0.0
    %1285 = vmatpush2.msra.mxu0 0.0
    %1286 = vmatprep.subr.mxu0 0.0
    %1287 = vmatpush2.msra.mxu0 0.0
    %1288 = vmatprep.subr.mxu0 0.0
    %1289 = vmatpush2.msra.mxu0 0.0
    %1290 = vmatprep.subr.mxu0 0.0
    %1291 = vmatpush2.msra.mxu0 0.0
    %1292 = vmatprep.subr.mxu0 0.0
    %1293 = vmatpush2.msra.mxu0 0.0
    %1294 = vmatprep.subr.mxu0 0.0
    %1295 = vmatpush2.msra.mxu0 0.0
    %1296 = vmatprep.mubr.f32.mxu0 0.0
    %1297 = vmatmul.mubr.f32.gmra.mxu0 %v1228
    %v1298 = vpop.f32.mrf.mxu0
    %v1299 = vadd.f32 0.0, %v1298
    %v1300 = vpop.f32.mrf.mxu0
    %1301 = vmatprep.mubr.f32.mxu0 0.0
    %1302 = vmatmul.mubr.f32.gmra.mxu0 %v1229
    %v1303 = vpop.f32.mrf.mxu0
    %v1304 = vadd.f32 0.0, %v1303
    %v1305 = vpop.f32.mrf.mxu0
    %1306 = vmatprep.mubr.f32.mxu0 0.0
    %1307 = vmatmul.mubr.f32.gmra.mxu0 %v1230
    %v1308 = vpop.f32.mrf.mxu0
    %v1309 = vadd.f32 0.0, %v1308
    %v1310 = vpop.f32.mrf.mxu0
    %1311 = vmatprep.mubr.f32.mxu0 0.0
    %1312 = vmatmul.mubr.f32.gmra.mxu0 %v1231
    %v1313 = vpop.f32.mrf.mxu0
    %v1314 = vadd.f32 0.0, %v1313
    %v1315 = vpop.f32.mrf.mxu0
    %1316 = vdwg.mxu0
    %s1317 = scalar_lea.vmem %s5, 128
    %v1318 = vld [vmem:[%s1317] sm:$0xff]
    %v1319 = vld [vmem:[%s1317 + $0x8] sm:$0xff]
    %v1320 = vld [vmem:[%s1317 + $0x10] sm:$0xff]
    %v1321 = vld [vmem:[%s1317 + $0x18] sm:$0xff]
    %v1323 = vsel %vm269, %v1299, 0
    %v1326 = vsel %vm269, %v1304, 0
    %v1329 = vsel %vm269, %v1309, 0
    %v1332 = vsel %vm269, %v1314, 0
    %1334 = vmatprep.subr.mxu0 0.0
    %1335 = vmatpush1.msra.mxu0 0.0
    %1336 = vmatprep.subr.mxu0 0.0
    %1337 = vmatpush1.msra.mxu0 0.0
    %1338 = vmatprep.subr.mxu0 0.0
    %1339 = vmatpush1.msra.mxu0 0.0
    %1340 = vmatprep.subr.mxu0 0.0
    %1341 = vmatpush1.msra.mxu0 0.0
    %1342 = vmatprep.subr.mxu0 0.0
    %1343 = vmatpush1.msra.mxu0 0.0
    %1344 = vmatprep.subr.mxu0 0.0
    %1345 = vmatpush1.msra.mxu0 0.0
    %1346 = vmatprep.subr.mxu0 0.0
    %1347 = vmatpush1.msra.mxu0 0.0
    %1348 = vmatprep.subr.mxu0 0.0
    %1349 = vmatpush1.msra.mxu0 0.0
    %1350 = vmatprep.subr.mxu0 0.0
    %1351 = vmatpush1.msra.mxu0 0.0
    %1352 = vmatprep.subr.mxu0 0.0
    %1353 = vmatpush1.msra.mxu0 0.0
    %1354 = vmatprep.subr.mxu0 0.0
    %1355 = vmatpush1.msra.mxu0 0.0
    %1356 = vmatprep.subr.mxu0 0.0
    %1357 = vmatpush1.msra.mxu0 0.0
    %1358 = vmatprep.subr.mxu0 0.0
    %1359 = vmatpush1.msra.mxu0 %v1321
    %1360 = vmatprep.subr.mxu0 0.0
    %1361 = vmatpush1.msra.mxu0 %v1320
    %1362 = vmatprep.subr.mxu0 0.0
    %1363 = vmatpush1.msra.mxu0 %v1319
    %1364 = vmatprep.subr.mxu0 0.0
    %1365 = vmatpush1.msra.mxu0 %v1318
    %1366 = vmatprep.subr.mxu0 0.0
    %1367 = vmatpush2.msra.mxu0 0.0
    %1368 = vmatprep.subr.mxu0 0.0
    %1369 = vmatpush2.msra.mxu0 0.0
    %1370 = vmatprep.subr.mxu0 0.0
    %1371 = vmatpush2.msra.mxu0 0.0
    %1372 = vmatprep.subr.mxu0 0.0
    %1373 = vmatpush2.msra.mxu0 0.0
    %1374 = vmatprep.subr.mxu0 0.0
    %1375 = vmatpush2.msra.mxu0 0.0
    %1376 = vmatprep.subr.mxu0 0.0
    %1377 = vmatpush2.msra.mxu0 0.0
    %1378 = vmatprep.subr.mxu0 0.0
    %1379 = vmatpush2.msra.mxu0 0.0
    %1380 = vmatprep.subr.mxu0 0.0
    %1381 = vmatpush2.msra.mxu0 0.0
    %1382 = vmatprep.subr.mxu0 0.0
    %1383 = vmatpush2.msra.mxu0 0.0
    %1384 = vmatprep.subr.mxu0 0.0
    %1385 = vmatpush2.msra.mxu0 0.0
    %1386 = vmatprep.subr.mxu0 0.0
    %1387 = vmatpush2.msra.mxu0 0.0
    %1388 = vmatprep.subr.mxu0 0.0
    %1389 = vmatpush2.msra.mxu0 0.0
    %1390 = vmatprep.subr.mxu0 0.0
    %1391 = vmatpush2.msra.mxu0 0.0
    %1392 = vmatprep.subr.mxu0 0.0
    %1393 = vmatpush2.msra.mxu0 0.0
    %1394 = vmatprep.subr.mxu0 0.0
    %1395 = vmatpush2.msra.mxu0 0.0
    %1396 = vmatprep.subr.mxu0 0.0
    %1397 = vmatpush2.msra.mxu0 0.0
    %1398 = vmatprep.mubr.f32.mxu0 0.0
    %1399 = vmatmul.mubr.f32.gmra.mxu0 %v1323
    %v1400 = vpop.f32.mrf.mxu0
    %v1401 = vadd.f32 0.0, %v1400
    %v1402 = vpop.f32.mrf.mxu0
    %1403 = vmatprep.mubr.f32.mxu0 0.0
    %1404 = vmatmul.mubr.f32.gmra.mxu0 %v1326
    %v1405 = vpop.f32.mrf.mxu0
    %v1406 = vadd.f32 0.0, %v1405
    %v1407 = vpop.f32.mrf.mxu0
    %1408 = vmatprep.mubr.f32.mxu0 0.0
    %1409 = vmatmul.mubr.f32.gmra.mxu0 %v1329
    %v1410 = vpop.f32.mrf.mxu0
    %v1411 = vadd.f32 0.0, %v1410
    %v1412 = vpop.f32.mrf.mxu0
    %1413 = vmatprep.mubr.f32.mxu0 0.0
    %1414 = vmatmul.mubr.f32.gmra.mxu0 %v1332
    %v1415 = vpop.f32.mrf.mxu0
    %v1416 = vadd.f32 0.0, %v1415
    %v1417 = vpop.f32.mrf.mxu0
    %1418 = vdwg.mxu0
    %v1419 = vadd.f32 %v1223, %v1401
    %v1420 = vadd.f32 %v1224, %v1406
    %v1421 = vadd.f32 %v1225, %v1411
    %v1422 = vadd.f32 %v1226, %v1416
    %s1423 = scalar_lea.vmem %s2, 160
    %v1424 = vld [vmem:[%s1423] sm:$0xff]
    %v1425 = vld [vmem:[%s1423 + $0x8] sm:$0xff]
    %v1426 = vld [vmem:[%s1423 + $0x10] sm:$0xff]
    %v1427 = vld [vmem:[%s1423 + $0x18] sm:$0xff]
    %1428 = vmatprep.subr.mxu0 0.0
    %1429 = vmatpush1.msra.mxu0 %v452
    %1430 = vmatprep.subr.mxu0 0.0
    %1431 = vmatpush1.msra.mxu0 %v451
    %1432 = vmatprep.subr.mxu0 0.0
    %1433 = vmatpush1.msra.mxu0 %v450
    %1434 = vmatprep.subr.mxu0 0.0
    %1435 = vmatpush1.msra.mxu0 %v449
    %1436 = vmatprep.subr.mxu0 0.0
    %1437 = vmatpush1.msra.mxu0 %v448
    %1438 = vmatprep.subr.mxu0 0.0
    %1439 = vmatpush1.msra.mxu0 %v447
    %1440 = vmatprep.subr.mxu0 0.0
    %1441 = vmatpush1.msra.mxu0 %v446
    %1442 = vmatprep.subr.mxu0 0.0
    %1443 = vmatpush1.msra.mxu0 %v445
    %1444 = vmatprep.subr.mxu0 0.0
    %1445 = vmatpush1.msra.mxu0 %v444
    %1446 = vmatprep.subr.mxu0 0.0
    %1447 = vmatpush1.msra.mxu0 %v443
    %1448 = vmatprep.subr.mxu0 0.0
    %1449 = vmatpush1.msra.mxu0 %v442
    %1450 = vmatprep.subr.mxu0 0.0
    %1451 = vmatpush1.msra.mxu0 %v441
    %1452 = vmatprep.subr.mxu0 0.0
    %1453 = vmatpush1.msra.mxu0 %v440
    %1454 = vmatprep.subr.mxu0 0.0
    %1455 = vmatpush1.msra.mxu0 %v439
    %1456 = vmatprep.subr.mxu0 0.0
    %1457 = vmatpush1.msra.mxu0 %v438
    %1458 = vmatprep.subr.mxu0 0.0
    %1459 = vmatpush1.msra.mxu0 %v437
    %1460 = vmatprep.subr.mxu0 0.0
    %1461 = vmatpush2.msra.mxu0 0.0
    %1462 = vmatprep.subr.mxu0 0.0
    %1463 = vmatpush2.msra.mxu0 0.0
    %1464 = vmatprep.subr.mxu0 0.0
    %1465 = vmatpush2.msra.mxu0 0.0
    %1466 = vmatprep.subr.mxu0 0.0
    %1467 = vmatpush2.msra.mxu0 0.0
    %1468 = vmatprep.subr.mxu0 0.0
    %1469 = vmatpush2.msra.mxu0 0.0
    %1470 = vmatprep.subr.mxu0 0.0
    %1471 = vmatpush2.msra.mxu0 0.0
    %1472 = vmatprep.subr.mxu0 0.0
    %1473 = vmatpush2.msra.mxu0 0.0
    %1474 = vmatprep.subr.mxu0 0.0
    %1475 = vmatpush2.msra.mxu0 0.0
    %1476 = vmatprep.subr.mxu0 0.0
    %1477 = vmatpush2.msra.mxu0 0.0
    %1478 = vmatprep.subr.mxu0 0.0
    %1479 = vmatpush2.msra.mxu0 0.0
    %1480 = vmatprep.subr.mxu0 0.0
    %1481 = vmatpush2.msra.mxu0 0.0
    %1482 = vmatprep.subr.mxu0 0.0
    %1483 = vmatpush2.msra.mxu0 0.0
    %1484 = vmatprep.subr.mxu0 0.0
    %1485 = vmatpush2.msra.mxu0 0.0
    %1486 = vmatprep.subr.mxu0 0.0
    %1487 = vmatpush2.msra.mxu0 0.0
    %1488 = vmatprep.subr.mxu0 0.0
    %1489 = vmatpush2.msra.mxu0 0.0
    %1490 = vmatprep.subr.mxu0 0.0
    %1491 = vmatpush2.msra.mxu0 0.0
    %1492 = vmatprep.mubr.f32.mxu0 0.0
    %1493 = vmatmul.mubr.f32.gmra.mxu0 %v1424
    %v1494 = vpop.f32.mrf.mxu0
    %v1495 = vadd.f32 0.0, %v1494
    %v1496 = vpop.f32.mrf.mxu0
    %1497 = vmatprep.mubr.f32.mxu0 0.0
    %1498 = vmatmul.mubr.f32.gmra.mxu0 %v1425
    %v1499 = vpop.f32.mrf.mxu0
    %v1500 = vadd.f32 0.0, %v1499
    %v1501 = vpop.f32.mrf.mxu0
    %1502 = vmatprep.mubr.f32.mxu0 0.0
    %1503 = vmatmul.mubr.f32.gmra.mxu0 %v1426
    %v1504 = vpop.f32.mrf.mxu0
    %v1505 = vadd.f32 0.0, %v1504
    %v1506 = vpop.f32.mrf.mxu0
    %1507 = vmatprep.mubr.f32.mxu0 0.0
    %1508 = vmatmul.mubr.f32.gmra.mxu0 %v1427
    %v1509 = vpop.f32.mrf.mxu0
    %v1510 = vadd.f32 0.0, %v1509
    %v1511 = vpop.f32.mrf.mxu0
    %1512 = vdwg.mxu0
    %s1513 = scalar_lea.vmem %s5, 160
    %v1514 = vld [vmem:[%s1513] sm:$0xff]
    %v1515 = vld [vmem:[%s1513 + $0x8] sm:$0xff]
    %v1516 = vld [vmem:[%s1513 + $0x10] sm:$0xff]
    %v1517 = vld [vmem:[%s1513 + $0x18] sm:$0xff]
    %v1519 = vsel %vm269, %v1495, 0
    %v1522 = vsel %vm269, %v1500, 0
    %v1525 = vsel %vm269, %v1505, 0
    %v1528 = vsel %vm269, %v1510, 0
    %1530 = vmatprep.subr.mxu0 0.0
    %1531 = vmatpush1.msra.mxu0 0.0
    %1532 = vmatprep.subr.mxu0 0.0
    %1533 = vmatpush1.msra.mxu0 0.0
    %1534 = vmatprep.subr.mxu0 0.0
    %1535 = vmatpush1.msra.mxu0 0.0
    %1536 = vmatprep.subr.mxu0 0.0
    %1537 = vmatpush1.msra.mxu0 0.0
    %1538 = vmatprep.subr.mxu0 0.0
    %1539 = vmatpush1.msra.mxu0 0.0
    %1540 = vmatprep.subr.mxu0 0.0
    %1541 = vmatpush1.msra.mxu0 0.0
    %1542 = vmatprep.subr.mxu0 0.0
    %1543 = vmatpush1.msra.mxu0 0.0
    %1544 = vmatprep.subr.mxu0 0.0
    %1545 = vmatpush1.msra.mxu0 0.0
    %1546 = vmatprep.subr.mxu0 0.0
    %1547 = vmatpush1.msra.mxu0 0.0
    %1548 = vmatprep.subr.mxu0 0.0
    %1549 = vmatpush1.msra.mxu0 0.0
    %1550 = vmatprep.subr.mxu0 0.0
    %1551 = vmatpush1.msra.mxu0 0.0
    %1552 = vmatprep.subr.mxu0 0.0
    %1553 = vmatpush1.msra.mxu0 0.0
    %1554 = vmatprep.subr.mxu0 0.0
    %1555 = vmatpush1.msra.mxu0 %v1517
    %1556 = vmatprep.subr.mxu0 0.0
    %1557 = vmatpush1.msra.mxu0 %v1516
    %1558 = vmatprep.subr.mxu0 0.0
    %1559 = vmatpush1.msra.mxu0 %v1515
    %1560 = vmatprep.subr.mxu0 0.0
    %1561 = vmatpush1.msra.mxu0 %v1514
    %1562 = vmatprep.subr.mxu0 0.0
    %1563 = vmatpush2.msra.mxu0 0.0
    %1564 = vmatprep.subr.mxu0 0.0
    %1565 = vmatpush2.msra.mxu0 0.0
    %1566 = vmatprep.subr.mxu0 0.0
    %1567 = vmatpush2.msra.mxu0 0.0
    %1568 = vmatprep.subr.mxu0 0.0
    %1569 = vmatpush2.msra.mxu0 0.0
    %1570 = vmatprep.subr.mxu0 0.0
    %1571 = vmatpush2.msra.mxu0 0.0
    %1572 = vmatprep.subr.mxu0 0.0
    %1573 = vmatpush2.msra.mxu0 0.0
    %1574 = vmatprep.subr.mxu0 0.0
    %1575 = vmatpush2.msra.mxu0 0.0
    %1576 = vmatprep.subr.mxu0 0.0
    %1577 = vmatpush2.msra.mxu0 0.0
    %1578 = vmatprep.subr.mxu0 0.0
    %1579 = vmatpush2.msra.mxu0 0.0
    %1580 = vmatprep.subr.mxu0 0.0
    %1581 = vmatpush2.msra.mxu0 0.0
    %1582 = vmatprep.subr.mxu0 0.0
    %1583 = vmatpush2.msra.mxu0 0.0
    %1584 = vmatprep.subr.mxu0 0.0
    %1585 = vmatpush2.msra.mxu0 0.0
    %1586 = vmatprep.subr.mxu0 0.0
    %1587 = vmatpush2.msra.mxu0 0.0
    %1588 = vmatprep.subr.mxu0 0.0
    %1589 = vmatpush2.msra.mxu0 0.0
    %1590 = vmatprep.subr.mxu0 0.0
    %1591 = vmatpush2.msra.mxu0 0.0
    %1592 = vmatprep.subr.mxu0 0.0
    %1593 = vmatpush2.msra.mxu0 0.0
    %1594 = vmatprep.mubr.f32.mxu0 0.0
    %1595 = vmatmul.mubr.f32.gmra.mxu0 %v1519
    %v1596 = vpop.f32.mrf.mxu0
    %v1597 = vadd.f32 0.0, %v1596
    %v1598 = vpop.f32.mrf.mxu0
    %1599 = vmatprep.mubr.f32.mxu0 0.0
    %1600 = vmatmul.mubr.f32.gmra.mxu0 %v1522
    %v1601 = vpop.f32.mrf.mxu0
    %v1602 = vadd.f32 0.0, %v1601
    %v1603 = vpop.f32.mrf.mxu0
    %1604 = vmatprep.mubr.f32.mxu0 0.0
    %1605 = vmatmul.mubr.f32.gmra.mxu0 %v1525
    %v1606 = vpop.f32.mrf.mxu0
    %v1607 = vadd.f32 0.0, %v1606
    %v1608 = vpop.f32.mrf.mxu0
    %1609 = vmatprep.mubr.f32.mxu0 0.0
    %1610 = vmatmul.mubr.f32.gmra.mxu0 %v1528
    %v1611 = vpop.f32.mrf.mxu0
    %v1612 = vadd.f32 0.0, %v1611
    %v1613 = vpop.f32.mrf.mxu0
    %1614 = vdwg.mxu0
    %v1615 = vadd.f32 %v1419, %v1597
    %v1616 = vadd.f32 %v1420, %v1602
    %v1617 = vadd.f32 %v1421, %v1607
    %v1618 = vadd.f32 %v1422, %v1612
    %s1619 = scalar_lea.vmem %s2, 192
    %v1620 = vld [vmem:[%s1619] sm:$0xff]
    %v1621 = vld [vmem:[%s1619 + $0x8] sm:$0xff]
    %v1622 = vld [vmem:[%s1619 + $0x10] sm:$0xff]
    %v1623 = vld [vmem:[%s1619 + $0x18] sm:$0xff]
    %1624 = vmatprep.subr.mxu0 0.0
    %1625 = vmatpush1.msra.mxu0 %v452
    %1626 = vmatprep.subr.mxu0 0.0
    %1627 = vmatpush1.msra.mxu0 %v451
    %1628 = vmatprep.subr.mxu0 0.0
    %1629 = vmatpush1.msra.mxu0 %v450
    %1630 = vmatprep.subr.mxu0 0.0
    %1631 = vmatpush1.msra.mxu0 %v449
    %1632 = vmatprep.subr.mxu0 0.0
    %1633 = vmatpush1.msra.mxu0 %v448
    %1634 = vmatprep.subr.mxu0 0.0
    %1635 = vmatpush1.msra.mxu0 %v447
    %1636 = vmatprep.subr.mxu0 0.0
    %1637 = vmatpush1.msra.mxu0 %v446
    %1638 = vmatprep.subr.mxu0 0.0
    %1639 = vmatpush1.msra.mxu0 %v445
    %1640 = vmatprep.subr.mxu0 0.0
    %1641 = vmatpush1.msra.mxu0 %v444
    %1642 = vmatprep.subr.mxu0 0.0
    %1643 = vmatpush1.msra.mxu0 %v443
    %1644 = vmatprep.subr.mxu0 0.0
    %1645 = vmatpush1.msra.mxu0 %v442
    %1646 = vmatprep.subr.mxu0 0.0
    %1647 = vmatpush1.msra.mxu0 %v441
    %1648 = vmatprep.subr.mxu0 0.0
    %1649 = vmatpush1.msra.mxu0 %v440
    %1650 = vmatprep.subr.mxu0 0.0
    %1651 = vmatpush1.msra.mxu0 %v439
    %1652 = vmatprep.subr.mxu0 0.0
    %1653 = vmatpush1.msra.mxu0 %v438
    %1654 = vmatprep.subr.mxu0 0.0
    %1655 = vmatpush1.msra.mxu0 %v437
    %1656 = vmatprep.subr.mxu0 0.0
    %1657 = vmatpush2.msra.mxu0 0.0
    %1658 = vmatprep.subr.mxu0 0.0
    %1659 = vmatpush2.msra.mxu0 0.0
    %1660 = vmatprep.subr.mxu0 0.0
    %1661 = vmatpush2.msra.mxu0 0.0
    %1662 = vmatprep.subr.mxu0 0.0
    %1663 = vmatpush2.msra.mxu0 0.0
    %1664 = vmatprep.subr.mxu0 0.0
    %1665 = vmatpush2.msra.mxu0 0.0
    %1666 = vmatprep.subr.mxu0 0.0
    %1667 = vmatpush2.msra.mxu0 0.0
    %1668 = vmatprep.subr.mxu0 0.0
    %1669 = vmatpush2.msra.mxu0 0.0
    %1670 = vmatprep.subr.mxu0 0.0
    %1671 = vmatpush2.msra.mxu0 0.0
    %1672 = vmatprep.subr.mxu0 0.0
    %1673 = vmatpush2.msra.mxu0 0.0
    %1674 = vmatprep.subr.mxu0 0.0
    %1675 = vmatpush2.msra.mxu0 0.0
    %1676 = vmatprep.subr.mxu0 0.0
    %1677 = vmatpush2.msra.mxu0 0.0
    %1678 = vmatprep.subr.mxu0 0.0
    %1679 = vmatpush2.msra.mxu0 0.0
    %1680 = vmatprep.subr.mxu0 0.0
    %1681 = vmatpush2.msra.mxu0 0.0
    %1682 = vmatprep.subr.mxu0 0.0
    %1683 = vmatpush2.msra.mxu0 0.0
    %1684 = vmatprep.subr.mxu0 0.0
    %1685 = vmatpush2.msra.mxu0 0.0
    %1686 = vmatprep.subr.mxu0 0.0
    %1687 = vmatpush2.msra.mxu0 0.0
    %1688 = vmatprep.mubr.f32.mxu0 0.0
    %1689 = vmatmul.mubr.f32.gmra.mxu0 %v1620
    %v1690 = vpop.f32.mrf.mxu0
    %v1691 = vadd.f32 0.0, %v1690
    %v1692 = vpop.f32.mrf.mxu0
    %1693 = vmatprep.mubr.f32.mxu0 0.0
    %1694 = vmatmul.mubr.f32.gmra.mxu0 %v1621
    %v1695 = vpop.f32.mrf.mxu0
    %v1696 = vadd.f32 0.0, %v1695
    %v1697 = vpop.f32.mrf.mxu0
    %1698 = vmatprep.mubr.f32.mxu0 0.0
    %1699 = vmatmul.mubr.f32.gmra.mxu0 %v1622
    %v1700 = vpop.f32.mrf.mxu0
    %v1701 = vadd.f32 0.0, %v1700
    %v1702 = vpop.f32.mrf.mxu0
    %1703 = vmatprep.mubr.f32.mxu0 0.0
    %1704 = vmatmul.mubr.f32.gmra.mxu0 %v1623
    %v1705 = vpop.f32.mrf.mxu0
    %v1706 = vadd.f32 0.0, %v1705
    %v1707 = vpop.f32.mrf.mxu0
    %1708 = vdwg.mxu0
    %s1709 = scalar_lea.vmem %s5, 192
    %v1710 = vld [vmem:[%s1709] sm:$0xff]
    %v1711 = vld [vmem:[%s1709 + $0x8] sm:$0xff]
    %v1712 = vld [vmem:[%s1709 + $0x10] sm:$0xff]
    %v1713 = vld [vmem:[%s1709 + $0x18] sm:$0xff]
    %v1715 = vsel %vm269, %v1691, 0
    %v1718 = vsel %vm269, %v1696, 0
    %v1721 = vsel %vm269, %v1701, 0
    %v1724 = vsel %vm269, %v1706, 0
    %1726 = vmatprep.subr.mxu0 0.0
    %1727 = vmatpush1.msra.mxu0 0.0
    %1728 = vmatprep.subr.mxu0 0.0
    %1729 = vmatpush1.msra.mxu0 0.0
    %1730 = vmatprep.subr.mxu0 0.0
    %1731 = vmatpush1.msra.mxu0 0.0
    %1732 = vmatprep.subr.mxu0 0.0
    %1733 = vmatpush1.msra.mxu0 0.0
    %1734 = vmatprep.subr.mxu0 0.0
    %1735 = vmatpush1.msra.mxu0 0.0
    %1736 = vmatprep.subr.mxu0 0.0
    %1737 = vmatpush1.msra.mxu0 0.0
    %1738 = vmatprep.subr.mxu0 0.0
    %1739 = vmatpush1.msra.mxu0 0.0
    %1740 = vmatprep.subr.mxu0 0.0
    %1741 = vmatpush1.msra.mxu0 0.0
    %1742 = vmatprep.subr.mxu0 0.0
    %1743 = vmatpush1.msra.mxu0 0.0
    %1744 = vmatprep.subr.mxu0 0.0
    %1745 = vmatpush1.msra.mxu0 0.0
    %1746 = vmatprep.subr.mxu0 0.0
    %1747 = vmatpush1.msra.mxu0 0.0
    %1748 = vmatprep.subr.mxu0 0.0
    %1749 = vmatpush1.msra.mxu0 0.0
    %1750 = vmatprep.subr.mxu0 0.0
    %1751 = vmatpush1.msra.mxu0 %v1713
    %1752 = vmatprep.subr.mxu0 0.0
    %1753 = vmatpush1.msra.mxu0 %v1712
    %1754 = vmatprep.subr.mxu0 0.0
    %1755 = vmatpush1.msra.mxu0 %v1711
    %1756 = vmatprep.subr.mxu0 0.0
    %1757 = vmatpush1.msra.mxu0 %v1710
    %1758 = vmatprep.subr.mxu0 0.0
    %1759 = vmatpush2.msra.mxu0 0.0
    %1760 = vmatprep.subr.mxu0 0.0
    %1761 = vmatpush2.msra.mxu0 0.0
    %1762 = vmatprep.subr.mxu0 0.0
    %1763 = vmatpush2.msra.mxu0 0.0
    %1764 = vmatprep.subr.mxu0 0.0
    %1765 = vmatpush2.msra.mxu0 0.0
    %1766 = vmatprep.subr.mxu0 0.0
    %1767 = vmatpush2.msra.mxu0 0.0
    %1768 = vmatprep.subr.mxu0 0.0
    %1769 = vmatpush2.msra.mxu0 0.0
    %1770 = vmatprep.subr.mxu0 0.0
    %1771 = vmatpush2.msra.mxu0 0.0
    %1772 = vmatprep.subr.mxu0 0.0
    %1773 = vmatpush2.msra.mxu0 0.0
    %1774 = vmatprep.subr.mxu0 0.0
    %1775 = vmatpush2.msra.mxu0 0.0
    %1776 = vmatprep.subr.mxu0 0.0
    %1777 = vmatpush2.msra.mxu0 0.0
    %1778 = vmatprep.subr.mxu0 0.0
    %1779 = vmatpush2.msra.mxu0 0.0
    %1780 = vmatprep.subr.mxu0 0.0
    %1781 = vmatpush2.msra.mxu0 0.0
    %1782 = vmatprep.subr.mxu0 0.0
    %1783 = vmatpush2.msra.mxu0 0.0
    %1784 = vmatprep.subr.mxu0 0.0
    %1785 = vmatpush2.msra.mxu0 0.0
    %1786 = vmatprep.subr.mxu0 0.0
    %1787 = vmatpush2.msra.mxu0 0.0
    %1788 = vmatprep.subr.mxu0 0.0
    %1789 = vmatpush2.msra.mxu0 0.0
    %1790 = vmatprep.mubr.f32.mxu0 0.0
    %1791 = vmatmul.mubr.f32.gmra.mxu0 %v1715
    %v1792 = vpop.f32.mrf.mxu0
    %v1793 = vadd.f32 0.0, %v1792
    %v1794 = vpop.f32.mrf.mxu0
    %1795 = vmatprep.mubr.f32.mxu0 0.0
    %1796 = vmatmul.mubr.f32.gmra.mxu0 %v1718
    %v1797 = vpop.f32.mrf.mxu0
    %v1798 = vadd.f32 0.0, %v1797
    %v1799 = vpop.f32.mrf.mxu0
    %1800 = vmatprep.mubr.f32.mxu0 0.0
    %1801 = vmatmul.mubr.f32.gmra.mxu0 %v1721
    %v1802 = vpop.f32.mrf.mxu0
    %v1803 = vadd.f32 0.0, %v1802
    %v1804 = vpop.f32.mrf.mxu0
    %1805 = vmatprep.mubr.f32.mxu0 0.0
    %1806 = vmatmul.mubr.f32.gmra.mxu0 %v1724
    %v1807 = vpop.f32.mrf.mxu0
    %v1808 = vadd.f32 0.0, %v1807
    %v1809 = vpop.f32.mrf.mxu0
    %1810 = vdwg.mxu0
    %v1811 = vadd.f32 %v1615, %v1793
    %v1812 = vadd.f32 %v1616, %v1798
    %v1813 = vadd.f32 %v1617, %v1803
    %v1814 = vadd.f32 %v1618, %v1808
    %s1815 = scalar_lea.vmem %s2, 224
    %v1816 = vld [vmem:[%s1815] sm:$0xff]
    %v1817 = vld [vmem:[%s1815 + $0x8] sm:$0xff]
    %v1818 = vld [vmem:[%s1815 + $0x10] sm:$0xff]
    %v1819 = vld [vmem:[%s1815 + $0x18] sm:$0xff]
    %1820 = vmatprep.subr.mxu0 0.0
    %1821 = vmatpush1.msra.mxu0 %v452
    %1822 = vmatprep.subr.mxu0 0.0
    %1823 = vmatpush1.msra.mxu0 %v451
    %1824 = vmatprep.subr.mxu0 0.0
    %1825 = vmatpush1.msra.mxu0 %v450
    %1826 = vmatprep.subr.mxu0 0.0
    %1827 = vmatpush1.msra.mxu0 %v449
    %1828 = vmatprep.subr.mxu0 0.0
    %1829 = vmatpush1.msra.mxu0 %v448
    %1830 = vmatprep.subr.mxu0 0.0
    %1831 = vmatpush1.msra.mxu0 %v447
    %1832 = vmatprep.subr.mxu0 0.0
    %1833 = vmatpush1.msra.mxu0 %v446
    %1834 = vmatprep.subr.mxu0 0.0
    %1835 = vmatpush1.msra.mxu0 %v445
    %1836 = vmatprep.subr.mxu0 0.0
    %1837 = vmatpush1.msra.mxu0 %v444
    %1838 = vmatprep.subr.mxu0 0.0
    %1839 = vmatpush1.msra.mxu0 %v443
    %1840 = vmatprep.subr.mxu0 0.0
    %1841 = vmatpush1.msra.mxu0 %v442
    %1842 = vmatprep.subr.mxu0 0.0
    %1843 = vmatpush1.msra.mxu0 %v441
    %1844 = vmatprep.subr.mxu0 0.0
    %1845 = vmatpush1.msra.mxu0 %v440
    %1846 = vmatprep.subr.mxu0 0.0
    %1847 = vmatpush1.msra.mxu0 %v439
    %1848 = vmatprep.subr.mxu0 0.0
    %1849 = vmatpush1.msra.mxu0 %v438
    %1850 = vmatprep.subr.mxu0 0.0
    %1851 = vmatpush1.msra.mxu0 %v437
    %1852 = vmatprep.subr.mxu0 0.0
    %1853 = vmatpush2.msra.mxu0 0.0
    %1854 = vmatprep.subr.mxu0 0.0
    %1855 = vmatpush2.msra.mxu0 0.0
    %1856 = vmatprep.subr.mxu0 0.0
    %1857 = vmatpush2.msra.mxu0 0.0
    %1858 = vmatprep.subr.mxu0 0.0
    %1859 = vmatpush2.msra.mxu0 0.0
    %1860 = vmatprep.subr.mxu0 0.0
    %1861 = vmatpush2.msra.mxu0 0.0
    %1862 = vmatprep.subr.mxu0 0.0
    %1863 = vmatpush2.msra.mxu0 0.0
    %1864 = vmatprep.subr.mxu0 0.0
    %1865 = vmatpush2.msra.mxu0 0.0
    %1866 = vmatprep.subr.mxu0 0.0
    %1867 = vmatpush2.msra.mxu0 0.0
    %1868 = vmatprep.subr.mxu0 0.0
    %1869 = vmatpush2.msra.mxu0 0.0
    %1870 = vmatprep.subr.mxu0 0.0
    %1871 = vmatpush2.msra.mxu0 0.0
    %1872 = vmatprep.subr.mxu0 0.0
    %1873 = vmatpush2.msra.mxu0 0.0
    %1874 = vmatprep.subr.mxu0 0.0
    %1875 = vmatpush2.msra.mxu0 0.0
    %1876 = vmatprep.subr.mxu0 0.0
    %1877 = vmatpush2.msra.mxu0 0.0
    %1878 = vmatprep.subr.mxu0 0.0
    %1879 = vmatpush2.msra.mxu0 0.0
    %1880 = vmatprep.subr.mxu0 0.0
    %1881 = vmatpush2.msra.mxu0 0.0
    %1882 = vmatprep.subr.mxu0 0.0
    %1883 = vmatpush2.msra.mxu0 0.0
    %1884 = vmatprep.mubr.f32.mxu0 0.0
    %1885 = vmatmul.mubr.f32.gmra.mxu0 %v1816
    %v1886 = vpop.f32.mrf.mxu0
    %v1887 = vadd.f32 0.0, %v1886
    %v1888 = vpop.f32.mrf.mxu0
    %1889 = vmatprep.mubr.f32.mxu0 0.0
    %1890 = vmatmul.mubr.f32.gmra.mxu0 %v1817
    %v1891 = vpop.f32.mrf.mxu0
    %v1892 = vadd.f32 0.0, %v1891
    %v1893 = vpop.f32.mrf.mxu0
    %1894 = vmatprep.mubr.f32.mxu0 0.0
    %1895 = vmatmul.mubr.f32.gmra.mxu0 %v1818
    %v1896 = vpop.f32.mrf.mxu0
    %v1897 = vadd.f32 0.0, %v1896
    %v1898 = vpop.f32.mrf.mxu0
    %1899 = vmatprep.mubr.f32.mxu0 0.0
    %1900 = vmatmul.mubr.f32.gmra.mxu0 %v1819
    %v1901 = vpop.f32.mrf.mxu0
    %v1902 = vadd.f32 0.0, %v1901
    %v1903 = vpop.f32.mrf.mxu0
    %1904 = vdwg.mxu0
    %s1905 = scalar_lea.vmem %s5, 224
    %v1906 = vld [vmem:[%s1905] sm:$0xff]
    %v1907 = vld [vmem:[%s1905 + $0x8] sm:$0xff]
    %v1908 = vld [vmem:[%s1905 + $0x10] sm:$0xff]
    %v1909 = vld [vmem:[%s1905 + $0x18] sm:$0xff]
    %v1911 = vsel %vm269, %v1887, 0
    %v1914 = vsel %vm269, %v1892, 0
    %v1917 = vsel %vm269, %v1897, 0
    %v1920 = vsel %vm269, %v1902, 0
    %1922 = vmatprep.subr.mxu0 0.0
    %1923 = vmatpush1.msra.mxu0 0.0
    %1924 = vmatprep.subr.mxu0 0.0
    %1925 = vmatpush1.msra.mxu0 0.0
    %1926 = vmatprep.subr.mxu0 0.0
    %1927 = vmatpush1.msra.mxu0 0.0
    %1928 = vmatprep.subr.mxu0 0.0
    %1929 = vmatpush1.msra.mxu0 0.0
    %1930 = vmatprep.subr.mxu0 0.0
    %1931 = vmatpush1.msra.mxu0 0.0
    %1932 = vmatprep.subr.mxu0 0.0
    %1933 = vmatpush1.msra.mxu0 0.0
    %1934 = vmatprep.subr.mxu0 0.0
    %1935 = vmatpush1.msra.mxu0 0.0
    %1936 = vmatprep.subr.mxu0 0.0
    %1937 = vmatpush1.msra.mxu0 0.0
    %1938 = vmatprep.subr.mxu0 0.0
    %1939 = vmatpush1.msra.mxu0 0.0
    %1940 = vmatprep.subr.mxu0 0.0
    %1941 = vmatpush1.msra.mxu0 0.0
    %1942 = vmatprep.subr.mxu0 0.0
    %1943 = vmatpush1.msra.mxu0 0.0
    %1944 = vmatprep.subr.mxu0 0.0
    %1945 = vmatpush1.msra.mxu0 0.0
    %1946 = vmatprep.subr.mxu0 0.0
    %1947 = vmatpush1.msra.mxu0 %v1909
    %1948 = vmatprep.subr.mxu0 0.0
    %1949 = vmatpush1.msra.mxu0 %v1908
    %1950 = vmatprep.subr.mxu0 0.0
    %1951 = vmatpush1.msra.mxu0 %v1907
    %1952 = vmatprep.subr.mxu0 0.0
    %1953 = vmatpush1.msra.mxu0 %v1906
    %1954 = vmatprep.subr.mxu0 0.0
    %1955 = vmatpush2.msra.mxu0 0.0
    %1956 = vmatprep.subr.mxu0 0.0
    %1957 = vmatpush2.msra.mxu0 0.0
    %1958 = vmatprep.subr.mxu0 0.0
    %1959 = vmatpush2.msra.mxu0 0.0
    %1960 = vmatprep.subr.mxu0 0.0
    %1961 = vmatpush2.msra.mxu0 0.0
    %1962 = vmatprep.subr.mxu0 0.0
    %1963 = vmatpush2.msra.mxu0 0.0
    %1964 = vmatprep.subr.mxu0 0.0
    %1965 = vmatpush2.msra.mxu0 0.0
    %1966 = vmatprep.subr.mxu0 0.0
    %1967 = vmatpush2.msra.mxu0 0.0
    %1968 = vmatprep.subr.mxu0 0.0
    %1969 = vmatpush2.msra.mxu0 0.0
    %1970 = vmatprep.subr.mxu0 0.0
    %1971 = vmatpush2.msra.mxu0 0.0
    %1972 = vmatprep.subr.mxu0 0.0
    %1973 = vmatpush2.msra.mxu0 0.0
    %1974 = vmatprep.subr.mxu0 0.0
    %1975 = vmatpush2.msra.mxu0 0.0
    %1976 = vmatprep.subr.mxu0 0.0
    %1977 = vmatpush2.msra.mxu0 0.0
    %1978 = vmatprep.subr.mxu0 0.0
    %1979 = vmatpush2.msra.mxu0 0.0
    %1980 = vmatprep.subr.mxu0 0.0
    %1981 = vmatpush2.msra.mxu0 0.0
    %1982 = vmatprep.subr.mxu0 0.0
    %1983 = vmatpush2.msra.mxu0 0.0
    %1984 = vmatprep.subr.mxu0 0.0
    %1985 = vmatpush2.msra.mxu0 0.0
    %1986 = vmatprep.mubr.f32.mxu0 0.0
    %1987 = vmatmul.mubr.f32.gmra.mxu0 %v1911
    %v1988 = vpop.f32.mrf.mxu0
    %v1989 = vadd.f32 0.0, %v1988
    %v1990 = vpop.f32.mrf.mxu0
    %1991 = vmatprep.mubr.f32.mxu0 0.0
    %1992 = vmatmul.mubr.f32.gmra.mxu0 %v1914
    %v1993 = vpop.f32.mrf.mxu0
    %v1994 = vadd.f32 0.0, %v1993
    %v1995 = vpop.f32.mrf.mxu0
    %1996 = vmatprep.mubr.f32.mxu0 0.0
    %1997 = vmatmul.mubr.f32.gmra.mxu0 %v1917
    %v1998 = vpop.f32.mrf.mxu0
    %v1999 = vadd.f32 0.0, %v1998
    %v2000 = vpop.f32.mrf.mxu0
    %2001 = vmatprep.mubr.f32.mxu0 0.0
    %2002 = vmatmul.mubr.f32.gmra.mxu0 %v1920
    %v2003 = vpop.f32.mrf.mxu0
    %v2004 = vadd.f32 0.0, %v2003
    %v2005 = vpop.f32.mrf.mxu0
    %2006 = vdwg.mxu0
    %v2007 = vadd.f32 %v1811, %v1989
    %v2008 = vadd.f32 %v1812, %v1994
    %v2009 = vadd.f32 %v1813, %v1999
    %v2010 = vadd.f32 %v1814, %v2004
    %s2011 = scalar_lea.vmem %s2, 256
    %v2012 = vld [vmem:[%s2011] sm:$0xff]
    %v2013 = vld [vmem:[%s2011 + $0x8] sm:$0xff]
    %v2014 = vld [vmem:[%s2011 + $0x10] sm:$0xff]
    %v2015 = vld [vmem:[%s2011 + $0x18] sm:$0xff]
    %2016 = vmatprep.subr.mxu0 0.0
    %2017 = vmatpush1.msra.mxu0 %v452
    %2018 = vmatprep.subr.mxu0 0.0
    %2019 = vmatpush1.msra.mxu0 %v451
    %2020 = vmatprep.subr.mxu0 0.0
    %2021 = vmatpush1.msra.mxu0 %v450
    %2022 = vmatprep.subr.mxu0 0.0
    %2023 = vmatpush1.msra.mxu0 %v449
    %2024 = vmatprep.subr.mxu0 0.0
    %2025 = vmatpush1.msra.mxu0 %v448
    %2026 = vmatprep.subr.mxu0 0.0
    %2027 = vmatpush1.msra.mxu0 %v447
    %2028 = vmatprep.subr.mxu0 0.0
    %2029 = vmatpush1.msra.mxu0 %v446
    %2030 = vmatprep.subr.mxu0 0.0
    %2031 = vmatpush1.msra.mxu0 %v445
    %2032 = vmatprep.subr.mxu0 0.0
    %2033 = vmatpush1.msra.mxu0 %v444
    %2034 = vmatprep.subr.mxu0 0.0
    %2035 = vmatpush1.msra.mxu0 %v443
    %2036 = vmatprep.subr.mxu0 0.0
    %2037 = vmatpush1.msra.mxu0 %v442
    %2038 = vmatprep.subr.mxu0 0.0
    %2039 = vmatpush1.msra.mxu0 %v441
    %2040 = vmatprep.subr.mxu0 0.0
    %2041 = vmatpush1.msra.mxu0 %v440
    %2042 = vmatprep.subr.mxu0 0.0
    %2043 = vmatpush1.msra.mxu0 %v439
    %2044 = vmatprep.subr.mxu0 0.0
    %2045 = vmatpush1.msra.mxu0 %v438
    %2046 = vmatprep.subr.mxu0 0.0
    %2047 = vmatpush1.msra.mxu0 %v437
    %2048 = vmatprep.subr.mxu0 0.0
    %2049 = vmatpush2.msra.mxu0 0.0
    %2050 = vmatprep.subr.mxu0 0.0
    %2051 = vmatpush2.msra.mxu0 0.0
    %2052 = vmatprep.subr.mxu0 0.0
    %2053 = vmatpush2.msra.mxu0 0.0
    %2054 = vmatprep.subr.mxu0 0.0
    %2055 = vmatpush2.msra.mxu0 0.0
    %2056 = vmatprep.subr.mxu0 0.0
    %2057 = vmatpush2.msra.mxu0 0.0
    %2058 = vmatprep.subr.mxu0 0.0
    %2059 = vmatpush2.msra.mxu0 0.0
    %2060 = vmatprep.subr.mxu0 0.0
    %2061 = vmatpush2.msra.mxu0 0.0
    %2062 = vmatprep.subr.mxu0 0.0
    %2063 = vmatpush2.msra.mxu0 0.0
    %2064 = vmatprep.subr.mxu0 0.0
    %2065 = vmatpush2.msra.mxu0 0.0
    %2066 = vmatprep.subr.mxu0 0.0
    %2067 = vmatpush2.msra.mxu0 0.0
    %2068 = vmatprep.subr.mxu0 0.0
    %2069 = vmatpush2.msra.mxu0 0.0
    %2070 = vmatprep.subr.mxu0 0.0
    %2071 = vmatpush2.msra.mxu0 0.0
    %2072 = vmatprep.subr.mxu0 0.0
    %2073 = vmatpush2.msra.mxu0 0.0
    %2074 = vmatprep.subr.mxu0 0.0
    %2075 = vmatpush2.msra.mxu0 0.0
    %2076 = vmatprep.subr.mxu0 0.0
    %2077 = vmatpush2.msra.mxu0 0.0
    %2078 = vmatprep.subr.mxu0 0.0
    %2079 = vmatpush2.msra.mxu0 0.0
    %2080 = vmatprep.mubr.f32.mxu0 0.0
    %2081 = vmatmul.mubr.f32.gmra.mxu0 %v2012
    %v2082 = vpop.f32.mrf.mxu0
    %v2083 = vadd.f32 0.0, %v2082
    %v2084 = vpop.f32.mrf.mxu0
    %2085 = vmatprep.mubr.f32.mxu0 0.0
    %2086 = vmatmul.mubr.f32.gmra.mxu0 %v2013
    %v2087 = vpop.f32.mrf.mxu0
    %v2088 = vadd.f32 0.0, %v2087
    %v2089 = vpop.f32.mrf.mxu0
    %2090 = vmatprep.mubr.f32.mxu0 0.0
    %2091 = vmatmul.mubr.f32.gmra.mxu0 %v2014
    %v2092 = vpop.f32.mrf.mxu0
    %v2093 = vadd.f32 0.0, %v2092
    %v2094 = vpop.f32.mrf.mxu0
    %2095 = vmatprep.mubr.f32.mxu0 0.0
    %2096 = vmatmul.mubr.f32.gmra.mxu0 %v2015
    %v2097 = vpop.f32.mrf.mxu0
    %v2098 = vadd.f32 0.0, %v2097
    %v2099 = vpop.f32.mrf.mxu0
    %2100 = vdwg.mxu0
    %s2101 = scalar_lea.vmem %s5, 256
    %v2102 = vld [vmem:[%s2101] sm:$0xff]
    %v2103 = vld [vmem:[%s2101 + $0x8] sm:$0xff]
    %v2104 = vld [vmem:[%s2101 + $0x10] sm:$0xff]
    %v2105 = vld [vmem:[%s2101 + $0x18] sm:$0xff]
    %v2107 = vsel %vm269, %v2083, 0
    %v2110 = vsel %vm269, %v2088, 0
    %v2113 = vsel %vm269, %v2093, 0
    %v2116 = vsel %vm269, %v2098, 0
    %2118 = vmatprep.subr.mxu0 0.0
    %2119 = vmatpush1.msra.mxu0 0.0
    %2120 = vmatprep.subr.mxu0 0.0
    %2121 = vmatpush1.msra.mxu0 0.0
    %2122 = vmatprep.subr.mxu0 0.0
    %2123 = vmatpush1.msra.mxu0 0.0
    %2124 = vmatprep.subr.mxu0 0.0
    %2125 = vmatpush1.msra.mxu0 0.0
    %2126 = vmatprep.subr.mxu0 0.0
    %2127 = vmatpush1.msra.mxu0 0.0
    %2128 = vmatprep.subr.mxu0 0.0
    %2129 = vmatpush1.msra.mxu0 0.0
    %2130 = vmatprep.subr.mxu0 0.0
    %2131 = vmatpush1.msra.mxu0 0.0
    %2132 = vmatprep.subr.mxu0 0.0
    %2133 = vmatpush1.msra.mxu0 0.0
    %2134 = vmatprep.subr.mxu0 0.0
    %2135 = vmatpush1.msra.mxu0 0.0
    %2136 = vmatprep.subr.mxu0 0.0
    %2137 = vmatpush1.msra.mxu0 0.0
    %2138 = vmatprep.subr.mxu0 0.0
    %2139 = vmatpush1.msra.mxu0 0.0
    %2140 = vmatprep.subr.mxu0 0.0
    %2141 = vmatpush1.msra.mxu0 0.0
    %2142 = vmatprep.subr.mxu0 0.0
    %2143 = vmatpush1.msra.mxu0 %v2105
    %2144 = vmatprep.subr.mxu0 0.0
    %2145 = vmatpush1.msra.mxu0 %v2104
    %2146 = vmatprep.subr.mxu0 0.0
    %2147 = vmatpush1.msra.mxu0 %v2103
    %2148 = vmatprep.subr.mxu0 0.0
    %2149 = vmatpush1.msra.mxu0 %v2102
    %2150 = vmatprep.subr.mxu0 0.0
    %2151 = vmatpush2.msra.mxu0 0.0
    %2152 = vmatprep.subr.mxu0 0.0
    %2153 = vmatpush2.msra.mxu0 0.0
    %2154 = vmatprep.subr.mxu0 0.0
    %2155 = vmatpush2.msra.mxu0 0.0
    %2156 = vmatprep.subr.mxu0 0.0
    %2157 = vmatpush2.msra.mxu0 0.0
    %2158 = vmatprep.subr.mxu0 0.0
    %2159 = vmatpush2.msra.mxu0 0.0
    %2160 = vmatprep.subr.mxu0 0.0
    %2161 = vmatpush2.msra.mxu0 0.0
    %2162 = vmatprep.subr.mxu0 0.0
    %2163 = vmatpush2.msra.mxu0 0.0
    %2164 = vmatprep.subr.mxu0 0.0
    %2165 = vmatpush2.msra.mxu0 0.0
    %2166 = vmatprep.subr.mxu0 0.0
    %2167 = vmatpush2.msra.mxu0 0.0
    %2168 = vmatprep.subr.mxu0 0.0
    %2169 = vmatpush2.msra.mxu0 0.0
    %2170 = vmatprep.subr.mxu0 0.0
    %2171 = vmatpush2.msra.mxu0 0.0
    %2172 = vmatprep.subr.mxu0 0.0
    %2173 = vmatpush2.msra.mxu0 0.0
    %2174 = vmatprep.subr.mxu0 0.0
    %2175 = vmatpush2.msra.mxu0 0.0
    %2176 = vmatprep.subr.mxu0 0.0
    %2177 = vmatpush2.msra.mxu0 0.0
    %2178 = vmatprep.subr.mxu0 0.0
    %2179 = vmatpush2.msra.mxu0 0.0
    %2180 = vmatprep.subr.mxu0 0.0
    %2181 = vmatpush2.msra.mxu0 0.0
    %2182 = vmatprep.mubr.f32.mxu0 0.0
    %2183 = vmatmul.mubr.f32.gmra.mxu0 %v2107
    %v2184 = vpop.f32.mrf.mxu0
    %v2185 = vadd.f32 0.0, %v2184
    %v2186 = vpop.f32.mrf.mxu0
    %2187 = vmatprep.mubr.f32.mxu0 0.0
    %2188 = vmatmul.mubr.f32.gmra.mxu0 %v2110
    %v2189 = vpop.f32.mrf.mxu0
    %v2190 = vadd.f32 0.0, %v2189
    %v2191 = vpop.f32.mrf.mxu0
    %2192 = vmatprep.mubr.f32.mxu0 0.0
    %2193 = vmatmul.mubr.f32.gmra.mxu0 %v2113
    %v2194 = vpop.f32.mrf.mxu0
    %v2195 = vadd.f32 0.0, %v2194
    %v2196 = vpop.f32.mrf.mxu0
    %2197 = vmatprep.mubr.f32.mxu0 0.0
    %2198 = vmatmul.mubr.f32.gmra.mxu0 %v2116
    %v2199 = vpop.f32.mrf.mxu0
    %v2200 = vadd.f32 0.0, %v2199
    %v2201 = vpop.f32.mrf.mxu0
    %2202 = vdwg.mxu0
    %v2203 = vadd.f32 %v2007, %v2185
    %v2204 = vadd.f32 %v2008, %v2190
    %v2205 = vadd.f32 %v2009, %v2195
    %v2206 = vadd.f32 %v2010, %v2200
    %v2207 = vld [vmem:[%s8 + $0x2] sm:$0x1]
    %v2208 = vld [vmem:[%s8 + $0x3] sm:$0x1]
    %v2209 = vsel %vm269, %v2203, 0.0
    %v2210 = vsel %vm269, %v2204, 0.0
    %v2211 = vadd.f32 %v2209, %v2210
    %v2212 = vsel %vm269, %v2205, 0.0
    %v2213 = vadd.f32 %v2211, %v2212
    %v2214 = vsel %vm269, %v2206, 0.0
    %v2215 = vadd.f32 %v2213, %v2214
    %v2216 = vrot.slane %v2215, 4
    %v2217 = vadd.f32 %v2215, %v2216
    %v2218 = vrot.slane %v2217, 2
    %v2219 = vadd.f32 %v2217, %v2218
    %v2220 = vrot.slane %v2219, 1
    %v2221 = vadd.f32 %v2219, %v2220
    %v2222 = vrcp.pop 32.0
    %v2223 = vmul.f32 %v2221, %v2222
    %v2224 = vsub.f32 %v2203, %v2223
    %v2225 = vsub.f32 %v2204, %v2223
    %v2226 = vsub.f32 %v2205, %v2223
    %v2227 = vsub.f32 %v2206, %v2223
    %v2228 = vmul.f32 %v2224, %v2224
    %v2229 = vmul.f32 %v2225, %v2225
    %v2230 = vmul.f32 %v2226, %v2226
    %v2231 = vmul.f32 %v2227, %v2227
    %v2232 = vsel %vm269, %v2228, 0.0
    %v2233 = vsel %vm269, %v2229, 0.0
    %v2234 = vadd.f32 %v2232, %v2233
    %v2235 = vsel %vm269, %v2230, 0.0
    %v2236 = vadd.f32 %v2234, %v2235
    %v2237 = vsel %vm269, %v2231, 0.0
    %v2238 = vadd.f32 %v2236, %v2237
    %v2239 = vrot.slane %v2238, 4
    %v2240 = vadd.f32 %v2238, %v2239
    %v2241 = vrot.slane %v2240, 2
    %v2242 = vadd.f32 %v2240, %v2241
    %v2243 = vrot.slane %v2242, 1
    %v2244 = vadd.f32 %v2242, %v2243
    %v2245 = vmul.f32 %v2244, %v2222
    %v2246 = vlaneseq
    %v2247 = vshrl.u32 %v2246, 7
    %v2248 = vsub.s32 0, %v2247
    %v2249 = vrot.slane %v2207, %v2248
    %v2250 = vmul.f32 %v2249, %v2224
    %v2251 = vmul.f32 %v2249, %v2225
    %v2252 = vmul.f32 %v2249, %v2226
    %v2253 = vmul.f32 %v2249, %v2227
    %v2254 = vadd.f32 %v2245, 1e-05
    %v2255 = vrsqrt.pop %v2254
    %v2256 = vmul.f32 %v2250, %v2255
    %v2257 = vmul.f32 %v2251, %v2255
    %v2258 = vmul.f32 %v2252, %v2255
    %v2259 = vmul.f32 %v2253, %v2255
    %v2260 = vlaneseq
    %v2261 = vshrl.u32 %v2260, 7
    %v2262 = vsub.s32 0, %v2261
    %v2263 = vrot.slane %v2208, %v2262
    %v2264 = vadd.f32 %v2256, %v2263
    %v2265 = vadd.f32 %v2257, %v2263
    %v2266 = vadd.f32 %v2258, %v2263
    %v2267 = vadd.f32 %v2259, %v2263
    %v2268 = vmax.f32 %v2264, 0.0
    %v2269 = vmax.f32 %v2265, 0.0
    %v2270 = vmax.f32 %v2266, 0.0
    %v2271 = vmax.f32 %v2267, 0.0
    %v2272 = vld [vmem:[%s3] sm:$0xff]
    %v2274 = vsel %vm269, %v2272, 0
    %2276 = vmatprep.subr.mxu0 0.0
    %2277 = vmatpush1.msra.mxu0 0.0
    %2278 = vmatprep.subr.mxu0 0.0
    %2279 = vmatpush1.msra.mxu0 0.0
    %2280 = vmatprep.subr.mxu0 0.0
    %2281 = vmatpush1.msra.mxu0 0.0
    %2282 = vmatprep.subr.mxu0 0.0
    %2283 = vmatpush1.msra.mxu0 0.0
    %2284 = vmatprep.subr.mxu0 0.0
    %2285 = vmatpush1.msra.mxu0 0.0
    %2286 = vmatprep.subr.mxu0 0.0
    %2287 = vmatpush1.msra.mxu0 0.0
    %2288 = vmatprep.subr.mxu0 0.0
    %2289 = vmatpush1.msra.mxu0 0.0
    %2290 = vmatprep.subr.mxu0 0.0
    %2291 = vmatpush1.msra.mxu0 0.0
    %2292 = vmatprep.subr.mxu0 0.0
    %2293 = vmatpush1.msra.mxu0 0.0
    %2294 = vmatprep.subr.mxu0 0.0
    %2295 = vmatpush1.msra.mxu0 0.0
    %2296 = vmatprep.subr.mxu0 0.0
    %2297 = vmatpush1.msra.mxu0 0.0
    %2298 = vmatprep.subr.mxu0 0.0
    %2299 = vmatpush1.msra.mxu0 0.0
    %2300 = vmatprep.subr.mxu0 0.0
    %2301 = vmatpush1.msra.mxu0 %v2271
    %2302 = vmatprep.subr.mxu0 0.0
    %2303 = vmatpush1.msra.mxu0 %v2270
    %2304 = vmatprep.subr.mxu0 0.0
    %2305 = vmatpush1.msra.mxu0 %v2269
    %2306 = vmatprep.subr.mxu0 0.0
    %2307 = vmatpush1.msra.mxu0 %v2268
    %2308 = vmatprep.subr.mxu0 0.0
    %2309 = vmatpush2.msra.mxu0 0.0
    %2310 = vmatprep.subr.mxu0 0.0
    %2311 = vmatpush2.msra.mxu0 0.0
    %2312 = vmatprep.subr.mxu0 0.0
    %2313 = vmatpush2.msra.mxu0 0.0
    %2314 = vmatprep.subr.mxu0 0.0
    %2315 = vmatpush2.msra.mxu0 0.0
    %2316 = vmatprep.subr.mxu0 0.0
    %2317 = vmatpush2.msra.mxu0 0.0
    %2318 = vmatprep.subr.mxu0 0.0
    %2319 = vmatpush2.msra.mxu0 0.0
    %2320 = vmatprep.subr.mxu0 0.0
    %2321 = vmatpush2.msra.mxu0 0.0
    %2322 = vmatprep.subr.mxu0 0.0
    %2323 = vmatpush2.msra.mxu0 0.0
    %2324 = vmatprep.subr.mxu0 0.0
    %2325 = vmatpush2.msra.mxu0 0.0
    %2326 = vmatprep.subr.mxu0 0.0
    %2327 = vmatpush2.msra.mxu0 0.0
    %2328 = vmatprep.subr.mxu0 0.0
    %2329 = vmatpush2.msra.mxu0 0.0
    %2330 = vmatprep.subr.mxu0 0.0
    %2331 = vmatpush2.msra.mxu0 0.0
    %2332 = vmatprep.subr.mxu0 0.0
    %2333 = vmatpush2.msra.mxu0 0.0
    %2334 = vmatprep.subr.mxu0 0.0
    %2335 = vmatpush2.msra.mxu0 0.0
    %2336 = vmatprep.subr.mxu0 0.0
    %2337 = vmatpush2.msra.mxu0 0.0
    %2338 = vmatprep.subr.mxu0 0.0
    %2339 = vmatpush2.msra.mxu0 0.0
    %2340 = vmatprep.mubr.f32.mxu0 0.0
    %2341 = vmatmul.mubr.f32.gmra.mxu0 %v2274
    %v2342 = vpop.f32.mrf.mxu0
    %v2343 = vadd.f32 0.0, %v2342
    %v2344 = vpop.f32.mrf.mxu0
    %2345 = vdwg.mxu0
    %s2346 = scalar_lea.vmem %s5, 288
    %v2347 = vld [vmem:[%s2346] sm:$0xff]
    %v2348 = vld [vmem:[%s2346 + $0x8] sm:$0xff]
    %v2349 = vld [vmem:[%s2346 + $0x10] sm:$0xff]
    %v2350 = vld [vmem:[%s2346 + $0x18] sm:$0xff]
    %s2351 = scalar_lea.vmem %s3, 8
    %v2352 = vld [vmem:[%s2351] sm:$0xff]
    %v2354 = vsel %vm269, %v2352, 0
    %2356 = vmatprep.subr.mxu0 0.0
    %2357 = vmatpush1.msra.mxu0 0.0
    %2358 = vmatprep.subr.mxu0 0.0
    %2359 = vmatpush1.msra.mxu0 0.0
    %2360 = vmatprep.subr.mxu0 0.0
    %2361 = vmatpush1.msra.mxu0 0.0
    %2362 = vmatprep.subr.mxu0 0.0
    %2363 = vmatpush1.msra.mxu0 0.0
    %2364 = vmatprep.subr.mxu0 0.0
    %2365 = vmatpush1.msra.mxu0 0.0
    %2366 = vmatprep.subr.mxu0 0.0
    %2367 = vmatpush1.msra.mxu0 0.0
    %2368 = vmatprep.subr.mxu0 0.0
    %2369 = vmatpush1.msra.mxu0 0.0
    %2370 = vmatprep.subr.mxu0 0.0
    %2371 = vmatpush1.msra.mxu0 0.0
    %2372 = vmatprep.subr.mxu0 0.0
    %2373 = vmatpush1.msra.mxu0 0.0
    %2374 = vmatprep.subr.mxu0 0.0
    %2375 = vmatpush1.msra.mxu0 0.0
    %2376 = vmatprep.subr.mxu0 0.0
    %2377 = vmatpush1.msra.mxu0 0.0
    %2378 = vmatprep.subr.mxu0 0.0
    %2379 = vmatpush1.msra.mxu0 0.0
    %2380 = vmatprep.subr.mxu0 0.0
    %2381 = vmatpush1.msra.mxu0 %v2271
    %2382 = vmatprep.subr.mxu0 0.0
    %2383 = vmatpush1.msra.mxu0 %v2270
    %2384 = vmatprep.subr.mxu0 0.0
    %2385 = vmatpush1.msra.mxu0 %v2269
    %2386 = vmatprep.subr.mxu0 0.0
    %2387 = vmatpush1.msra.mxu0 %v2268
    %2388 = vmatprep.subr.mxu0 0.0
    %2389 = vmatpush2.msra.mxu0 0.0
    %2390 = vmatprep.subr.mxu0 0.0
    %2391 = vmatpush2.msra.mxu0 0.0
    %2392 = vmatprep.subr.mxu0 0.0
    %2393 = vmatpush2.msra.mxu0 0.0
    %2394 = vmatprep.subr.mxu0 0.0
    %2395 = vmatpush2.msra.mxu0 0.0
    %2396 = vmatprep.subr.mxu0 0.0
    %2397 = vmatpush2.msra.mxu0 0.0
    %2398 = vmatprep.subr.mxu0 0.0
    %2399 = vmatpush2.msra.mxu0 0.0
    %2400 = vmatprep.subr.mxu0 0.0
    %2401 = vmatpush2.msra.mxu0 0.0
    %2402 = vmatprep.subr.mxu0 0.0
    %2403 = vmatpush2.msra.mxu0 0.0
    %2404 = vmatprep.subr.mxu0 0.0
    %2405 = vmatpush2.msra.mxu0 0.0
    %2406 = vmatprep.subr.mxu0 0.0
    %2407 = vmatpush2.msra.mxu0 0.0
    %2408 = vmatprep.subr.mxu0 0.0
    %2409 = vmatpush2.msra.mxu0 0.0
    %2410 = vmatprep.subr.mxu0 0.0
    %2411 = vmatpush2.msra.mxu0 0.0
    %2412 = vmatprep.subr.mxu0 0.0
    %2413 = vmatpush2.msra.mxu0 0.0
    %2414 = vmatprep.subr.mxu0 0.0
    %2415 = vmatpush2.msra.mxu0 0.0
    %2416 = vmatprep.subr.mxu0 0.0
    %2417 = vmatpush2.msra.mxu0 0.0
    %2418 = vmatprep.subr.mxu0 0.0
    %2419 = vmatpush2.msra.mxu0 0.0
    %2420 = vmatprep.mubr.f32.mxu0 0.0
    %2421 = vmatmul.mubr.f32.gmra.mxu0 %v2354
    %v2422 = vpop.f32.mrf.mxu0
    %v2423 = vadd.f32 0.0, %v2422
    %v2424 = vpop.f32.mrf.mxu0
    %2425 = vdwg.mxu0
    %s2426 = scalar_lea.vmem %s5, 320
    %v2427 = vld [vmem:[%s2426] sm:$0xff]
    %v2428 = vld [vmem:[%s2426 + $0x8] sm:$0xff]
    %v2429 = vld [vmem:[%s2426 + $0x10] sm:$0xff]
    %v2430 = vld [vmem:[%s2426 + $0x18] sm:$0xff]
    %v2432 = vsel %vm269, %v2423, 0
    %2434 = vmatprep.subr.mxu0 0.0
    %2435 = vmatpush1.msra.mxu0 0.0
    %2436 = vmatprep.subr.mxu0 0.0
    %2437 = vmatpush1.msra.mxu0 0.0
    %2438 = vmatprep.subr.mxu0 0.0
    %2439 = vmatpush1.msra.mxu0 0.0
    %2440 = vmatprep.subr.mxu0 0.0
    %2441 = vmatpush1.msra.mxu0 0.0
    %2442 = vmatprep.subr.mxu0 0.0
    %2443 = vmatpush1.msra.mxu0 0.0
    %2444 = vmatprep.subr.mxu0 0.0
    %2445 = vmatpush1.msra.mxu0 0.0
    %2446 = vmatprep.subr.mxu0 0.0
    %2447 = vmatpush1.msra.mxu0 0.0
    %2448 = vmatprep.subr.mxu0 0.0
    %2449 = vmatpush1.msra.mxu0 0.0
    %2450 = vmatprep.subr.mxu0 0.0
    %2451 = vmatpush1.msra.mxu0 0.0
    %2452 = vmatprep.subr.mxu0 0.0
    %2453 = vmatpush1.msra.mxu0 0.0
    %2454 = vmatprep.subr.mxu0 0.0
    %2455 = vmatpush1.msra.mxu0 0.0
    %2456 = vmatprep.subr.mxu0 0.0
    %2457 = vmatpush1.msra.mxu0 0.0
    %2458 = vmatprep.subr.mxu0 0.0
    %2459 = vmatpush1.msra.mxu0 %v2430
    %2460 = vmatprep.subr.mxu0 0.0
    %2461 = vmatpush1.msra.mxu0 %v2429
    %2462 = vmatprep.subr.mxu0 0.0
    %2463 = vmatpush1.msra.mxu0 %v2428
    %2464 = vmatprep.subr.mxu0 0.0
    %2465 = vmatpush1.msra.mxu0 %v2427
    %2466 = vmatprep.subr.mxu0 0.0
    %2467 = vmatpush2.msra.mxu0 0.0
    %2468 = vmatprep.subr.mxu0 0.0
    %2469 = vmatpush2.msra.mxu0 0.0
    %2470 = vmatprep.subr.mxu0 0.0
    %2471 = vmatpush2.msra.mxu0 0.0
    %2472 = vmatprep.subr.mxu0 0.0
    %2473 = vmatpush2.msra.mxu0 0.0
    %2474 = vmatprep.subr.mxu0 0.0
    %2475 = vmatpush2.msra.mxu0 0.0
    %2476 = vmatprep.subr.mxu0 0.0
    %2477 = vmatpush2.msra.mxu0 0.0
    %2478 = vmatprep.subr.mxu0 0.0
    %2479 = vmatpush2.msra.mxu0 0.0
    %2480 = vmatprep.subr.mxu0 0.0
    %2481 = vmatpush2.msra.mxu0 0.0
    %2482 = vmatprep.subr.mxu0 0.0
    %2483 = vmatpush2.msra.mxu0 0.0
    %2484 = vmatprep.subr.mxu0 0.0
    %2485 = vmatpush2.msra.mxu0 0.0
    %2486 = vmatprep.subr.mxu0 0.0
    %2487 = vmatpush2.msra.mxu0 0.0
    %2488 = vmatprep.subr.mxu0 0.0
    %2489 = vmatpush2.msra.mxu0 0.0
    %2490 = vmatprep.subr.mxu0 0.0
    %2491 = vmatpush2.msra.mxu0 0.0
    %2492 = vmatprep.subr.mxu0 0.0
    %2493 = vmatpush2.msra.mxu0 0.0
    %2494 = vmatprep.subr.mxu0 0.0
    %2495 = vmatpush2.msra.mxu0 0.0
    %2496 = vmatprep.subr.mxu0 0.0
    %2497 = vmatpush2.msra.mxu0 0.0
    %2498 = vmatprep.mubr.f32.mxu0 0.0
    %2499 = vmatmul.mubr.f32.gmra.mxu0 %v2432
    %v2500 = vpop.f32.mrf.mxu0
    %v2501 = vadd.f32 0.0, %v2500
    %v2502 = vpop.f32.mrf.mxu0
    %2503 = vdwg.mxu0
    %v2505 = vsel %vm269, %v2343, 0
    %2507 = vmatprep.subr.mxu0 0.0
    %2508 = vmatpush1.msra.mxu0 0.0
    %2509 = vmatprep.subr.mxu0 0.0
    %2510 = vmatpush1.msra.mxu0 0.0
    %2511 = vmatprep.subr.mxu0 0.0
    %2512 = vmatpush1.msra.mxu0 0.0
    %2513 = vmatprep.subr.mxu0 0.0
    %2514 = vmatpush1.msra.mxu0 0.0
    %2515 = vmatprep.subr.mxu0 0.0
    %2516 = vmatpush1.msra.mxu0 0.0
    %2517 = vmatprep.subr.mxu0 0.0
    %2518 = vmatpush1.msra.mxu0 0.0
    %2519 = vmatprep.subr.mxu0 0.0
    %2520 = vmatpush1.msra.mxu0 0.0
    %2521 = vmatprep.subr.mxu0 0.0
    %2522 = vmatpush1.msra.mxu0 0.0
    %2523 = vmatprep.subr.mxu0 0.0
    %2524 = vmatpush1.msra.mxu0 0.0
    %2525 = vmatprep.subr.mxu0 0.0
    %2526 = vmatpush1.msra.mxu0 0.0
    %2527 = vmatprep.subr.mxu0 0.0
    %2528 = vmatpush1.msra.mxu0 0.0
    %2529 = vmatprep.subr.mxu0 0.0
    %2530 = vmatpush1.msra.mxu0 0.0
    %2531 = vmatprep.subr.mxu0 0.0
    %2532 = vmatpush1.msra.mxu0 %v2350
    %2533 = vmatprep.subr.mxu0 0.0
    %2534 = vmatpush1.msra.mxu0 %v2349
    %2535 = vmatprep.subr.mxu0 0.0
    %2536 = vmatpush1.msra.mxu0 %v2348
    %2537 = vmatprep.subr.mxu0 0.0
    %2538 = vmatpush1.msra.mxu0 %v2347
    %2539 = vmatprep.subr.mxu0 0.0
    %2540 = vmatpush2.msra.mxu0 0.0
    %2541 = vmatprep.subr.mxu0 0.0
    %2542 = vmatpush2.msra.mxu0 0.0
    %2543 = vmatprep.subr.mxu0 0.0
    %2544 = vmatpush2.msra.mxu0 0.0
    %2545 = vmatprep.subr.mxu0 0.0
    %2546 = vmatpush2.msra.mxu0 0.0
    %2547 = vmatprep.subr.mxu0 0.0
    %2548 = vmatpush2.msra.mxu0 0.0
    %2549 = vmatprep.subr.mxu0 0.0
    %2550 = vmatpush2.msra.mxu0 0.0
    %2551 = vmatprep.subr.mxu0 0.0
    %2552 = vmatpush2.msra.mxu0 0.0
    %2553 = vmatprep.subr.mxu0 0.0
    %2554 = vmatpush2.msra.mxu0 0.0
    %2555 = vmatprep.subr.mxu0 0.0
    %2556 = vmatpush2.msra.mxu0 0.0
    %2557 = vmatprep.subr.mxu0 0.0
    %2558 = vmatpush2.msra.mxu0 0.0
    %2559 = vmatprep.subr.mxu0 0.0
    %2560 = vmatpush2.msra.mxu0 0.0
    %2561 = vmatprep.subr.mxu0 0.0
    %2562 = vmatpush2.msra.mxu0 0.0
    %2563 = vmatprep.subr.mxu0 0.0
    %2564 = vmatpush2.msra.mxu0 0.0
    %2565 = vmatprep.subr.mxu0 0.0
    %2566 = vmatpush2.msra.mxu0 0.0
    %2567 = vmatprep.subr.mxu0 0.0
    %2568 = vmatpush2.msra.mxu0 0.0
    %2569 = vmatprep.subr.mxu0 0.0
    %2570 = vmatpush2.msra.mxu0 0.0
    %2571 = vmatprep.mubr.f32.mxu0 0.0
    %2572 = vmatmul.mubr.f32.gmra.mxu0 %v2505
    %v2573 = vpop.f32.mrf.mxu0
    %v2574 = vadd.f32 %v2501, %v2573
    %v2575 = vpop.f32.mrf.mxu0
    %2576 = vdwg.mxu0
    %s2577 = scalar_lea.vmem %s3, 16
    %v2578 = vld [vmem:[%s2577] sm:$0xff]
    %v2580 = vsel %vm269, %v2578, 0
    %2582 = vmatprep.subr.mxu0 0.0
    %2583 = vmatpush1.msra.mxu0 0.0
    %2584 = vmatprep.subr.mxu0 0.0
    %2585 = vmatpush1.msra.mxu0 0.0
    %2586 = vmatprep.subr.mxu0 0.0
    %2587 = vmatpush1.msra.mxu0 0.0
    %2588 = vmatprep.subr.mxu0 0.0
    %2589 = vmatpush1.msra.mxu0 0.0
    %2590 = vmatprep.subr.mxu0 0.0
    %2591 = vmatpush1.msra.mxu0 0.0
    %2592 = vmatprep.subr.mxu0 0.0
    %2593 = vmatpush1.msra.mxu0 0.0
    %2594 = vmatprep.subr.mxu0 0.0
    %2595 = vmatpush1.msra.mxu0 0.0
    %2596 = vmatprep.subr.mxu0 0.0
    %2597 = vmatpush1.msra.mxu0 0.0
    %2598 = vmatprep.subr.mxu0 0.0
    %2599 = vmatpush1.msra.mxu0 0.0
    %2600 = vmatprep.subr.mxu0 0.0
    %2601 = vmatpush1.msra.mxu0 0.0
    %2602 = vmatprep.subr.mxu0 0.0
    %2603 = vmatpush1.msra.mxu0 0.0
    %2604 = vmatprep.subr.mxu0 0.0
    %2605 = vmatpush1.msra.mxu0 0.0
    %2606 = vmatprep.subr.mxu0 0.0
    %2607 = vmatpush1.msra.mxu0 %v2271
    %2608 = vmatprep.subr.mxu0 0.0
    %2609 = vmatpush1.msra.mxu0 %v2270
    %2610 = vmatprep.subr.mxu0 0.0
    %2611 = vmatpush1.msra.mxu0 %v2269
    %2612 = vmatprep.subr.mxu0 0.0
    %2613 = vmatpush1.msra.mxu0 %v2268
    %2614 = vmatprep.subr.mxu0 0.0
    %2615 = vmatpush2.msra.mxu0 0.0
    %2616 = vmatprep.subr.mxu0 0.0
    %2617 = vmatpush2.msra.mxu0 0.0
    %2618 = vmatprep.subr.mxu0 0.0
    %2619 = vmatpush2.msra.mxu0 0.0
    %2620 = vmatprep.subr.mxu0 0.0
    %2621 = vmatpush2.msra.mxu0 0.0
    %2622 = vmatprep.subr.mxu0 0.0
    %2623 = vmatpush2.msra.mxu0 0.0
    %2624 = vmatprep.subr.mxu0 0.0
    %2625 = vmatpush2.msra.mxu0 0.0
    %2626 = vmatprep.subr.mxu0 0.0
    %2627 = vmatpush2.msra.mxu0 0.0
    %2628 = vmatprep.subr.mxu0 0.0
    %2629 = vmatpush2.msra.mxu0 0.0
    %2630 = vmatprep.subr.mxu0 0.0
    %2631 = vmatpush2.msra.mxu0 0.0
    %2632 = vmatprep.subr.mxu0 0.0
    %2633 = vmatpush2.msra.mxu0 0.0
    %2634 = vmatprep.subr.mxu0 0.0
    %2635 = vmatpush2.msra.mxu0 0.0
    %2636 = vmatprep.subr.mxu0 0.0
    %2637 = vmatpush2.msra.mxu0 0.0
    %2638 = vmatprep.subr.mxu0 0.0
    %2639 = vmatpush2.msra.mxu0 0.0
    %2640 = vmatprep.subr.mxu0 0.0
    %2641 = vmatpush2.msra.mxu0 0.0
    %2642 = vmatprep.subr.mxu0 0.0
    %2643 = vmatpush2.msra.mxu0 0.0
    %2644 = vmatprep.subr.mxu0 0.0
    %2645 = vmatpush2.msra.mxu0 0.0
    %2646 = vmatprep.mubr.f32.mxu0 0.0
    %2647 = vmatmul.mubr.f32.gmra.mxu0 %v2580
    %v2648 = vpop.f32.mrf.mxu0
    %v2649 = vadd.f32 0.0, %v2648
    %v2650 = vpop.f32.mrf.mxu0
    %2651 = vdwg.mxu0
    %s2652 = scalar_lea.vmem %s5, 352
    %v2653 = vld [vmem:[%s2652] sm:$0xff]
    %v2654 = vld [vmem:[%s2652 + $0x8] sm:$0xff]
    %v2655 = vld [vmem:[%s2652 + $0x10] sm:$0xff]
    %v2656 = vld [vmem:[%s2652 + $0x18] sm:$0xff]
    %v2658 = vsel %vm269, %v2649, 0
    %2660 = vmatprep.subr.mxu0 0.0
    %2661 = vmatpush1.msra.mxu0 0.0
    %2662 = vmatprep.subr.mxu0 0.0
    %2663 = vmatpush1.msra.mxu0 0.0
    %2664 = vmatprep.subr.mxu0 0.0
    %2665 = vmatpush1.msra.mxu0 0.0
    %2666 = vmatprep.subr.mxu0 0.0
    %2667 = vmatpush1.msra.mxu0 0.0
    %2668 = vmatprep.subr.mxu0 0.0
    %2669 = vmatpush1.msra.mxu0 0.0
    %2670 = vmatprep.subr.mxu0 0.0
    %2671 = vmatpush1.msra.mxu0 0.0
    %2672 = vmatprep.subr.mxu0 0.0
    %2673 = vmatpush1.msra.mxu0 0.0
    %2674 = vmatprep.subr.mxu0 0.0
    %2675 = vmatpush1.msra.mxu0 0.0
    %2676 = vmatprep.subr.mxu0 0.0
    %2677 = vmatpush1.msra.mxu0 0.0
    %2678 = vmatprep.subr.mxu0 0.0
    %2679 = vmatpush1.msra.mxu0 0.0
    %2680 = vmatprep.subr.mxu0 0.0
    %2681 = vmatpush1.msra.mxu0 0.0
    %2682 = vmatprep.subr.mxu0 0.0
    %2683 = vmatpush1.msra.mxu0 0.0
    %2684 = vmatprep.subr.mxu0 0.0
    %2685 = vmatpush1.msra.mxu0 %v2656
    %2686 = vmatprep.subr.mxu0 0.0
    %2687 = vmatpush1.msra.mxu0 %v2655
    %2688 = vmatprep.subr.mxu0 0.0
    %2689 = vmatpush1.msra.mxu0 %v2654
    %2690 = vmatprep.subr.mxu0 0.0
    %2691 = vmatpush1.msra.mxu0 %v2653
    %2692 = vmatprep.subr.mxu0 0.0
    %2693 = vmatpush2.msra.mxu0 0.0
    %2694 = vmatprep.subr.mxu0 0.0
    %2695 = vmatpush2.msra.mxu0 0.0
    %2696 = vmatprep.subr.mxu0 0.0
    %2697 = vmatpush2.msra.mxu0 0.0
    %2698 = vmatprep.subr.mxu0 0.0
    %2699 = vmatpush2.msra.mxu0 0.0
    %2700 = vmatprep.subr.mxu0 0.0
    %2701 = vmatpush2.msra.mxu0 0.0
    %2702 = vmatprep.subr.mxu0 0.0
    %2703 = vmatpush2.msra.mxu0 0.0
    %2704 = vmatprep.subr.mxu0 0.0
    %2705 = vmatpush2.msra.mxu0 0.0
    %2706 = vmatprep.subr.mxu0 0.0
    %2707 = vmatpush2.msra.mxu0 0.0
    %2708 = vmatprep.subr.mxu0 0.0
    %2709 = vmatpush2.msra.mxu0 0.0
    %2710 = vmatprep.subr.mxu0 0.0
    %2711 = vmatpush2.msra.mxu0 0.0
    %2712 = vmatprep.subr.mxu0 0.0
    %2713 = vmatpush2.msra.mxu0 0.0
    %2714 = vmatprep.subr.mxu0 0.0
    %2715 = vmatpush2.msra.mxu0 0.0
    %2716 = vmatprep.subr.mxu0 0.0
    %2717 = vmatpush2.msra.mxu0 0.0
    %2718 = vmatprep.subr.mxu0 0.0
    %2719 = vmatpush2.msra.mxu0 0.0
    %2720 = vmatprep.subr.mxu0 0.0
    %2721 = vmatpush2.msra.mxu0 0.0
    %2722 = vmatprep.subr.mxu0 0.0
    %2723 = vmatpush2.msra.mxu0 0.0
    %2724 = vmatprep.mubr.f32.mxu0 0.0
    %2725 = vmatmul.mubr.f32.gmra.mxu0 %v2658
    %v2726 = vpop.f32.mrf.mxu0
    %v2727 = vadd.f32 0.0, %v2726
    %v2728 = vpop.f32.mrf.mxu0
    %2729 = vdwg.mxu0
    %v2730 = vadd.f32 %v2574, %v2727
    %s2731 = scalar_lea.vmem %s3, 24
    %v2732 = vld [vmem:[%s2731] sm:$0xff]
    %v2734 = vsel %vm269, %v2732, 0
    %2736 = vmatprep.subr.mxu0 0.0
    %2737 = vmatpush1.msra.mxu0 0.0
    %2738 = vmatprep.subr.mxu0 0.0
    %2739 = vmatpush1.msra.mxu0 0.0
    %2740 = vmatprep.subr.mxu0 0.0
    %2741 = vmatpush1.msra.mxu0 0.0
    %2742 = vmatprep.subr.mxu0 0.0
    %2743 = vmatpush1.msra.mxu0 0.0
    %2744 = vmatprep.subr.mxu0 0.0
    %2745 = vmatpush1.msra.mxu0 0.0
    %2746 = vmatprep.subr.mxu0 0.0
    %2747 = vmatpush1.msra.mxu0 0.0
    %2748 = vmatprep.subr.mxu0 0.0
    %2749 = vmatpush1.msra.mxu0 0.0
    %2750 = vmatprep.subr.mxu0 0.0
    %2751 = vmatpush1.msra.mxu0 0.0
    %2752 = vmatprep.subr.mxu0 0.0
    %2753 = vmatpush1.msra.mxu0 0.0
    %2754 = vmatprep.subr.mxu0 0.0
    %2755 = vmatpush1.msra.mxu0 0.0
    %2756 = vmatprep.subr.mxu0 0.0
    %2757 = vmatpush1.msra.mxu0 0.0
    %2758 = vmatprep.subr.mxu0 0.0
    %2759 = vmatpush1.msra.mxu0 0.0
    %2760 = vmatprep.subr.mxu0 0.0
    %2761 = vmatpush1.msra.mxu0 %v2271
    %2762 = vmatprep.subr.mxu0 0.0
    %2763 = vmatpush1.msra.mxu0 %v2270
    %2764 = vmatprep.subr.mxu0 0.0
    %2765 = vmatpush1.msra.mxu0 %v2269
    %2766 = vmatprep.subr.mxu0 0.0
    %2767 = vmatpush1.msra.mxu0 %v2268
    %2768 = vmatprep.subr.mxu0 0.0
    %2769 = vmatpush2.msra.mxu0 0.0
    %2770 = vmatprep.subr.mxu0 0.0
    %2771 = vmatpush2.msra.mxu0 0.0
    %2772 = vmatprep.subr.mxu0 0.0
    %2773 = vmatpush2.msra.mxu0 0.0
    %2774 = vmatprep.subr.mxu0 0.0
    %2775 = vmatpush2.msra.mxu0 0.0
    %2776 = vmatprep.subr.mxu0 0.0
    %2777 = vmatpush2.msra.mxu0 0.0
    %2778 = vmatprep.subr.mxu0 0.0
    %2779 = vmatpush2.msra.mxu0 0.0
    %2780 = vmatprep.subr.mxu0 0.0
    %2781 = vmatpush2.msra.mxu0 0.0
    %2782 = vmatprep.subr.mxu0 0.0
    %2783 = vmatpush2.msra.mxu0 0.0
    %2784 = vmatprep.subr.mxu0 0.0
    %2785 = vmatpush2.msra.mxu0 0.0
    %2786 = vmatprep.subr.mxu0 0.0
    %2787 = vmatpush2.msra.mxu0 0.0
    %2788 = vmatprep.subr.mxu0 0.0
    %2789 = vmatpush2.msra.mxu0 0.0
    %2790 = vmatprep.subr.mxu0 0.0
    %2791 = vmatpush2.msra.mxu0 0.0
    %2792 = vmatprep.subr.mxu0 0.0
    %2793 = vmatpush2.msra.mxu0 0.0
    %2794 = vmatprep.subr.mxu0 0.0
    %2795 = vmatpush2.msra.mxu0 0.0
    %2796 = vmatprep.subr.mxu0 0.0
    %2797 = vmatpush2.msra.mxu0 0.0
    %2798 = vmatprep.subr.mxu0 0.0
    %2799 = vmatpush2.msra.mxu0 0.0
    %2800 = vmatprep.mubr.f32.mxu0 0.0
    %2801 = vmatmul.mubr.f32.gmra.mxu0 %v2734
    %v2802 = vpop.f32.mrf.mxu0
    %v2803 = vadd.f32 0.0, %v2802
    %v2804 = vpop.f32.mrf.mxu0
    %2805 = vdwg.mxu0
    %s2806 = scalar_lea.vmem %s5, 384
    %v2807 = vld [vmem:[%s2806] sm:$0xff]
    %v2808 = vld [vmem:[%s2806 + $0x8] sm:$0xff]
    %v2809 = vld [vmem:[%s2806 + $0x10] sm:$0xff]
    %v2810 = vld [vmem:[%s2806 + $0x18] sm:$0xff]
    %v2812 = vsel %vm269, %v2803, 0
    %2814 = vmatprep.subr.mxu0 0.0
    %2815 = vmatpush1.msra.mxu0 0.0
    %2816 = vmatprep.subr.mxu0 0.0
    %2817 = vmatpush1.msra.mxu0 0.0
    %2818 = vmatprep.subr.mxu0 0.0
    %2819 = vmatpush1.msra.mxu0 0.0
    %2820 = vmatprep.subr.mxu0 0.0
    %2821 = vmatpush1.msra.mxu0 0.0
    %2822 = vmatprep.subr.mxu0 0.0
    %2823 = vmatpush1.msra.mxu0 0.0
    %2824 = vmatprep.subr.mxu0 0.0
    %2825 = vmatpush1.msra.mxu0 0.0
    %2826 = vmatprep.subr.mxu0 0.0
    %2827 = vmatpush1.msra.mxu0 0.0
    %2828 = vmatprep.subr.mxu0 0.0
    %2829 = vmatpush1.msra.mxu0 0.0
    %2830 = vmatprep.subr.mxu0 0.0
    %2831 = vmatpush1.msra.mxu0 0.0
    %2832 = vmatprep.subr.mxu0 0.0
    %2833 = vmatpush1.msra.mxu0 0.0
    %2834 = vmatprep.subr.mxu0 0.0
    %2835 = vmatpush1.msra.mxu0 0.0
    %2836 = vmatprep.subr.mxu0 0.0
    %2837 = vmatpush1.msra.mxu0 0.0
    %2838 = vmatprep.subr.mxu0 0.0
    %2839 = vmatpush1.msra.mxu0 %v2810
    %2840 = vmatprep.subr.mxu0 0.0
    %2841 = vmatpush1.msra.mxu0 %v2809
    %2842 = vmatprep.subr.mxu0 0.0
    %2843 = vmatpush1.msra.mxu0 %v2808
    %2844 = vmatprep.subr.mxu0 0.0
    %2845 = vmatpush1.msra.mxu0 %v2807
    %2846 = vmatprep.subr.mxu0 0.0
    %2847 = vmatpush2.msra.mxu0 0.0
    %2848 = vmatprep.subr.mxu0 0.0
    %2849 = vmatpush2.msra.mxu0 0.0
    %2850 = vmatprep.subr.mxu0 0.0
    %2851 = vmatpush2.msra.mxu0 0.0
    %2852 = vmatprep.subr.mxu0 0.0
    %2853 = vmatpush2.msra.mxu0 0.0
    %2854 = vmatprep.subr.mxu0 0.0
    %2855 = vmatpush2.msra.mxu0 0.0
    %2856 = vmatprep.subr.mxu0 0.0
    %2857 = vmatpush2.msra.mxu0 0.0
    %2858 = vmatprep.subr.mxu0 0.0
    %2859 = vmatpush2.msra.mxu0 0.0
    %2860 = vmatprep.subr.mxu0 0.0
    %2861 = vmatpush2.msra.mxu0 0.0
    %2862 = vmatprep.subr.mxu0 0.0
    %2863 = vmatpush2.msra.mxu0 0.0
    %2864 = vmatprep.subr.mxu0 0.0
    %2865 = vmatpush2.msra.mxu0 0.0
    %2866 = vmatprep.subr.mxu0 0.0
    %2867 = vmatpush2.msra.mxu0 0.0
    %2868 = vmatprep.subr.mxu0 0.0
    %2869 = vmatpush2.msra.mxu0 0.0
    %2870 = vmatprep.subr.mxu0 0.0
    %2871 = vmatpush2.msra.mxu0 0.0
    %2872 = vmatprep.subr.mxu0 0.0
    %2873 = vmatpush2.msra.mxu0 0.0
    %2874 = vmatprep.subr.mxu0 0.0
    %2875 = vmatpush2.msra.mxu0 0.0
    %2876 = vmatprep.subr.mxu0 0.0
    %2877 = vmatpush2.msra.mxu0 0.0
    %2878 = vmatprep.mubr.f32.mxu0 0.0
    %2879 = vmatmul.mubr.f32.gmra.mxu0 %v2812
    %v2880 = vpop.f32.mrf.mxu0
    %v2881 = vadd.f32 0.0, %v2880
    %v2882 = vpop.f32.mrf.mxu0
    %2883 = vdwg.mxu0
    %v2884 = vadd.f32 %v2730, %v2881
    %s2885 = scalar_lea.vmem %s3, 32
    %v2886 = vld [vmem:[%s2885] sm:$0xff]
    %v2888 = vsel %vm269, %v2886, 0
    %2890 = vmatprep.subr.mxu0 0.0
    %2891 = vmatpush1.msra.mxu0 0.0
    %2892 = vmatprep.subr.mxu0 0.0
    %2893 = vmatpush1.msra.mxu0 0.0
    %2894 = vmatprep.subr.mxu0 0.0
    %2895 = vmatpush1.msra.mxu0 0.0
    %2896 = vmatprep.subr.mxu0 0.0
    %2897 = vmatpush1.msra.mxu0 0.0
    %2898 = vmatprep.subr.mxu0 0.0
    %2899 = vmatpush1.msra.mxu0 0.0
    %2900 = vmatprep.subr.mxu0 0.0
    %2901 = vmatpush1.msra.mxu0 0.0
    %2902 = vmatprep.subr.mxu0 0.0
    %2903 = vmatpush1.msra.mxu0 0.0
    %2904 = vmatprep.subr.mxu0 0.0
    %2905 = vmatpush1.msra.mxu0 0.0
    %2906 = vmatprep.subr.mxu0 0.0
    %2907 = vmatpush1.msra.mxu0 0.0
    %2908 = vmatprep.subr.mxu0 0.0
    %2909 = vmatpush1.msra.mxu0 0.0
    %2910 = vmatprep.subr.mxu0 0.0
    %2911 = vmatpush1.msra.mxu0 0.0
    %2912 = vmatprep.subr.mxu0 0.0
    %2913 = vmatpush1.msra.mxu0 0.0
    %2914 = vmatprep.subr.mxu0 0.0
    %2915 = vmatpush1.msra.mxu0 %v2271
    %2916 = vmatprep.subr.mxu0 0.0
    %2917 = vmatpush1.msra.mxu0 %v2270
    %2918 = vmatprep.subr.mxu0 0.0
    %2919 = vmatpush1.msra.mxu0 %v2269
    %2920 = vmatprep.subr.mxu0 0.0
    %2921 = vmatpush1.msra.mxu0 %v2268
    %2922 = vmatprep.subr.mxu0 0.0
    %2923 = vmatpush2.msra.mxu0 0.0
    %2924 = vmatprep.subr.mxu0 0.0
    %2925 = vmatpush2.msra.mxu0 0.0
    %2926 = vmatprep.subr.mxu0 0.0
    %2927 = vmatpush2.msra.mxu0 0.0
    %2928 = vmatprep.subr.mxu0 0.0
    %2929 = vmatpush2.msra.mxu0 0.0
    %2930 = vmatprep.subr.mxu0 0.0
    %2931 = vmatpush2.msra.mxu0 0.0
    %2932 = vmatprep.subr.mxu0 0.0
    %2933 = vmatpush2.msra.mxu0 0.0
    %2934 = vmatprep.subr.mxu0 0.0
    %2935 = vmatpush2.msra.mxu0 0.0
    %2936 = vmatprep.subr.mxu0 0.0
    %2937 = vmatpush2.msra.mxu0 0.0
    %2938 = vmatprep.subr.mxu0 0.0
    %2939 = vmatpush2.msra.mxu0 0.0
    %2940 = vmatprep.subr.mxu0 0.0
    %2941 = vmatpush2.msra.mxu0 0.0
    %2942 = vmatprep.subr.mxu0 0.0
    %2943 = vmatpush2.msra.mxu0 0.0
    %2944 = vmatprep.subr.mxu0 0.0
    %2945 = vmatpush2.msra.mxu0 0.0
    %2946 = vmatprep.subr.mxu0 0.0
    %2947 = vmatpush2.msra.mxu0 0.0
    %2948 = vmatprep.subr.mxu0 0.0
    %2949 = vmatpush2.msra.mxu0 0.0
    %2950 = vmatprep.subr.mxu0 0.0
    %2951 = vmatpush2.msra.mxu0 0.0
    %2952 = vmatprep.subr.mxu0 0.0
    %2953 = vmatpush2.msra.mxu0 0.0
    %2954 = vmatprep.mubr.f32.mxu0 0.0
    %2955 = vmatmul.mubr.f32.gmra.mxu0 %v2888
    %v2956 = vpop.f32.mrf.mxu0
    %v2957 = vadd.f32 0.0, %v2956
    %v2958 = vpop.f32.mrf.mxu0
    %2959 = vdwg.mxu0
    %s2960 = scalar_lea.vmem %s5, 416
    %v2961 = vld [vmem:[%s2960] sm:$0xff]
    %v2962 = vld [vmem:[%s2960 + $0x8] sm:$0xff]
    %v2963 = vld [vmem:[%s2960 + $0x10] sm:$0xff]
    %v2964 = vld [vmem:[%s2960 + $0x18] sm:$0xff]
    %v2966 = vsel %vm269, %v2957, 0
    %2968 = vmatprep.subr.mxu0 0.0
    %2969 = vmatpush1.msra.mxu0 0.0
    %2970 = vmatprep.subr.mxu0 0.0
    %2971 = vmatpush1.msra.mxu0 0.0
    %2972 = vmatprep.subr.mxu0 0.0
    %2973 = vmatpush1.msra.mxu0 0.0
    %2974 = vmatprep.subr.mxu0 0.0
    %2975 = vmatpush1.msra.mxu0 0.0
    %2976 = vmatprep.subr.mxu0 0.0
    %2977 = vmatpush1.msra.mxu0 0.0
    %2978 = vmatprep.subr.mxu0 0.0
    %2979 = vmatpush1.msra.mxu0 0.0
    %2980 = vmatprep.subr.mxu0 0.0
    %2981 = vmatpush1.msra.mxu0 0.0
    %2982 = vmatprep.subr.mxu0 0.0
    %2983 = vmatpush1.msra.mxu0 0.0
    %2984 = vmatprep.subr.mxu0 0.0
    %2985 = vmatpush1.msra.mxu0 0.0
    %2986 = vmatprep.subr.mxu0 0.0
    %2987 = vmatpush1.msra.mxu0 0.0
    %2988 = vmatprep.subr.mxu0 0.0
    %2989 = vmatpush1.msra.mxu0 0.0
    %2990 = vmatprep.subr.mxu0 0.0
    %2991 = vmatpush1.msra.mxu0 0.0
    %2992 = vmatprep.subr.mxu0 0.0
    %2993 = vmatpush1.msra.mxu0 %v2964
    %2994 = vmatprep.subr.mxu0 0.0
    %2995 = vmatpush1.msra.mxu0 %v2963
    %2996 = vmatprep.subr.mxu0 0.0
    %2997 = vmatpush1.msra.mxu0 %v2962
    %2998 = vmatprep.subr.mxu0 0.0
    %2999 = vmatpush1.msra.mxu0 %v2961
    %3000 = vmatprep.subr.mxu0 0.0
    %3001 = vmatpush2.msra.mxu0 0.0
    %3002 = vmatprep.subr.mxu0 0.0
    %3003 = vmatpush2.msra.mxu0 0.0
    %3004 = vmatprep.subr.mxu0 0.0
    %3005 = vmatpush2.msra.mxu0 0.0
    %3006 = vmatprep.subr.mxu0 0.0
    %3007 = vmatpush2.msra.mxu0 0.0
    %3008 = vmatprep.subr.mxu0 0.0
    %3009 = vmatpush2.msra.mxu0 0.0
    %3010 = vmatprep.subr.mxu0 0.0
    %3011 = vmatpush2.msra.mxu0 0.0
    %3012 = vmatprep.subr.mxu0 0.0
    %3013 = vmatpush2.msra.mxu0 0.0
    %3014 = vmatprep.subr.mxu0 0.0
    %3015 = vmatpush2.msra.mxu0 0.0
    %3016 = vmatprep.subr.mxu0 0.0
    %3017 = vmatpush2.msra.mxu0 0.0
    %3018 = vmatprep.subr.mxu0 0.0
    %3019 = vmatpush2.msra.mxu0 0.0
    %3020 = vmatprep.subr.mxu0 0.0
    %3021 = vmatpush2.msra.mxu0 0.0
    %3022 = vmatprep.subr.mxu0 0.0
    %3023 = vmatpush2.msra.mxu0 0.0
    %3024 = vmatprep.subr.mxu0 0.0
    %3025 = vmatpush2.msra.mxu0 0.0
    %3026 = vmatprep.subr.mxu0 0.0
    %3027 = vmatpush2.msra.mxu0 0.0
    %3028 = vmatprep.subr.mxu0 0.0
    %3029 = vmatpush2.msra.mxu0 0.0
    %3030 = vmatprep.subr.mxu0 0.0
    %3031 = vmatpush2.msra.mxu0 0.0
    %3032 = vmatprep.mubr.f32.mxu0 0.0
    %3033 = vmatmul.mubr.f32.gmra.mxu0 %v2966
    %v3034 = vpop.f32.mrf.mxu0
    %v3035 = vadd.f32 0.0, %v3034
    %v3036 = vpop.f32.mrf.mxu0
    %3037 = vdwg.mxu0
    %v3038 = vadd.f32 %v2884, %v3035
    %s3039 = scalar_lea.vmem %s3, 40
    %v3040 = vld [vmem:[%s3039] sm:$0xff]
    %v3042 = vsel %vm269, %v3040, 0
    %3044 = vmatprep.subr.mxu0 0.0
    %3045 = vmatpush1.msra.mxu0 0.0
    %3046 = vmatprep.subr.mxu0 0.0
    %3047 = vmatpush1.msra.mxu0 0.0
    %3048 = vmatprep.subr.mxu0 0.0
    %3049 = vmatpush1.msra.mxu0 0.0
    %3050 = vmatprep.subr.mxu0 0.0
    %3051 = vmatpush1.msra.mxu0 0.0
    %3052 = vmatprep.subr.mxu0 0.0
    %3053 = vmatpush1.msra.mxu0 0.0
    %3054 = vmatprep.subr.mxu0 0.0
    %3055 = vmatpush1.msra.mxu0 0.0
    %3056 = vmatprep.subr.mxu0 0.0
    %3057 = vmatpush1.msra.mxu0 0.0
    %3058 = vmatprep.subr.mxu0 0.0
    %3059 = vmatpush1.msra.mxu0 0.0
    %3060 = vmatprep.subr.mxu0 0.0
    %3061 = vmatpush1.msra.mxu0 0.0
    %3062 = vmatprep.subr.mxu0 0.0
    %3063 = vmatpush1.msra.mxu0 0.0
    %3064 = vmatprep.subr.mxu0 0.0
    %3065 = vmatpush1.msra.mxu0 0.0
    %3066 = vmatprep.subr.mxu0 0.0
    %3067 = vmatpush1.msra.mxu0 0.0
    %3068 = vmatprep.subr.mxu0 0.0
    %3069 = vmatpush1.msra.mxu0 %v2271
    %3070 = vmatprep.subr.mxu0 0.0
    %3071 = vmatpush1.msra.mxu0 %v2270
    %3072 = vmatprep.subr.mxu0 0.0
    %3073 = vmatpush1.msra.mxu0 %v2269
    %3074 = vmatprep.subr.mxu0 0.0
    %3075 = vmatpush1.msra.mxu0 %v2268
    %3076 = vmatprep.subr.mxu0 0.0
    %3077 = vmatpush2.msra.mxu0 0.0
    %3078 = vmatprep.subr.mxu0 0.0
    %3079 = vmatpush2.msra.mxu0 0.0
    %3080 = vmatprep.subr.mxu0 0.0
    %3081 = vmatpush2.msra.mxu0 0.0
    %3082 = vmatprep.subr.mxu0 0.0
    %3083 = vmatpush2.msra.mxu0 0.0
    %3084 = vmatprep.subr.mxu0 0.0
    %3085 = vmatpush2.msra.mxu0 0.0
    %3086 = vmatprep.subr.mxu0 0.0
    %3087 = vmatpush2.msra.mxu0 0.0
    %3088 = vmatprep.subr.mxu0 0.0
    %3089 = vmatpush2.msra.mxu0 0.0
    %3090 = vmatprep.subr.mxu0 0.0
    %3091 = vmatpush2.msra.mxu0 0.0
    %3092 = vmatprep.subr.mxu0 0.0
    %3093 = vmatpush2.msra.mxu0 0.0
    %3094 = vmatprep.subr.mxu0 0.0
    %3095 = vmatpush2.msra.mxu0 0.0
    %3096 = vmatprep.subr.mxu0 0.0
    %3097 = vmatpush2.msra.mxu0 0.0
    %3098 = vmatprep.subr.mxu0 0.0
    %3099 = vmatpush2.msra.mxu0 0.0
    %3100 = vmatprep.subr.mxu0 0.0
    %3101 = vmatpush2.msra.mxu0 0.0
    %3102 = vmatprep.subr.mxu0 0.0
    %3103 = vmatpush2.msra.mxu0 0.0
    %3104 = vmatprep.subr.mxu0 0.0
    %3105 = vmatpush2.msra.mxu0 0.0
    %3106 = vmatprep.subr.mxu0 0.0
    %3107 = vmatpush2.msra.mxu0 0.0
    %3108 = vmatprep.mubr.f32.mxu0 0.0
    %3109 = vmatmul.mubr.f32.gmra.mxu0 %v3042
    %v3110 = vpop.f32.mrf.mxu0
    %v3111 = vadd.f32 0.0, %v3110
    %v3112 = vpop.f32.mrf.mxu0
    %3113 = vdwg.mxu0
    %s3114 = scalar_lea.vmem %s5, 448
    %v3115 = vld [vmem:[%s3114] sm:$0xff]
    %v3116 = vld [vmem:[%s3114 + $0x8] sm:$0xff]
    %v3117 = vld [vmem:[%s3114 + $0x10] sm:$0xff]
    %v3118 = vld [vmem:[%s3114 + $0x18] sm:$0xff]
    %v3120 = vsel %vm269, %v3111, 0
    %3122 = vmatprep.subr.mxu0 0.0
    %3123 = vmatpush1.msra.mxu0 0.0
    %3124 = vmatprep.subr.mxu0 0.0
    %3125 = vmatpush1.msra.mxu0 0.0
    %3126 = vmatprep.subr.mxu0 0.0
    %3127 = vmatpush1.msra.mxu0 0.0
    %3128 = vmatprep.subr.mxu0 0.0
    %3129 = vmatpush1.msra.mxu0 0.0
    %3130 = vmatprep.subr.mxu0 0.0
    %3131 = vmatpush1.msra.mxu0 0.0
    %3132 = vmatprep.subr.mxu0 0.0
    %3133 = vmatpush1.msra.mxu0 0.0
    %3134 = vmatprep.subr.mxu0 0.0
    %3135 = vmatpush1.msra.mxu0 0.0
    %3136 = vmatprep.subr.mxu0 0.0
    %3137 = vmatpush1.msra.mxu0 0.0
    %3138 = vmatprep.subr.mxu0 0.0
    %3139 = vmatpush1.msra.mxu0 0.0
    %3140 = vmatprep.subr.mxu0 0.0
    %3141 = vmatpush1.msra.mxu0 0.0
    %3142 = vmatprep.subr.mxu0 0.0
    %3143 = vmatpush1.msra.mxu0 0.0
    %3144 = vmatprep.subr.mxu0 0.0
    %3145 = vmatpush1.msra.mxu0 0.0
    %3146 = vmatprep.subr.mxu0 0.0
    %3147 = vmatpush1.msra.mxu0 %v3118
    %3148 = vmatprep.subr.mxu0 0.0
    %3149 = vmatpush1.msra.mxu0 %v3117
    %3150 = vmatprep.subr.mxu0 0.0
    %3151 = vmatpush1.msra.mxu0 %v3116
    %3152 = vmatprep.subr.mxu0 0.0
    %3153 = vmatpush1.msra.mxu0 %v3115
    %3154 = vmatprep.subr.mxu0 0.0
    %3155 = vmatpush2.msra.mxu0 0.0
    %3156 = vmatprep.subr.mxu0 0.0
    %3157 = vmatpush2.msra.mxu0 0.0
    %3158 = vmatprep.subr.mxu0 0.0
    %3159 = vmatpush2.msra.mxu0 0.0
    %3160 = vmatprep.subr.mxu0 0.0
    %3161 = vmatpush2.msra.mxu0 0.0
    %3162 = vmatprep.subr.mxu0 0.0
    %3163 = vmatpush2.msra.mxu0 0.0
    %3164 = vmatprep.subr.mxu0 0.0
    %3165 = vmatpush2.msra.mxu0 0.0
    %3166 = vmatprep.subr.mxu0 0.0
    %3167 = vmatpush2.msra.mxu0 0.0
    %3168 = vmatprep.subr.mxu0 0.0
    %3169 = vmatpush2.msra.mxu0 0.0
    %3170 = vmatprep.subr.mxu0 0.0
    %3171 = vmatpush2.msra.mxu0 0.0
    %3172 = vmatprep.subr.mxu0 0.0
    %3173 = vmatpush2.msra.mxu0 0.0
    %3174 = vmatprep.subr.mxu0 0.0
    %3175 = vmatpush2.msra.mxu0 0.0
    %3176 = vmatprep.subr.mxu0 0.0
    %3177 = vmatpush2.msra.mxu0 0.0
    %3178 = vmatprep.subr.mxu0 0.0
    %3179 = vmatpush2.msra.mxu0 0.0
    %3180 = vmatprep.subr.mxu0 0.0
    %3181 = vmatpush2.msra.mxu0 0.0
    %3182 = vmatprep.subr.mxu0 0.0
    %3183 = vmatpush2.msra.mxu0 0.0
    %3184 = vmatprep.subr.mxu0 0.0
    %3185 = vmatpush2.msra.mxu0 0.0
    %3186 = vmatprep.mubr.f32.mxu0 0.0
    %3187 = vmatmul.mubr.f32.gmra.mxu0 %v3120
    %v3188 = vpop.f32.mrf.mxu0
    %v3189 = vadd.f32 0.0, %v3188
    %v3190 = vpop.f32.mrf.mxu0
    %3191 = vdwg.mxu0
    %v3192 = vadd.f32 %v3038, %v3189
    %s3193 = scalar_lea.vmem %s3, 48
    %v3194 = vld [vmem:[%s3193] sm:$0xff]
    %v3196 = vsel %vm269, %v3194, 0
    %3198 = vmatprep.subr.mxu0 0.0
    %3199 = vmatpush1.msra.mxu0 0.0
    %3200 = vmatprep.subr.mxu0 0.0
    %3201 = vmatpush1.msra.mxu0 0.0
    %3202 = vmatprep.subr.mxu0 0.0
    %3203 = vmatpush1.msra.mxu0 0.0
    %3204 = vmatprep.subr.mxu0 0.0
    %3205 = vmatpush1.msra.mxu0 0.0
    %3206 = vmatprep.subr.mxu0 0.0
    %3207 = vmatpush1.msra.mxu0 0.0
    %3208 = vmatprep.subr.mxu0 0.0
    %3209 = vmatpush1.msra.mxu0 0.0
    %3210 = vmatprep.subr.mxu0 0.0
    %3211 = vmatpush1.msra.mxu0 0.0
    %3212 = vmatprep.subr.mxu0 0.0
    %3213 = vmatpush1.msra.mxu0 0.0
    %3214 = vmatprep.subr.mxu0 0.0
    %3215 = vmatpush1.msra.mxu0 0.0
    %3216 = vmatprep.subr.mxu0 0.0
    %3217 = vmatpush1.msra.mxu0 0.0
    %3218 = vmatprep.subr.mxu0 0.0
    %3219 = vmatpush1.msra.mxu0 0.0
    %3220 = vmatprep.subr.mxu0 0.0
    %3221 = vmatpush1.msra.mxu0 0.0
    %3222 = vmatprep.subr.mxu0 0.0
    %3223 = vmatpush1.msra.mxu0 %v2271
    %3224 = vmatprep.subr.mxu0 0.0
    %3225 = vmatpush1.msra.mxu0 %v2270
    %3226 = vmatprep.subr.mxu0 0.0
    %3227 = vmatpush1.msra.mxu0 %v2269
    %3228 = vmatprep.subr.mxu0 0.0
    %3229 = vmatpush1.msra.mxu0 %v2268
    %3230 = vmatprep.subr.mxu0 0.0
    %3231 = vmatpush2.msra.mxu0 0.0
    %3232 = vmatprep.subr.mxu0 0.0
    %3233 = vmatpush2.msra.mxu0 0.0
    %3234 = vmatprep.subr.mxu0 0.0
    %3235 = vmatpush2.msra.mxu0 0.0
    %3236 = vmatprep.subr.mxu0 0.0
    %3237 = vmatpush2.msra.mxu0 0.0
    %3238 = vmatprep.subr.mxu0 0.0
    %3239 = vmatpush2.msra.mxu0 0.0
    %3240 = vmatprep.subr.mxu0 0.0
    %3241 = vmatpush2.msra.mxu0 0.0
    %3242 = vmatprep.subr.mxu0 0.0
    %3243 = vmatpush2.msra.mxu0 0.0
    %3244 = vmatprep.subr.mxu0 0.0
    %3245 = vmatpush2.msra.mxu0 0.0
    %3246 = vmatprep.subr.mxu0 0.0
    %3247 = vmatpush2.msra.mxu0 0.0
    %3248 = vmatprep.subr.mxu0 0.0
    %3249 = vmatpush2.msra.mxu0 0.0
    %3250 = vmatprep.subr.mxu0 0.0
    %3251 = vmatpush2.msra.mxu0 0.0
    %3252 = vmatprep.subr.mxu0 0.0
    %3253 = vmatpush2.msra.mxu0 0.0
    %3254 = vmatprep.subr.mxu0 0.0
    %3255 = vmatpush2.msra.mxu0 0.0
    %3256 = vmatprep.subr.mxu0 0.0
    %3257 = vmatpush2.msra.mxu0 0.0
    %3258 = vmatprep.subr.mxu0 0.0
    %3259 = vmatpush2.msra.mxu0 0.0
    %3260 = vmatprep.subr.mxu0 0.0
    %3261 = vmatpush2.msra.mxu0 0.0
    %3262 = vmatprep.mubr.f32.mxu0 0.0
    %3263 = vmatmul.mubr.f32.gmra.mxu0 %v3196
    %v3264 = vpop.f32.mrf.mxu0
    %v3265 = vadd.f32 0.0, %v3264
    %v3266 = vpop.f32.mrf.mxu0
    %3267 = vdwg.mxu0
    %s3268 = scalar_lea.vmem %s5, 480
    %v3269 = vld [vmem:[%s3268] sm:$0xff]
    %v3270 = vld [vmem:[%s3268 + $0x8] sm:$0xff]
    %v3271 = vld [vmem:[%s3268 + $0x10] sm:$0xff]
    %v3272 = vld [vmem:[%s3268 + $0x18] sm:$0xff]
    %v3274 = vsel %vm269, %v3265, 0
    %3276 = vmatprep.subr.mxu0 0.0
    %3277 = vmatpush1.msra.mxu0 0.0
    %3278 = vmatprep.subr.mxu0 0.0
    %3279 = vmatpush1.msra.mxu0 0.0
    %3280 = vmatprep.subr.mxu0 0.0
    %3281 = vmatpush1.msra.mxu0 0.0
    %3282 = vmatprep.subr.mxu0 0.0
    %3283 = vmatpush1.msra.mxu0 0.0
    %3284 = vmatprep.subr.mxu0 0.0
    %3285 = vmatpush1.msra.mxu0 0.0
    %3286 = vmatprep.subr.mxu0 0.0
    %3287 = vmatpush1.msra.mxu0 0.0
    %3288 = vmatprep.subr.mxu0 0.0
    %3289 = vmatpush1.msra.mxu0 0.0
    %3290 = vmatprep.subr.mxu0 0.0
    %3291 = vmatpush1.msra.mxu0 0.0
    %3292 = vmatprep.subr.mxu0 0.0
    %3293 = vmatpush1.msra.mxu0 0.0
    %3294 = vmatprep.subr.mxu0 0.0
    %3295 = vmatpush1.msra.mxu0 0.0
    %3296 = vmatprep.subr.mxu0 0.0
    %3297 = vmatpush1.msra.mxu0 0.0
    %3298 = vmatprep.subr.mxu0 0.0
    %3299 = vmatpush1.msra.mxu0 0.0
    %3300 = vmatprep.subr.mxu0 0.0
    %3301 = vmatpush1.msra.mxu0 %v3272
    %3302 = vmatprep.subr.mxu0 0.0
    %3303 = vmatpush1.msra.mxu0 %v3271
    %3304 = vmatprep.subr.mxu0 0.0
    %3305 = vmatpush1.msra.mxu0 %v3270
    %3306 = vmatprep.subr.mxu0 0.0
    %3307 = vmatpush1.msra.mxu0 %v3269
    %3308 = vmatprep.subr.mxu0 0.0
    %3309 = vmatpush2.msra.mxu0 0.0
    %3310 = vmatprep.subr.mxu0 0.0
    %3311 = vmatpush2.msra.mxu0 0.0
    %3312 = vmatprep.subr.mxu0 0.0
    %3313 = vmatpush2.msra.mxu0 0.0
    %3314 = vmatprep.subr.mxu0 0.0
    %3315 = vmatpush2.msra.mxu0 0.0
    %3316 = vmatprep.subr.mxu0 0.0
    %3317 = vmatpush2.msra.mxu0 0.0
    %3318 = vmatprep.subr.mxu0 0.0
    %3319 = vmatpush2.msra.mxu0 0.0
    %3320 = vmatprep.subr.mxu0 0.0
    %3321 = vmatpush2.msra.mxu0 0.0
    %3322 = vmatprep.subr.mxu0 0.0
    %3323 = vmatpush2.msra.mxu0 0.0
    %3324 = vmatprep.subr.mxu0 0.0
    %3325 = vmatpush2.msra.mxu0 0.0
    %3326 = vmatprep.subr.mxu0 0.0
    %3327 = vmatpush2.msra.mxu0 0.0
    %3328 = vmatprep.subr.mxu0 0.0
    %3329 = vmatpush2.msra.mxu0 0.0
    %3330 = vmatprep.subr.mxu0 0.0
    %3331 = vmatpush2.msra.mxu0 0.0
    %3332 = vmatprep.subr.mxu0 0.0
    %3333 = vmatpush2.msra.mxu0 0.0
    %3334 = vmatprep.subr.mxu0 0.0
    %3335 = vmatpush2.msra.mxu0 0.0
    %3336 = vmatprep.subr.mxu0 0.0
    %3337 = vmatpush2.msra.mxu0 0.0
    %3338 = vmatprep.subr.mxu0 0.0
    %3339 = vmatpush2.msra.mxu0 0.0
    %3340 = vmatprep.mubr.f32.mxu0 0.0
    %3341 = vmatmul.mubr.f32.gmra.mxu0 %v3274
    %v3342 = vpop.f32.mrf.mxu0
    %v3343 = vadd.f32 0.0, %v3342
    %v3344 = vpop.f32.mrf.mxu0
    %3345 = vdwg.mxu0
    %v3346 = vadd.f32 %v3192, %v3343
    %s3347 = scalar_lea.vmem %s3, 56
    %v3348 = vld [vmem:[%s3347] sm:$0xff]
    %v3350 = vsel %vm269, %v3348, 0
    %3352 = vmatprep.subr.mxu0 0.0
    %3353 = vmatpush1.msra.mxu0 0.0
    %3354 = vmatprep.subr.mxu0 0.0
    %3355 = vmatpush1.msra.mxu0 0.0
    %3356 = vmatprep.subr.mxu0 0.0
    %3357 = vmatpush1.msra.mxu0 0.0
    %3358 = vmatprep.subr.mxu0 0.0
    %3359 = vmatpush1.msra.mxu0 0.0
    %3360 = vmatprep.subr.mxu0 0.0
    %3361 = vmatpush1.msra.mxu0 0.0
    %3362 = vmatprep.subr.mxu0 0.0
    %3363 = vmatpush1.msra.mxu0 0.0
    %3364 = vmatprep.subr.mxu0 0.0
    %3365 = vmatpush1.msra.mxu0 0.0
    %3366 = vmatprep.subr.mxu0 0.0
    %3367 = vmatpush1.msra.mxu0 0.0
    %3368 = vmatprep.subr.mxu0 0.0
    %3369 = vmatpush1.msra.mxu0 0.0
    %3370 = vmatprep.subr.mxu0 0.0
    %3371 = vmatpush1.msra.mxu0 0.0
    %3372 = vmatprep.subr.mxu0 0.0
    %3373 = vmatpush1.msra.mxu0 0.0
    %3374 = vmatprep.subr.mxu0 0.0
    %3375 = vmatpush1.msra.mxu0 0.0
    %3376 = vmatprep.subr.mxu0 0.0
    %3377 = vmatpush1.msra.mxu0 %v2271
    %3378 = vmatprep.subr.mxu0 0.0
    %3379 = vmatpush1.msra.mxu0 %v2270
    %3380 = vmatprep.subr.mxu0 0.0
    %3381 = vmatpush1.msra.mxu0 %v2269
    %3382 = vmatprep.subr.mxu0 0.0
    %3383 = vmatpush1.msra.mxu0 %v2268
    %3384 = vmatprep.subr.mxu0 0.0
    %3385 = vmatpush2.msra.mxu0 0.0
    %3386 = vmatprep.subr.mxu0 0.0
    %3387 = vmatpush2.msra.mxu0 0.0
    %3388 = vmatprep.subr.mxu0 0.0
    %3389 = vmatpush2.msra.mxu0 0.0
    %3390 = vmatprep.subr.mxu0 0.0
    %3391 = vmatpush2.msra.mxu0 0.0
    %3392 = vmatprep.subr.mxu0 0.0
    %3393 = vmatpush2.msra.mxu0 0.0
    %3394 = vmatprep.subr.mxu0 0.0
    %3395 = vmatpush2.msra.mxu0 0.0
    %3396 = vmatprep.subr.mxu0 0.0
    %3397 = vmatpush2.msra.mxu0 0.0
    %3398 = vmatprep.subr.mxu0 0.0
    %3399 = vmatpush2.msra.mxu0 0.0
    %3400 = vmatprep.subr.mxu0 0.0
    %3401 = vmatpush2.msra.mxu0 0.0
    %3402 = vmatprep.subr.mxu0 0.0
    %3403 = vmatpush2.msra.mxu0 0.0
    %3404 = vmatprep.subr.mxu0 0.0
    %3405 = vmatpush2.msra.mxu0 0.0
    %3406 = vmatprep.subr.mxu0 0.0
    %3407 = vmatpush2.msra.mxu0 0.0
    %3408 = vmatprep.subr.mxu0 0.0
    %3409 = vmatpush2.msra.mxu0 0.0
    %3410 = vmatprep.subr.mxu0 0.0
    %3411 = vmatpush2.msra.mxu0 0.0
    %3412 = vmatprep.subr.mxu0 0.0
    %3413 = vmatpush2.msra.mxu0 0.0
    %3414 = vmatprep.subr.mxu0 0.0
    %3415 = vmatpush2.msra.mxu0 0.0
    %3416 = vmatprep.mubr.f32.mxu0 0.0
    %3417 = vmatmul.mubr.f32.gmra.mxu0 %v3350
    %v3418 = vpop.f32.mrf.mxu0
    %v3419 = vadd.f32 0.0, %v3418
    %v3420 = vpop.f32.mrf.mxu0
    %3421 = vdwg.mxu0
    %s3422 = scalar_lea.vmem %s5, 512
    %v3423 = vld [vmem:[%s3422] sm:$0xff]
    %v3424 = vld [vmem:[%s3422 + $0x8] sm:$0xff]
    %v3425 = vld [vmem:[%s3422 + $0x10] sm:$0xff]
    %v3426 = vld [vmem:[%s3422 + $0x18] sm:$0xff]
    %v3428 = vsel %vm269, %v3419, 0
    %3430 = vmatprep.subr.mxu0 0.0
    %3431 = vmatpush1.msra.mxu0 0.0
    %3432 = vmatprep.subr.mxu0 0.0
    %3433 = vmatpush1.msra.mxu0 0.0
    %3434 = vmatprep.subr.mxu0 0.0
    %3435 = vmatpush1.msra.mxu0 0.0
    %3436 = vmatprep.subr.mxu0 0.0
    %3437 = vmatpush1.msra.mxu0 0.0
    %3438 = vmatprep.subr.mxu0 0.0
    %3439 = vmatpush1.msra.mxu0 0.0
    %3440 = vmatprep.subr.mxu0 0.0
    %3441 = vmatpush1.msra.mxu0 0.0
    %3442 = vmatprep.subr.mxu0 0.0
    %3443 = vmatpush1.msra.mxu0 0.0
    %3444 = vmatprep.subr.mxu0 0.0
    %3445 = vmatpush1.msra.mxu0 0.0
    %3446 = vmatprep.subr.mxu0 0.0
    %3447 = vmatpush1.msra.mxu0 0.0
    %3448 = vmatprep.subr.mxu0 0.0
    %3449 = vmatpush1.msra.mxu0 0.0
    %3450 = vmatprep.subr.mxu0 0.0
    %3451 = vmatpush1.msra.mxu0 0.0
    %3452 = vmatprep.subr.mxu0 0.0
    %3453 = vmatpush1.msra.mxu0 0.0
    %3454 = vmatprep.subr.mxu0 0.0
    %3455 = vmatpush1.msra.mxu0 %v3426
    %3456 = vmatprep.subr.mxu0 0.0
    %3457 = vmatpush1.msra.mxu0 %v3425
    %3458 = vmatprep.subr.mxu0 0.0
    %3459 = vmatpush1.msra.mxu0 %v3424
    %3460 = vmatprep.subr.mxu0 0.0
    %3461 = vmatpush1.msra.mxu0 %v3423
    %3462 = vmatprep.subr.mxu0 0.0
    %3463 = vmatpush2.msra.mxu0 0.0
    %3464 = vmatprep.subr.mxu0 0.0
    %3465 = vmatpush2.msra.mxu0 0.0
    %3466 = vmatprep.subr.mxu0 0.0
    %3467 = vmatpush2.msra.mxu0 0.0
    %3468 = vmatprep.subr.mxu0 0.0
    %3469 = vmatpush2.msra.mxu0 0.0
    %3470 = vmatprep.subr.mxu0 0.0
    %3471 = vmatpush2.msra.mxu0 0.0
    %3472 = vmatprep.subr.mxu0 0.0
    %3473 = vmatpush2.msra.mxu0 0.0
    %3474 = vmatprep.subr.mxu0 0.0
    %3475 = vmatpush2.msra.mxu0 0.0
    %3476 = vmatprep.subr.mxu0 0.0
    %3477 = vmatpush2.msra.mxu0 0.0
    %3478 = vmatprep.subr.mxu0 0.0
    %3479 = vmatpush2.msra.mxu0 0.0
    %3480 = vmatprep.subr.mxu0 0.0
    %3481 = vmatpush2.msra.mxu0 0.0
    %3482 = vmatprep.subr.mxu0 0.0
    %3483 = vmatpush2.msra.mxu0 0.0
    %3484 = vmatprep.subr.mxu0 0.0
    %3485 = vmatpush2.msra.mxu0 0.0
    %3486 = vmatprep.subr.mxu0 0.0
    %3487 = vmatpush2.msra.mxu0 0.0
    %3488 = vmatprep.subr.mxu0 0.0
    %3489 = vmatpush2.msra.mxu0 0.0
    %3490 = vmatprep.subr.mxu0 0.0
    %3491 = vmatpush2.msra.mxu0 0.0
    %3492 = vmatprep.subr.mxu0 0.0
    %3493 = vmatpush2.msra.mxu0 0.0
    %3494 = vmatprep.mubr.f32.mxu0 0.0
    %3495 = vmatmul.mubr.f32.gmra.mxu0 %v3428
    %v3496 = vpop.f32.mrf.mxu0
    %v3497 = vadd.f32 0.0, %v3496
    %v3498 = vpop.f32.mrf.mxu0
    %3499 = vdwg.mxu0
    %v3500 = vadd.f32 %v3346, %v3497
    %s3501 = scalar_lea.vmem %s3, 64
    %v3502 = vld [vmem:[%s3501] sm:$0xff]
    %v3504 = vsel %vm269, %v3502, 0
    %3506 = vmatprep.subr.mxu0 0.0
    %3507 = vmatpush1.msra.mxu0 0.0
    %3508 = vmatprep.subr.mxu0 0.0
    %3509 = vmatpush1.msra.mxu0 0.0
    %3510 = vmatprep.subr.mxu0 0.0
    %3511 = vmatpush1.msra.mxu0 0.0
    %3512 = vmatprep.subr.mxu0 0.0
    %3513 = vmatpush1.msra.mxu0 0.0
    %3514 = vmatprep.subr.mxu0 0.0
    %3515 = vmatpush1.msra.mxu0 0.0
    %3516 = vmatprep.subr.mxu0 0.0
    %3517 = vmatpush1.msra.mxu0 0.0
    %3518 = vmatprep.subr.mxu0 0.0
    %3519 = vmatpush1.msra.mxu0 0.0
    %3520 = vmatprep.subr.mxu0 0.0
    %3521 = vmatpush1.msra.mxu0 0.0
    %3522 = vmatprep.subr.mxu0 0.0
    %3523 = vmatpush1.msra.mxu0 0.0
    %3524 = vmatprep.subr.mxu0 0.0
    %3525 = vmatpush1.msra.mxu0 0.0
    %3526 = vmatprep.subr.mxu0 0.0
    %3527 = vmatpush1.msra.mxu0 0.0
    %3528 = vmatprep.subr.mxu0 0.0
    %3529 = vmatpush1.msra.mxu0 0.0
    %3530 = vmatprep.subr.mxu0 0.0
    %3531 = vmatpush1.msra.mxu0 %v2271
    %3532 = vmatprep.subr.mxu0 0.0
    %3533 = vmatpush1.msra.mxu0 %v2270
    %3534 = vmatprep.subr.mxu0 0.0
    %3535 = vmatpush1.msra.mxu0 %v2269
    %3536 = vmatprep.subr.mxu0 0.0
    %3537 = vmatpush1.msra.mxu0 %v2268
    %3538 = vmatprep.subr.mxu0 0.0
    %3539 = vmatpush2.msra.mxu0 0.0
    %3540 = vmatprep.subr.mxu0 0.0
    %3541 = vmatpush2.msra.mxu0 0.0
    %3542 = vmatprep.subr.mxu0 0.0
    %3543 = vmatpush2.msra.mxu0 0.0
    %3544 = vmatprep.subr.mxu0 0.0
    %3545 = vmatpush2.msra.mxu0 0.0
    %3546 = vmatprep.subr.mxu0 0.0
    %3547 = vmatpush2.msra.mxu0 0.0
    %3548 = vmatprep.subr.mxu0 0.0
    %3549 = vmatpush2.msra.mxu0 0.0
    %3550 = vmatprep.subr.mxu0 0.0
    %3551 = vmatpush2.msra.mxu0 0.0
    %3552 = vmatprep.subr.mxu0 0.0
    %3553 = vmatpush2.msra.mxu0 0.0
    %3554 = vmatprep.subr.mxu0 0.0
    %3555 = vmatpush2.msra.mxu0 0.0
    %3556 = vmatprep.subr.mxu0 0.0
    %3557 = vmatpush2.msra.mxu0 0.0
    %3558 = vmatprep.subr.mxu0 0.0
    %3559 = vmatpush2.msra.mxu0 0.0
    %3560 = vmatprep.subr.mxu0 0.0
    %3561 = vmatpush2.msra.mxu0 0.0
    %3562 = vmatprep.subr.mxu0 0.0
    %3563 = vmatpush2.msra.mxu0 0.0
    %3564 = vmatprep.subr.mxu0 0.0
    %3565 = vmatpush2.msra.mxu0 0.0
    %3566 = vmatprep.subr.mxu0 0.0
    %3567 = vmatpush2.msra.mxu0 0.0
    %3568 = vmatprep.subr.mxu0 0.0
    %3569 = vmatpush2.msra.mxu0 0.0
    %3570 = vmatprep.mubr.f32.mxu0 0.0
    %3571 = vmatmul.mubr.f32.gmra.mxu0 %v3504
    %v3572 = vpop.f32.mrf.mxu0
    %v3573 = vadd.f32 0.0, %v3572
    %v3574 = vpop.f32.mrf.mxu0
    %3575 = vdwg.mxu0
    %s3576 = scalar_lea.vmem %s5, 544
    %v3577 = vld [vmem:[%s3576] sm:$0xff]
    %v3578 = vld [vmem:[%s3576 + $0x8] sm:$0xff]
    %v3579 = vld [vmem:[%s3576 + $0x10] sm:$0xff]
    %v3580 = vld [vmem:[%s3576 + $0x18] sm:$0xff]
    %v3582 = vsel %vm269, %v3573, 0
    %3584 = vmatprep.subr.mxu0 0.0
    %3585 = vmatpush1.msra.mxu0 0.0
    %3586 = vmatprep.subr.mxu0 0.0
    %3587 = vmatpush1.msra.mxu0 0.0
    %3588 = vmatprep.subr.mxu0 0.0
    %3589 = vmatpush1.msra.mxu0 0.0
    %3590 = vmatprep.subr.mxu0 0.0
    %3591 = vmatpush1.msra.mxu0 0.0
    %3592 = vmatprep.subr.mxu0 0.0
    %3593 = vmatpush1.msra.mxu0 0.0
    %3594 = vmatprep.subr.mxu0 0.0
    %3595 = vmatpush1.msra.mxu0 0.0
    %3596 = vmatprep.subr.mxu0 0.0
    %3597 = vmatpush1.msra.mxu0 0.0
    %3598 = vmatprep.subr.mxu0 0.0
    %3599 = vmatpush1.msra.mxu0 0.0
    %3600 = vmatprep.subr.mxu0 0.0
    %3601 = vmatpush1.msra.mxu0 0.0
    %3602 = vmatprep.subr.mxu0 0.0
    %3603 = vmatpush1.msra.mxu0 0.0
    %3604 = vmatprep.subr.mxu0 0.0
    %3605 = vmatpush1.msra.mxu0 0.0
    %3606 = vmatprep.subr.mxu0 0.0
    %3607 = vmatpush1.msra.mxu0 0.0
    %3608 = vmatprep.subr.mxu0 0.0
    %3609 = vmatpush1.msra.mxu0 %v3580
    %3610 = vmatprep.subr.mxu0 0.0
    %3611 = vmatpush1.msra.mxu0 %v3579
    %3612 = vmatprep.subr.mxu0 0.0
    %3613 = vmatpush1.msra.mxu0 %v3578
    %3614 = vmatprep.subr.mxu0 0.0
    %3615 = vmatpush1.msra.mxu0 %v3577
    %3616 = vmatprep.subr.mxu0 0.0
    %3617 = vmatpush2.msra.mxu0 0.0
    %3618 = vmatprep.subr.mxu0 0.0
    %3619 = vmatpush2.msra.mxu0 0.0
    %3620 = vmatprep.subr.mxu0 0.0
    %3621 = vmatpush2.msra.mxu0 0.0
    %3622 = vmatprep.subr.mxu0 0.0
    %3623 = vmatpush2.msra.mxu0 0.0
    %3624 = vmatprep.subr.mxu0 0.0
    %3625 = vmatpush2.msra.mxu0 0.0
    %3626 = vmatprep.subr.mxu0 0.0
    %3627 = vmatpush2.msra.mxu0 0.0
    %3628 = vmatprep.subr.mxu0 0.0
    %3629 = vmatpush2.msra.mxu0 0.0
    %3630 = vmatprep.subr.mxu0 0.0
    %3631 = vmatpush2.msra.mxu0 0.0
    %3632 = vmatprep.subr.mxu0 0.0
    %3633 = vmatpush2.msra.mxu0 0.0
    %3634 = vmatprep.subr.mxu0 0.0
    %3635 = vmatpush2.msra.mxu0 0.0
    %3636 = vmatprep.subr.mxu0 0.0
    %3637 = vmatpush2.msra.mxu0 0.0
    %3638 = vmatprep.subr.mxu0 0.0
    %3639 = vmatpush2.msra.mxu0 0.0
    %3640 = vmatprep.subr.mxu0 0.0
    %3641 = vmatpush2.msra.mxu0 0.0
    %3642 = vmatprep.subr.mxu0 0.0
    %3643 = vmatpush2.msra.mxu0 0.0
    %3644 = vmatprep.subr.mxu0 0.0
    %3645 = vmatpush2.msra.mxu0 0.0
    %3646 = vmatprep.subr.mxu0 0.0
    %3647 = vmatpush2.msra.mxu0 0.0
    %3648 = vmatprep.mubr.f32.mxu0 0.0
    %3649 = vmatmul.mubr.f32.gmra.mxu0 %v3582
    %v3650 = vpop.f32.mrf.mxu0
    %v3651 = vadd.f32 0.0, %v3650
    %v3652 = vpop.f32.mrf.mxu0
    %3653 = vdwg.mxu0
    %v3654 = vadd.f32 %v3500, %v3651
    %v3655 = vld [vmem:[%s8 + $0x4] sm:$0x1]
    %v3656 = vld [vmem:[%s8 + $0x5] sm:$0x1]
    %v3657 = vsel %vm269, %v3654, 0.0
    %v3658 = vrot.slane %v3657, 4
    %v3659 = vadd.f32 %v3657, %v3658
    %v3660 = vrot.slane %v3659, 2
    %v3661 = vadd.f32 %v3659, %v3660
    %v3662 = vrot.slane %v3661, 1
    %v3663 = vadd.f32 %v3661, %v3662
    %v3664 = vrcp.pop 8.0
    %v3665 = vmul.f32 %v3663, %v3664
    %v3666 = vsub.f32 %v3654, %v3665
    %v3667 = vmul.f32 %v3666, %v3666
    %v3668 = vsel %vm269, %v3667, 0.0
    %v3669 = vrot.slane %v3668, 4
    %v3670 = vadd.f32 %v3668, %v3669
    %v3671 = vrot.slane %v3670, 2
    %v3672 = vadd.f32 %v3670, %v3671
    %v3673 = vrot.slane %v3672, 1
    %v3674 = vadd.f32 %v3672, %v3673
    %v3675 = vmul.f32 %v3674, %v3664
    %v3676 = vlaneseq
    %v3677 = vshrl.u32 %v3676, 7
    %v3678 = vsub.s32 0, %v3677
    %v3679 = vrot.slane %v3655, %v3678
    %v3680 = vmul.f32 %v3679, %v3666
    %v3681 = vadd.f32 %v3675, 1e-05
    %v3682 = vrsqrt.pop %v3681
    %v3683 = vmul.f32 %v3680, %v3682
    %v3684 = vlaneseq
    %v3685 = vshrl.u32 %v3684, 7
    %v3686 = vsub.s32 0, %v3685
    %v3687 = vrot.slane %v3656, %v3686
    %v3688 = vadd.f32 %v3683, %v3687
    %v3689 = vmax.f32 %v3688, 0.0
    %v3690 = vld [vmem:[%s4] sm:$0x3]
    %vm3691 = vcmask 64512
    %v3693 = vsel %vm3691, %v3690, 0
    %3695 = vmatprep.subr.mxu0 0.0
    %3696 = vmatpush1.msra.mxu0 0.0
    %3697 = vmatprep.subr.mxu0 0.0
    %3698 = vmatpush1.msra.mxu0 0.0
    %3699 = vmatprep.subr.mxu0 0.0
    %3700 = vmatpush1.msra.mxu0 0.0
    %3701 = vmatprep.subr.mxu0 0.0
    %3702 = vmatpush1.msra.mxu0 0.0
    %3703 = vmatprep.subr.mxu0 0.0
    %3704 = vmatpush1.msra.mxu0 0.0
    %3705 = vmatprep.subr.mxu0 0.0
    %3706 = vmatpush1.msra.mxu0 0.0
    %3707 = vmatprep.subr.mxu0 0.0
    %3708 = vmatpush1.msra.mxu0 0.0
    %3709 = vmatprep.subr.mxu0 0.0
    %3710 = vmatpush1.msra.mxu0 0.0
    %3711 = vmatprep.subr.mxu0 0.0
    %3712 = vmatpush1.msra.mxu0 0.0
    %3713 = vmatprep.subr.mxu0 0.0
    %3714 = vmatpush1.msra.mxu0 0.0
    %3715 = vmatprep.subr.mxu0 0.0
    %3716 = vmatpush1.msra.mxu0 0.0
    %3717 = vmatprep.subr.mxu0 0.0
    %3718 = vmatpush1.msra.mxu0 0.0
    %3719 = vmatprep.subr.mxu0 0.0
    %3720 = vmatpush1.msra.mxu0 0.0
    %3721 = vmatprep.subr.mxu0 0.0
    %3722 = vmatpush1.msra.mxu0 0.0
    %3723 = vmatprep.subr.mxu0 0.0
    %3724 = vmatpush1.msra.mxu0 0.0
    %3725 = vmatprep.subr.mxu0 0.0
    %3726 = vmatpush1.msra.mxu0 %v3689
    %3727 = vmatprep.subr.mxu0 0.0
    %3728 = vmatpush2.msra.mxu0 0.0
    %3729 = vmatprep.subr.mxu0 0.0
    %3730 = vmatpush2.msra.mxu0 0.0
    %3731 = vmatprep.subr.mxu0 0.0
    %3732 = vmatpush2.msra.mxu0 0.0
    %3733 = vmatprep.subr.mxu0 0.0
    %3734 = vmatpush2.msra.mxu0 0.0
    %3735 = vmatprep.subr.mxu0 0.0
    %3736 = vmatpush2.msra.mxu0 0.0
    %3737 = vmatprep.subr.mxu0 0.0
    %3738 = vmatpush2.msra.mxu0 0.0
    %3739 = vmatprep.subr.mxu0 0.0
    %3740 = vmatpush2.msra.mxu0 0.0
    %3741 = vmatprep.subr.mxu0 0.0
    %3742 = vmatpush2.msra.mxu0 0.0
    %3743 = vmatprep.subr.mxu0 0.0
    %3744 = vmatpush2.msra.mxu0 0.0
    %3745 = vmatprep.subr.mxu0 0.0
    %3746 = vmatpush2.msra.mxu0 0.0
    %3747 = vmatprep.subr.mxu0 0.0
    %3748 = vmatpush2.msra.mxu0 0.0
    %3749 = vmatprep.subr.mxu0 0.0
    %3750 = vmatpush2.msra.mxu0 0.0
    %3751 = vmatprep.subr.mxu0 0.0
    %3752 = vmatpush2.msra.mxu0 0.0
    %3753 = vmatprep.subr.mxu0 0.0
    %3754 = vmatpush2.msra.mxu0 0.0
    %3755 = vmatprep.subr.mxu0 0.0
    %3756 = vmatpush2.msra.mxu0 0.0
    %3757 = vmatprep.subr.mxu0 0.0
    %3758 = vmatpush2.msra.mxu0 0.0
    %3759 = vmatprep.mubr.f32.mxu0 0.0
    %3760 = vmatmul.mubr.f32.gmra.mxu0 %v3693
    %v3761 = vpop.f32.mrf.mxu0
    %v3762 = vadd.f32 0.0, %v3761
    %v3763 = vpop.f32.mrf.mxu0
    %3764 = vdwg.mxu0
    %s3765 = scalar_lea.vmem %s5, 576
    %v3766 = vld [vmem:[%s3765] sm:$0xff]
    %v3767 = vld [vmem:[%s3765 + $0x8] sm:$0xff]
    %v3768 = vld [vmem:[%s3765 + $0x10] sm:$0xff]
    %v3769 = vld [vmem:[%s3765 + $0x18] sm:$0xff]
    %s3770 = scalar_lea.vmem %s4, 2
    %v3771 = vld [vmem:[%s3770] sm:$0x3]
    %v3773 = vsel %vm3691, %v3771, 0
    %3775 = vmatprep.subr.mxu0 0.0
    %3776 = vmatpush1.msra.mxu0 0.0
    %3777 = vmatprep.subr.mxu0 0.0
    %3778 = vmatpush1.msra.mxu0 0.0
    %3779 = vmatprep.subr.mxu0 0.0
    %3780 = vmatpush1.msra.mxu0 0.0
    %3781 = vmatprep.subr.mxu0 0.0
    %3782 = vmatpush1.msra.mxu0 0.0
    %3783 = vmatprep.subr.mxu0 0.0
    %3784 = vmatpush1.msra.mxu0 0.0
    %3785 = vmatprep.subr.mxu0 0.0
    %3786 = vmatpush1.msra.mxu0 0.0
    %3787 = vmatprep.subr.mxu0 0.0
    %3788 = vmatpush1.msra.mxu0 0.0
    %3789 = vmatprep.subr.mxu0 0.0
    %3790 = vmatpush1.msra.mxu0 0.0
    %3791 = vmatprep.subr.mxu0 0.0
    %3792 = vmatpush1.msra.mxu0 0.0
    %3793 = vmatprep.subr.mxu0 0.0
    %3794 = vmatpush1.msra.mxu0 0.0
    %3795 = vmatprep.subr.mxu0 0.0
    %3796 = vmatpush1.msra.mxu0 0.0
    %3797 = vmatprep.subr.mxu0 0.0
    %3798 = vmatpush1.msra.mxu0 0.0
    %3799 = vmatprep.subr.mxu0 0.0
    %3800 = vmatpush1.msra.mxu0 0.0
    %3801 = vmatprep.subr.mxu0 0.0
    %3802 = vmatpush1.msra.mxu0 0.0
    %3803 = vmatprep.subr.mxu0 0.0
    %3804 = vmatpush1.msra.mxu0 0.0
    %3805 = vmatprep.subr.mxu0 0.0
    %3806 = vmatpush1.msra.mxu0 %v3689
    %3807 = vmatprep.subr.mxu0 0.0
    %3808 = vmatpush2.msra.mxu0 0.0
    %3809 = vmatprep.subr.mxu0 0.0
    %3810 = vmatpush2.msra.mxu0 0.0
    %3811 = vmatprep.subr.mxu0 0.0
    %3812 = vmatpush2.msra.mxu0 0.0
    %3813 = vmatprep.subr.mxu0 0.0
    %3814 = vmatpush2.msra.mxu0 0.0
    %3815 = vmatprep.subr.mxu0 0.0
    %3816 = vmatpush2.msra.mxu0 0.0
    %3817 = vmatprep.subr.mxu0 0.0
    %3818 = vmatpush2.msra.mxu0 0.0
    %3819 = vmatprep.subr.mxu0 0.0
    %3820 = vmatpush2.msra.mxu0 0.0
    %3821 = vmatprep.subr.mxu0 0.0
    %3822 = vmatpush2.msra.mxu0 0.0
    %3823 = vmatprep.subr.mxu0 0.0
    %3824 = vmatpush2.msra.mxu0 0.0
    %3825 = vmatprep.subr.mxu0 0.0
    %3826 = vmatpush2.msra.mxu0 0.0
    %3827 = vmatprep.subr.mxu0 0.0
    %3828 = vmatpush2.msra.mxu0 0.0
    %3829 = vmatprep.subr.mxu0 0.0
    %3830 = vmatpush2.msra.mxu0 0.0
    %3831 = vmatprep.subr.mxu0 0.0
    %3832 = vmatpush2.msra.mxu0 0.0
    %3833 = vmatprep.subr.mxu0 0.0
    %3834 = vmatpush2.msra.mxu0 0.0
    %3835 = vmatprep.subr.mxu0 0.0
    %3836 = vmatpush2.msra.mxu0 0.0
    %3837 = vmatprep.subr.mxu0 0.0
    %3838 = vmatpush2.msra.mxu0 0.0
    %3839 = vmatprep.mubr.f32.mxu0 0.0
    %3840 = vmatmul.mubr.f32.gmra.mxu0 %v3773
    %v3841 = vpop.f32.mrf.mxu0
    %v3842 = vadd.f32 0.0, %v3841
    %v3843 = vpop.f32.mrf.mxu0
    %3844 = vdwg.mxu0
    %s3845 = scalar_lea.vmem %s5, 608
    %v3846 = vld [vmem:[%s3845] sm:$0xff]
    %v3847 = vld [vmem:[%s3845 + $0x8] sm:$0xff]
    %v3848 = vld [vmem:[%s3845 + $0x10] sm:$0xff]
    %v3849 = vld [vmem:[%s3845 + $0x18] sm:$0xff]
    %v3851 = vsel %vm269, %v3842, 0
    %3853 = vmatprep.subr.mxu0 0.0
    %3854 = vmatpush1.msra.mxu0 0.0
    %3855 = vmatprep.subr.mxu0 0.0
    %3856 = vmatpush1.msra.mxu0 0.0
    %3857 = vmatprep.subr.mxu0 0.0
    %3858 = vmatpush1.msra.mxu0 0.0
    %3859 = vmatprep.subr.mxu0 0.0
    %3860 = vmatpush1.msra.mxu0 0.0
    %3861 = vmatprep.subr.mxu0 0.0
    %3862 = vmatpush1.msra.mxu0 0.0
    %3863 = vmatprep.subr.mxu0 0.0
    %3864 = vmatpush1.msra.mxu0 0.0
    %3865 = vmatprep.subr.mxu0 0.0
    %3866 = vmatpush1.msra.mxu0 0.0
    %3867 = vmatprep.subr.mxu0 0.0
    %3868 = vmatpush1.msra.mxu0 0.0
    %3869 = vmatprep.subr.mxu0 0.0
    %3870 = vmatpush1.msra.mxu0 0.0
    %3871 = vmatprep.subr.mxu0 0.0
    %3872 = vmatpush1.msra.mxu0 0.0
    %3873 = vmatprep.subr.mxu0 0.0
    %3874 = vmatpush1.msra.mxu0 0.0
    %3875 = vmatprep.subr.mxu0 0.0
    %3876 = vmatpush1.msra.mxu0 0.0
    %3877 = vmatprep.subr.mxu0 0.0
    %3878 = vmatpush1.msra.mxu0 %v3849
    %3879 = vmatprep.subr.mxu0 0.0
    %3880 = vmatpush1.msra.mxu0 %v3848
    %3881 = vmatprep.subr.mxu0 0.0
    %3882 = vmatpush1.msra.mxu0 %v3847
    %3883 = vmatprep.subr.mxu0 0.0
    %3884 = vmatpush1.msra.mxu0 %v3846
    %3885 = vmatprep.subr.mxu0 0.0
    %3886 = vmatpush2.msra.mxu0 0.0
    %3887 = vmatprep.subr.mxu0 0.0
    %3888 = vmatpush2.msra.mxu0 0.0
    %3889 = vmatprep.subr.mxu0 0.0
    %3890 = vmatpush2.msra.mxu0 0.0
    %3891 = vmatprep.subr.mxu0 0.0
    %3892 = vmatpush2.msra.mxu0 0.0
    %3893 = vmatprep.subr.mxu0 0.0
    %3894 = vmatpush2.msra.mxu0 0.0
    %3895 = vmatprep.subr.mxu0 0.0
    %3896 = vmatpush2.msra.mxu0 0.0
    %3897 = vmatprep.subr.mxu0 0.0
    %3898 = vmatpush2.msra.mxu0 0.0
    %3899 = vmatprep.subr.mxu0 0.0
    %3900 = vmatpush2.msra.mxu0 0.0
    %3901 = vmatprep.subr.mxu0 0.0
    %3902 = vmatpush2.msra.mxu0 0.0
    %3903 = vmatprep.subr.mxu0 0.0
    %3904 = vmatpush2.msra.mxu0 0.0
    %3905 = vmatprep.subr.mxu0 0.0
    %3906 = vmatpush2.msra.mxu0 0.0
    %3907 = vmatprep.subr.mxu0 0.0
    %3908 = vmatpush2.msra.mxu0 0.0
    %3909 = vmatprep.subr.mxu0 0.0
    %3910 = vmatpush2.msra.mxu0 0.0
    %3911 = vmatprep.subr.mxu0 0.0
    %3912 = vmatpush2.msra.mxu0 0.0
    %3913 = vmatprep.subr.mxu0 0.0
    %3914 = vmatpush2.msra.mxu0 0.0
    %3915 = vmatprep.subr.mxu0 0.0
    %3916 = vmatpush2.msra.mxu0 0.0
    %3917 = vmatprep.mubr.f32.mxu0 0.0
    %3918 = vmatmul.mubr.f32.gmra.mxu0 %v3851
    %v3919 = vpop.f32.mrf.mxu0
    %v3920 = vadd.f32 0.0, %v3919
    %v3921 = vpop.f32.mrf.mxu0
    %3922 = vdwg.mxu0
    %v3924 = vsel %vm269, %v3762, 0
    %3926 = vmatprep.subr.mxu0 0.0
    %3927 = vmatpush1.msra.mxu0 0.0
    %3928 = vmatprep.subr.mxu0 0.0
    %3929 = vmatpush1.msra.mxu0 0.0
    %3930 = vmatprep.subr.mxu0 0.0
    %3931 = vmatpush1.msra.mxu0 0.0
    %3932 = vmatprep.subr.mxu0 0.0
    %3933 = vmatpush1.msra.mxu0 0.0
    %3934 = vmatprep.subr.mxu0 0.0
    %3935 = vmatpush1.msra.mxu0 0.0
    %3936 = vmatprep.subr.mxu0 0.0
    %3937 = vmatpush1.msra.mxu0 0.0
    %3938 = vmatprep.subr.mxu0 0.0
    %3939 = vmatpush1.msra.mxu0 0.0
    %3940 = vmatprep.subr.mxu0 0.0
    %3941 = vmatpush1.msra.mxu0 0.0
    %3942 = vmatprep.subr.mxu0 0.0
    %3943 = vmatpush1.msra.mxu0 0.0
    %3944 = vmatprep.subr.mxu0 0.0
    %3945 = vmatpush1.msra.mxu0 0.0
    %3946 = vmatprep.subr.mxu0 0.0
    %3947 = vmatpush1.msra.mxu0 0.0
    %3948 = vmatprep.subr.mxu0 0.0
    %3949 = vmatpush1.msra.mxu0 0.0
    %3950 = vmatprep.subr.mxu0 0.0
    %3951 = vmatpush1.msra.mxu0 %v3769
    %3952 = vmatprep.subr.mxu0 0.0
    %3953 = vmatpush1.msra.mxu0 %v3768
    %3954 = vmatprep.subr.mxu0 0.0
    %3955 = vmatpush1.msra.mxu0 %v3767
    %3956 = vmatprep.subr.mxu0 0.0
    %3957 = vmatpush1.msra.mxu0 %v3766
    %3958 = vmatprep.subr.mxu0 0.0
    %3959 = vmatpush2.msra.mxu0 0.0
    %3960 = vmatprep.subr.mxu0 0.0
    %3961 = vmatpush2.msra.mxu0 0.0
    %3962 = vmatprep.subr.mxu0 0.0
    %3963 = vmatpush2.msra.mxu0 0.0
    %3964 = vmatprep.subr.mxu0 0.0
    %3965 = vmatpush2.msra.mxu0 0.0
    %3966 = vmatprep.subr.mxu0 0.0
    %3967 = vmatpush2.msra.mxu0 0.0
    %3968 = vmatprep.subr.mxu0 0.0
    %3969 = vmatpush2.msra.mxu0 0.0
    %3970 = vmatprep.subr.mxu0 0.0
    %3971 = vmatpush2.msra.mxu0 0.0
    %3972 = vmatprep.subr.mxu0 0.0
    %3973 = vmatpush2.msra.mxu0 0.0
    %3974 = vmatprep.subr.mxu0 0.0
    %3975 = vmatpush2.msra.mxu0 0.0
    %3976 = vmatprep.subr.mxu0 0.0
    %3977 = vmatpush2.msra.mxu0 0.0
    %3978 = vmatprep.subr.mxu0 0.0
    %3979 = vmatpush2.msra.mxu0 0.0
    %3980 = vmatprep.subr.mxu0 0.0
    %3981 = vmatpush2.msra.mxu0 0.0
    %3982 = vmatprep.subr.mxu0 0.0
    %3983 = vmatpush2.msra.mxu0 0.0
    %3984 = vmatprep.subr.mxu0 0.0
    %3985 = vmatpush2.msra.mxu0 0.0
    %3986 = vmatprep.subr.mxu0 0.0
    %3987 = vmatpush2.msra.mxu0 0.0
    %3988 = vmatprep.subr.mxu0 0.0
    %3989 = vmatpush2.msra.mxu0 0.0
    %3990 = vmatprep.mubr.f32.mxu0 0.0
    %3991 = vmatmul.mubr.f32.gmra.mxu0 %v3924
    %v3992 = vpop.f32.mrf.mxu0
    %v3993 = vadd.f32 %v3920, %v3992
    %v3994 = vpop.f32.mrf.mxu0
    %3995 = vdwg.mxu0
    %s3996 = scalar_lea.vmem %s4, 4
    %v3997 = vld [vmem:[%s3996] sm:$0x3]
    %v3999 = vsel %vm3691, %v3997, 0
    %4001 = vmatprep.subr.mxu0 0.0
    %4002 = vmatpush1.msra.mxu0 0.0
    %4003 = vmatprep.subr.mxu0 0.0
    %4004 = vmatpush1.msra.mxu0 0.0
    %4005 = vmatprep.subr.mxu0 0.0
    %4006 = vmatpush1.msra.mxu0 0.0
    %4007 = vmatprep.subr.mxu0 0.0
    %4008 = vmatpush1.msra.mxu0 0.0
    %4009 = vmatprep.subr.mxu0 0.0
    %4010 = vmatpush1.msra.mxu0 0.0
    %4011 = vmatprep.subr.mxu0 0.0
    %4012 = vmatpush1.msra.mxu0 0.0
    %4013 = vmatprep.subr.mxu0 0.0
    %4014 = vmatpush1.msra.mxu0 0.0
    %4015 = vmatprep.subr.mxu0 0.0
    %4016 = vmatpush1.msra.mxu0 0.0
    %4017 = vmatprep.subr.mxu0 0.0
    %4018 = vmatpush1.msra.mxu0 0.0
    %4019 = vmatprep.subr.mxu0 0.0
    %4020 = vmatpush1.msra.mxu0 0.0
    %4021 = vmatprep.subr.mxu0 0.0
    %4022 = vmatpush1.msra.mxu0 0.0
    %4023 = vmatprep.subr.mxu0 0.0
    %4024 = vmatpush1.msra.mxu0 0.0
    %4025 = vmatprep.subr.mxu0 0.0
    %4026 = vmatpush1.msra.mxu0 0.0
    %4027 = vmatprep.subr.mxu0 0.0
    %4028 = vmatpush1.msra.mxu0 0.0
    %4029 = vmatprep.subr.mxu0 0.0
    %4030 = vmatpush1.msra.mxu0 0.0
    %4031 = vmatprep.subr.mxu0 0.0
    %4032 = vmatpush1.msra.mxu0 %v3689
    %4033 = vmatprep.subr.mxu0 0.0
    %4034 = vmatpush2.msra.mxu0 0.0
    %4035 = vmatprep.subr.mxu0 0.0
    %4036 = vmatpush2.msra.mxu0 0.0
    %4037 = vmatprep.subr.mxu0 0.0
    %4038 = vmatpush2.msra.mxu0 0.0
    %4039 = vmatprep.subr.mxu0 0.0
    %4040 = vmatpush2.msra.mxu0 0.0
    %4041 = vmatprep.subr.mxu0 0.0
    %4042 = vmatpush2.msra.mxu0 0.0
    %4043 = vmatprep.subr.mxu0 0.0
    %4044 = vmatpush2.msra.mxu0 0.0
    %4045 = vmatprep.subr.mxu0 0.0
    %4046 = vmatpush2.msra.mxu0 0.0
    %4047 = vmatprep.subr.mxu0 0.0
    %4048 = vmatpush2.msra.mxu0 0.0
    %4049 = vmatprep.subr.mxu0 0.0
    %4050 = vmatpush2.msra.mxu0 0.0
    %4051 = vmatprep.subr.mxu0 0.0
    %4052 = vmatpush2.msra.mxu0 0.0
    %4053 = vmatprep.subr.mxu0 0.0
    %4054 = vmatpush2.msra.mxu0 0.0
    %4055 = vmatprep.subr.mxu0 0.0
    %4056 = vmatpush2.msra.mxu0 0.0
    %4057 = vmatprep.subr.mxu0 0.0
    %4058 = vmatpush2.msra.mxu0 0.0
    %4059 = vmatprep.subr.mxu0 0.0
    %4060 = vmatpush2.msra.mxu0 0.0
    %4061 = vmatprep.subr.mxu0 0.0
    %4062 = vmatpush2.msra.mxu0 0.0
    %4063 = vmatprep.subr.mxu0 0.0
    %4064 = vmatpush2.msra.mxu0 0.0
    %4065 = vmatprep.mubr.f32.mxu0 0.0
    %4066 = vmatmul.mubr.f32.gmra.mxu0 %v3999
    %v4067 = vpop.f32.mrf.mxu0
    %v4068 = vadd.f32 0.0, %v4067
    %v4069 = vpop.f32.mrf.mxu0
    %4070 = vdwg.mxu0
    %s4071 = scalar_lea.vmem %s5, 640
    %v4072 = vld [vmem:[%s4071] sm:$0xff]
    %v4073 = vld [vmem:[%s4071 + $0x8] sm:$0xff]
    %v4074 = vld [vmem:[%s4071 + $0x10] sm:$0xff]
    %v4075 = vld [vmem:[%s4071 + $0x18] sm:$0xff]
    %v4077 = vsel %vm269, %v4068, 0
    %4079 = vmatprep.subr.mxu0 0.0
    %4080 = vmatpush1.msra.mxu0 0.0
    %4081 = vmatprep.subr.mxu0 0.0
    %4082 = vmatpush1.msra.mxu0 0.0
    %4083 = vmatprep.subr.mxu0 0.0
    %4084 = vmatpush1.msra.mxu0 0.0
    %4085 = vmatprep.subr.mxu0 0.0
    %4086 = vmatpush1.msra.mxu0 0.0
    %4087 = vmatprep.subr.mxu0 0.0
    %4088 = vmatpush1.msra.mxu0 0.0
    %4089 = vmatprep.subr.mxu0 0.0
    %4090 = vmatpush1.msra.mxu0 0.0
    %4091 = vmatprep.subr.mxu0 0.0
    %4092 = vmatpush1.msra.mxu0 0.0
    %4093 = vmatprep.subr.mxu0 0.0
    %4094 = vmatpush1.msra.mxu0 0.0
    %4095 = vmatprep.subr.mxu0 0.0
    %4096 = vmatpush1.msra.mxu0 0.0
    %4097 = vmatprep.subr.mxu0 0.0
    %4098 = vmatpush1.msra.mxu0 0.0
    %4099 = vmatprep.subr.mxu0 0.0
    %4100 = vmatpush1.msra.mxu0 0.0
    %4101 = vmatprep.subr.mxu0 0.0
    %4102 = vmatpush1.msra.mxu0 0.0
    %4103 = vmatprep.subr.mxu0 0.0
    %4104 = vmatpush1.msra.mxu0 %v4075
    %4105 = vmatprep.subr.mxu0 0.0
    %4106 = vmatpush1.msra.mxu0 %v4074
    %4107 = vmatprep.subr.mxu0 0.0
    %4108 = vmatpush1.msra.mxu0 %v4073
    %4109 = vmatprep.subr.mxu0 0.0
    %4110 = vmatpush1.msra.mxu0 %v4072
    %4111 = vmatprep.subr.mxu0 0.0
    %4112 = vmatpush2.msra.mxu0 0.0
    %4113 = vmatprep.subr.mxu0 0.0
    %4114 = vmatpush2.msra.mxu0 0.0
    %4115 = vmatprep.subr.mxu0 0.0
    %4116 = vmatpush2.msra.mxu0 0.0
    %4117 = vmatprep.subr.mxu0 0.0
    %4118 = vmatpush2.msra.mxu0 0.0
    %4119 = vmatprep.subr.mxu0 0.0
    %4120 = vmatpush2.msra.mxu0 0.0
    %4121 = vmatprep.subr.mxu0 0.0
    %4122 = vmatpush2.msra.mxu0 0.0
    %4123 = vmatprep.subr.mxu0 0.0
    %4124 = vmatpush2.msra.mxu0 0.0
    %4125 = vmatprep.subr.mxu0 0.0
    %4126 = vmatpush2.msra.mxu0 0.0
    %4127 = vmatprep.subr.mxu0 0.0
    %4128 = vmatpush2.msra.mxu0 0.0
    %4129 = vmatprep.subr.mxu0 0.0
    %4130 = vmatpush2.msra.mxu0 0.0
    %4131 = vmatprep.subr.mxu0 0.0
    %4132 = vmatpush2.msra.mxu0 0.0
    %4133 = vmatprep.subr.mxu0 0.0
    %4134 = vmatpush2.msra.mxu0 0.0
    %4135 = vmatprep.subr.mxu0 0.0
    %4136 = vmatpush2.msra.mxu0 0.0
    %4137 = vmatprep.subr.mxu0 0.0
    %4138 = vmatpush2.msra.mxu0 0.0
    %4139 = vmatprep.subr.mxu0 0.0
    %4140 = vmatpush2.msra.mxu0 0.0
    %4141 = vmatprep.subr.mxu0 0.0
    %4142 = vmatpush2.msra.mxu0 0.0
    %4143 = vmatprep.mubr.f32.mxu0 0.0
    %4144 = vmatmul.mubr.f32.gmra.mxu0 %v4077
    %v4145 = vpop.f32.mrf.mxu0
    %v4146 = vadd.f32 0.0, %v4145
    %v4147 = vpop.f32.mrf.mxu0
    %4148 = vdwg.mxu0
    %v4149 = vadd.f32 %v3993, %v4146
    %s4150 = scalar_lea.vmem %s4, 6
    %v4151 = vld [vmem:[%s4150] sm:$0x3]
    %v4153 = vsel %vm3691, %v4151, 0
    %4155 = vmatprep.subr.mxu0 0.0
    %4156 = vmatpush1.msra.mxu0 0.0
    %4157 = vmatprep.subr.mxu0 0.0
    %4158 = vmatpush1.msra.mxu0 0.0
    %4159 = vmatprep.subr.mxu0 0.0
    %4160 = vmatpush1.msra.mxu0 0.0
    %4161 = vmatprep.subr.mxu0 0.0
    %4162 = vmatpush1.msra.mxu0 0.0
    %4163 = vmatprep.subr.mxu0 0.0
    %4164 = vmatpush1.msra.mxu0 0.0
    %4165 = vmatprep.subr.mxu0 0.0
    %4166 = vmatpush1.msra.mxu0 0.0
    %4167 = vmatprep.subr.mxu0 0.0
    %4168 = vmatpush1.msra.mxu0 0.0
    %4169 = vmatprep.subr.mxu0 0.0
    %4170 = vmatpush1.msra.mxu0 0.0
    %4171 = vmatprep.subr.mxu0 0.0
    %4172 = vmatpush1.msra.mxu0 0.0
    %4173 = vmatprep.subr.mxu0 0.0
    %4174 = vmatpush1.msra.mxu0 0.0
    %4175 = vmatprep.subr.mxu0 0.0
    %4176 = vmatpush1.msra.mxu0 0.0
    %4177 = vmatprep.subr.mxu0 0.0
    %4178 = vmatpush1.msra.mxu0 0.0
    %4179 = vmatprep.subr.mxu0 0.0
    %4180 = vmatpush1.msra.mxu0 0.0
    %4181 = vmatprep.subr.mxu0 0.0
    %4182 = vmatpush1.msra.mxu0 0.0
    %4183 = vmatprep.subr.mxu0 0.0
    %4184 = vmatpush1.msra.mxu0 0.0
    %4185 = vmatprep.subr.mxu0 0.0
    %4186 = vmatpush1.msra.mxu0 %v3689
    %4187 = vmatprep.subr.mxu0 0.0
    %4188 = vmatpush2.msra.mxu0 0.0
    %4189 = vmatprep.subr.mxu0 0.0
    %4190 = vmatpush2.msra.mxu0 0.0
    %4191 = vmatprep.subr.mxu0 0.0
    %4192 = vmatpush2.msra.mxu0 0.0
    %4193 = vmatprep.subr.mxu0 0.0
    %4194 = vmatpush2.msra.mxu0 0.0
    %4195 = vmatprep.subr.mxu0 0.0
    %4196 = vmatpush2.msra.mxu0 0.0
    %4197 = vmatprep.subr.mxu0 0.0
    %4198 = vmatpush2.msra.mxu0 0.0
    %4199 = vmatprep.subr.mxu0 0.0
    %4200 = vmatpush2.msra.mxu0 0.0
    %4201 = vmatprep.subr.mxu0 0.0
    %4202 = vmatpush2.msra.mxu0 0.0
    %4203 = vmatprep.subr.mxu0 0.0
    %4204 = vmatpush2.msra.mxu0 0.0
    %4205 = vmatprep.subr.mxu0 0.0
    %4206 = vmatpush2.msra.mxu0 0.0
    %4207 = vmatprep.subr.mxu0 0.0
    %4208 = vmatpush2.msra.mxu0 0.0
    %4209 = vmatprep.subr.mxu0 0.0
    %4210 = vmatpush2.msra.mxu0 0.0
    %4211 = vmatprep.subr.mxu0 0.0
    %4212 = vmatpush2.msra.mxu0 0.0
    %4213 = vmatprep.subr.mxu0 0.0
    %4214 = vmatpush2.msra.mxu0 0.0
    %4215 = vmatprep.subr.mxu0 0.0
    %4216 = vmatpush2.msra.mxu0 0.0
    %4217 = vmatprep.subr.mxu0 0.0
    %4218 = vmatpush2.msra.mxu0 0.0
    %4219 = vmatprep.mubr.f32.mxu0 0.0
    %4220 = vmatmul.mubr.f32.gmra.mxu0 %v4153
    %v4221 = vpop.f32.mrf.mxu0
    %v4222 = vadd.f32 0.0, %v4221
    %v4223 = vpop.f32.mrf.mxu0
    %4224 = vdwg.mxu0
    %s4225 = scalar_lea.vmem %s5, 672
    %v4226 = vld [vmem:[%s4225] sm:$0xff]
    %v4227 = vld [vmem:[%s4225 + $0x8] sm:$0xff]
    %v4228 = vld [vmem:[%s4225 + $0x10] sm:$0xff]
    %v4229 = vld [vmem:[%s4225 + $0x18] sm:$0xff]
    %v4231 = vsel %vm269, %v4222, 0
    %4233 = vmatprep.subr.mxu0 0.0
    %4234 = vmatpush1.msra.mxu0 0.0
    %4235 = vmatprep.subr.mxu0 0.0
    %4236 = vmatpush1.msra.mxu0 0.0
    %4237 = vmatprep.subr.mxu0 0.0
    %4238 = vmatpush1.msra.mxu0 0.0
    %4239 = vmatprep.subr.mxu0 0.0
    %4240 = vmatpush1.msra.mxu0 0.0
    %4241 = vmatprep.subr.mxu0 0.0
    %4242 = vmatpush1.msra.mxu0 0.0
    %4243 = vmatprep.subr.mxu0 0.0
    %4244 = vmatpush1.msra.mxu0 0.0
    %4245 = vmatprep.subr.mxu0 0.0
    %4246 = vmatpush1.msra.mxu0 0.0
    %4247 = vmatprep.subr.mxu0 0.0
    %4248 = vmatpush1.msra.mxu0 0.0
    %4249 = vmatprep.subr.mxu0 0.0
    %4250 = vmatpush1.msra.mxu0 0.0
    %4251 = vmatprep.subr.mxu0 0.0
    %4252 = vmatpush1.msra.mxu0 0.0
    %4253 = vmatprep.subr.mxu0 0.0
    %4254 = vmatpush1.msra.mxu0 0.0
    %4255 = vmatprep.subr.mxu0 0.0
    %4256 = vmatpush1.msra.mxu0 0.0
    %4257 = vmatprep.subr.mxu0 0.0
    %4258 = vmatpush1.msra.mxu0 %v4229
    %4259 = vmatprep.subr.mxu0 0.0
    %4260 = vmatpush1.msra.mxu0 %v4228
    %4261 = vmatprep.subr.mxu0 0.0
    %4262 = vmatpush1.msra.mxu0 %v4227
    %4263 = vmatprep.subr.mxu0 0.0
    %4264 = vmatpush1.msra.mxu0 %v4226
    %4265 = vmatprep.subr.mxu0 0.0
    %4266 = vmatpush2.msra.mxu0 0.0
    %4267 = vmatprep.subr.mxu0 0.0
    %4268 = vmatpush2.msra.mxu0 0.0
    %4269 = vmatprep.subr.mxu0 0.0
    %4270 = vmatpush2.msra.mxu0 0.0
    %4271 = vmatprep.subr.mxu0 0.0
    %4272 = vmatpush2.msra.mxu0 0.0
    %4273 = vmatprep.subr.mxu0 0.0
    %4274 = vmatpush2.msra.mxu0 0.0
    %4275 = vmatprep.subr.mxu0 0.0
    %4276 = vmatpush2.msra.mxu0 0.0
    %4277 = vmatprep.subr.mxu0 0.0
    %4278 = vmatpush2.msra.mxu0 0.0
    %4279 = vmatprep.subr.mxu0 0.0
    %4280 = vmatpush2.msra.mxu0 0.0
    %4281 = vmatprep.subr.mxu0 0.0
    %4282 = vmatpush2.msra.mxu0 0.0
    %4283 = vmatprep.subr.mxu0 0.0
    %4284 = vmatpush2.msra.mxu0 0.0
    %4285 = vmatprep.subr.mxu0 0.0
    %4286 = vmatpush2.msra.mxu0 0.0
    %4287 = vmatprep.subr.mxu0 0.0
    %4288 = vmatpush2.msra.mxu0 0.0
    %4289 = vmatprep.subr.mxu0 0.0
    %4290 = vmatpush2.msra.mxu0 0.0
    %4291 = vmatprep.subr.mxu0 0.0
    %4292 = vmatpush2.msra.mxu0 0.0
    %4293 = vmatprep.subr.mxu0 0.0
    %4294 = vmatpush2.msra.mxu0 0.0
    %4295 = vmatprep.subr.mxu0 0.0
    %4296 = vmatpush2.msra.mxu0 0.0
    %4297 = vmatprep.mubr.f32.mxu0 0.0
    %4298 = vmatmul.mubr.f32.gmra.mxu0 %v4231
    %v4299 = vpop.f32.mrf.mxu0
    %v4300 = vadd.f32 0.0, %v4299
    %v4301 = vpop.f32.mrf.mxu0
    %4302 = vdwg.mxu0
    %v4303 = vadd.f32 %v4149, %v4300
    %s4304 = scalar_lea.vmem %s4, 8
    %v4305 = vld [vmem:[%s4304] sm:$0x3]
    %v4307 = vsel %vm3691, %v4305, 0
    %4309 = vmatprep.subr.mxu0 0.0
    %4310 = vmatpush1.msra.mxu0 0.0
    %4311 = vmatprep.subr.mxu0 0.0
    %4312 = vmatpush1.msra.mxu0 0.0
    %4313 = vmatprep.subr.mxu0 0.0
    %4314 = vmatpush1.msra.mxu0 0.0
    %4315 = vmatprep.subr.mxu0 0.0
    %4316 = vmatpush1.msra.mxu0 0.0
    %4317 = vmatprep.subr.mxu0 0.0
    %4318 = vmatpush1.msra.mxu0 0.0
    %4319 = vmatprep.subr.mxu0 0.0
    %4320 = vmatpush1.msra.mxu0 0.0
    %4321 = vmatprep.subr.mxu0 0.0
    %4322 = vmatpush1.msra.mxu0 0.0
    %4323 = vmatprep.subr.mxu0 0.0
    %4324 = vmatpush1.msra.mxu0 0.0
    %4325 = vmatprep.subr.mxu0 0.0
    %4326 = vmatpush1.msra.mxu0 0.0
    %4327 = vmatprep.subr.mxu0 0.0
    %4328 = vmatpush1.msra.mxu0 0.0
    %4329 = vmatprep.subr.mxu0 0.0
    %4330 = vmatpush1.msra.mxu0 0.0
    %4331 = vmatprep.subr.mxu0 0.0
    %4332 = vmatpush1.msra.mxu0 0.0
    %4333 = vmatprep.subr.mxu0 0.0
    %4334 = vmatpush1.msra.mxu0 0.0
    %4335 = vmatprep.subr.mxu0 0.0
    %4336 = vmatpush1.msra.mxu0 0.0
    %4337 = vmatprep.subr.mxu0 0.0
    %4338 = vmatpush1.msra.mxu0 0.0
    %4339 = vmatprep.subr.mxu0 0.0
    %4340 = vmatpush1.msra.mxu0 %v3689
    %4341 = vmatprep.subr.mxu0 0.0
    %4342 = vmatpush2.msra.mxu0 0.0
    %4343 = vmatprep.subr.mxu0 0.0
    %4344 = vmatpush2.msra.mxu0 0.0
    %4345 = vmatprep.subr.mxu0 0.0
    %4346 = vmatpush2.msra.mxu0 0.0
    %4347 = vmatprep.subr.mxu0 0.0
    %4348 = vmatpush2.msra.mxu0 0.0
    %4349 = vmatprep.subr.mxu0 0.0
    %4350 = vmatpush2.msra.mxu0 0.0
    %4351 = vmatprep.subr.mxu0 0.0
    %4352 = vmatpush2.msra.mxu0 0.0
    %4353 = vmatprep.subr.mxu0 0.0
    %4354 = vmatpush2.msra.mxu0 0.0
    %4355 = vmatprep.subr.mxu0 0.0
    %4356 = vmatpush2.msra.mxu0 0.0
    %4357 = vmatprep.subr.mxu0 0.0
    %4358 = vmatpush2.msra.mxu0 0.0
    %4359 = vmatprep.subr.mxu0 0.0
    %4360 = vmatpush2.msra.mxu0 0.0
    %4361 = vmatprep.subr.mxu0 0.0
    %4362 = vmatpush2.msra.mxu0 0.0
    %4363 = vmatprep.subr.mxu0 0.0
    %4364 = vmatpush2.msra.mxu0 0.0
    %4365 = vmatprep.subr.mxu0 0.0
    %4366 = vmatpush2.msra.mxu0 0.0
    %4367 = vmatprep.subr.mxu0 0.0
    %4368 = vmatpush2.msra.mxu0 0.0
    %4369 = vmatprep.subr.mxu0 0.0
    %4370 = vmatpush2.msra.mxu0 0.0
    %4371 = vmatprep.subr.mxu0 0.0
    %4372 = vmatpush2.msra.mxu0 0.0
    %4373 = vmatprep.mubr.f32.mxu0 0.0
    %4374 = vmatmul.mubr.f32.gmra.mxu0 %v4307
    %v4375 = vpop.f32.mrf.mxu0
    %v4376 = vadd.f32 0.0, %v4375
    %v4377 = vpop.f32.mrf.mxu0
    %4378 = vdwg.mxu0
    %s4379 = scalar_lea.vmem %s5, 704
    %v4380 = vld [vmem:[%s4379] sm:$0xff]
    %v4381 = vld [vmem:[%s4379 + $0x8] sm:$0xff]
    %v4382 = vld [vmem:[%s4379 + $0x10] sm:$0xff]
    %v4383 = vld [vmem:[%s4379 + $0x18] sm:$0xff]
    %v4385 = vsel %vm269, %v4376, 0
    %4387 = vmatprep.subr.mxu0 0.0
    %4388 = vmatpush1.msra.mxu0 0.0
    %4389 = vmatprep.subr.mxu0 0.0
    %4390 = vmatpush1.msra.mxu0 0.0
    %4391 = vmatprep.subr.mxu0 0.0
    %4392 = vmatpush1.msra.mxu0 0.0
    %4393 = vmatprep.subr.mxu0 0.0
    %4394 = vmatpush1.msra.mxu0 0.0
    %4395 = vmatprep.subr.mxu0 0.0
    %4396 = vmatpush1.msra.mxu0 0.0
    %4397 = vmatprep.subr.mxu0 0.0
    %4398 = vmatpush1.msra.mxu0 0.0
    %4399 = vmatprep.subr.mxu0 0.0
    %4400 = vmatpush1.msra.mxu0 0.0
    %4401 = vmatprep.subr.mxu0 0.0
    %4402 = vmatpush1.msra.mxu0 0.0
    %4403 = vmatprep.subr.mxu0 0.0
    %4404 = vmatpush1.msra.mxu0 0.0
    %4405 = vmatprep.subr.mxu0 0.0
    %4406 = vmatpush1.msra.mxu0 0.0
    %4407 = vmatprep.subr.mxu0 0.0
    %4408 = vmatpush1.msra.mxu0 0.0
    %4409 = vmatprep.subr.mxu0 0.0
    %4410 = vmatpush1.msra.mxu0 0.0
    %4411 = vmatprep.subr.mxu0 0.0
    %4412 = vmatpush1.msra.mxu0 %v4383
    %4413 = vmatprep.subr.mxu0 0.0
    %4414 = vmatpush1.msra.mxu0 %v4382
    %4415 = vmatprep.subr.mxu0 0.0
    %4416 = vmatpush1.msra.mxu0 %v4381
    %4417 = vmatprep.subr.mxu0 0.0
    %4418 = vmatpush1.msra.mxu0 %v4380
    %4419 = vmatprep.subr.mxu0 0.0
    %4420 = vmatpush2.msra.mxu0 0.0
    %4421 = vmatprep.subr.mxu0 0.0
    %4422 = vmatpush2.msra.mxu0 0.0
    %4423 = vmatprep.subr.mxu0 0.0
    %4424 = vmatpush2.msra.mxu0 0.0
    %4425 = vmatprep.subr.mxu0 0.0
    %4426 = vmatpush2.msra.mxu0 0.0
    %4427 = vmatprep.subr.mxu0 0.0
    %4428 = vmatpush2.msra.mxu0 0.0
    %4429 = vmatprep.subr.mxu0 0.0
    %4430 = vmatpush2.msra.mxu0 0.0
    %4431 = vmatprep.subr.mxu0 0.0
    %4432 = vmatpush2.msra.mxu0 0.0
    %4433 = vmatprep.subr.mxu0 0.0
    %4434 = vmatpush2.msra.mxu0 0.0
    %4435 = vmatprep.subr.mxu0 0.0
    %4436 = vmatpush2.msra.mxu0 0.0
    %4437 = vmatprep.subr.mxu0 0.0
    %4438 = vmatpush2.msra.mxu0 0.0
    %4439 = vmatprep.subr.mxu0 0.0
    %4440 = vmatpush2.msra.mxu0 0.0
    %4441 = vmatprep.subr.mxu0 0.0
    %4442 = vmatpush2.msra.mxu0 0.0
    %4443 = vmatprep.subr.mxu0 0.0
    %4444 = vmatpush2.msra.mxu0 0.0
    %4445 = vmatprep.subr.mxu0 0.0
    %4446 = vmatpush2.msra.mxu0 0.0
    %4447 = vmatprep.subr.mxu0 0.0
    %4448 = vmatpush2.msra.mxu0 0.0
    %4449 = vmatprep.subr.mxu0 0.0
    %4450 = vmatpush2.msra.mxu0 0.0
    %4451 = vmatprep.mubr.f32.mxu0 0.0
    %4452 = vmatmul.mubr.f32.gmra.mxu0 %v4385
    %v4453 = vpop.f32.mrf.mxu0
    %v4454 = vadd.f32 0.0, %v4453
    %v4455 = vpop.f32.mrf.mxu0
    %4456 = vdwg.mxu0
    %v4457 = vadd.f32 %v4303, %v4454
    %s4458 = scalar_lea.vmem %s4, 10
    %v4459 = vld [vmem:[%s4458] sm:$0x3]
    %v4461 = vsel %vm3691, %v4459, 0
    %4463 = vmatprep.subr.mxu0 0.0
    %4464 = vmatpush1.msra.mxu0 0.0
    %4465 = vmatprep.subr.mxu0 0.0
    %4466 = vmatpush1.msra.mxu0 0.0
    %4467 = vmatprep.subr.mxu0 0.0
    %4468 = vmatpush1.msra.mxu0 0.0
    %4469 = vmatprep.subr.mxu0 0.0
    %4470 = vmatpush1.msra.mxu0 0.0
    %4471 = vmatprep.subr.mxu0 0.0
    %4472 = vmatpush1.msra.mxu0 0.0
    %4473 = vmatprep.subr.mxu0 0.0
    %4474 = vmatpush1.msra.mxu0 0.0
    %4475 = vmatprep.subr.mxu0 0.0
    %4476 = vmatpush1.msra.mxu0 0.0
    %4477 = vmatprep.subr.mxu0 0.0
    %4478 = vmatpush1.msra.mxu0 0.0
    %4479 = vmatprep.subr.mxu0 0.0
    %4480 = vmatpush1.msra.mxu0 0.0
    %4481 = vmatprep.subr.mxu0 0.0
    %4482 = vmatpush1.msra.mxu0 0.0
    %4483 = vmatprep.subr.mxu0 0.0
    %4484 = vmatpush1.msra.mxu0 0.0
    %4485 = vmatprep.subr.mxu0 0.0
    %4486 = vmatpush1.msra.mxu0 0.0
    %4487 = vmatprep.subr.mxu0 0.0
    %4488 = vmatpush1.msra.mxu0 0.0
    %4489 = vmatprep.subr.mxu0 0.0
    %4490 = vmatpush1.msra.mxu0 0.0
    %4491 = vmatprep.subr.mxu0 0.0
    %4492 = vmatpush1.msra.mxu0 0.0
    %4493 = vmatprep.subr.mxu0 0.0
    %4494 = vmatpush1.msra.mxu0 %v3689
    %4495 = vmatprep.subr.mxu0 0.0
    %4496 = vmatpush2.msra.mxu0 0.0
    %4497 = vmatprep.subr.mxu0 0.0
    %4498 = vmatpush2.msra.mxu0 0.0
    %4499 = vmatprep.subr.mxu0 0.0
    %4500 = vmatpush2.msra.mxu0 0.0
    %4501 = vmatprep.subr.mxu0 0.0
    %4502 = vmatpush2.msra.mxu0 0.0
    %4503 = vmatprep.subr.mxu0 0.0
    %4504 = vmatpush2.msra.mxu0 0.0
    %4505 = vmatprep.subr.mxu0 0.0
    %4506 = vmatpush2.msra.mxu0 0.0
    %4507 = vmatprep.subr.mxu0 0.0
    %4508 = vmatpush2.msra.mxu0 0.0
    %4509 = vmatprep.subr.mxu0 0.0
    %4510 = vmatpush2.msra.mxu0 0.0
    %4511 = vmatprep.subr.mxu0 0.0
    %4512 = vmatpush2.msra.mxu0 0.0
    %4513 = vmatprep.subr.mxu0 0.0
    %4514 = vmatpush2.msra.mxu0 0.0
    %4515 = vmatprep.subr.mxu0 0.0
    %4516 = vmatpush2.msra.mxu0 0.0
    %4517 = vmatprep.subr.mxu0 0.0
    %4518 = vmatpush2.msra.mxu0 0.0
    %4519 = vmatprep.subr.mxu0 0.0
    %4520 = vmatpush2.msra.mxu0 0.0
    %4521 = vmatprep.subr.mxu0 0.0
    %4522 = vmatpush2.msra.mxu0 0.0
    %4523 = vmatprep.subr.mxu0 0.0
    %4524 = vmatpush2.msra.mxu0 0.0
    %4525 = vmatprep.subr.mxu0 0.0
    %4526 = vmatpush2.msra.mxu0 0.0
    %4527 = vmatprep.mubr.f32.mxu0 0.0
    %4528 = vmatmul.mubr.f32.gmra.mxu0 %v4461
    %v4529 = vpop.f32.mrf.mxu0
    %v4530 = vadd.f32 0.0, %v4529
    %v4531 = vpop.f32.mrf.mxu0
    %4532 = vdwg.mxu0
    %s4533 = scalar_lea.vmem %s5, 736
    %v4534 = vld [vmem:[%s4533] sm:$0xff]
    %v4535 = vld [vmem:[%s4533 + $0x8] sm:$0xff]
    %v4536 = vld [vmem:[%s4533 + $0x10] sm:$0xff]
    %v4537 = vld [vmem:[%s4533 + $0x18] sm:$0xff]
    %v4539 = vsel %vm269, %v4530, 0
    %4541 = vmatprep.subr.mxu0 0.0
    %4542 = vmatpush1.msra.mxu0 0.0
    %4543 = vmatprep.subr.mxu0 0.0
    %4544 = vmatpush1.msra.mxu0 0.0
    %4545 = vmatprep.subr.mxu0 0.0
    %4546 = vmatpush1.msra.mxu0 0.0
    %4547 = vmatprep.subr.mxu0 0.0
    %4548 = vmatpush1.msra.mxu0 0.0
    %4549 = vmatprep.subr.mxu0 0.0
    %4550 = vmatpush1.msra.mxu0 0.0
    %4551 = vmatprep.subr.mxu0 0.0
    %4552 = vmatpush1.msra.mxu0 0.0
    %4553 = vmatprep.subr.mxu0 0.0
    %4554 = vmatpush1.msra.mxu0 0.0
    %4555 = vmatprep.subr.mxu0 0.0
    %4556 = vmatpush1.msra.mxu0 0.0
    %4557 = vmatprep.subr.mxu0 0.0
    %4558 = vmatpush1.msra.mxu0 0.0
    %4559 = vmatprep.subr.mxu0 0.0
    %4560 = vmatpush1.msra.mxu0 0.0
    %4561 = vmatprep.subr.mxu0 0.0
    %4562 = vmatpush1.msra.mxu0 0.0
    %4563 = vmatprep.subr.mxu0 0.0
    %4564 = vmatpush1.msra.mxu0 0.0
    %4565 = vmatprep.subr.mxu0 0.0
    %4566 = vmatpush1.msra.mxu0 %v4537
    %4567 = vmatprep.subr.mxu0 0.0
    %4568 = vmatpush1.msra.mxu0 %v4536
    %4569 = vmatprep.subr.mxu0 0.0
    %4570 = vmatpush1.msra.mxu0 %v4535
    %4571 = vmatprep.subr.mxu0 0.0
    %4572 = vmatpush1.msra.mxu0 %v4534
    %4573 = vmatprep.subr.mxu0 0.0
    %4574 = vmatpush2.msra.mxu0 0.0
    %4575 = vmatprep.subr.mxu0 0.0
    %4576 = vmatpush2.msra.mxu0 0.0
    %4577 = vmatprep.subr.mxu0 0.0
    %4578 = vmatpush2.msra.mxu0 0.0
    %4579 = vmatprep.subr.mxu0 0.0
    %4580 = vmatpush2.msra.mxu0 0.0
    %4581 = vmatprep.subr.mxu0 0.0
    %4582 = vmatpush2.msra.mxu0 0.0
    %4583 = vmatprep.subr.mxu0 0.0
    %4584 = vmatpush2.msra.mxu0 0.0
    %4585 = vmatprep.subr.mxu0 0.0
    %4586 = vmatpush2.msra.mxu0 0.0
    %4587 = vmatprep.subr.mxu0 0.0
    %4588 = vmatpush2.msra.mxu0 0.0
    %4589 = vmatprep.subr.mxu0 0.0
    %4590 = vmatpush2.msra.mxu0 0.0
    %4591 = vmatprep.subr.mxu0 0.0
    %4592 = vmatpush2.msra.mxu0 0.0
    %4593 = vmatprep.subr.mxu0 0.0
    %4594 = vmatpush2.msra.mxu0 0.0
    %4595 = vmatprep.subr.mxu0 0.0
    %4596 = vmatpush2.msra.mxu0 0.0
    %4597 = vmatprep.subr.mxu0 0.0
    %4598 = vmatpush2.msra.mxu0 0.0
    %4599 = vmatprep.subr.mxu0 0.0
    %4600 = vmatpush2.msra.mxu0 0.0
    %4601 = vmatprep.subr.mxu0 0.0
    %4602 = vmatpush2.msra.mxu0 0.0
    %4603 = vmatprep.subr.mxu0 0.0
    %4604 = vmatpush2.msra.mxu0 0.0
    %4605 = vmatprep.mubr.f32.mxu0 0.0
    %4606 = vmatmul.mubr.f32.gmra.mxu0 %v4539
    %v4607 = vpop.f32.mrf.mxu0
    %v4608 = vadd.f32 0.0, %v4607
    %v4609 = vpop.f32.mrf.mxu0
    %4610 = vdwg.mxu0
    %v4611 = vadd.f32 %v4457, %v4608
    %s4612 = scalar_lea.vmem %s4, 12
    %v4613 = vld [vmem:[%s4612] sm:$0x3]
    %v4615 = vsel %vm3691, %v4613, 0
    %4617 = vmatprep.subr.mxu0 0.0
    %4618 = vmatpush1.msra.mxu0 0.0
    %4619 = vmatprep.subr.mxu0 0.0
    %4620 = vmatpush1.msra.mxu0 0.0
    %4621 = vmatprep.subr.mxu0 0.0
    %4622 = vmatpush1.msra.mxu0 0.0
    %4623 = vmatprep.subr.mxu0 0.0
    %4624 = vmatpush1.msra.mxu0 0.0
    %4625 = vmatprep.subr.mxu0 0.0
    %4626 = vmatpush1.msra.mxu0 0.0
    %4627 = vmatprep.subr.mxu0 0.0
    %4628 = vmatpush1.msra.mxu0 0.0
    %4629 = vmatprep.subr.mxu0 0.0
    %4630 = vmatpush1.msra.mxu0 0.0
    %4631 = vmatprep.subr.mxu0 0.0
    %4632 = vmatpush1.msra.mxu0 0.0
    %4633 = vmatprep.subr.mxu0 0.0
    %4634 = vmatpush1.msra.mxu0 0.0
    %4635 = vmatprep.subr.mxu0 0.0
    %4636 = vmatpush1.msra.mxu0 0.0
    %4637 = vmatprep.subr.mxu0 0.0
    %4638 = vmatpush1.msra.mxu0 0.0
    %4639 = vmatprep.subr.mxu0 0.0
    %4640 = vmatpush1.msra.mxu0 0.0
    %4641 = vmatprep.subr.mxu0 0.0
    %4642 = vmatpush1.msra.mxu0 0.0
    %4643 = vmatprep.subr.mxu0 0.0
    %4644 = vmatpush1.msra.mxu0 0.0
    %4645 = vmatprep.subr.mxu0 0.0
    %4646 = vmatpush1.msra.mxu0 0.0
    %4647 = vmatprep.subr.mxu0 0.0
    %4648 = vmatpush1.msra.mxu0 %v3689
    %4649 = vmatprep.subr.mxu0 0.0
    %4650 = vmatpush2.msra.mxu0 0.0
    %4651 = vmatprep.subr.mxu0 0.0
    %4652 = vmatpush2.msra.mxu0 0.0
    %4653 = vmatprep.subr.mxu0 0.0
    %4654 = vmatpush2.msra.mxu0 0.0
    %4655 = vmatprep.subr.mxu0 0.0
    %4656 = vmatpush2.msra.mxu0 0.0
    %4657 = vmatprep.subr.mxu0 0.0
    %4658 = vmatpush2.msra.mxu0 0.0
    %4659 = vmatprep.subr.mxu0 0.0
    %4660 = vmatpush2.msra.mxu0 0.0
    %4661 = vmatprep.subr.mxu0 0.0
    %4662 = vmatpush2.msra.mxu0 0.0
    %4663 = vmatprep.subr.mxu0 0.0
    %4664 = vmatpush2.msra.mxu0 0.0
    %4665 = vmatprep.subr.mxu0 0.0
    %4666 = vmatpush2.msra.mxu0 0.0
    %4667 = vmatprep.subr.mxu0 0.0
    %4668 = vmatpush2.msra.mxu0 0.0
    %4669 = vmatprep.subr.mxu0 0.0
    %4670 = vmatpush2.msra.mxu0 0.0
    %4671 = vmatprep.subr.mxu0 0.0
    %4672 = vmatpush2.msra.mxu0 0.0
    %4673 = vmatprep.subr.mxu0 0.0
    %4674 = vmatpush2.msra.mxu0 0.0
    %4675 = vmatprep.subr.mxu0 0.0
    %4676 = vmatpush2.msra.mxu0 0.0
    %4677 = vmatprep.subr.mxu0 0.0
    %4678 = vmatpush2.msra.mxu0 0.0
    %4679 = vmatprep.subr.mxu0 0.0
    %4680 = vmatpush2.msra.mxu0 0.0
    %4681 = vmatprep.mubr.f32.mxu0 0.0
    %4682 = vmatmul.mubr.f32.gmra.mxu0 %v4615
    %v4683 = vpop.f32.mrf.mxu0
    %v4684 = vadd.f32 0.0, %v4683
    %v4685 = vpop.f32.mrf.mxu0
    %4686 = vdwg.mxu0
    %s4687 = scalar_lea.vmem %s5, 768
    %v4688 = vld [vmem:[%s4687] sm:$0xff]
    %v4689 = vld [vmem:[%s4687 + $0x8] sm:$0xff]
    %v4690 = vld [vmem:[%s4687 + $0x10] sm:$0xff]
    %v4691 = vld [vmem:[%s4687 + $0x18] sm:$0xff]
    %v4693 = vsel %vm269, %v4684, 0
    %4695 = vmatprep.subr.mxu0 0.0
    %4696 = vmatpush1.msra.mxu0 0.0
    %4697 = vmatprep.subr.mxu0 0.0
    %4698 = vmatpush1.msra.mxu0 0.0
    %4699 = vmatprep.subr.mxu0 0.0
    %4700 = vmatpush1.msra.mxu0 0.0
    %4701 = vmatprep.subr.mxu0 0.0
    %4702 = vmatpush1.msra.mxu0 0.0
    %4703 = vmatprep.subr.mxu0 0.0
    %4704 = vmatpush1.msra.mxu0 0.0
    %4705 = vmatprep.subr.mxu0 0.0
    %4706 = vmatpush1.msra.mxu0 0.0
    %4707 = vmatprep.subr.mxu0 0.0
    %4708 = vmatpush1.msra.mxu0 0.0
    %4709 = vmatprep.subr.mxu0 0.0
    %4710 = vmatpush1.msra.mxu0 0.0
    %4711 = vmatprep.subr.mxu0 0.0
    %4712 = vmatpush1.msra.mxu0 0.0
    %4713 = vmatprep.subr.mxu0 0.0
    %4714 = vmatpush1.msra.mxu0 0.0
    %4715 = vmatprep.subr.mxu0 0.0
    %4716 = vmatpush1.msra.mxu0 0.0
    %4717 = vmatprep.subr.mxu0 0.0
    %4718 = vmatpush1.msra.mxu0 0.0
    %4719 = vmatprep.subr.mxu0 0.0
    %4720 = vmatpush1.msra.mxu0 %v4691
    %4721 = vmatprep.subr.mxu0 0.0
    %4722 = vmatpush1.msra.mxu0 %v4690
    %4723 = vmatprep.subr.mxu0 0.0
    %4724 = vmatpush1.msra.mxu0 %v4689
    %4725 = vmatprep.subr.mxu0 0.0
    %4726 = vmatpush1.msra.mxu0 %v4688
    %4727 = vmatprep.subr.mxu0 0.0
    %4728 = vmatpush2.msra.mxu0 0.0
    %4729 = vmatprep.subr.mxu0 0.0
    %4730 = vmatpush2.msra.mxu0 0.0
    %4731 = vmatprep.subr.mxu0 0.0
    %4732 = vmatpush2.msra.mxu0 0.0
    %4733 = vmatprep.subr.mxu0 0.0
    %4734 = vmatpush2.msra.mxu0 0.0
    %4735 = vmatprep.subr.mxu0 0.0
    %4736 = vmatpush2.msra.mxu0 0.0
    %4737 = vmatprep.subr.mxu0 0.0
    %4738 = vmatpush2.msra.mxu0 0.0
    %4739 = vmatprep.subr.mxu0 0.0
    %4740 = vmatpush2.msra.mxu0 0.0
    %4741 = vmatprep.subr.mxu0 0.0
    %4742 = vmatpush2.msra.mxu0 0.0
    %4743 = vmatprep.subr.mxu0 0.0
    %4744 = vmatpush2.msra.mxu0 0.0
    %4745 = vmatprep.subr.mxu0 0.0
    %4746 = vmatpush2.msra.mxu0 0.0
    %4747 = vmatprep.subr.mxu0 0.0
    %4748 = vmatpush2.msra.mxu0 0.0
    %4749 = vmatprep.subr.mxu0 0.0
    %4750 = vmatpush2.msra.mxu0 0.0
    %4751 = vmatprep.subr.mxu0 0.0
    %4752 = vmatpush2.msra.mxu0 0.0
    %4753 = vmatprep.subr.mxu0 0.0
    %4754 = vmatpush2.msra.mxu0 0.0
    %4755 = vmatprep.subr.mxu0 0.0
    %4756 = vmatpush2.msra.mxu0 0.0
    %4757 = vmatprep.subr.mxu0 0.0
    %4758 = vmatpush2.msra.mxu0 0.0
    %4759 = vmatprep.mubr.f32.mxu0 0.0
    %4760 = vmatmul.mubr.f32.gmra.mxu0 %v4693
    %v4761 = vpop.f32.mrf.mxu0
    %v4762 = vadd.f32 0.0, %v4761
    %v4763 = vpop.f32.mrf.mxu0
    %4764 = vdwg.mxu0
    %v4765 = vadd.f32 %v4611, %v4762
    %s4766 = scalar_lea.vmem %s4, 14
    %v4767 = vld [vmem:[%s4766] sm:$0x3]
    %v4769 = vsel %vm3691, %v4767, 0
    %4771 = vmatprep.subr.mxu0 0.0
    %4772 = vmatpush1.msra.mxu0 0.0
    %4773 = vmatprep.subr.mxu0 0.0
    %4774 = vmatpush1.msra.mxu0 0.0
    %4775 = vmatprep.subr.mxu0 0.0
    %4776 = vmatpush1.msra.mxu0 0.0
    %4777 = vmatprep.subr.mxu0 0.0
    %4778 = vmatpush1.msra.mxu0 0.0
    %4779 = vmatprep.subr.mxu0 0.0
    %4780 = vmatpush1.msra.mxu0 0.0
    %4781 = vmatprep.subr.mxu0 0.0
    %4782 = vmatpush1.msra.mxu0 0.0
    %4783 = vmatprep.subr.mxu0 0.0
    %4784 = vmatpush1.msra.mxu0 0.0
    %4785 = vmatprep.subr.mxu0 0.0
    %4786 = vmatpush1.msra.mxu0 0.0
    %4787 = vmatprep.subr.mxu0 0.0
    %4788 = vmatpush1.msra.mxu0 0.0
    %4789 = vmatprep.subr.mxu0 0.0
    %4790 = vmatpush1.msra.mxu0 0.0
    %4791 = vmatprep.subr.mxu0 0.0
    %4792 = vmatpush1.msra.mxu0 0.0
    %4793 = vmatprep.subr.mxu0 0.0
    %4794 = vmatpush1.msra.mxu0 0.0
    %4795 = vmatprep.subr.mxu0 0.0
    %4796 = vmatpush1.msra.mxu0 0.0
    %4797 = vmatprep.subr.mxu0 0.0
    %4798 = vmatpush1.msra.mxu0 0.0
    %4799 = vmatprep.subr.mxu0 0.0
    %4800 = vmatpush1.msra.mxu0 0.0
    %4801 = vmatprep.subr.mxu0 0.0
    %4802 = vmatpush1.msra.mxu0 %v3689
    %4803 = vmatprep.subr.mxu0 0.0
    %4804 = vmatpush2.msra.mxu0 0.0
    %4805 = vmatprep.subr.mxu0 0.0
    %4806 = vmatpush2.msra.mxu0 0.0
    %4807 = vmatprep.subr.mxu0 0.0
    %4808 = vmatpush2.msra.mxu0 0.0
    %4809 = vmatprep.subr.mxu0 0.0
    %4810 = vmatpush2.msra.mxu0 0.0
    %4811 = vmatprep.subr.mxu0 0.0
    %4812 = vmatpush2.msra.mxu0 0.0
    %4813 = vmatprep.subr.mxu0 0.0
    %4814 = vmatpush2.msra.mxu0 0.0
    %4815 = vmatprep.subr.mxu0 0.0
    %4816 = vmatpush2.msra.mxu0 0.0
    %4817 = vmatprep.subr.mxu0 0.0
    %4818 = vmatpush2.msra.mxu0 0.0
    %4819 = vmatprep.subr.mxu0 0.0
    %4820 = vmatpush2.msra.mxu0 0.0
    %4821 = vmatprep.subr.mxu0 0.0
    %4822 = vmatpush2.msra.mxu0 0.0
    %4823 = vmatprep.subr.mxu0 0.0
    %4824 = vmatpush2.msra.mxu0 0.0
    %4825 = vmatprep.subr.mxu0 0.0
    %4826 = vmatpush2.msra.mxu0 0.0
    %4827 = vmatprep.subr.mxu0 0.0
    %4828 = vmatpush2.msra.mxu0 0.0
    %4829 = vmatprep.subr.mxu0 0.0
    %4830 = vmatpush2.msra.mxu0 0.0
    %4831 = vmatprep.subr.mxu0 0.0
    %4832 = vmatpush2.msra.mxu0 0.0
    %4833 = vmatprep.subr.mxu0 0.0
    %4834 = vmatpush2.msra.mxu0 0.0
    %4835 = vmatprep.mubr.f32.mxu0 0.0
    %4836 = vmatmul.mubr.f32.gmra.mxu0 %v4769
    %v4837 = vpop.f32.mrf.mxu0
    %v4838 = vadd.f32 0.0, %v4837
    %v4839 = vpop.f32.mrf.mxu0
    %4840 = vdwg.mxu0
    %s4841 = scalar_lea.vmem %s5, 800
    %v4842 = vld [vmem:[%s4841] sm:$0xff]
    %v4843 = vld [vmem:[%s4841 + $0x8] sm:$0xff]
    %v4844 = vld [vmem:[%s4841 + $0x10] sm:$0xff]
    %v4845 = vld [vmem:[%s4841 + $0x18] sm:$0xff]
    %v4847 = vsel %vm269, %v4838, 0
    %4849 = vmatprep.subr.mxu0 0.0
    %4850 = vmatpush1.msra.mxu0 0.0
    %4851 = vmatprep.subr.mxu0 0.0
    %4852 = vmatpush1.msra.mxu0 0.0
    %4853 = vmatprep.subr.mxu0 0.0
    %4854 = vmatpush1.msra.mxu0 0.0
    %4855 = vmatprep.subr.mxu0 0.0
    %4856 = vmatpush1.msra.mxu0 0.0
    %4857 = vmatprep.subr.mxu0 0.0
    %4858 = vmatpush1.msra.mxu0 0.0
    %4859 = vmatprep.subr.mxu0 0.0
    %4860 = vmatpush1.msra.mxu0 0.0
    %4861 = vmatprep.subr.mxu0 0.0
    %4862 = vmatpush1.msra.mxu0 0.0
    %4863 = vmatprep.subr.mxu0 0.0
    %4864 = vmatpush1.msra.mxu0 0.0
    %4865 = vmatprep.subr.mxu0 0.0
    %4866 = vmatpush1.msra.mxu0 0.0
    %4867 = vmatprep.subr.mxu0 0.0
    %4868 = vmatpush1.msra.mxu0 0.0
    %4869 = vmatprep.subr.mxu0 0.0
    %4870 = vmatpush1.msra.mxu0 0.0
    %4871 = vmatprep.subr.mxu0 0.0
    %4872 = vmatpush1.msra.mxu0 0.0
    %4873 = vmatprep.subr.mxu0 0.0
    %4874 = vmatpush1.msra.mxu0 %v4845
    %4875 = vmatprep.subr.mxu0 0.0
    %4876 = vmatpush1.msra.mxu0 %v4844
    %4877 = vmatprep.subr.mxu0 0.0
    %4878 = vmatpush1.msra.mxu0 %v4843
    %4879 = vmatprep.subr.mxu0 0.0
    %4880 = vmatpush1.msra.mxu0 %v4842
    %4881 = vmatprep.subr.mxu0 0.0
    %4882 = vmatpush2.msra.mxu0 0.0
    %4883 = vmatprep.subr.mxu0 0.0
    %4884 = vmatpush2.msra.mxu0 0.0
    %4885 = vmatprep.subr.mxu0 0.0
    %4886 = vmatpush2.msra.mxu0 0.0
    %4887 = vmatprep.subr.mxu0 0.0
    %4888 = vmatpush2.msra.mxu0 0.0
    %4889 = vmatprep.subr.mxu0 0.0
    %4890 = vmatpush2.msra.mxu0 0.0
    %4891 = vmatprep.subr.mxu0 0.0
    %4892 = vmatpush2.msra.mxu0 0.0
    %4893 = vmatprep.subr.mxu0 0.0
    %4894 = vmatpush2.msra.mxu0 0.0
    %4895 = vmatprep.subr.mxu0 0.0
    %4896 = vmatpush2.msra.mxu0 0.0
    %4897 = vmatprep.subr.mxu0 0.0
    %4898 = vmatpush2.msra.mxu0 0.0
    %4899 = vmatprep.subr.mxu0 0.0
    %4900 = vmatpush2.msra.mxu0 0.0
    %4901 = vmatprep.subr.mxu0 0.0
    %4902 = vmatpush2.msra.mxu0 0.0
    %4903 = vmatprep.subr.mxu0 0.0
    %4904 = vmatpush2.msra.mxu0 0.0
    %4905 = vmatprep.subr.mxu0 0.0
    %4906 = vmatpush2.msra.mxu0 0.0
    %4907 = vmatprep.subr.mxu0 0.0
    %4908 = vmatpush2.msra.mxu0 0.0
    %4909 = vmatprep.subr.mxu0 0.0
    %4910 = vmatpush2.msra.mxu0 0.0
    %4911 = vmatprep.subr.mxu0 0.0
    %4912 = vmatpush2.msra.mxu0 0.0
    %4913 = vmatprep.mubr.f32.mxu0 0.0
    %4914 = vmatmul.mubr.f32.gmra.mxu0 %v4847
    %v4915 = vpop.f32.mrf.mxu0
    %v4916 = vadd.f32 0.0, %v4915
    %v4917 = vpop.f32.mrf.mxu0
    %4918 = vdwg.mxu0
    %v4919 = vadd.f32 %v4765, %v4916
    %s4920 = scalar_lea.vmem %s4, 16
    %v4921 = vld [vmem:[%s4920] sm:$0x3]
    %v4923 = vsel %vm3691, %v4921, 0
    %4925 = vmatprep.subr.mxu0 0.0
    %4926 = vmatpush1.msra.mxu0 0.0
    %4927 = vmatprep.subr.mxu0 0.0
    %4928 = vmatpush1.msra.mxu0 0.0
    %4929 = vmatprep.subr.mxu0 0.0
    %4930 = vmatpush1.msra.mxu0 0.0
    %4931 = vmatprep.subr.mxu0 0.0
    %4932 = vmatpush1.msra.mxu0 0.0
    %4933 = vmatprep.subr.mxu0 0.0
    %4934 = vmatpush1.msra.mxu0 0.0
    %4935 = vmatprep.subr.mxu0 0.0
    %4936 = vmatpush1.msra.mxu0 0.0
    %4937 = vmatprep.subr.mxu0 0.0
    %4938 = vmatpush1.msra.mxu0 0.0
    %4939 = vmatprep.subr.mxu0 0.0
    %4940 = vmatpush1.msra.mxu0 0.0
    %4941 = vmatprep.subr.mxu0 0.0
    %4942 = vmatpush1.msra.mxu0 0.0
    %4943 = vmatprep.subr.mxu0 0.0
    %4944 = vmatpush1.msra.mxu0 0.0
    %4945 = vmatprep.subr.mxu0 0.0
    %4946 = vmatpush1.msra.mxu0 0.0
    %4947 = vmatprep.subr.mxu0 0.0
    %4948 = vmatpush1.msra.mxu0 0.0
    %4949 = vmatprep.subr.mxu0 0.0
    %4950 = vmatpush1.msra.mxu0 0.0
    %4951 = vmatprep.subr.mxu0 0.0
    %4952 = vmatpush1.msra.mxu0 0.0
    %4953 = vmatprep.subr.mxu0 0.0
    %4954 = vmatpush1.msra.mxu0 0.0
    %4955 = vmatprep.subr.mxu0 0.0
    %4956 = vmatpush1.msra.mxu0 %v3689
    %4957 = vmatprep.subr.mxu0 0.0
    %4958 = vmatpush2.msra.mxu0 0.0
    %4959 = vmatprep.subr.mxu0 0.0
    %4960 = vmatpush2.msra.mxu0 0.0
    %4961 = vmatprep.subr.mxu0 0.0
    %4962 = vmatpush2.msra.mxu0 0.0
    %4963 = vmatprep.subr.mxu0 0.0
    %4964 = vmatpush2.msra.mxu0 0.0
    %4965 = vmatprep.subr.mxu0 0.0
    %4966 = vmatpush2.msra.mxu0 0.0
    %4967 = vmatprep.subr.mxu0 0.0
    %4968 = vmatpush2.msra.mxu0 0.0
    %4969 = vmatprep.subr.mxu0 0.0
    %4970 = vmatpush2.msra.mxu0 0.0
    %4971 = vmatprep.subr.mxu0 0.0
    %4972 = vmatpush2.msra.mxu0 0.0
    %4973 = vmatprep.subr.mxu0 0.0
    %4974 = vmatpush2.msra.mxu0 0.0
    %4975 = vmatprep.subr.mxu0 0.0
    %4976 = vmatpush2.msra.mxu0 0.0
    %4977 = vmatprep.subr.mxu0 0.0
    %4978 = vmatpush2.msra.mxu0 0.0
    %4979 = vmatprep.subr.mxu0 0.0
    %4980 = vmatpush2.msra.mxu0 0.0
    %4981 = vmatprep.subr.mxu0 0.0
    %4982 = vmatpush2.msra.mxu0 0.0
    %4983 = vmatprep.subr.mxu0 0.0
    %4984 = vmatpush2.msra.mxu0 0.0
    %4985 = vmatprep.subr.mxu0 0.0
    %4986 = vmatpush2.msra.mxu0 0.0
    %4987 = vmatprep.subr.mxu0 0.0
    %4988 = vmatpush2.msra.mxu0 0.0
    %4989 = vmatprep.mubr.f32.mxu0 0.0
    %4990 = vmatmul.mubr.f32.gmra.mxu0 %v4923
    %v4991 = vpop.f32.mrf.mxu0
    %v4992 = vadd.f32 0.0, %v4991
    %v4993 = vpop.f32.mrf.mxu0
    %4994 = vdwg.mxu0
    %s4995 = scalar_lea.vmem %s5, 832
    %v4996 = vld [vmem:[%s4995] sm:$0xff]
    %v4997 = vld [vmem:[%s4995 + $0x8] sm:$0xff]
    %v4998 = vld [vmem:[%s4995 + $0x10] sm:$0xff]
    %v4999 = vld [vmem:[%s4995 + $0x18] sm:$0xff]
    %v5001 = vsel %vm269, %v4992, 0
    %5003 = vmatprep.subr.mxu0 0.0
    %5004 = vmatpush1.msra.mxu0 0.0
    %5005 = vmatprep.subr.mxu0 0.0
    %5006 = vmatpush1.msra.mxu0 0.0
    %5007 = vmatprep.subr.mxu0 0.0
    %5008 = vmatpush1.msra.mxu0 0.0
    %5009 = vmatprep.subr.mxu0 0.0
    %5010 = vmatpush1.msra.mxu0 0.0
    %5011 = vmatprep.subr.mxu0 0.0
    %5012 = vmatpush1.msra.mxu0 0.0
    %5013 = vmatprep.subr.mxu0 0.0
    %5014 = vmatpush1.msra.mxu0 0.0
    %5015 = vmatprep.subr.mxu0 0.0
    %5016 = vmatpush1.msra.mxu0 0.0
    %5017 = vmatprep.subr.mxu0 0.0
    %5018 = vmatpush1.msra.mxu0 0.0
    %5019 = vmatprep.subr.mxu0 0.0
    %5020 = vmatpush1.msra.mxu0 0.0
    %5021 = vmatprep.subr.mxu0 0.0
    %5022 = vmatpush1.msra.mxu0 0.0
    %5023 = vmatprep.subr.mxu0 0.0
    %5024 = vmatpush1.msra.mxu0 0.0
    %5025 = vmatprep.subr.mxu0 0.0
    %5026 = vmatpush1.msra.mxu0 0.0
    %5027 = vmatprep.subr.mxu0 0.0
    %5028 = vmatpush1.msra.mxu0 %v4999
    %5029 = vmatprep.subr.mxu0 0.0
    %5030 = vmatpush1.msra.mxu0 %v4998
    %5031 = vmatprep.subr.mxu0 0.0
    %5032 = vmatpush1.msra.mxu0 %v4997
    %5033 = vmatprep.subr.mxu0 0.0
    %5034 = vmatpush1.msra.mxu0 %v4996
    %5035 = vmatprep.subr.mxu0 0.0
    %5036 = vmatpush2.msra.mxu0 0.0
    %5037 = vmatprep.subr.mxu0 0.0
    %5038 = vmatpush2.msra.mxu0 0.0
    %5039 = vmatprep.subr.mxu0 0.0
    %5040 = vmatpush2.msra.mxu0 0.0
    %5041 = vmatprep.subr.mxu0 0.0
    %5042 = vmatpush2.msra.mxu0 0.0
    %5043 = vmatprep.subr.mxu0 0.0
    %5044 = vmatpush2.msra.mxu0 0.0
    %5045 = vmatprep.subr.mxu0 0.0
    %5046 = vmatpush2.msra.mxu0 0.0
    %5047 = vmatprep.subr.mxu0 0.0
    %5048 = vmatpush2.msra.mxu0 0.0
    %5049 = vmatprep.subr.mxu0 0.0
    %5050 = vmatpush2.msra.mxu0 0.0
    %5051 = vmatprep.subr.mxu0 0.0
    %5052 = vmatpush2.msra.mxu0 0.0
    %5053 = vmatprep.subr.mxu0 0.0
    %5054 = vmatpush2.msra.mxu0 0.0
    %5055 = vmatprep.subr.mxu0 0.0
    %5056 = vmatpush2.msra.mxu0 0.0
    %5057 = vmatprep.subr.mxu0 0.0
    %5058 = vmatpush2.msra.mxu0 0.0
    %5059 = vmatprep.subr.mxu0 0.0
    %5060 = vmatpush2.msra.mxu0 0.0
    %5061 = vmatprep.subr.mxu0 0.0
    %5062 = vmatpush2.msra.mxu0 0.0
    %5063 = vmatprep.subr.mxu0 0.0
    %5064 = vmatpush2.msra.mxu0 0.0
    %5065 = vmatprep.subr.mxu0 0.0
    %5066 = vmatpush2.msra.mxu0 0.0
    %5067 = vmatprep.mubr.f32.mxu0 0.0
    %5068 = vmatmul.mubr.f32.gmra.mxu0 %v5001
    %v5069 = vpop.f32.mrf.mxu0
    %v5070 = vadd.f32 0.0, %v5069
    %v5071 = vpop.f32.mrf.mxu0
    %5072 = vdwg.mxu0
    %v5073 = vadd.f32 %v4919, %v5070
    %v5074 = vld [vmem:[%s8 + $0x6] sm:$0x1]
    %v5075 = vld [vmem:[%s8 + $0x7] sm:$0x1]
    %vm5076 = vcmask 254976
    %v5077 = vsel %vm5076, %v5073, 0.0
    %v5078 = vrot.slane %v5077, 4
    %v5079 = vadd.f32 %v5077, %v5078
    %v5080 = vrot.slane %v5079, 2
    %v5081 = vadd.f32 %v5079, %v5080
    %v5082 = vrot.slane %v5081, 1
    %v5083 = vadd.f32 %v5081, %v5082
    %v5084 = vrcp.pop 2.0
    %v5085 = vmul.f32 %v5083, %v5084
    %v5086 = vsub.f32 %v5073, %v5085
    %v5087 = vmul.f32 %v5086, %v5086
    %v5088 = vsel %vm5076, %v5087, 0.0
    %v5089 = vrot.slane %v5088, 4
    %v5090 = vadd.f32 %v5088, %v5089
    %v5091 = vrot.slane %v5090, 2
    %v5092 = vadd.f32 %v5090, %v5091
    %v5093 = vrot.slane %v5092, 1
    %v5094 = vadd.f32 %v5092, %v5093
    %v5095 = vmul.f32 %v5094, %v5084
    %v5096 = vlaneseq
    %v5097 = vshrl.u32 %v5096, 7
    %v5098 = vsub.s32 0, %v5097
    %v5099 = vrot.slane %v5074, %v5098
    %v5100 = vmul.f32 %v5099, %v5086
    %v5101 = vadd.f32 %v5095, 1e-05
    %v5102 = vrsqrt.pop %v5101
    %v5103 = vmul.f32 %v5100, %v5102
    %v5104 = vlaneseq
    %v5105 = vshrl.u32 %v5104, 7
    %v5106 = vsub.s32 0, %v5105
    %v5107 = vrot.slane %v5075, %v5106
    %v5108 = vadd.f32 %v5103, %v5107
    %v5109 = vmax.f32 %v5108, 0.0
    %v5110 = vld [vmem:[%s6] sm:$0xff]
    %vm5111 = vcmask 15360
    %v5113 = vsel %vm5111, %v5110, 0
    %vm5115 = vcmask 1041408
    %v5117 = vsel %vm5115, %v5109, 0
    %5119 = vmatprep.subr.mxu0 0.0
    %5120 = vmatpush1.msra.mxu0 0.0
    %5121 = vmatprep.subr.mxu0 0.0
    %5122 = vmatpush1.msra.mxu0 0.0
    %5123 = vmatprep.subr.mxu0 0.0
    %5124 = vmatpush1.msra.mxu0 0.0
    %5125 = vmatprep.subr.mxu0 0.0
    %5126 = vmatpush1.msra.mxu0 0.0
    %5127 = vmatprep.subr.mxu0 0.0
    %5128 = vmatpush1.msra.mxu0 0.0
    %5129 = vmatprep.subr.mxu0 0.0
    %5130 = vmatpush1.msra.mxu0 0.0
    %5131 = vmatprep.subr.mxu0 0.0
    %5132 = vmatpush1.msra.mxu0 0.0
    %5133 = vmatprep.subr.mxu0 0.0
    %5134 = vmatpush1.msra.mxu0 0.0
    %5135 = vmatprep.subr.mxu0 0.0
    %5136 = vmatpush1.msra.mxu0 0.0
    %5137 = vmatprep.subr.mxu0 0.0
    %5138 = vmatpush1.msra.mxu0 0.0
    %5139 = vmatprep.subr.mxu0 0.0
    %5140 = vmatpush1.msra.mxu0 0.0
    %5141 = vmatprep.subr.mxu0 0.0
    %5142 = vmatpush1.msra.mxu0 0.0
    %5143 = vmatprep.subr.mxu0 0.0
    %5144 = vmatpush1.msra.mxu0 0.0
    %5145 = vmatprep.subr.mxu0 0.0
    %5146 = vmatpush1.msra.mxu0 0.0
    %5147 = vmatprep.subr.mxu0 0.0
    %5148 = vmatpush1.msra.mxu0 0.0
    %5149 = vmatprep.subr.mxu0 0.0
    %5150 = vmatpush1.msra.mxu0 %v5117
    %5151 = vmatprep.subr.mxu0 0.0
    %5152 = vmatpush2.msra.mxu0 0.0
    %5153 = vmatprep.subr.mxu0 0.0
    %5154 = vmatpush2.msra.mxu0 0.0
    %5155 = vmatprep.subr.mxu0 0.0
    %5156 = vmatpush2.msra.mxu0 0.0
    %5157 = vmatprep.subr.mxu0 0.0
    %5158 = vmatpush2.msra.mxu0 0.0
    %5159 = vmatprep.subr.mxu0 0.0
    %5160 = vmatpush2.msra.mxu0 0.0
    %5161 = vmatprep.subr.mxu0 0.0
    %5162 = vmatpush2.msra.mxu0 0.0
    %5163 = vmatprep.subr.mxu0 0.0
    %5164 = vmatpush2.msra.mxu0 0.0
    %5165 = vmatprep.subr.mxu0 0.0
    %5166 = vmatpush2.msra.mxu0 0.0
    %5167 = vmatprep.subr.mxu0 0.0
    %5168 = vmatpush2.msra.mxu0 0.0
    %5169 = vmatprep.subr.mxu0 0.0
    %5170 = vmatpush2.msra.mxu0 0.0
    %5171 = vmatprep.subr.mxu0 0.0
    %5172 = vmatpush2.msra.mxu0 0.0
    %5173 = vmatprep.subr.mxu0 0.0
    %5174 = vmatpush2.msra.mxu0 0.0
    %5175 = vmatprep.subr.mxu0 0.0
    %5176 = vmatpush2.msra.mxu0 0.0
    %5177 = vmatprep.subr.mxu0 0.0
    %5178 = vmatpush2.msra.mxu0 0.0
    %5179 = vmatprep.subr.mxu0 0.0
    %5180 = vmatpush2.msra.mxu0 0.0
    %5181 = vmatprep.subr.mxu0 0.0
    %5182 = vmatpush2.msra.mxu0 0.0
    %5183 = vmatprep.mubr.f32.mxu0 0.0
    %5184 = vmatmul.mubr.f32.gmra.mxu0 %v5113
    %v5185 = vpop.f32.mrf.mxu0
    %v5186 = vadd.f32 0.0, %v5185
    %v5187 = vpop.f32.mrf.mxu0
    %5188 = vdwg.mxu0
    %v5189 = vld [vmem:[%s7] sm:$0xff]
    %v5190 = vld [vmem:[%s7 + $0x8] sm:$0xff]
    %v5191 = vld [vmem:[%s7 + $0x10] sm:$0xff]
    %v5192 = vld [vmem:[%s7 + $0x18] sm:$0xff]
    %v5194 = vsel %vm269, %v5186, 0
    %5196 = vmatprep.subr.mxu0 0.0
    %5197 = vmatpush1.msra.mxu0 0.0
    %5198 = vmatprep.subr.mxu0 0.0
    %5199 = vmatpush1.msra.mxu0 0.0
    %5200 = vmatprep.subr.mxu0 0.0
    %5201 = vmatpush1.msra.mxu0 0.0
    %5202 = vmatprep.subr.mxu0 0.0
    %5203 = vmatpush1.msra.mxu0 0.0
    %5204 = vmatprep.subr.mxu0 0.0
    %5205 = vmatpush1.msra.mxu0 0.0
    %5206 = vmatprep.subr.mxu0 0.0
    %5207 = vmatpush1.msra.mxu0 0.0
    %5208 = vmatprep.subr.mxu0 0.0
    %5209 = vmatpush1.msra.mxu0 0.0
    %5210 = vmatprep.subr.mxu0 0.0
    %5211 = vmatpush1.msra.mxu0 0.0
    %5212 = vmatprep.subr.mxu0 0.0
    %5213 = vmatpush1.msra.mxu0 0.0
    %5214 = vmatprep.subr.mxu0 0.0
    %5215 = vmatpush1.msra.mxu0 0.0
    %5216 = vmatprep.subr.mxu0 0.0
    %5217 = vmatpush1.msra.mxu0 0.0
    %5218 = vmatprep.subr.mxu0 0.0
    %5219 = vmatpush1.msra.mxu0 0.0
    %5220 = vmatprep.subr.mxu0 0.0
    %5221 = vmatpush1.msra.mxu0 %v5192
    %5222 = vmatprep.subr.mxu0 0.0
    %5223 = vmatpush1.msra.mxu0 %v5191
    %5224 = vmatprep.subr.mxu0 0.0
    %5225 = vmatpush1.msra.mxu0 %v5190
    %5226 = vmatprep.subr.mxu0 0.0
    %5227 = vmatpush1.msra.mxu0 %v5189
    %5228 = vmatprep.subr.mxu0 0.0
    %5229 = vmatpush2.msra.mxu0 0.0
    %5230 = vmatprep.subr.mxu0 0.0
    %5231 = vmatpush2.msra.mxu0 0.0
    %5232 = vmatprep.subr.mxu0 0.0
    %5233 = vmatpush2.msra.mxu0 0.0
    %5234 = vmatprep.subr.mxu0 0.0
    %5235 = vmatpush2.msra.mxu0 0.0
    %5236 = vmatprep.subr.mxu0 0.0
    %5237 = vmatpush2.msra.mxu0 0.0
    %5238 = vmatprep.subr.mxu0 0.0
    %5239 = vmatpush2.msra.mxu0 0.0
    %5240 = vmatprep.subr.mxu0 0.0
    %5241 = vmatpush2.msra.mxu0 0.0
    %5242 = vmatprep.subr.mxu0 0.0
    %5243 = vmatpush2.msra.mxu0 0.0
    %5244 = vmatprep.subr.mxu0 0.0
    %5245 = vmatpush2.msra.mxu0 0.0
    %5246 = vmatprep.subr.mxu0 0.0
    %5247 = vmatpush2.msra.mxu0 0.0
    %5248 = vmatprep.subr.mxu0 0.0
    %5249 = vmatpush2.msra.mxu0 0.0
    %5250 = vmatprep.subr.mxu0 0.0
    %5251 = vmatpush2.msra.mxu0 0.0
    %5252 = vmatprep.subr.mxu0 0.0
    %5253 = vmatpush2.msra.mxu0 0.0
    %5254 = vmatprep.subr.mxu0 0.0
    %5255 = vmatpush2.msra.mxu0 0.0
    %5256 = vmatprep.subr.mxu0 0.0
    %5257 = vmatpush2.msra.mxu0 0.0
    %5258 = vmatprep.subr.mxu0 0.0
    %5259 = vmatpush2.msra.mxu0 0.0
    %5260 = vmatprep.mubr.f32.mxu0 0.0
    %5261 = vmatmul.mubr.f32.gmra.mxu0 %v5194
    %v5262 = vpop.f32.mrf.mxu0
    %v5263 = vadd.f32 0.0, %v5262
    %v5264 = vpop.f32.mrf.mxu0
    %5265 = vdwg.mxu0
    %v5266 = vld [vmem:[%s8 + $0x8] sm:$0x1]
    %v5267 = vld [vmem:[%s8 + $0x9] sm:$0x1]
    %v5268 = vsel %vm269, %v5263, 0.0
    %v5269 = vrot.slane %v5268, 4
    %v5270 = vadd.f32 %v5268, %v5269
    %v5271 = vrot.slane %v5270, 2
    %v5272 = vadd.f32 %v5270, %v5271
    %v5273 = vrot.slane %v5272, 1
    %v5274 = vadd.f32 %v5272, %v5273
    %v5275 = vmul.f32 %v5274, %v3664
    %v5276 = vsub.f32 %v5263, %v5275
    %v5277 = vmul.f32 %v5276, %v5276
    %v5278 = vsel %vm269, %v5277, 0.0
    %v5279 = vrot.slane %v5278, 4
    %v5280 = vadd.f32 %v5278, %v5279
    %v5281 = vrot.slane %v5280, 2
    %v5282 = vadd.f32 %v5280, %v5281
    %v5283 = vrot.slane %v5282, 1
    %v5284 = vadd.f32 %v5282, %v5283
    %v5285 = vmul.f32 %v5284, %v3664
    %v5286 = vlaneseq
    %v5287 = vshrl.u32 %v5286, 7
    %v5288 = vsub.s32 0, %v5287
    %v5289 = vrot.slane %v5266, %v5288
    %v5290 = vmul.f32 %v5289, %v5276
    %v5291 = vadd.f32 %v5285, 1e-05
    %v5292 = vrsqrt.pop %v5291
    %v5293 = vmul.f32 %v5290, %v5292
    %v5294 = vlaneseq
    %v5295 = vshrl.u32 %v5294, 7
    %v5296 = vsub.s32 0, %v5295
    %v5297 = vrot.slane %v5267, %v5296
    %v5298 = vadd.f32 %v5293, %v5297
    %v5299 = vmax.f32 %v5298, 0.0
    %v5300 = vld [vmem:[%s9] sm:$0xff]
    %v5301 = vld [vmem:[%s9 + $0x8] sm:$0xff]
    %v5302 = vld [vmem:[%s9 + $0x10] sm:$0xff]
    %v5303 = vld [vmem:[%s9 + $0x18] sm:$0xff]
    %v5304 = vld [vmem:[%s9 + $0x20] sm:$0x1]
    %v5305 = vlaneseq
    %v5306 = vshrl.u32 %v5305, 7
    %v5307 = vsub.s32 0, %v5306
    %v5308 = vrot.slane %v5304, %v5307
    %v5310 = vsel %vm269, %v5299, 0
    %5312 = vmatprep.subr.mxu0 0.0
    %5313 = vmatpush1.msra.mxu0 0.0
    %5314 = vmatprep.subr.mxu0 0.0
    %5315 = vmatpush1.msra.mxu0 0.0
    %5316 = vmatprep.subr.mxu0 0.0
    %5317 = vmatpush1.msra.mxu0 0.0
    %5318 = vmatprep.subr.mxu0 0.0
    %5319 = vmatpush1.msra.mxu0 0.0
    %5320 = vmatprep.subr.mxu0 0.0
    %5321 = vmatpush1.msra.mxu0 0.0
    %5322 = vmatprep.subr.mxu0 0.0
    %5323 = vmatpush1.msra.mxu0 0.0
    %5324 = vmatprep.subr.mxu0 0.0
    %5325 = vmatpush1.msra.mxu0 0.0
    %5326 = vmatprep.subr.mxu0 0.0
    %5327 = vmatpush1.msra.mxu0 0.0
    %5328 = vmatprep.subr.mxu0 0.0
    %5329 = vmatpush1.msra.mxu0 0.0
    %5330 = vmatprep.subr.mxu0 0.0
    %5331 = vmatpush1.msra.mxu0 0.0
    %5332 = vmatprep.subr.mxu0 0.0
    %5333 = vmatpush1.msra.mxu0 0.0
    %5334 = vmatprep.subr.mxu0 0.0
    %5335 = vmatpush1.msra.mxu0 0.0
    %5336 = vmatprep.subr.mxu0 0.0
    %5337 = vmatpush1.msra.mxu0 %v5303
    %5338 = vmatprep.subr.mxu0 0.0
    %5339 = vmatpush1.msra.mxu0 %v5302
    %5340 = vmatprep.subr.mxu0 0.0
    %5341 = vmatpush1.msra.mxu0 %v5301
    %5342 = vmatprep.subr.mxu0 0.0
    %5343 = vmatpush1.msra.mxu0 %v5300
    %5344 = vmatprep.subr.mxu0 0.0
    %5345 = vmatpush2.msra.mxu0 0.0
    %5346 = vmatprep.subr.mxu0 0.0
    %5347 = vmatpush2.msra.mxu0 0.0
    %5348 = vmatprep.subr.mxu0 0.0
    %5349 = vmatpush2.msra.mxu0 0.0
    %5350 = vmatprep.subr.mxu0 0.0
    %5351 = vmatpush2.msra.mxu0 0.0
    %5352 = vmatprep.subr.mxu0 0.0
    %5353 = vmatpush2.msra.mxu0 0.0
    %5354 = vmatprep.subr.mxu0 0.0
    %5355 = vmatpush2.msra.mxu0 0.0
    %5356 = vmatprep.subr.mxu0 0.0
    %5357 = vmatpush2.msra.mxu0 0.0
    %5358 = vmatprep.subr.mxu0 0.0
    %5359 = vmatpush2.msra.mxu0 0.0
    %5360 = vmatprep.subr.mxu0 0.0
    %5361 = vmatpush2.msra.mxu0 0.0
    %5362 = vmatprep.subr.mxu0 0.0
    %5363 = vmatpush2.msra.mxu0 0.0
    %5364 = vmatprep.subr.mxu0 0.0
    %5365 = vmatpush2.msra.mxu0 0.0
    %5366 = vmatprep.subr.mxu0 0.0
    %5367 = vmatpush2.msra.mxu0 0.0
    %5368 = vmatprep.subr.mxu0 0.0
    %5369 = vmatpush2.msra.mxu0 0.0
    %5370 = vmatprep.subr.mxu0 0.0
    %5371 = vmatpush2.msra.mxu0 0.0
    %5372 = vmatprep.subr.mxu0 0.0
    %5373 = vmatpush2.msra.mxu0 0.0
    %5374 = vmatprep.subr.mxu0 0.0
    %5375 = vmatpush2.msra.mxu0 0.0
    %5376 = vmatprep.mubr.f32.mxu0 0.0
    %5377 = vmatmul.mubr.f32.gmra.mxu0 %v5310
    %v5378 = vpop.f32.mrf.mxu0
    %v5379 = vadd.f32 %v5308, %v5378
    %v5380 = vpop.f32.mrf.mxu0
    %5381 = vdwg.mxu0
    %5382 = vst.msk [vmem:[#allocation2] sm:$0xff] %vm3691, %v5379
    %v5383 = vsel %vm3691, %v5379, -inf
    %5384 = vmax.xlane.f32.xlu0 %v5383
    %v5385 = vpop.xlane.xlu0 %5384
    %v5386 = vsub.f32 %v5379, %v5385
    %v5387 = vmul.f32 %v5386, 1.442695
    %v5388 = vpow.pop %v5387
    %v5389 = vsel %vm3691, %v5388, 0.0
    %5390 = vadd.xlane.f32.xlu0 %v5389
    %v5391 = vpop.xlane.xlu0 %5390
    %v5392 = vrcp.pop %v5391
    %v5393 = vmul.f32 %v5388, %v5392
    %5394 = vst.msk [vmem:[#allocation4] sm:$0xff] %vm3691, %v5393
    %v5395 = vld [vmem:[%s10] sm:$0xff]
    %v5396 = vld [vmem:[%s10 + $0x8] sm:$0xff]
    %v5397 = vld [vmem:[%s10 + $0x10] sm:$0xff]
    %v5398 = vld [vmem:[%s10 + $0x18] sm:$0xff]
    %v5399 = vld [vmem:[%s10 + $0x20] sm:$0x1]
    %v5400 = vlaneseq
    %v5401 = vshrl.u32 %v5400, 7
    %v5402 = vsub.s32 0, %v5401
    %v5403 = vrot.slane %v5399, %v5402
    %5404 = vmatprep.subr.mxu0 0.0
    %5405 = vmatpush1.msra.mxu0 0.0
    %5406 = vmatprep.subr.mxu0 0.0
    %5407 = vmatpush1.msra.mxu0 0.0
    %5408 = vmatprep.subr.mxu0 0.0
    %5409 = vmatpush1.msra.mxu0 0.0
    %5410 = vmatprep.subr.mxu0 0.0
    %5411 = vmatpush1.msra.mxu0 0.0
    %5412 = vmatprep.subr.mxu0 0.0
    %5413 = vmatpush1.msra.mxu0 0.0
    %5414 = vmatprep.subr.mxu0 0.0
    %5415 = vmatpush1.msra.mxu0 0.0
    %5416 = vmatprep.subr.mxu0 0.0
    %5417 = vmatpush1.msra.mxu0 0.0
    %5418 = vmatprep.subr.mxu0 0.0
    %5419 = vmatpush1.msra.mxu0 0.0
    %5420 = vmatprep.subr.mxu0 0.0
    %5421 = vmatpush1.msra.mxu0 0.0
    %5422 = vmatprep.subr.mxu0 0.0
    %5423 = vmatpush1.msra.mxu0 0.0
    %5424 = vmatprep.subr.mxu0 0.0
    %5425 = vmatpush1.msra.mxu0 0.0
    %5426 = vmatprep.subr.mxu0 0.0
    %5427 = vmatpush1.msra.mxu0 0.0
    %5428 = vmatprep.subr.mxu0 0.0
    %5429 = vmatpush1.msra.mxu0 %v5398
    %5430 = vmatprep.subr.mxu0 0.0
    %5431 = vmatpush1.msra.mxu0 %v5397
    %5432 = vmatprep.subr.mxu0 0.0
    %5433 = vmatpush1.msra.mxu0 %v5396
    %5434 = vmatprep.subr.mxu0 0.0
    %5435 = vmatpush1.msra.mxu0 %v5395
    %5436 = vmatprep.subr.mxu0 0.0
    %5437 = vmatpush2.msra.mxu0 0.0
    %5438 = vmatprep.subr.mxu0 0.0
    %5439 = vmatpush2.msra.mxu0 0.0
    %5440 = vmatprep.subr.mxu0 0.0
    %5441 = vmatpush2.msra.mxu0 0.0
    %5442 = vmatprep.subr.mxu0 0.0
    %5443 = vmatpush2.msra.mxu0 0.0
    %5444 = vmatprep.subr.mxu0 0.0
    %5445 = vmatpush2.msra.mxu0 0.0
    %5446 = vmatprep.subr.mxu0 0.0
    %5447 = vmatpush2.msra.mxu0 0.0
    %5448 = vmatprep.subr.mxu0 0.0
    %5449 = vmatpush2.msra.mxu0 0.0
    %5450 = vmatprep.subr.mxu0 0.0
    %5451 = vmatpush2.msra.mxu0 0.0
    %5452 = vmatprep.subr.mxu0 0.0
    %5453 = vmatpush2.msra.mxu0 0.0
    %5454 = vmatprep.subr.mxu0 0.0
    %5455 = vmatpush2.msra.mxu0 0.0
    %5456 = vmatprep.subr.mxu0 0.0
    %5457 = vmatpush2.msra.mxu0 0.0
    %5458 = vmatprep.subr.mxu0 0.0
    %5459 = vmatpush2.msra.mxu0 0.0
    %5460 = vmatprep.subr.mxu0 0.0
    %5461 = vmatpush2.msra.mxu0 0.0
    %5462 = vmatprep.subr.mxu0 0.0
    %5463 = vmatpush2.msra.mxu0 0.0
    %5464 = vmatprep.subr.mxu0 0.0
    %5465 = vmatpush2.msra.mxu0 0.0
    %5466 = vmatprep.subr.mxu0 0.0
    %5467 = vmatpush2.msra.mxu0 0.0
    %5468 = vmatprep.mubr.f32.mxu0 0.0
    %5469 = vmatmul.mubr.f32.gmra.mxu0 %v5310
    %v5470 = vpop.f32.mrf.mxu0
    %v5471 = vadd.f32 %v5403, %v5470
    %v5472 = vpop.f32.mrf.mxu0
    %5473 = vdwg.mxu0
    %vm5474 = vcmask 80896
    %5475 = vst.msk [vmem:[#allocation6] sm:$0xff] %vm5474, %v5471
    %v5476 = vsel %vm5474, %v5471, -inf
    %5477 = vmax.xlane.f32.xlu0 %v5476
    %v5478 = vpop.xlane.xlu0 %5477
    %v5479 = vsub.f32 %v5471, %v5478
    %v5480 = vmul.f32 %v5479, 1.442695
    %v5481 = vpow.pop %v5480
    %v5482 = vsel %vm5474, %v5481, 0.0
    %5483 = vadd.xlane.f32.xlu0 %v5482
    %v5484 = vpop.xlane.xlu0 %5483
    %v5485 = vrcp.pop %v5484
    %v5486 = vmul.f32 %v5481, %v5485
    %5487 = vst.msk [vmem:[#allocation7] sm:$0xff] %vm5474, %v5486
    %v5488 = vld [vmem:[%s11] sm:$0xff]
    %v5489 = vld [vmem:[%s11 + $0x8] sm:$0xff]
    %v5490 = vld [vmem:[%s11 + $0x10] sm:$0xff]
    %v5491 = vld [vmem:[%s11 + $0x18] sm:$0xff]
    %v5492 = vld [vmem:[%s11 + $0x20] sm:$0x1]
    %v5493 = vlaneseq
    %v5494 = vshrl.u32 %v5493, 7
    %v5495 = vsub.s32 0, %v5494
    %v5496 = vrot.slane %v5492, %v5495
    %5497 = vmatprep.subr.mxu0 0.0
    %5498 = vmatpush1.msra.mxu0 0.0
    %5499 = vmatprep.subr.mxu0 0.0
    %5500 = vmatpush1.msra.mxu0 0.0
    %5501 = vmatprep.subr.mxu0 0.0
    %5502 = vmatpush1.msra.mxu0 0.0
    %5503 = vmatprep.subr.mxu0 0.0
    %5504 = vmatpush1.msra.mxu0 0.0
    %5505 = vmatprep.subr.mxu0 0.0
    %5506 = vmatpush1.msra.mxu0 0.0
    %5507 = vmatprep.subr.mxu0 0.0
    %5508 = vmatpush1.msra.mxu0 0.0
    %5509 = vmatprep.subr.mxu0 0.0
    %5510 = vmatpush1.msra.mxu0 0.0
    %5511 = vmatprep.subr.mxu0 0.0
    %5512 = vmatpush1.msra.mxu0 0.0
    %5513 = vmatprep.subr.mxu0 0.0
    %5514 = vmatpush1.msra.mxu0 0.0
    %5515 = vmatprep.subr.mxu0 0.0
    %5516 = vmatpush1.msra.mxu0 0.0
    %5517 = vmatprep.subr.mxu0 0.0
    %5518 = vmatpush1.msra.mxu0 0.0
    %5519 = vmatprep.subr.mxu0 0.0
    %5520 = vmatpush1.msra.mxu0 0.0
    %5521 = vmatprep.subr.mxu0 0.0
    %5522 = vmatpush1.msra.mxu0 %v5491
    %5523 = vmatprep.subr.mxu0 0.0
    %5524 = vmatpush1.msra.mxu0 %v5490
    %5525 = vmatprep.subr.mxu0 0.0
    %5526 = vmatpush1.msra.mxu0 %v5489
    %5527 = vmatprep.subr.mxu0 0.0
    %5528 = vmatpush1.msra.mxu0 %v5488
    %5529 = vmatprep.subr.mxu0 0.0
    %5530 = vmatpush2.msra.mxu0 0.0
    %5531 = vmatprep.subr.mxu0 0.0
    %5532 = vmatpush2.msra.mxu0 0.0
    %5533 = vmatprep.subr.mxu0 0.0
    %5534 = vmatpush2.msra.mxu0 0.0
    %5535 = vmatprep.subr.mxu0 0.0
    %5536 = vmatpush2.msra.mxu0 0.0
    %5537 = vmatprep.subr.mxu0 0.0
    %5538 = vmatpush2.msra.mxu0 0.0
    %5539 = vmatprep.subr.mxu0 0.0
    %5540 = vmatpush2.msra.mxu0 0.0
    %5541 = vmatprep.subr.mxu0 0.0
    %5542 = vmatpush2.msra.mxu0 0.0
    %5543 = vmatprep.subr.mxu0 0.0
    %5544 = vmatpush2.msra.mxu0 0.0
    %5545 = vmatprep.subr.mxu0 0.0
    %5546 = vmatpush2.msra.mxu0 0.0
    %5547 = vmatprep.subr.mxu0 0.0
    %5548 = vmatpush2.msra.mxu0 0.0
    %5549 = vmatprep.subr.mxu0 0.0
    %5550 = vmatpush2.msra.mxu0 0.0
    %5551 = vmatprep.subr.mxu0 0.0
    %5552 = vmatpush2.msra.mxu0 0.0
    %5553 = vmatprep.subr.mxu0 0.0
    %5554 = vmatpush2.msra.mxu0 0.0
    %5555 = vmatprep.subr.mxu0 0.0
    %5556 = vmatpush2.msra.mxu0 0.0
    %5557 = vmatprep.subr.mxu0 0.0
    %5558 = vmatpush2.msra.mxu0 0.0
    %5559 = vmatprep.subr.mxu0 0.0
    %5560 = vmatpush2.msra.mxu0 0.0
    %5561 = vmatprep.mubr.f32.mxu0 0.0
    %5562 = vmatmul.mubr.f32.gmra.mxu0 %v5310
    %v5563 = vpop.f32.mrf.mxu0
    %v5564 = vadd.f32 %v5496, %v5563
    %v5565 = vpop.f32.mrf.mxu0
    %5566 = vdwg.mxu0
    %v5567 = vxor.u32 %v5564, 2147483648
    %v5568 = vmul.f32 %v5567, 1.442695
    %v5569 = vpow.pop %v5568
    %v5570 = vadd.f32 %v5569, 1.0
    %v5571 = vrcp.pop %v5570
    %v5572 = vmul.f32 1.0, %v5571
    %vm5573 = vcmask 7168
    %5574 = vst.msk [vmem:[%s16] sm:$0xff] %vm5573, %v5572
    // Predicated region
    $region50: #{posterior_forward.1} parent=1 // pred_check
      _
    $region51: #{posterior_forward.1} parent=1 // pred_check_branch
      %5576 = sbr.rel (0) target = $region53
    $region52: #{posterior_forward.1} parent=1 // pred_region
      %s5578 = ssub.s32 128, 128
      %5579 = vsyncadd [#allocation3], %s5578
      %s5581 = sshll.u32 [#allocation2], 4
      %s5582 = int_to_ptr.vmem [resolvable:$true] %s5581
      %5584 = dma.vmem_to_hbm [thread:$0]  %s5582, 128, %s12, [#allocation3]
    $region53: #{posterior_forward.1} parent=1 // pred_fallthru
      _
    // Predicated region
    $region54: #{posterior_forward.1} parent=1 // pred_check
      _
    $region55: #{posterior_forward.1} parent=1 // pred_check_branch
      %5586 = sbr.rel (0) target = $region57
    $region56: #{posterior_forward.1} parent=1 // pred_region
      %s5588 = ssub.s32 128, 128
      %5589 = vsyncadd [#allocation5], %s5588
      %s5591 = sshll.u32 [#allocation4], 4
      %s5592 = int_to_ptr.vmem [resolvable:$true] %s5591
      %5594 = dma.vmem_to_hbm [thread:$0]  %s5592, 128, %s13, [#allocation5]
    $region57: #{posterior_forward.1} parent=1 // pred_fallthru
      _
    // Predicated region
    $region58: #{posterior_forward.1} parent=1 // pred_check
      _
    $region59: #{posterior_forward.1} parent=1 // pred_check_branch
      %5596 = sbr.rel (0) target = $region61
    $region60: #{posterior_forward.1} parent=1 // pred_region
      %s5598 = ssub.s32 128, 128
      %5599 = vsyncadd [#allocation5], %s5598
      %s5601 = sshll.u32 [#allocation6], 4
      %s5602 = int_to_ptr.vmem [resolvable:$true] %s5601
      %5604 = dma.vmem_to_hbm [thread:$0]  %s5602, 128, %s14, [#allocation5]
    $region61: #{posterior_forward.1} parent=1 // pred_fallthru
      _
    // Predicated region
    $region62: #{posterior_forward.1} parent=1 // pred_check
      _
    $region63: #{posterior_forward.1} parent=1 // pred_check_branch
      %5606 = sbr.rel (0) target = $region65
    $region64: #{posterior_forward.1} parent=1 // pred_region
      %s5608 = ssub.s32 128, 128
      %5609 = vsyncadd [#allocation8], %s5608
      %s5611 = sshll.u32 [#allocation7], 4
      %s5612 = int_to_ptr.vmem [resolvable:$true] %s5611
      %5614 = dma.vmem_to_hbm [thread:$0]  %s5612, 128, %s15, [#allocation8]
    $region65: #{posterior_forward.1} parent=1 // pred_fallthru
      _
    // Predicated region
    $region66: #{posterior_forward.1} parent=1 // pred_check
      _
    $region67: #{posterior_forward.1} parent=1 // pred_check_branch
      %5616 = sbr.rel (0) target = $region69
    $region68: #{posterior_forward.1} parent=1 // pred_region
      _
    $region69: #{posterior_forward.1} parent=1 // pred_fallthru
      _
    // Predicated region
    $region70: #{posterior_forward.1} parent=1 // pred_check
      _
    $region71: #{posterior_forward.1} parent=1 // pred_check_branch
      %5618 = sbr.rel (0) target = $region73
    $region72: #{posterior_forward.1} parent=1 // pred_region
      %5619 = dma.done [#allocation3], 128
    $region73: #{posterior_forward.1} parent=1 // pred_fallthru
      _
    // Predicated region
    $region74: #{posterior_forward.1} parent=1 // pred_check
      _
    $region75: #{posterior_forward.1} parent=1 // pred_check_branch
      %5621 = sbr.rel (0) target = $region77
    $region76: #{posterior_forward.1} parent=1 // pred_region
      %5622 = dma.done [#allocation5], 128
    $region77: #{posterior_forward.1} parent=1 // pred_fallthru
      _
    // Predicated region
    $region78: #{posterior_forward.1} parent=1 // pred_check
      _
    $region79: #{posterior_forward.1} parent=1 // pred_check_branch
      %5624 = sbr.rel (0) target = $region81
    $region80: #{posterior_forward.1} parent=1 // pred_region
      %5625 = dma.done [#allocation5], 128
    $region81: #{posterior_forward.1} parent=1 // pred_fallthru
      _
    // Predicated region
    $region82: #{posterior_forward.1} parent=1 // pred_check
      _
    $region83: #{posterior_forward.1} parent=1 // pred_check_branch
      %5627 = sbr.rel (0) target = $region85
    $region84: #{posterior_forward.1} parent=1 // pred_region
      %5628 = dma.done [#allocation8], 128
    $region85: #{posterior_forward.1} parent=1 // pred_fallthru
      _
    // Predicated region
    $region86: #{posterior_forward.1} parent=1 // pred_check
      _
    $region87: #{posterior_forward.1} parent=1 // pred_check_branch
      %5630 = sbr.rel (0) target = $region89
    $region88: #{posterior_forward.1} parent=1 // pred_region
      _
    $region89: #{posterior_forward.1} parent=1 // pred_fallthru
      _
    %5631 = vsyncpa [#allocation3], 1
    %5632 = vsyncpa [#allocation5], 1
    %5633 = vsyncpa [#allocation8], 1

</llo_original>
